<compile_context>
chip_gen: v6e
topology: v6e:2x2x1
jax: 0.10.0
libtpu: 0.0.40
codegen_flags: <defaults>
</compile_context>

<pallas_src>
import functools

import jax
import jax.numpy as jnp
import numpy as np
from jax import lax
from jax.experimental import pallas as pl
from jax.experimental.pallas import tpu as pltpu


# ------------------------------ Pallas kernel ------------------------------- #

def wide_basic_kernel(x_ref, s1_ref, t1_ref, w1_ref, b1_ref,
                      s2_ref, t2_ref, w2_ref, b2_ref,
                      o_ref, pad_ref, col_ref, *, H, W, PAD, B):
    """One grid step = B images, flattened NHWC -> (B*HW, C) rows, channels on lanes.

    pad_ref : (B*(HW+2*PAD), C) bf16  -- per-image zero-padded activation (reused by both convs)
    col_ref : (B*HW, 9*C)       bf16  -- im2col slab; conv = one (B*HW, 9C) @ (9C, F) matmul
    """
    HW = H * W
    C = x_ref.shape[-1]
    PSTRIDE = HW + 2 * PAD                      # rows per image inside pad_ref

    # ---- W-boundary masks: computed once, pre-broadcast to (HW, C) (no per-tap
    #      re-broadcast; JAX does not CSE broadcast_in_dim). ---------------------------
    row = lax.broadcasted_iota(jnp.int32, (HW, 1), 0)
    wpos = (row & (W - 1)) if (W & (W - 1)) == 0 else (row % W)
    mask_l = jnp.broadcast_to(wpos > 0, (HW, C)).astype(jnp.bfloat16)       # w-1 valid
    mask_r = jnp.broadcast_to(wpos < (W - 1), (HW, C)).astype(jnp.bfloat16)  # w+1 valid

    # ---- zero the vertical halos once per grid step (shared by both convs).
    #      Full PAD rows (>= W+1 needed) are zeroed to keep the stores sublane-aligned.
    #      Deliberately NOT gated on program_id: with dimension_semantics=('parallel',)
    #      each TensorCore has its own scratch copy. --------------------------------
    halo = jnp.zeros((PAD, C), jnp.bfloat16)
    for b in range(B):
        base = b * PSTRIDE
        pad_ref[pl.ds(base, PAD), :] = halo
        pad_ref[pl.ds(base + PAD + HW, PAD), :] = halo

    def build_cols(b):
        """Pack the 9 shifted (HW, C) taps of image b along K into the im2col slab."""
        base = b * PSTRIDE + PAD
        for oy in (-1, 0, 1):
            for ox in (-1, 0, 1):
                tap = (oy + 1) * 3 + (ox + 1)               # HWIO tap index (ky*3 + kx)
                t = pad_ref[pl.ds(base + oy * W + ox, HW), :]
                if ox == -1:                                # mask wrapped reads at w == 0
                    t = t * mask_l
                elif ox == 1:                               # mask wrapped reads at w == W-1
                    t = t * mask_r
                col_ref[pl.ds(b * HW, HW), pl.ds(tap * C, C)] = t

    # ---- relu(bn1(x)) -> bf16 padded scratch -> im2col slab ---------------------------
    s1 = s1_ref[...]
    t1 = t1_ref[...]
    for b in range(B):
        a1 = jnp.maximum(x_ref[pl.ds(b * HW, HW), :] * s1 + t1, 0.0)
        pad_ref[pl.ds(b * PSTRIDE + PAD, HW), :] = a1.astype(jnp.bfloat16)
        build_cols(b)

    # ---- conv1: single MXU matmul, K = 9*C; f32 accumulation --------------------------
    y1 = jnp.dot(col_ref[...], w1_ref[...], preferred_element_type=jnp.float32)
    y1 = y1 + b1_ref[...]
    # dropout (eval mode) == identity

    # ---- relu(bn2(y1)) -> padded scratch (reused) -> im2col slab ----------------------
    a2 = jnp.maximum(y1 * s2_ref[...] + t2_ref[...], 0.0).astype(jnp.bfloat16)
    for b in range(B):
        pad_ref[pl.ds(b * PSTRIDE + PAD, HW), :] = a2[b * HW:(b + 1) * HW]
        build_cols(b)

    # ---- conv2: single MXU matmul + bias + identity shortcut --------------------------
    y2 = jnp.dot(col_ref[...], w2_ref[...], preferred_element_type=jnp.float32)
    # x is re-read here (not held live across the convs) to relieve vreg pressure.
    o_ref[...] = (y2 + b2_ref[...] + x_ref[...]).astype(o_ref.dtype)


# ----------------------------- wrapper (NCHW) ------------------------------- #

def _pick_b_tile(N, HW, C, F):
    """Batch tile: amortize per-step overhead, but keep >= 2 grid steps (v7x megacore)
    and the im2col slab under ~2 MiB."""
    best = 1
    for bt in range(1, N + 1):
        if N % bt:
            continue
        if N >= 2 and N // bt < 2:
            break
        if bt * HW * 9 * max(C, F) * 2 > (2 << 20):
            break
        best = bt
    return best


def wide_basic_forward(x_nchw, params, b_tile=None):
    """Forward of wide_basic (C==F, stride=1, eval-mode BN/dropout). NCHW in/out."""
    N, C, H, W = x_nchw.shape
    F = params["w2"].shape[-1]
    assert C == F, "identity shortcut requires C == F (stride == 1)"
    HW = H * W
    PAD = ((W + 1 + 15) // 16) * 16             # >= W+1 halo rows, bf16 sublane aligned
    B = _pick_b_tile(N, HW, C, F) if b_tile is None else b_tile
    assert N % B == 0

    # NHWC rows, channels on lanes, batch flattened into the matmul M dimension.
    x2 = jnp.transpose(x_nchw, (0, 2, 3, 1)).reshape(N * HW, C)

    # Weights reshaped for the K-packed im2col matmul: row block tap*C + c matches the
    # slab column block of tap (ky*3 + kx).  Pre-cast to bf16.
    w1 = params["w1"].reshape(9 * C, F).astype(jnp.bfloat16)
    w2 = params["w2"].reshape(9 * F, F).astype(jnp.bfloat16)
    s1 = params["s1"].reshape(1, C).astype(jnp.float32)
    t1 = params["t1"].reshape(1, C).astype(jnp.float32)
    s2 = params["s2"].reshape(1, F).astype(jnp.float32)
    t2 = params["t2"].reshape(1, F).astype(jnp.float32)
    b1 = params["b1"].reshape(1, F).astype(jnp.float32)
    b2 = params["b2"].reshape(1, F).astype(jnp.float32)

    kernel = functools.partial(wide_basic_kernel, H=H, W=W, PAD=PAD, B=B)

    def const_spec(shape):
        nd = len(shape)
        return pl.BlockSpec(shape, lambda n, _nd=nd: (0,) * _nd)

    # Explicit per-step VMEM budget (double-buffered in/out blocks + resident weights +
    # bf16 scratches), with headroom; keeps us honest on v7x's smaller VMEM.
    vmem_bytes = (
        2 * 2 * (B * HW * max(C, F) * 4)            # x-in + out blocks, double-buffered, f32
        + (9 * C * F + 9 * F * F) * 2               # resident bf16 conv weights
        + B * (HW + 2 * PAD) * C * 2                # padded activation scratch (bf16)
        + B * HW * 9 * C * 2                        # im2col slab (bf16)
        + 8 * max(C, F) * 4                         # folded BN scale/shift + conv biases
    )
    vmem_limit = int(min(32 << 20, max(8 << 20, 2 * vmem_bytes)))

    out2 = pl.pallas_call(
        kernel,
        out_shape=jax.ShapeDtypeStruct((N * HW, F), jnp.float32),
        grid=(N // B,),
        in_specs=[
            pl.BlockSpec((B * HW, C), lambda n: (n, 0)),        # x (B images / step)
            const_spec((1, C)), const_spec((1, C)),             # s1, t1 (bn1 folded)
            const_spec((9 * C, F)), const_spec((1, F)),         # w1 (K-packed), b1
            const_spec((1, F)), const_spec((1, F)),             # s2, t2 (bn2 folded)
            const_spec((9 * F, F)), const_spec((1, F)),         # w2 (K-packed), b2
        ],
        out_specs=pl.BlockSpec((B * HW, F), lambda n: (n, 0)),
        scratch_shapes=[
            pltpu.VMEM((B * (HW + 2 * PAD), C), jnp.bfloat16),  # padded activation (reused)
            pltpu.VMEM((B * HW, 9 * C), jnp.bfloat16),          # im2col slab (reused)
        ],
        compiler_params=pltpu.CompilerParams(
            dimension_semantics=("parallel",),
            vmem_limit_bytes=vmem_limit),
    )(x2, s1, t1, w1, b1, s2, t2, w2, b2)

    return jnp.transpose(out2.reshape(N, H, W, F), (0, 3, 1, 2))


# ------------------------------ reference (JAX) ----------------------------- #

def reference_forward(x_nchw, params):
    C = x_nchw.shape[1]
    F = params["w2"].shape[-1]
    s1 = params["s1"].reshape(1, C, 1, 1); t1 = params["t1"].reshape(1, C, 1, 1)
    s2 = params["s2"].reshape(1, F, 1, 1); t2 = params["t2"].reshape(1, F, 1, 1)
    w1 = jnp.transpose(params["w1"], (3, 2, 0, 1))  # HWIO -> OIHW
    w2 = jnp.transpose(params["w2"], (3, 2, 0, 1))
    a1 = jnp.maximum(x_nchw * s1 + t1, 0.0)
    y1 = lax.conv_general_dilated(a1, w1, (1, 1), "SAME",
                                  dimension_numbers=("NCHW", "OIHW", "NCHW"))
    y1 = y1 + params["b1"].reshape(1, F, 1, 1)
    a2 = jnp.maximum(y1 * s2 + t2, 0.0)
    y2 = lax.conv_general_dilated(a2, w2, (1, 1), "SAME",
                                  dimension_numbers=("NCHW", "OIHW", "NCHW"))
    y2 = y2 + params["b2"].reshape(1, F, 1, 1)
    return y2 + x_nchw


# ---------------------------------- main ------------------------------------ #

def make_params(key, C, F, eps=1e-5):
    ks = jax.random.split(key, 12)
    # BatchNorm2d(C) eval-mode params -> folded scale/shift
    g1 = 1.0 + 0.1 * jax.random.normal(ks[0], (C,), jnp.float32)
    b1 = 0.1 * jax.random.normal(ks[1], (C,), jnp.float32)
    m1 = 0.1 * jax.random.normal(ks[2], (C,), jnp.float32)
    v1 = jax.random.uniform(ks[3], (C,), jnp.float32, 0.5, 1.5)
    s1 = g1 / jnp.sqrt(v1 + eps)
    t1 = b1 - m1 * s1
    # BatchNorm2d(F)
    g2 = 1.0 + 0.1 * jax.random.normal(ks[4], (F,), jnp.float32)
    b2 = 0.1 * jax.random.normal(ks[5], (F,), jnp.float32)
    m2 = 0.1 * jax.random.normal(ks[6], (F,), jnp.float32)
    v2 = jax.random.uniform(ks[7], (F,), jnp.float32, 0.5, 1.5)
    s2 = g2 / jnp.sqrt(v2 + eps)
    t2 = b2 - m2 * s2
    # Conv2d weights (stored HWIO: (3, 3, Cin, Cout)) + biases
    w1 = jax.random.normal(ks[8], (3, 3, C, F), jnp.float32) * np.sqrt(2.0 / (9 * C))
    cb1 = 0.05 * jax.random.normal(ks[9], (F,), jnp.float32)
    w2 = jax.random.normal(ks[10], (3, 3, F, F), jnp.float32) * np.sqrt(2.0 / (9 * F))
    cb2 = 0.05 * jax.random.normal(ks[11], (F,), jnp.float32)
    return dict(s1=s1, t1=t1, s2=s2, t2=t2, w1=w1, b1=cb1, w2=w2, b2=cb2)


if __name__ == "__main__":
    N, C, H, W = 2, 32, 16, 16
    F = C          # C == F and stride == 1  ->  identity shortcut (nn.Sequential())
    key = jax.random.PRNGKey(0)
    kx, kp = jax.random.split(key)
    x = jax.random.normal(kx, (N, C, H, W), jnp.float32)   # NCHW, like PyTorch
    params = make_params(kp, C, F)

    out = jax.jit(wide_basic_forward)(x, params)
    out = jax.block_until_ready(out)

    ref = jax.block_until_ready(reference_forward(x, params))
    assert out.shape == (N, F, H, W)
    np.testing.assert_allclose(np.asarray(out), np.asarray(ref), rtol=5e-2, atol=5e-2)

    print("KERNEL_OK")
</pallas_src>

<mosaic_0001>
module attributes {stable_mosaic.version = 11 : i64} {
  func.func @wide_basic_kernel(%arg0: i32, %arg1: memref<256x32xf32, #tpu.memory_space<vmem>>, %arg2: memref<1x32xf32, #tpu.memory_space<vmem>>, %arg3: memref<1x32xf32, #tpu.memory_space<vmem>>, %arg4: memref<288x32xbf16, #tpu.memory_space<vmem>>, %arg5: memref<1x32xf32, #tpu.memory_space<vmem>>, %arg6: memref<1x32xf32, #tpu.memory_space<vmem>>, %arg7: memref<1x32xf32, #tpu.memory_space<vmem>>, %arg8: memref<288x32xbf16, #tpu.memory_space<vmem>>, %arg9: memref<1x32xf32, #tpu.memory_space<vmem>>, %arg10: memref<256x32xf32, #tpu.memory_space<vmem>>, %arg11: memref<320x32xbf16, #tpu.memory_space<vmem>>, %arg12: memref<256x288xbf16, #tpu.memory_space<vmem>>) attributes {dimension_semantics = [#tpu.dimension_semantics<parallel>], iteration_bounds = array<i64: 2>, scalar_prefetch = 0 : i64, scratch_operands = 2 : i64, tpu.core_type = #tpu.core_type<tc>, window_params = [{transform_indices = @transform_0, window_bounds = array<i64: 256, 32>}, {pipeline_mode = #tpu.pipeline_mode<synchronous>, transform_indices = @transform_1, window_bounds = array<i64: 1, 32>}, {pipeline_mode = #tpu.pipeline_mode<synchronous>, transform_indices = @transform_2, window_bounds = array<i64: 1, 32>}, {pipeline_mode = #tpu.pipeline_mode<synchronous>, transform_indices = @transform_3, window_bounds = array<i64: 288, 32>}, {pipeline_mode = #tpu.pipeline_mode<synchronous>, transform_indices = @transform_4, window_bounds = array<i64: 1, 32>}, {pipeline_mode = #tpu.pipeline_mode<synchronous>, transform_indices = @transform_5, window_bounds = array<i64: 1, 32>}, {pipeline_mode = #tpu.pipeline_mode<synchronous>, transform_indices = @transform_6, window_bounds = array<i64: 1, 32>}, {pipeline_mode = #tpu.pipeline_mode<synchronous>, transform_indices = @transform_7, window_bounds = array<i64: 288, 32>}, {pipeline_mode = #tpu.pipeline_mode<synchronous>, transform_indices = @transform_8, window_bounds = array<i64: 1, 32>}, {transform_indices = @transform_9, window_bounds = array<i64: 256, 32>}]} {
    %0 = tpu.iota {dimensions = array<i32: 0>} : vector<256x1xi32>
    %c15_i32 = arith.constant 15 : i32
    %1 = vector.broadcast %c15_i32 : i32 to vector<256x1xi32>
    %2 = arith.andi %0, %1 : vector<256x1xi32>
    %c0_i32 = arith.constant 0 : i32
    %3 = vector.broadcast %c0_i32 : i32 to vector<256x1xi32>
    %4 = arith.cmpi sgt, %2, %3 : vector<256x1xi32>
    %5 = vector.shape_cast %4 : vector<256x1xi1> to vector<256x1xi1>
    %6 = vector.broadcast %5 : vector<256x1xi1> to vector<256x32xi1>
    %7 = arith.extui %6 : vector<256x32xi1> to vector<256x32xi32>
    %8 = arith.sitofp %7 : vector<256x32xi32> to vector<256x32xf32>
    %9 = arith.truncf %8 : vector<256x32xf32> to vector<256x32xbf16>
    %c15_i32_0 = arith.constant 15 : i32
    %10 = vector.broadcast %c15_i32_0 : i32 to vector<256x1xi32>
    %11 = arith.cmpi slt, %2, %10 : vector<256x1xi32>
    %12 = vector.shape_cast %11 : vector<256x1xi1> to vector<256x1xi1>
    %13 = vector.broadcast %12 : vector<256x1xi1> to vector<256x32xi1>
    %14 = arith.extui %13 : vector<256x32xi1> to vector<256x32xi32>
    %15 = arith.sitofp %14 : vector<256x32xi32> to vector<256x32xf32>
    %16 = arith.truncf %15 : vector<256x32xf32> to vector<256x32xbf16>
    %cst = arith.constant 0.000000e+00 : bf16
    %17 = vector.broadcast %cst : bf16 to vector<32x32xbf16>
    %c0 = arith.constant 0 : index
    %c0_1 = arith.constant 0 : index
    %18 = vector.load %arg11[%c0, %c0_1] : memref<320x32xbf16, #tpu.memory_space<vmem>>, vector<32x32xbf16>
    tpu.vector_store %arg11[%c0, %c0_1], %17 {strides = array<i32>} : memref<320x32xbf16, #tpu.memory_space<vmem>>, vector<32x32xbf16>,
    %c288 = arith.constant 288 : index
    %c0_2 = arith.constant 0 : index
    %19 = vector.load %arg11[%c288, %c0_2] : memref<320x32xbf16, #tpu.memory_space<vmem>>, vector<32x32xbf16>
    tpu.vector_store %arg11[%c288, %c0_2], %17 {strides = array<i32>} : memref<320x32xbf16, #tpu.memory_space<vmem>>, vector<32x32xbf16>,
    %c0_3 = arith.constant 0 : index
    %c0_4 = arith.constant 0 : index
    %20 = vector.load %arg2[%c0_3, %c0_4] : memref<1x32xf32, #tpu.memory_space<vmem>>, vector<1x32xf32>
    %c0_5 = arith.constant 0 : index
    %c0_6 = arith.constant 0 : index
    %21 = vector.load %arg3[%c0_5, %c0_6] : memref<1x32xf32, #tpu.memory_space<vmem>>, vector<1x32xf32>
    %c0_7 = arith.constant 0 : index
    %c0_8 = arith.constant 0 : index
    %22 = vector.load %arg1[%c0_7, %c0_8] : memref<256x32xf32, #tpu.memory_space<vmem>>, vector<256x32xf32>
    %23 = vector.broadcast %20 : vector<1x32xf32> to vector<256x32xf32>
    %24 = arith.mulf %22, %23 : vector<256x32xf32>
    %25 = vector.broadcast %21 : vector<1x32xf32> to vector<256x32xf32>
    %26 = arith.addf %24, %25 : vector<256x32xf32>
    %cst_9 = arith.constant 0.000000e+00 : f32
    %27 = vector.broadcast %cst_9 : f32 to vector<256x32xf32>
    %28 = arith.maximumf %26, %27 : vector<256x32xf32>
    %29 = arith.truncf %28 : vector<256x32xf32> to vector<256x32xbf16>
    %c32 = arith.constant 32 : index
    %c0_10 = arith.constant 0 : index
    %30 = vector.load %arg11[%c32, %c0_10] : memref<320x32xbf16, #tpu.memory_space<vmem>>, vector<256x32xbf16>
    tpu.vector_store %arg11[%c32, %c0_10], %29 {strides = array<i32>} : memref<320x32xbf16, #tpu.memory_space<vmem>>, vector<256x32xbf16>,
    %c15 = arith.constant 15 : index
    %c0_11 = arith.constant 0 : index
    %31 = vector.load %arg11[%c15, %c0_11] : memref<320x32xbf16, #tpu.memory_space<vmem>>, vector<256x32xbf16>
    %32 = arith.mulf %31, %9 : vector<256x32xbf16>
    %c0_12 = arith.constant 0 : index
    %c0_13 = arith.constant 0 : index
    %33 = vector.load %arg12[%c0_12, %c0_13] : memref<256x288xbf16, #tpu.memory_space<vmem>>, vector<256x32xbf16>
    tpu.vector_store %arg12[%c0_12, %c0_13], %32 {strides = array<i32>} : memref<256x288xbf16, #tpu.memory_space<vmem>>, vector<256x32xbf16>,
    %c16 = arith.constant 16 : index
    %c0_14 = arith.constant 0 : index
    %34 = vector.load %arg11[%c16, %c0_14] : memref<320x32xbf16, #tpu.memory_space<vmem>>, vector<256x32xbf16>
    %c0_15 = arith.constant 0 : index
    %c32_16 = arith.constant 32 : index
    %35 = vector.load %arg12[%c0_15, %c32_16] : memref<256x288xbf16, #tpu.memory_space<vmem>>, vector<256x32xbf16>
    tpu.vector_store %arg12[%c0_15, %c32_16], %34 {strides = array<i32>} : memref<256x288xbf16, #tpu.memory_space<vmem>>, vector<256x32xbf16>,
    %c17 = arith.constant 17 : index
    %c0_17 = arith.constant 0 : index
    %36 = vector.load %arg11[%c17, %c0_17] : memref<320x32xbf16, #tpu.memory_space<vmem>>, vector<256x32xbf16>
    %37 = arith.mulf %36, %16 : vector<256x32xbf16>
    %c0_18 = arith.constant 0 : index
    %c64 = arith.constant 64 : index
    %38 = vector.load %arg12[%c0_18, %c64] : memref<256x288xbf16, #tpu.memory_space<vmem>>, vector<256x32xbf16>
    tpu.vector_store %arg12[%c0_18, %c64], %37 {strides = array<i32>} : memref<256x288xbf16, #tpu.memory_space<vmem>>, vector<256x32xbf16>,
    %c31 = arith.constant 31 : index
    %c0_19 = arith.constant 0 : index
    %39 = vector.load %arg11[%c31, %c0_19] : memref<320x32xbf16, #tpu.memory_space<vmem>>, vector<256x32xbf16>
    %40 = arith.mulf %39, %9 : vector<256x32xbf16>
    %c0_20 = arith.constant 0 : index
    %c96 = arith.constant 96 : index
    %41 = vector.load %arg12[%c0_20, %c96] : memref<256x288xbf16, #tpu.memory_space<vmem>>, vector<256x32xbf16>
    tpu.vector_store %arg12[%c0_20, %c96], %40 {strides = array<i32>} : memref<256x288xbf16, #tpu.memory_space<vmem>>, vector<256x32xbf16>,
    %c32_21 = arith.constant 32 : index
    %c0_22 = arith.constant 0 : index
    %42 = vector.load %arg11[%c32_21, %c0_22] : memref<320x32xbf16, #tpu.memory_space<vmem>>, vector<256x32xbf16>
    %c0_23 = arith.constant 0 : index
    %c128 = arith.constant 128 : index
    %43 = vector.load %arg12[%c0_23, %c128] : memref<256x288xbf16, #tpu.memory_space<vmem>>, vector<256x32xbf16>
    tpu.vector_store %arg12[%c0_23, %c128], %42 {strides = array<i32>} : memref<256x288xbf16, #tpu.memory_space<vmem>>, vector<256x32xbf16>,
    %c33 = arith.constant 33 : index
    %c0_24 = arith.constant 0 : index
    %44 = vector.load %arg11[%c33, %c0_24] : memref<320x32xbf16, #tpu.memory_space<vmem>>, vector<256x32xbf16>
    %45 = arith.mulf %44, %16 : vector<256x32xbf16>
    %c0_25 = arith.constant 0 : index
    %c160 = arith.constant 160 : index
    %46 = vector.load %arg12[%c0_25, %c160] : memref<256x288xbf16, #tpu.memory_space<vmem>>, vector<256x32xbf16>
    tpu.vector_store %arg12[%c0_25, %c160], %45 {strides = array<i32>} : memref<256x288xbf16, #tpu.memory_space<vmem>>, vector<256x32xbf16>,
    %c47 = arith.constant 47 : index
    %c0_26 = arith.constant 0 : index
    %47 = vector.load %arg11[%c47, %c0_26] : memref<320x32xbf16, #tpu.memory_space<vmem>>, vector<256x32xbf16>
    %48 = arith.mulf %47, %9 : vector<256x32xbf16>
    %c0_27 = arith.constant 0 : index
    %c192 = arith.constant 192 : index
    %49 = vector.load %arg12[%c0_27, %c192] : memref<256x288xbf16, #tpu.memory_space<vmem>>, vector<256x32xbf16>
    tpu.vector_store %arg12[%c0_27, %c192], %48 {strides = array<i32>} : memref<256x288xbf16, #tpu.memory_space<vmem>>, vector<256x32xbf16>,
    %c48 = arith.constant 48 : index
    %c0_28 = arith.constant 0 : index
    %50 = vector.load %arg11[%c48, %c0_28] : memref<320x32xbf16, #tpu.memory_space<vmem>>, vector<256x32xbf16>
    %c0_29 = arith.constant 0 : index
    %c224 = arith.constant 224 : index
    %51 = vector.load %arg12[%c0_29, %c224] : memref<256x288xbf16, #tpu.memory_space<vmem>>, vector<256x32xbf16>
    tpu.vector_store %arg12[%c0_29, %c224], %50 {strides = array<i32>} : memref<256x288xbf16, #tpu.memory_space<vmem>>, vector<256x32xbf16>,
    %c49 = arith.constant 49 : index
    %c0_30 = arith.constant 0 : index
    %52 = vector.load %arg11[%c49, %c0_30] : memref<320x32xbf16, #tpu.memory_space<vmem>>, vector<256x32xbf16>
    %53 = arith.mulf %52, %16 : vector<256x32xbf16>
    %c0_31 = arith.constant 0 : index
    %c256 = arith.constant 256 : index
    %54 = vector.load %arg12[%c0_31, %c256] : memref<256x288xbf16, #tpu.memory_space<vmem>>, vector<256x32xbf16>
    tpu.vector_store %arg12[%c0_31, %c256], %53 {strides = array<i32>} : memref<256x288xbf16, #tpu.memory_space<vmem>>, vector<256x32xbf16>,
    %c0_32 = arith.constant 0 : index
    %c0_33 = arith.constant 0 : index
    %55 = vector.load %arg12[%c0_32, %c0_33] : memref<256x288xbf16, #tpu.memory_space<vmem>>, vector<256x288xbf16>
    %c0_34 = arith.constant 0 : index
    %c0_35 = arith.constant 0 : index
    %56 = vector.load %arg4[%c0_34, %c0_35] : memref<288x32xbf16, #tpu.memory_space<vmem>>, vector<288x32xbf16>
    %cst_36 = arith.constant dense<0.000000e+00> : vector<256x32xf32>
    %57 = tpu.matmul %55, %56, %cst_36 {dimension_numbers = #tpu.dot_dimension_numbers<[1], [0], [0], [1], [0, 0, 1, 1], [], []>} : vector<256x288xbf16>, vector<288x32xbf16>, vector<256x32xf32> -> vector<256x32xf32>
    %c0_37 = arith.constant 0 : index
    %c0_38 = arith.constant 0 : index
    %58 = vector.load %arg5[%c0_37, %c0_38] : memref<1x32xf32, #tpu.memory_space<vmem>>, vector<1x32xf32>
    %59 = vector.broadcast %58 : vector<1x32xf32> to vector<256x32xf32>
    %60 = arith.addf %57, %59 : vector<256x32xf32>
    %c0_39 = arith.constant 0 : index
    %c0_40 = arith.constant 0 : index
    %61 = vector.load %arg6[%c0_39, %c0_40] : memref<1x32xf32, #tpu.memory_space<vmem>>, vector<1x32xf32>
    %62 = vector.broadcast %61 : vector<1x32xf32> to vector<256x32xf32>
    %63 = arith.mulf %60, %62 : vector<256x32xf32>
    %c0_41 = arith.constant 0 : index
    %c0_42 = arith.constant 0 : index
    %64 = vector.load %arg7[%c0_41, %c0_42] : memref<1x32xf32, #tpu.memory_space<vmem>>, vector<1x32xf32>
    %65 = vector.broadcast %64 : vector<1x32xf32> to vector<256x32xf32>
    %66 = arith.addf %63, %65 : vector<256x32xf32>
    %cst_43 = arith.constant 0.000000e+00 : f32
    %67 = vector.broadcast %cst_43 : f32 to vector<256x32xf32>
    %68 = arith.maximumf %66, %67 : vector<256x32xf32>
    %69 = arith.truncf %68 : vector<256x32xf32> to vector<256x32xbf16>
    %c32_44 = arith.constant 32 : index
    %c0_45 = arith.constant 0 : index
    %70 = vector.load %arg11[%c32_44, %c0_45] : memref<320x32xbf16, #tpu.memory_space<vmem>>, vector<256x32xbf16>
    tpu.vector_store %arg11[%c32_44, %c0_45], %69 {strides = array<i32>} : memref<320x32xbf16, #tpu.memory_space<vmem>>, vector<256x32xbf16>,
    %c15_46 = arith.constant 15 : index
    %c0_47 = arith.constant 0 : index
    %71 = vector.load %arg11[%c15_46, %c0_47] : memref<320x32xbf16, #tpu.memory_space<vmem>>, vector<256x32xbf16>
    %72 = arith.mulf %71, %9 : vector<256x32xbf16>
    %c0_48 = arith.constant 0 : index
    %c0_49 = arith.constant 0 : index
    %73 = vector.load %arg12[%c0_48, %c0_49] : memref<256x288xbf16, #tpu.memory_space<vmem>>, vector<256x32xbf16>
    tpu.vector_store %arg12[%c0_48, %c0_49], %72 {strides = array<i32>} : memref<256x288xbf16, #tpu.memory_space<vmem>>, vector<256x32xbf16>,
    %c16_50 = arith.constant 16 : index
    %c0_51 = arith.constant 0 : index
    %74 = vector.load %arg11[%c16_50, %c0_51] : memref<320x32xbf16, #tpu.memory_space<vmem>>, vector<256x32xbf16>
    %c0_52 = arith.constant 0 : index
    %c32_53 = arith.constant 32 : index
    %75 = vector.load %arg12[%c0_52, %c32_53] : memref<256x288xbf16, #tpu.memory_space<vmem>>, vector<256x32xbf16>
    tpu.vector_store %arg12[%c0_52, %c32_53], %74 {strides = array<i32>} : memref<256x288xbf16, #tpu.memory_space<vmem>>, vector<256x32xbf16>,
    %c17_54 = arith.constant 17 : index
    %c0_55 = arith.constant 0 : index
    %76 = vector.load %arg11[%c17_54, %c0_55] : memref<320x32xbf16, #tpu.memory_space<vmem>>, vector<256x32xbf16>
    %77 = arith.mulf %76, %16 : vector<256x32xbf16>
    %c0_56 = arith.constant 0 : index
    %c64_57 = arith.constant 64 : index
    %78 = vector.load %arg12[%c0_56, %c64_57] : memref<256x288xbf16, #tpu.memory_space<vmem>>, vector<256x32xbf16>
    tpu.vector_store %arg12[%c0_56, %c64_57], %77 {strides = array<i32>} : memref<256x288xbf16, #tpu.memory_space<vmem>>, vector<256x32xbf16>,
    %c31_58 = arith.constant 31 : index
    %c0_59 = arith.constant 0 : index
    %79 = vector.load %arg11[%c31_58, %c0_59] : memref<320x32xbf16, #tpu.memory_space<vmem>>, vector<256x32xbf16>
    %80 = arith.mulf %79, %9 : vector<256x32xbf16>
    %c0_60 = arith.constant 0 : index
    %c96_61 = arith.constant 96 : index
    %81 = vector.load %arg12[%c0_60, %c96_61] : memref<256x288xbf16, #tpu.memory_space<vmem>>, vector<256x32xbf16>
    tpu.vector_store %arg12[%c0_60, %c96_61], %80 {strides = array<i32>} : memref<256x288xbf16, #tpu.memory_space<vmem>>, vector<256x32xbf16>,
    %c32_62 = arith.constant 32 : index
    %c0_63 = arith.constant 0 : index
    %82 = vector.load %arg11[%c32_62, %c0_63] : memref<320x32xbf16, #tpu.memory_space<vmem>>, vector<256x32xbf16>
    %c0_64 = arith.constant 0 : index
    %c128_65 = arith.constant 128 : index
    %83 = vector.load %arg12[%c0_64, %c128_65] : memref<256x288xbf16, #tpu.memory_space<vmem>>, vector<256x32xbf16>
    tpu.vector_store %arg12[%c0_64, %c128_65], %82 {strides = array<i32>} : memref<256x288xbf16, #tpu.memory_space<vmem>>, vector<256x32xbf16>,
    %c33_66 = arith.constant 33 : index
    %c0_67 = arith.constant 0 : index
    %84 = vector.load %arg11[%c33_66, %c0_67] : memref<320x32xbf16, #tpu.memory_space<vmem>>, vector<256x32xbf16>
    %85 = arith.mulf %84, %16 : vector<256x32xbf16>
    %c0_68 = arith.constant 0 : index
    %c160_69 = arith.constant 160 : index
    %86 = vector.load %arg12[%c0_68, %c160_69] : memref<256x288xbf16, #tpu.memory_space<vmem>>, vector<256x32xbf16>
    tpu.vector_store %arg12[%c0_68, %c160_69], %85 {strides = array<i32>} : memref<256x288xbf16, #tpu.memory_space<vmem>>, vector<256x32xbf16>,
    %c47_70 = arith.constant 47 : index
    %c0_71 = arith.constant 0 : index
    %87 = vector.load %arg11[%c47_70, %c0_71] : memref<320x32xbf16, #tpu.memory_space<vmem>>, vector<256x32xbf16>
    %88 = arith.mulf %87, %9 : vector<256x32xbf16>
    %c0_72 = arith.constant 0 : index
    %c192_73 = arith.constant 192 : index
    %89 = vector.load %arg12[%c0_72, %c192_73] : memref<256x288xbf16, #tpu.memory_space<vmem>>, vector<256x32xbf16>
    tpu.vector_store %arg12[%c0_72, %c192_73], %88 {strides = array<i32>} : memref<256x288xbf16, #tpu.memory_space<vmem>>, vector<256x32xbf16>,
    %c48_74 = arith.constant 48 : index
    %c0_75 = arith.constant 0 : index
    %90 = vector.load %arg11[%c48_74, %c0_75] : memref<320x32xbf16, #tpu.memory_space<vmem>>, vector<256x32xbf16>
    %c0_76 = arith.constant 0 : index
    %c224_77 = arith.constant 224 : index
    %91 = vector.load %arg12[%c0_76, %c224_77] : memref<256x288xbf16, #tpu.memory_space<vmem>>, vector<256x32xbf16>
    tpu.vector_store %arg12[%c0_76, %c224_77], %90 {strides = array<i32>} : memref<256x288xbf16, #tpu.memory_space<vmem>>, vector<256x32xbf16>,
    %c49_78 = arith.constant 49 : index
    %c0_79 = arith.constant 0 : index
    %92 = vector.load %arg11[%c49_78, %c0_79] : memref<320x32xbf16, #tpu.memory_space<vmem>>, vector<256x32xbf16>
    %93 = arith.mulf %92, %16 : vector<256x32xbf16>
    %c0_80 = arith.constant 0 : index
    %c256_81 = arith.constant 256 : index
    %94 = vector.load %arg12[%c0_80, %c256_81] : memref<256x288xbf16, #tpu.memory_space<vmem>>, vector<256x32xbf16>
    tpu.vector_store %arg12[%c0_80, %c256_81], %93 {strides = array<i32>} : memref<256x288xbf16, #tpu.memory_space<vmem>>, vector<256x32xbf16>,
    %c0_82 = arith.constant 0 : index
    %c0_83 = arith.constant 0 : index
    %95 = vector.load %arg12[%c0_82, %c0_83] : memref<256x288xbf16, #tpu.memory_space<vmem>>, vector<256x288xbf16>
    %c0_84 = arith.constant 0 : index
    %c0_85 = arith.constant 0 : index
    %96 = vector.load %arg8[%c0_84, %c0_85] : memref<288x32xbf16, #tpu.memory_space<vmem>>, vector<288x32xbf16>
    %cst_86 = arith.constant dense<0.000000e+00> : vector<256x32xf32>
    %97 = tpu.matmul %95, %96, %cst_86 {dimension_numbers = #tpu.dot_dimension_numbers<[1], [0], [0], [1], [0, 0, 1, 1], [], []>} : vector<256x288xbf16>, vector<288x32xbf16>, vector<256x32xf32> -> vector<256x32xf32>
    %c0_87 = arith.constant 0 : index
    %c0_88 = arith.constant 0 : index
    %98 = vector.load %arg9[%c0_87, %c0_88] : memref<1x32xf32, #tpu.memory_space<vmem>>, vector<1x32xf32>
    %99 = vector.broadcast %98 : vector<1x32xf32> to vector<256x32xf32>
    %100 = arith.addf %97, %99 : vector<256x32xf32>
    %c0_89 = arith.constant 0 : index
    %c0_90 = arith.constant 0 : index
    %101 = vector.load %arg1[%c0_89, %c0_90] : memref<256x32xf32, #tpu.memory_space<vmem>>, vector<256x32xf32>
    %102 = arith.addf %100, %101 : vector<256x32xf32>
    %c0_91 = arith.constant 0 : index
    %c0_92 = arith.constant 0 : index
    %103 = vector.load %arg10[%c0_91, %c0_92] : memref<256x32xf32, #tpu.memory_space<vmem>>, vector<256x32xf32>
    tpu.vector_store %arg10[%c0_91, %c0_92], %102 {strides = array<i32>} : memref<256x32xf32, #tpu.memory_space<vmem>>, vector<256x32xf32>,
    return
  }
  func.func @transform_0(%arg0: i32) -> (i32, i32) {
    %c0_i32 = arith.constant 0 : i32
    %c0_i32_0 = arith.constant 0 : i32
    return %arg0, %c0_i32 : i32, i32
  }
  func.func @transform_1(%arg0: i32) -> (i32, i32) {
    %c0_i32 = arith.constant 0 : i32
    %c0_i32_0 = arith.constant 0 : i32
    %c0_i32_1 = arith.constant 0 : i32
    return %c0_i32, %c0_i32_0 : i32, i32
  }
  func.func @transform_2(%arg0: i32) -> (i32, i32) {
    %c0_i32 = arith.constant 0 : i32
    %c0_i32_0 = arith.constant 0 : i32
    %c0_i32_1 = arith.constant 0 : i32
    return %c0_i32, %c0_i32_0 : i32, i32
  }
  func.func @transform_3(%arg0: i32) -> (i32, i32) {
    %c0_i32 = arith.constant 0 : i32
    %c0_i32_0 = arith.constant 0 : i32
    %c0_i32_1 = arith.constant 0 : i32
    return %c0_i32, %c0_i32_0 : i32, i32
  }
  func.func @transform_4(%arg0: i32) -> (i32, i32) {
    %c0_i32 = arith.constant 0 : i32
    %c0_i32_0 = arith.constant 0 : i32
    %c0_i32_1 = arith.constant 0 : i32
    return %c0_i32, %c0_i32_0 : i32, i32
  }
  func.func @transform_5(%arg0: i32) -> (i32, i32) {
    %c0_i32 = arith.constant 0 : i32
    %c0_i32_0 = arith.constant 0 : i32
    %c0_i32_1 = arith.constant 0 : i32
    return %c0_i32, %c0_i32_0 : i32, i32
  }
  func.func @transform_6(%arg0: i32) -> (i32, i32) {
    %c0_i32 = arith.constant 0 : i32
    %c0_i32_0 = arith.constant 0 : i32
    %c0_i32_1 = arith.constant 0 : i32
    return %c0_i32, %c0_i32_0 : i32, i32
  }
  func.func @transform_7(%arg0: i32) -> (i32, i32) {
    %c0_i32 = arith.constant 0 : i32
    %c0_i32_0 = arith.constant 0 : i32
    %c0_i32_1 = arith.constant 0 : i32
    return %c0_i32, %c0_i32_0 : i32, i32
  }
  func.func @transform_8(%arg0: i32) -> (i32, i32) {
    %c0_i32 = arith.constant 0 : i32
    %c0_i32_0 = arith.constant 0 : i32
    %c0_i32_1 = arith.constant 0 : i32
    return %c0_i32, %c0_i32_0 : i32, i32
  }
  func.func @transform_9(%arg0: i32) -> (i32, i32) {
    %c0_i32 = arith.constant 0 : i32
    %c0_i32_0 = arith.constant 0 : i32
    return %arg0, %c0_i32 : i32, i32
  }
}

</mosaic_0001>

<llo_original>
// kernel: wide_basic_forward.1
$region0: #{wide_basic_forward.1}
  #allocation0 [shape = 'u32[]', space=smem, size = 0x4, offset = 0x4, fixed_abs, tag = 'smem constant byte address 0x4 - core index']
  #allocation1 [shape = 'u32[144,128]{1,0:T(1,128)}', space=vmem, size = 0x12000, scoped, tag = 'internal scratch']
  #allocation2 [shape = 'bf16[320,32]{1,0:T(8,128)(2,1)}', space=vmem, size = 0x14000, scoped, tag = 'scratch operand']
  #allocation3 [shape = 'bf16[256,288]{1,0:T(8,128)(2,1)}', space=vmem, size = 0x30000, scoped, tag = 'scratch operand']
  %s0 = inlined_call_operand.vmem [shape: f32[512,32], index: 0, kind: input, shape index: {}]
  %s1 = inlined_call_operand.vmem [shape: f32[1,32], index: 1, kind: input, shape index: {}]
  %s2 = inlined_call_operand.vmem [shape: f32[1,32], index: 2, kind: input, shape index: {}]
  %s3 = inlined_call_operand.vmem [shape: bf16[288,32], index: 3, kind: input, shape index: {}]
  %s4 = inlined_call_operand.vmem [shape: f32[1,32], index: 4, kind: input, shape index: {}]
  %s5 = inlined_call_operand.vmem [shape: f32[1,32], index: 5, kind: input, shape index: {}]
  %s6 = inlined_call_operand.vmem [shape: f32[1,32], index: 6, kind: input, shape index: {}]
  %s7 = inlined_call_operand.vmem [shape: bf16[288,32], index: 7, kind: input, shape index: {}]
  %s8 = inlined_call_operand.vmem [shape: f32[1,32], index: 8, kind: input, shape index: {}]
  %s9 = inlined_call_operand.hbm [shape: f32[512,32], index: 9, kind: output, shape index: {}]
  %s10 = sld [smem:[#allocation0]]
  $region69: #{wide_basic_forward.1} parent=0
    _
  %s12 = ssub.s32 1, %s10
  %s13 = scalar_select 0, %s12, %s10
  $region1: #{wide_basic_forward.1} parent=0
    #allocation4 [shape = 'u8[262144]{0}', space=vmem, size = 0x40000, scoped, tag = 'output window, operand 0']
    #allocation5 [shape = 's32[2]{0}', space=sflag, size = 0x8, scoped, tag = 'scoped memory for wide_basic_forward.1']
    %14 = vsyncpa [#allocation5], 0
    %s15 = scalar_lea.sflag [#allocation5], 1
    %16 = vsyncpa %s15, 0
    loop: start=0, step=1, limit=4
    $region2: #{wide_basic_forward.1} parent=1 // loop_pre_header
      _
    $region3: #{wide_basic_forward.1} parent=1 // loop_header
      %s18 = sphi 0, %s22
      %p19 = scmp.ge.s32.totalorder %s18, 4
      %s28 = sphi 0, %s30
      %s31 = sphi 0, %s28
      %s32 = sphi 0, %s31
      %s48 = sphi 0, %s32
      %s52 = sphi 0, %s52
      %s54 = sphi 0, %s52
      %s55 = sphi 0, %s54
      %s69 = sphi 0, %s55
      %s73 = sphi 0, %s73
      %s75 = sphi 0, %s73
      %s76 = sphi 0, %s75
      %s90 = sphi 0, %s76
      %s94 = sphi 0, %s94
      %s96 = sphi 0, %s94
      %s97 = sphi 0, %s96
      %s111 = sphi 0, %s97
      %s115 = sphi 0, %s115
      %s117 = sphi 0, %s115
      %s118 = sphi 0, %s117
      %s132 = sphi 0, %s118
      %s136 = sphi 0, %s136
      %s138 = sphi 0, %s136
      %s139 = sphi 0, %s138
      %s153 = sphi 0, %s139
      %s157 = sphi 0, %s157
      %s159 = sphi 0, %s157
      %s160 = sphi 0, %s159
      %s174 = sphi 0, %s160
      %s178 = sphi 0, %s178
      %s180 = sphi 0, %s178
      %s181 = sphi 0, %s180
      %s195 = sphi 0, %s181
      %s199 = sphi 0, %s199
      %s201 = sphi 0, %s199
      %s202 = sphi 0, %s201
      %s216 = sphi 0, %s202
      %s222 = sphi 0, %s224
      %s225 = sphi 0, %s222
      %s226 = sphi 0, %s225
      %s242 = sphi 0, %s226
    $region4: #{wide_basic_forward.1} parent=1 // loop_header_branch
      %21 = sbr.rel (%p19) target = $region8
    $region5: #{wide_basic_forward.1} parent=1 // loop_body
      %s23 = ssub.s32 %s18, 1
      %s24 = ssub.s32 %s18, 2
      %s25 = sadd.s32 %s18, 1
      %s26 = ssub.s32 %s18, %s25
      %p27 = scmp.eq.s32.totalorder %s26, 0
      %s29 = sadd.s32 %s28, 1
      %s30 = scalar_select %p27, %s28, %s29
      %p33 = pneg %p27
      %p34 = scmp.eq.s32.totalorder %s18, 1
      %p35 = por %p33, %p34
      %p36 = scmp.ne.s32.totalorder %s28, %s31
      %p37 = scmp.eq.s32.totalorder %s18, 0
      %p38 = por %p36, %p37
      %p39 = scmp.ne.s32.totalorder %s28, %s31
      %p40 = scmp.eq.s32.totalorder %s23, 1
      %p41 = por %p39, %p40
      %p42 = scmp.ne.s32.totalorder %s31, %s32
      %p43 = scmp.eq.s32.totalorder %s23, 0
      %p44 = por %p42, %p43
      %p45 = scmp.ne.s32.totalorder %s31, %s32
      %p46 = scmp.eq.s32.totalorder %s24, 1
      %p47 = por %p45, %p46
      %p49 = scmp.ne.s32.totalorder %s32, %s48
      %p50 = scmp.eq.s32.totalorder %s24, 0
      %p51 = por %p49, %p50
      %s53 = sadd.s32 %s52, 1
      %p56 = scmp.eq.s32.totalorder %s18, 1
      %p57 = scmp.ne.s32.totalorder %s52, %s54
      %p58 = scmp.eq.s32.totalorder %s18, 0
      %p59 = por %p57, %p58
      %p60 = scmp.ne.s32.totalorder %s52, %s54
      %p61 = scmp.eq.s32.totalorder %s23, 1
      %p62 = por %p60, %p61
      %p63 = scmp.ne.s32.totalorder %s54, %s55
      %p64 = scmp.eq.s32.totalorder %s23, 0
      %p65 = por %p63, %p64
      %p66 = scmp.ne.s32.totalorder %s54, %s55
      %p67 = scmp.eq.s32.totalorder %s24, 1
      %p68 = por %p66, %p67
      %p70 = scmp.ne.s32.totalorder %s55, %s69
      %p71 = scmp.eq.s32.totalorder %s24, 0
      %p72 = por %p70, %p71
      %s74 = sadd.s32 %s73, 1
      %p77 = scmp.eq.s32.totalorder %s18, 1
      %p78 = scmp.ne.s32.totalorder %s73, %s75
      %p79 = scmp.eq.s32.totalorder %s18, 0
      %p80 = por %p78, %p79
      %p81 = scmp.ne.s32.totalorder %s73, %s75
      %p82 = scmp.eq.s32.totalorder %s23, 1
      %p83 = por %p81, %p82
      %p84 = scmp.ne.s32.totalorder %s75, %s76
      %p85 = scmp.eq.s32.totalorder %s23, 0
      %p86 = por %p84, %p85
      %p87 = scmp.ne.s32.totalorder %s75, %s76
      %p88 = scmp.eq.s32.totalorder %s24, 1
      %p89 = por %p87, %p88
      %p91 = scmp.ne.s32.totalorder %s76, %s90
      %p92 = scmp.eq.s32.totalorder %s24, 0
      %p93 = por %p91, %p92
      %s95 = sadd.s32 %s94, 1
      %p98 = scmp.eq.s32.totalorder %s18, 1
      %p99 = scmp.ne.s32.totalorder %s94, %s96
      %p100 = scmp.eq.s32.totalorder %s18, 0
      %p101 = por %p99, %p100
      %p102 = scmp.ne.s32.totalorder %s94, %s96
      %p103 = scmp.eq.s32.totalorder %s23, 1
      %p104 = por %p102, %p103
      %p105 = scmp.ne.s32.totalorder %s96, %s97
      %p106 = scmp.eq.s32.totalorder %s23, 0
      %p107 = por %p105, %p106
      %p108 = scmp.ne.s32.totalorder %s96, %s97
      %p109 = scmp.eq.s32.totalorder %s24, 1
      %p110 = por %p108, %p109
      %p112 = scmp.ne.s32.totalorder %s97, %s111
      %p113 = scmp.eq.s32.totalorder %s24, 0
      %p114 = por %p112, %p113
      %s116 = sadd.s32 %s115, 1
      %p119 = scmp.eq.s32.totalorder %s18, 1
      %p120 = scmp.ne.s32.totalorder %s115, %s117
      %p121 = scmp.eq.s32.totalorder %s18, 0
      %p122 = por %p120, %p121
      %p123 = scmp.ne.s32.totalorder %s115, %s117
      %p124 = scmp.eq.s32.totalorder %s23, 1
      %p125 = por %p123, %p124
      %p126 = scmp.ne.s32.totalorder %s117, %s118
      %p127 = scmp.eq.s32.totalorder %s23, 0
      %p128 = por %p126, %p127
      %p129 = scmp.ne.s32.totalorder %s117, %s118
      %p130 = scmp.eq.s32.totalorder %s24, 1
      %p131 = por %p129, %p130
      %p133 = scmp.ne.s32.totalorder %s118, %s132
      %p134 = scmp.eq.s32.totalorder %s24, 0
      %p135 = por %p133, %p134
      %s137 = sadd.s32 %s136, 1
      %p140 = scmp.eq.s32.totalorder %s18, 1
      %p141 = scmp.ne.s32.totalorder %s136, %s138
      %p142 = scmp.eq.s32.totalorder %s18, 0
      %p143 = por %p141, %p142
      %p144 = scmp.ne.s32.totalorder %s136, %s138
      %p145 = scmp.eq.s32.totalorder %s23, 1
      %p146 = por %p144, %p145
      %p147 = scmp.ne.s32.totalorder %s138, %s139
      %p148 = scmp.eq.s32.totalorder %s23, 0
      %p149 = por %p147, %p148
      %p150 = scmp.ne.s32.totalorder %s138, %s139
      %p151 = scmp.eq.s32.totalorder %s24, 1
      %p152 = por %p150, %p151
      %p154 = scmp.ne.s32.totalorder %s139, %s153
      %p155 = scmp.eq.s32.totalorder %s24, 0
      %p156 = por %p154, %p155
      %s158 = sadd.s32 %s157, 1
      %p161 = scmp.eq.s32.totalorder %s18, 1
      %p162 = scmp.ne.s32.totalorder %s157, %s159
      %p163 = scmp.eq.s32.totalorder %s18, 0
      %p164 = por %p162, %p163
      %p165 = scmp.ne.s32.totalorder %s157, %s159
      %p166 = scmp.eq.s32.totalorder %s23, 1
      %p167 = por %p165, %p166
      %p168 = scmp.ne.s32.totalorder %s159, %s160
      %p169 = scmp.eq.s32.totalorder %s23, 0
      %p170 = por %p168, %p169
      %p171 = scmp.ne.s32.totalorder %s159, %s160
      %p172 = scmp.eq.s32.totalorder %s24, 1
      %p173 = por %p171, %p172
      %p175 = scmp.ne.s32.totalorder %s160, %s174
      %p176 = scmp.eq.s32.totalorder %s24, 0
      %p177 = por %p175, %p176
      %s179 = sadd.s32 %s178, 1
      %p182 = scmp.eq.s32.totalorder %s18, 1
      %p183 = scmp.ne.s32.totalorder %s178, %s180
      %p184 = scmp.eq.s32.totalorder %s18, 0
      %p185 = por %p183, %p184
      %p186 = scmp.ne.s32.totalorder %s178, %s180
      %p187 = scmp.eq.s32.totalorder %s23, 1
      %p188 = por %p186, %p187
      %p189 = scmp.ne.s32.totalorder %s180, %s181
      %p190 = scmp.eq.s32.totalorder %s23, 0
      %p191 = por %p189, %p190
      %p192 = scmp.ne.s32.totalorder %s180, %s181
      %p193 = scmp.eq.s32.totalorder %s24, 1
      %p194 = por %p192, %p193
      %p196 = scmp.ne.s32.totalorder %s181, %s195
      %p197 = scmp.eq.s32.totalorder %s24, 0
      %p198 = por %p196, %p197
      %s200 = sadd.s32 %s199, 1
      %p203 = scmp.eq.s32.totalorder %s18, 1
      %p204 = scmp.ne.s32.totalorder %s199, %s201
      %p205 = scmp.eq.s32.totalorder %s18, 0
      %p206 = por %p204, %p205
      %p207 = scmp.ne.s32.totalorder %s199, %s201
      %p208 = scmp.eq.s32.totalorder %s23, 1
      %p209 = por %p207, %p208
      %p210 = scmp.ne.s32.totalorder %s201, %s202
      %p211 = scmp.eq.s32.totalorder %s23, 0
      %p212 = por %p210, %p211
      %p213 = scmp.ne.s32.totalorder %s201, %s202
      %p214 = scmp.eq.s32.totalorder %s24, 1
      %p215 = por %p213, %p214
      %p217 = scmp.ne.s32.totalorder %s202, %s216
      %p218 = scmp.eq.s32.totalorder %s24, 0
      %p219 = por %p217, %p218
      %s220 = ssub.s32 %s18, %s25
      %p221 = scmp.eq.s32.totalorder %s220, 0
      %s223 = sadd.s32 %s222, 1
      %s224 = scalar_select %p221, %s222, %s223
      %p227 = pneg %p221
      %p228 = scmp.eq.s32.totalorder %s18, 1
      %p229 = por %p227, %p228
      %p230 = scmp.ne.s32.totalorder %s222, %s225
      %p231 = scmp.eq.s32.totalorder %s18, 0
      %p232 = por %p230, %p231
      %p233 = scmp.ne.s32.totalorder %s222, %s225
      %p234 = scmp.eq.s32.totalorder %s23, 1
      %p235 = por %p233, %p234
      %p236 = scmp.ne.s32.totalorder %s225, %s226
      %p237 = scmp.eq.s32.totalorder %s23, 0
      %p238 = por %p236, %p237
      %p239 = scmp.ne.s32.totalorder %s225, %s226
      %p240 = scmp.eq.s32.totalorder %s24, 1
      %p241 = por %p239, %p240
      %p243 = scmp.ne.s32.totalorder %s226, %s242
      %p244 = scmp.eq.s32.totalorder %s24, 0
      %p245 = por %p243, %p244
      %p246 = scmp.le.s32.totalorder 1, %s18
      %p247 = scmp.lt.s32.totalorder %s18, 3
      %p248 = pnand %p246, %p247
      %p249 = pneg %p248
      // Predicated region
      $region9: #{wide_basic_forward.1} parent=5 // pred_check
        _
      $region10: #{wide_basic_forward.1} parent=5 // pred_check_branch
        %251 = sbr.rel (%p248) target = $region12
      $region11: #{wide_basic_forward.1} parent=5 // pred_region
        %s252 = ssub.s32 %s18, 1
        // Predicated region
        $region13: #{wide_basic_forward.1} parent=11 // pred_check
          %p253 = pneg %p65
        $region14: #{wide_basic_forward.1} parent=11 // pred_check_branch
          %255 = sbr.rel (%p253) target = $region16
        $region15: #{wide_basic_forward.1} parent=11 // pred_region
          _
        $region16: #{wide_basic_forward.1} parent=11 // pred_fallthru
          _
        // Predicated region
        $region17: #{wide_basic_forward.1} parent=11 // pred_check
          %p256 = pneg %p86
        $region18: #{wide_basic_forward.1} parent=11 // pred_check_branch
          %258 = sbr.rel (%p256) target = $region20
        $region19: #{wide_basic_forward.1} parent=11 // pred_region
          _
        $region20: #{wide_basic_forward.1} parent=11 // pred_fallthru
          _
        // Predicated region
        $region21: #{wide_basic_forward.1} parent=11 // pred_check
          %p259 = pneg %p107
        $region22: #{wide_basic_forward.1} parent=11 // pred_check_branch
          %261 = sbr.rel (%p259) target = $region24
        $region23: #{wide_basic_forward.1} parent=11 // pred_region
          _
        $region24: #{wide_basic_forward.1} parent=11 // pred_fallthru
          _
        // Predicated region
        $region25: #{wide_basic_forward.1} parent=11 // pred_check
          %p262 = pneg %p128
        $region26: #{wide_basic_forward.1} parent=11 // pred_check_branch
          %264 = sbr.rel (%p262) target = $region28
        $region27: #{wide_basic_forward.1} parent=11 // pred_region
          _
        $region28: #{wide_basic_forward.1} parent=11 // pred_fallthru
          _
        // Predicated region
        $region29: #{wide_basic_forward.1} parent=11 // pred_check
          %p265 = pneg %p149
        $region30: #{wide_basic_forward.1} parent=11 // pred_check_branch
          %267 = sbr.rel (%p265) target = $region32
        $region31: #{wide_basic_forward.1} parent=11 // pred_region
          _
        $region32: #{wide_basic_forward.1} parent=11 // pred_fallthru
          _
        // Predicated region
        $region33: #{wide_basic_forward.1} parent=11 // pred_check
          %p268 = pneg %p170
        $region34: #{wide_basic_forward.1} parent=11 // pred_check_branch
          %270 = sbr.rel (%p268) target = $region36
        $region35: #{wide_basic_forward.1} parent=11 // pred_region
          _
        $region36: #{wide_basic_forward.1} parent=11 // pred_fallthru
          _
        // Predicated region
        $region37: #{wide_basic_forward.1} parent=11 // pred_check
          %p271 = pneg %p191
        $region38: #{wide_basic_forward.1} parent=11 // pred_check_branch
          %273 = sbr.rel (%p271) target = $region40
        $region39: #{wide_basic_forward.1} parent=11 // pred_region
          _
        $region40: #{wide_basic_forward.1} parent=11 // pred_fallthru
          _
        // Predicated region
        $region41: #{wide_basic_forward.1} parent=11 // pred_check
          %p274 = pneg %p212
        $region42: #{wide_basic_forward.1} parent=11 // pred_check_branch
          %276 = sbr.rel (%p274) target = $region44
        $region43: #{wide_basic_forward.1} parent=11 // pred_region
          _
        $region44: #{wide_basic_forward.1} parent=11 // pred_fallthru
          _
      $region12: #{wide_basic_forward.1} parent=5 // pred_fallthru
        _
      %p277 = scmp.lt.s32.totalorder %s18, 2
      // Predicated region
      $region45: #{wide_basic_forward.1} parent=5 // pred_check
        %p278 = pneg %p277
      $region46: #{wide_basic_forward.1} parent=5 // pred_check_branch
        %280 = sbr.rel (%p278) target = $region48
      $region47: #{wide_basic_forward.1} parent=5 // pred_region
        // Predicated region
        $region49: #{wide_basic_forward.1} parent=47 // pred_check
          %p281 = pneg %p38
        $region50: #{wide_basic_forward.1} parent=47 // pred_check_branch
          %283 = sbr.rel (%p281) target = $region52
        $region51: #{wide_basic_forward.1} parent=47 // pred_region
          %s284 = smul.u32 32, %s18
          %p285 = scmp.lt.s32.totalorder %s284, 63
          %s286 = scalar_select %p285, %s284, 63
          %s287 = smul.addr %s286, 8
          %s288 = scalar_lea.vmem %s0, %s287
          %s289 = smul.u32 32, %s18
        $region52: #{wide_basic_forward.1} parent=47 // pred_fallthru
          _
      $region48: #{wide_basic_forward.1} parent=5 // pred_fallthru
        _
      %p290 = scmp.le.s32.totalorder 1, %s18
      %p291 = scmp.lt.s32.totalorder %s18, 3
      %p292 = pnand %p290, %p291
      %p293 = pneg %p292
      // Predicated region
      $region53: #{wide_basic_forward.1} parent=5 // pred_check
        _
      $region54: #{wide_basic_forward.1} parent=5 // pred_check_branch
        %295 = sbr.rel (%p292) target = $region56
      $region55: #{wide_basic_forward.1} parent=5 // pred_region
        %s296 = ssub.s32 %s18, 1
        %s297 = smul.u32 32, %s23
        %p298 = scmp.lt.s32.totalorder %s297, 63
        %s299 = scalar_select %p298, %s297, 63
        %s300 = smul.addr %s299, 8
        %s301 = scalar_lea.vmem %s0, %s300
        %p302 = pneg %p44
        %p303 = pneg %p41
        %p304 = pneg %p65
        %p305 = pneg %p62
        %p306 = pneg %p86
        %p307 = pneg %p83
        %p308 = pneg %p107
        %p309 = pneg %p104
        %p310 = pneg %p128
        %p311 = pneg %p125
        %p312 = pneg %p149
        %p313 = pneg %p146
        %p314 = pneg %p170
        %p315 = pneg %p167
        %p316 = pneg %p191
        %p317 = pneg %p188
        %p318 = pneg %p212
        %p319 = pneg %p209
        %p320 = pneg %p238
        %p321 = pneg %p235
        %s322 = sand.u32 %s225, 1
        %s323 = scalar_lea.sflag [#allocation5], %s322
        %s324 = sand.u32 %s225, 1
        %s325 = smul.addr %s324, 256
        %s326 = scalar_lea.vmem [#allocation4], %s325
        %s327 = smul.u32 32, %s23
        %p328 = scmp.lt.s32.totalorder %s327, 63
        %s329 = scalar_select %p328, %s327, 63
        %s330 = smul.addr %s329, 8
        %s331 = scalar_lea.vmem %s0, %s330
        %s332 = smul.u32 32, %s23
        %s333 = smul.u32 32, %s23
        %v335 = vlaneseq
        %v336 = vshrl.u32 %v335, 7
        %v337 = vadd.s32 %v336, 8
        %v338 = vadd.s32 %v336, 16
        %v339 = vadd.s32 %v336, 24
        %v340 = vadd.s32 %v336, 32
        %v341 = vadd.s32 %v336, 40
        %v342 = vadd.s32 %v336, 48
        %v343 = vadd.s32 %v336, 56
        %v344 = vadd.s32 %v336, 64
        %v345 = vadd.s32 %v336, 72
        %v346 = vadd.s32 %v336, 80
        %v347 = vadd.s32 %v336, 88
        %v348 = vadd.s32 %v336, 96
        %v349 = vadd.s32 %v336, 104
        %v350 = vadd.s32 %v336, 112
        %v351 = vadd.s32 %v336, 120
        %v352 = vadd.s32 %v336, 128
        %v353 = vadd.s32 %v336, 136
        %v354 = vadd.s32 %v336, 144
        %v355 = vadd.s32 %v336, 152
        %v356 = vadd.s32 %v336, 160
        %v357 = vadd.s32 %v336, 168
        %v358 = vadd.s32 %v336, 176
        %v359 = vadd.s32 %v336, 184
        %v360 = vadd.s32 %v336, 192
        %v361 = vadd.s32 %v336, 200
        %v362 = vadd.s32 %v336, 208
        %v363 = vadd.s32 %v336, 216
        %v364 = vadd.s32 %v336, 224
        %v365 = vadd.s32 %v336, 232
        %v366 = vadd.s32 %v336, 240
        %v367 = vadd.s32 %v336, 248
        %v368 = vand.u32 %v336, 15
        %v369 = vand.u32 %v337, 15
        %v370 = vand.u32 %v338, 15
        %v371 = vand.u32 %v339, 15
        %v372 = vand.u32 %v340, 15
        %v373 = vand.u32 %v341, 15
        %v374 = vand.u32 %v342, 15
        %v375 = vand.u32 %v343, 15
        %v376 = vand.u32 %v344, 15
        %v377 = vand.u32 %v345, 15
        %v378 = vand.u32 %v346, 15
        %v379 = vand.u32 %v347, 15
        %v380 = vand.u32 %v348, 15
        %v381 = vand.u32 %v349, 15
        %v382 = vand.u32 %v350, 15
        %v383 = vand.u32 %v351, 15
        %v384 = vand.u32 %v352, 15
        %v385 = vand.u32 %v353, 15
        %v386 = vand.u32 %v354, 15
        %v387 = vand.u32 %v355, 15
        %v388 = vand.u32 %v356, 15
        %v389 = vand.u32 %v357, 15
        %v390 = vand.u32 %v358, 15
        %v391 = vand.u32 %v359, 15
        %v392 = vand.u32 %v360, 15
        %v393 = vand.u32 %v361, 15
        %v394 = vand.u32 %v362, 15
        %v395 = vand.u32 %v363, 15
        %v396 = vand.u32 %v364, 15
        %v397 = vand.u32 %v365, 15
        %v398 = vand.u32 %v366, 15
        %v399 = vand.u32 %v367, 15
        %vm400 = vcmp.gt.s32.totalorder %v368, 0
        %vm401 = vcmp.gt.s32.totalorder %v369, 0
        %vm402 = vcmp.gt.s32.totalorder %v370, 0
        %vm403 = vcmp.gt.s32.totalorder %v371, 0
        %vm404 = vcmp.gt.s32.totalorder %v372, 0
        %vm405 = vcmp.gt.s32.totalorder %v373, 0
        %vm406 = vcmp.gt.s32.totalorder %v374, 0
        %vm407 = vcmp.gt.s32.totalorder %v375, 0
        %vm408 = vcmp.gt.s32.totalorder %v376, 0
        %vm409 = vcmp.gt.s32.totalorder %v377, 0
        %vm410 = vcmp.gt.s32.totalorder %v378, 0
        %vm411 = vcmp.gt.s32.totalorder %v379, 0
        %vm412 = vcmp.gt.s32.totalorder %v380, 0
        %vm413 = vcmp.gt.s32.totalorder %v381, 0
        %vm414 = vcmp.gt.s32.totalorder %v382, 0
        %vm415 = vcmp.gt.s32.totalorder %v383, 0
        %vm416 = vcmp.gt.s32.totalorder %v384, 0
        %vm417 = vcmp.gt.s32.totalorder %v385, 0
        %vm418 = vcmp.gt.s32.totalorder %v386, 0
        %vm419 = vcmp.gt.s32.totalorder %v387, 0
        %vm420 = vcmp.gt.s32.totalorder %v388, 0
        %vm421 = vcmp.gt.s32.totalorder %v389, 0
        %vm422 = vcmp.gt.s32.totalorder %v390, 0
        %vm423 = vcmp.gt.s32.totalorder %v391, 0
        %vm424 = vcmp.gt.s32.totalorder %v392, 0
        %vm425 = vcmp.gt.s32.totalorder %v393, 0
        %vm426 = vcmp.gt.s32.totalorder %v394, 0
        %vm427 = vcmp.gt.s32.totalorder %v395, 0
        %vm428 = vcmp.gt.s32.totalorder %v396, 0
        %vm429 = vcmp.gt.s32.totalorder %v397, 0
        %vm430 = vcmp.gt.s32.totalorder %v398, 0
        %vm431 = vcmp.gt.s32.totalorder %v399, 0
        %v432 = vsel %vm400, 1, 0
        %v433 = vsel %vm401, 1, 0
        %v434 = vsel %vm402, 1, 0
        %v435 = vsel %vm403, 1, 0
        %v436 = vsel %vm404, 1, 0
        %v437 = vsel %vm405, 1, 0
        %v438 = vsel %vm406, 1, 0
        %v439 = vsel %vm407, 1, 0
        %v440 = vsel %vm408, 1, 0
        %v441 = vsel %vm409, 1, 0
        %v442 = vsel %vm410, 1, 0
        %v443 = vsel %vm411, 1, 0
        %v444 = vsel %vm412, 1, 0
        %v445 = vsel %vm413, 1, 0
        %v446 = vsel %vm414, 1, 0
        %v447 = vsel %vm415, 1, 0
        %v448 = vsel %vm416, 1, 0
        %v449 = vsel %vm417, 1, 0
        %v450 = vsel %vm418, 1, 0
        %v451 = vsel %vm419, 1, 0
        %v452 = vsel %vm420, 1, 0
        %v453 = vsel %vm421, 1, 0
        %v454 = vsel %vm422, 1, 0
        %v455 = vsel %vm423, 1, 0
        %v456 = vsel %vm424, 1, 0
        %v457 = vsel %vm425, 1, 0
        %v458 = vsel %vm426, 1, 0
        %v459 = vsel %vm427, 1, 0
        %v460 = vsel %vm428, 1, 0
        %v461 = vsel %vm429, 1, 0
        %v462 = vsel %vm430, 1, 0
        %v463 = vsel %vm431, 1, 0
        %vm464 = vcmp.eq.s32.totalorder %v432, 1
        %vm465 = vcmp.eq.s32.totalorder %v433, 1
        %vm466 = vcmp.eq.s32.totalorder %v434, 1
        %vm467 = vcmp.eq.s32.totalorder %v435, 1
        %vm468 = vcmp.eq.s32.totalorder %v436, 1
        %vm469 = vcmp.eq.s32.totalorder %v437, 1
        %vm470 = vcmp.eq.s32.totalorder %v438, 1
        %vm471 = vcmp.eq.s32.totalorder %v439, 1
        %vm472 = vcmp.eq.s32.totalorder %v440, 1
        %vm473 = vcmp.eq.s32.totalorder %v441, 1
        %vm474 = vcmp.eq.s32.totalorder %v442, 1
        %vm475 = vcmp.eq.s32.totalorder %v443, 1
        %vm476 = vcmp.eq.s32.totalorder %v444, 1
        %vm477 = vcmp.eq.s32.totalorder %v445, 1
        %vm478 = vcmp.eq.s32.totalorder %v446, 1
        %vm479 = vcmp.eq.s32.totalorder %v447, 1
        %vm480 = vcmp.eq.s32.totalorder %v448, 1
        %vm481 = vcmp.eq.s32.totalorder %v449, 1
        %vm482 = vcmp.eq.s32.totalorder %v450, 1
        %vm483 = vcmp.eq.s32.totalorder %v451, 1
        %vm484 = vcmp.eq.s32.totalorder %v452, 1
        %vm485 = vcmp.eq.s32.totalorder %v453, 1
        %vm486 = vcmp.eq.s32.totalorder %v454, 1
        %vm487 = vcmp.eq.s32.totalorder %v455, 1
        %vm488 = vcmp.eq.s32.totalorder %v456, 1
        %vm489 = vcmp.eq.s32.totalorder %v457, 1
        %vm490 = vcmp.eq.s32.totalorder %v458, 1
        %vm491 = vcmp.eq.s32.totalorder %v459, 1
        %vm492 = vcmp.eq.s32.totalorder %v460, 1
        %vm493 = vcmp.eq.s32.totalorder %v461, 1
        %vm494 = vcmp.eq.s32.totalorder %v462, 1
        %vm495 = vcmp.eq.s32.totalorder %v463, 1
        %v496 = vsel %vm464, 1, 0
        %v497 = vsel %vm465, 1, 0
        %v498 = vsel %vm466, 1, 0
        %v499 = vsel %vm467, 1, 0
        %v500 = vsel %vm468, 1, 0
        %v501 = vsel %vm469, 1, 0
        %v502 = vsel %vm470, 1, 0
        %v503 = vsel %vm471, 1, 0
        %v504 = vsel %vm472, 1, 0
        %v505 = vsel %vm473, 1, 0
        %v506 = vsel %vm474, 1, 0
        %v507 = vsel %vm475, 1, 0
        %v508 = vsel %vm476, 1, 0
        %v509 = vsel %vm477, 1, 0
        %v510 = vsel %vm478, 1, 0
        %v511 = vsel %vm479, 1, 0
        %v512 = vsel %vm480, 1, 0
        %v513 = vsel %vm481, 1, 0
        %v514 = vsel %vm482, 1, 0
        %v515 = vsel %vm483, 1, 0
        %v516 = vsel %vm484, 1, 0
        %v517 = vsel %vm485, 1, 0
        %v518 = vsel %vm486, 1, 0
        %v519 = vsel %vm487, 1, 0
        %v520 = vsel %vm488, 1, 0
        %v521 = vsel %vm489, 1, 0
        %v522 = vsel %vm490, 1, 0
        %v523 = vsel %vm491, 1, 0
        %v524 = vsel %vm492, 1, 0
        %v525 = vsel %vm493, 1, 0
        %v526 = vsel %vm494, 1, 0
        %v527 = vsel %vm495, 1, 0
        %v528 = vcvt.s32.f32 %v496
        %v529 = vcvt.s32.f32 %v497
        %v530 = vcvt.s32.f32 %v498
        %v531 = vcvt.s32.f32 %v499
        %v532 = vcvt.s32.f32 %v500
        %v533 = vcvt.s32.f32 %v501
        %v534 = vcvt.s32.f32 %v502
        %v535 = vcvt.s32.f32 %v503
        %v536 = vcvt.s32.f32 %v504
        %v537 = vcvt.s32.f32 %v505
        %v538 = vcvt.s32.f32 %v506
        %v539 = vcvt.s32.f32 %v507
        %v540 = vcvt.s32.f32 %v508
        %v541 = vcvt.s32.f32 %v509
        %v542 = vcvt.s32.f32 %v510
        %v543 = vcvt.s32.f32 %v511
        %v544 = vcvt.s32.f32 %v512
        %v545 = vcvt.s32.f32 %v513
        %v546 = vcvt.s32.f32 %v514
        %v547 = vcvt.s32.f32 %v515
        %v548 = vcvt.s32.f32 %v516
        %v549 = vcvt.s32.f32 %v517
        %v550 = vcvt.s32.f32 %v518
        %v551 = vcvt.s32.f32 %v519
        %v552 = vcvt.s32.f32 %v520
        %v553 = vcvt.s32.f32 %v521
        %v554 = vcvt.s32.f32 %v522
        %v555 = vcvt.s32.f32 %v523
        %v556 = vcvt.s32.f32 %v524
        %v557 = vcvt.s32.f32 %v525
        %v558 = vcvt.s32.f32 %v526
        %v559 = vcvt.s32.f32 %v527
        %v560 = vpack.c.bf16 %v529, %v528
        %v561 = vpack.c.bf16 %v531, %v530
        %v562 = vpack.c.bf16 %v533, %v532
        %v563 = vpack.c.bf16 %v535, %v534
        %v564 = vpack.c.bf16 %v537, %v536
        %v565 = vpack.c.bf16 %v539, %v538
        %v566 = vpack.c.bf16 %v541, %v540
        %v567 = vpack.c.bf16 %v543, %v542
        %v568 = vpack.c.bf16 %v545, %v544
        %v569 = vpack.c.bf16 %v547, %v546
        %v570 = vpack.c.bf16 %v549, %v548
        %v571 = vpack.c.bf16 %v551, %v550
        %v572 = vpack.c.bf16 %v553, %v552
        %v573 = vpack.c.bf16 %v555, %v554
        %v574 = vpack.c.bf16 %v557, %v556
        %v575 = vpack.c.bf16 %v559, %v558
        %vm576 = vcmp.lt.s32.totalorder %v368, 15
        %vm577 = vcmp.lt.s32.totalorder %v369, 15
        %vm578 = vcmp.lt.s32.totalorder %v370, 15
        %vm579 = vcmp.lt.s32.totalorder %v371, 15
        %vm580 = vcmp.lt.s32.totalorder %v372, 15
        %vm581 = vcmp.lt.s32.totalorder %v373, 15
        %vm582 = vcmp.lt.s32.totalorder %v374, 15
        %vm583 = vcmp.lt.s32.totalorder %v375, 15
        %vm584 = vcmp.lt.s32.totalorder %v376, 15
        %vm585 = vcmp.lt.s32.totalorder %v377, 15
        %vm586 = vcmp.lt.s32.totalorder %v378, 15
        %vm587 = vcmp.lt.s32.totalorder %v379, 15
        %vm588 = vcmp.lt.s32.totalorder %v380, 15
        %vm589 = vcmp.lt.s32.totalorder %v381, 15
        %vm590 = vcmp.lt.s32.totalorder %v382, 15
        %vm591 = vcmp.lt.s32.totalorder %v383, 15
        %vm592 = vcmp.lt.s32.totalorder %v384, 15
        %vm593 = vcmp.lt.s32.totalorder %v385, 15
        %vm594 = vcmp.lt.s32.totalorder %v386, 15
        %vm595 = vcmp.lt.s32.totalorder %v387, 15
        %vm596 = vcmp.lt.s32.totalorder %v388, 15
        %vm597 = vcmp.lt.s32.totalorder %v389, 15
        %vm598 = vcmp.lt.s32.totalorder %v390, 15
        %vm599 = vcmp.lt.s32.totalorder %v391, 15
        %vm600 = vcmp.lt.s32.totalorder %v392, 15
        %vm601 = vcmp.lt.s32.totalorder %v393, 15
        %vm602 = vcmp.lt.s32.totalorder %v394, 15
        %vm603 = vcmp.lt.s32.totalorder %v395, 15
        %vm604 = vcmp.lt.s32.totalorder %v396, 15
        %vm605 = vcmp.lt.s32.totalorder %v397, 15
        %vm606 = vcmp.lt.s32.totalorder %v398, 15
        %vm607 = vcmp.lt.s32.totalorder %v399, 15
        %v608 = vsel %vm576, 1, 0
        %v609 = vsel %vm577, 1, 0
        %v610 = vsel %vm578, 1, 0
        %v611 = vsel %vm579, 1, 0
        %v612 = vsel %vm580, 1, 0
        %v613 = vsel %vm581, 1, 0
        %v614 = vsel %vm582, 1, 0
        %v615 = vsel %vm583, 1, 0
        %v616 = vsel %vm584, 1, 0
        %v617 = vsel %vm585, 1, 0
        %v618 = vsel %vm586, 1, 0
        %v619 = vsel %vm587, 1, 0
        %v620 = vsel %vm588, 1, 0
        %v621 = vsel %vm589, 1, 0
        %v622 = vsel %vm590, 1, 0
        %v623 = vsel %vm591, 1, 0
        %v624 = vsel %vm592, 1, 0
        %v625 = vsel %vm593, 1, 0
        %v626 = vsel %vm594, 1, 0
        %v627 = vsel %vm595, 1, 0
        %v628 = vsel %vm596, 1, 0
        %v629 = vsel %vm597, 1, 0
        %v630 = vsel %vm598, 1, 0
        %v631 = vsel %vm599, 1, 0
        %v632 = vsel %vm600, 1, 0
        %v633 = vsel %vm601, 1, 0
        %v634 = vsel %vm602, 1, 0
        %v635 = vsel %vm603, 1, 0
        %v636 = vsel %vm604, 1, 0
        %v637 = vsel %vm605, 1, 0
        %v638 = vsel %vm606, 1, 0
        %v639 = vsel %vm607, 1, 0
        %vm640 = vcmp.eq.s32.totalorder %v608, 1
        %vm641 = vcmp.eq.s32.totalorder %v609, 1
        %vm642 = vcmp.eq.s32.totalorder %v610, 1
        %vm643 = vcmp.eq.s32.totalorder %v611, 1
        %vm644 = vcmp.eq.s32.totalorder %v612, 1
        %vm645 = vcmp.eq.s32.totalorder %v613, 1
        %vm646 = vcmp.eq.s32.totalorder %v614, 1
        %vm647 = vcmp.eq.s32.totalorder %v615, 1
        %vm648 = vcmp.eq.s32.totalorder %v616, 1
        %vm649 = vcmp.eq.s32.totalorder %v617, 1
        %vm650 = vcmp.eq.s32.totalorder %v618, 1
        %vm651 = vcmp.eq.s32.totalorder %v619, 1
        %vm652 = vcmp.eq.s32.totalorder %v620, 1
        %vm653 = vcmp.eq.s32.totalorder %v621, 1
        %vm654 = vcmp.eq.s32.totalorder %v622, 1
        %vm655 = vcmp.eq.s32.totalorder %v623, 1
        %vm656 = vcmp.eq.s32.totalorder %v624, 1
        %vm657 = vcmp.eq.s32.totalorder %v625, 1
        %vm658 = vcmp.eq.s32.totalorder %v626, 1
        %vm659 = vcmp.eq.s32.totalorder %v627, 1
        %vm660 = vcmp.eq.s32.totalorder %v628, 1
        %vm661 = vcmp.eq.s32.totalorder %v629, 1
        %vm662 = vcmp.eq.s32.totalorder %v630, 1
        %vm663 = vcmp.eq.s32.totalorder %v631, 1
        %vm664 = vcmp.eq.s32.totalorder %v632, 1
        %vm665 = vcmp.eq.s32.totalorder %v633, 1
        %vm666 = vcmp.eq.s32.totalorder %v634, 1
        %vm667 = vcmp.eq.s32.totalorder %v635, 1
        %vm668 = vcmp.eq.s32.totalorder %v636, 1
        %vm669 = vcmp.eq.s32.totalorder %v637, 1
        %vm670 = vcmp.eq.s32.totalorder %v638, 1
        %vm671 = vcmp.eq.s32.totalorder %v639, 1
        %v672 = vsel %vm640, 1, 0
        %v673 = vsel %vm641, 1, 0
        %v674 = vsel %vm642, 1, 0
        %v675 = vsel %vm643, 1, 0
        %v676 = vsel %vm644, 1, 0
        %v677 = vsel %vm645, 1, 0
        %v678 = vsel %vm646, 1, 0
        %v679 = vsel %vm647, 1, 0
        %v680 = vsel %vm648, 1, 0
        %v681 = vsel %vm649, 1, 0
        %v682 = vsel %vm650, 1, 0
        %v683 = vsel %vm651, 1, 0
        %v684 = vsel %vm652, 1, 0
        %v685 = vsel %vm653, 1, 0
        %v686 = vsel %vm654, 1, 0
        %v687 = vsel %vm655, 1, 0
        %v688 = vsel %vm656, 1, 0
        %v689 = vsel %vm657, 1, 0
        %v690 = vsel %vm658, 1, 0
        %v691 = vsel %vm659, 1, 0
        %v692 = vsel %vm660, 1, 0
        %v693 = vsel %vm661, 1, 0
        %v694 = vsel %vm662, 1, 0
        %v695 = vsel %vm663, 1, 0
        %v696 = vsel %vm664, 1, 0
        %v697 = vsel %vm665, 1, 0
        %v698 = vsel %vm666, 1, 0
        %v699 = vsel %vm667, 1, 0
        %v700 = vsel %vm668, 1, 0
        %v701 = vsel %vm669, 1, 0
        %v702 = vsel %vm670, 1, 0
        %v703 = vsel %vm671, 1, 0
        %v704 = vcvt.s32.f32 %v672
        %v705 = vcvt.s32.f32 %v673
        %v706 = vcvt.s32.f32 %v674
        %v707 = vcvt.s32.f32 %v675
        %v708 = vcvt.s32.f32 %v676
        %v709 = vcvt.s32.f32 %v677
        %v710 = vcvt.s32.f32 %v678
        %v711 = vcvt.s32.f32 %v679
        %v712 = vcvt.s32.f32 %v680
        %v713 = vcvt.s32.f32 %v681
        %v714 = vcvt.s32.f32 %v682
        %v715 = vcvt.s32.f32 %v683
        %v716 = vcvt.s32.f32 %v684
        %v717 = vcvt.s32.f32 %v685
        %v718 = vcvt.s32.f32 %v686
        %v719 = vcvt.s32.f32 %v687
        %v720 = vcvt.s32.f32 %v688
        %v721 = vcvt.s32.f32 %v689
        %v722 = vcvt.s32.f32 %v690
        %v723 = vcvt.s32.f32 %v691
        %v724 = vcvt.s32.f32 %v692
        %v725 = vcvt.s32.f32 %v693
        %v726 = vcvt.s32.f32 %v694
        %v727 = vcvt.s32.f32 %v695
        %v728 = vcvt.s32.f32 %v696
        %v729 = vcvt.s32.f32 %v697
        %v730 = vcvt.s32.f32 %v698
        %v731 = vcvt.s32.f32 %v699
        %v732 = vcvt.s32.f32 %v700
        %v733 = vcvt.s32.f32 %v701
        %v734 = vcvt.s32.f32 %v702
        %v735 = vcvt.s32.f32 %v703
        %v736 = vpack.c.bf16 %v705, %v704
        %v737 = vpack.c.bf16 %v707, %v706
        %v738 = vpack.c.bf16 %v709, %v708
        %v739 = vpack.c.bf16 %v711, %v710
        %v740 = vpack.c.bf16 %v713, %v712
        %v741 = vpack.c.bf16 %v715, %v714
        %v742 = vpack.c.bf16 %v717, %v716
        %v743 = vpack.c.bf16 %v719, %v718
        %v744 = vpack.c.bf16 %v721, %v720
        %v745 = vpack.c.bf16 %v723, %v722
        %v746 = vpack.c.bf16 %v725, %v724
        %v747 = vpack.c.bf16 %v727, %v726
        %v748 = vpack.c.bf16 %v729, %v728
        %v749 = vpack.c.bf16 %v731, %v730
        %v750 = vpack.c.bf16 %v733, %v732
        %v751 = vpack.c.bf16 %v735, %v734
        %vm752 = vcmask 257024
        %753 = vst.msk [vmem:[#allocation2] sm:$0xf] %vm752, 0
        %754 = vst.msk [vmem:[#allocation2 + $0x4] sm:$0xf] %vm752, 0
        %755 = vst.msk [vmem:[#allocation2 + $0x8] sm:$0xf] %vm752, 0
        %756 = vst.msk [vmem:[#allocation2 + $0xc] sm:$0xf] %vm752, 0
        %757 = vst.msk [vmem:[#allocation2 + $0x90] sm:$0xf] %vm752, 0
        %758 = vst.msk [vmem:[#allocation2 + $0x94] sm:$0xf] %vm752, 0
        %759 = vst.msk [vmem:[#allocation2 + $0x98] sm:$0xf] %vm752, 0
        %760 = vst.msk [vmem:[#allocation2 + $0x9c] sm:$0xf] %vm752, 0
        %v761 = vld [vmem:[%s1] sm:$0x1]
        %v762 = vld [vmem:[%s2] sm:$0x1]
        %v763 = vld [vmem:[%s331] sm:$0xff]
        %v764 = vld [vmem:[%s331 + $0x8] sm:$0xff]
        %v765 = vld [vmem:[%s331 + $0x10] sm:$0xff]
        %v766 = vld [vmem:[%s331 + $0x18] sm:$0xff]
        %v767 = vld [vmem:[%s331 + $0x20] sm:$0xff]
        %v768 = vld [vmem:[%s331 + $0x28] sm:$0xff]
        %v769 = vld [vmem:[%s331 + $0x30] sm:$0xff]
        %v770 = vld [vmem:[%s331 + $0x38] sm:$0xff]
        %v771 = vld [vmem:[%s331 + $0x40] sm:$0xff]
        %v772 = vld [vmem:[%s331 + $0x48] sm:$0xff]
        %v773 = vld [vmem:[%s331 + $0x50] sm:$0xff]
        %v774 = vld [vmem:[%s331 + $0x58] sm:$0xff]
        %v775 = vld [vmem:[%s331 + $0x60] sm:$0xff]
        %v776 = vld [vmem:[%s331 + $0x68] sm:$0xff]
        %v777 = vld [vmem:[%s331 + $0x70] sm:$0xff]
        %v778 = vld [vmem:[%s331 + $0x78] sm:$0xff]
        %v779 = vld [vmem:[%s331 + $0x80] sm:$0xff]
        %v780 = vld [vmem:[%s331 + $0x88] sm:$0xff]
        %v781 = vld [vmem:[%s331 + $0x90] sm:$0xff]
        %v782 = vld [vmem:[%s331 + $0x98] sm:$0xff]
        %v783 = vld [vmem:[%s331 + $0xa0] sm:$0xff]
        %v784 = vld [vmem:[%s331 + $0xa8] sm:$0xff]
        %v785 = vld [vmem:[%s331 + $0xb0] sm:$0xff]
        %v786 = vld [vmem:[%s331 + $0xb8] sm:$0xff]
        %v787 = vld [vmem:[%s331 + $0xc0] sm:$0xff]
        %v788 = vld [vmem:[%s331 + $0xc8] sm:$0xff]
        %v789 = vld [vmem:[%s331 + $0xd0] sm:$0xff]
        %v790 = vld [vmem:[%s331 + $0xd8] sm:$0xff]
        %v791 = vld [vmem:[%s331 + $0xe0] sm:$0xff]
        %v792 = vld [vmem:[%s331 + $0xe8] sm:$0xff]
        %v793 = vld [vmem:[%s331 + $0xf0] sm:$0xff]
        %v794 = vld [vmem:[%s331 + $0xf8] sm:$0xff]
        %v796 = vlaneseq
        %v797 = vshrl.u32 %v796, 7
        %v798 = vsub.s32 0, %v797
        %v799 = vrot.slane %v761, %v798
        %v801 = vmul.f32 %v763, %v799
        %v802 = vmul.f32 %v764, %v799
        %v803 = vmul.f32 %v765, %v799
        %v804 = vmul.f32 %v766, %v799
        %v805 = vmul.f32 %v767, %v799
        %v806 = vmul.f32 %v768, %v799
        %v807 = vmul.f32 %v769, %v799
        %v808 = vmul.f32 %v770, %v799
        %v809 = vmul.f32 %v771, %v799
        %v810 = vmul.f32 %v772, %v799
        %v811 = vmul.f32 %v773, %v799
        %v812 = vmul.f32 %v774, %v799
        %v813 = vmul.f32 %v775, %v799
        %v814 = vmul.f32 %v776, %v799
        %v815 = vmul.f32 %v777, %v799
        %v816 = vmul.f32 %v778, %v799
        %v817 = vmul.f32 %v779, %v799
        %v818 = vmul.f32 %v780, %v799
        %v819 = vmul.f32 %v781, %v799
        %v820 = vmul.f32 %v782, %v799
        %v821 = vmul.f32 %v783, %v799
        %v822 = vmul.f32 %v784, %v799
        %v823 = vmul.f32 %v785, %v799
        %v824 = vmul.f32 %v786, %v799
        %v825 = vmul.f32 %v787, %v799
        %v826 = vmul.f32 %v788, %v799
        %v827 = vmul.f32 %v789, %v799
        %v828 = vmul.f32 %v790, %v799
        %v829 = vmul.f32 %v791, %v799
        %v830 = vmul.f32 %v792, %v799
        %v831 = vmul.f32 %v793, %v799
        %v832 = vmul.f32 %v794, %v799
        %v834 = vlaneseq
        %v835 = vshrl.u32 %v834, 7
        %v836 = vsub.s32 0, %v835
        %v837 = vrot.slane %v762, %v836
        %v839 = vadd.f32 %v801, %v837
        %v840 = vadd.f32 %v802, %v837
        %v841 = vadd.f32 %v803, %v837
        %v842 = vadd.f32 %v804, %v837
        %v843 = vadd.f32 %v805, %v837
        %v844 = vadd.f32 %v806, %v837
        %v845 = vadd.f32 %v807, %v837
        %v846 = vadd.f32 %v808, %v837
        %v847 = vadd.f32 %v809, %v837
        %v848 = vadd.f32 %v810, %v837
        %v849 = vadd.f32 %v811, %v837
        %v850 = vadd.f32 %v812, %v837
        %v851 = vadd.f32 %v813, %v837
        %v852 = vadd.f32 %v814, %v837
        %v853 = vadd.f32 %v815, %v837
        %v854 = vadd.f32 %v816, %v837
        %v855 = vadd.f32 %v817, %v837
        %v856 = vadd.f32 %v818, %v837
        %v857 = vadd.f32 %v819, %v837
        %v858 = vadd.f32 %v820, %v837
        %v859 = vadd.f32 %v821, %v837
        %v860 = vadd.f32 %v822, %v837
        %v861 = vadd.f32 %v823, %v837
        %v862 = vadd.f32 %v824, %v837
        %v863 = vadd.f32 %v825, %v837
        %v864 = vadd.f32 %v826, %v837
        %v865 = vadd.f32 %v827, %v837
        %v866 = vadd.f32 %v828, %v837
        %v867 = vadd.f32 %v829, %v837
        %v868 = vadd.f32 %v830, %v837
        %v869 = vadd.f32 %v831, %v837
        %v870 = vadd.f32 %v832, %v837
        %v871 = vmax.f32 %v839, 0.0
        %v872 = vmax.f32 %v840, 0.0
        %v873 = vmax.f32 %v841, 0.0
        %v874 = vmax.f32 %v842, 0.0
        %v875 = vmax.f32 %v843, 0.0
        %v876 = vmax.f32 %v844, 0.0
        %v877 = vmax.f32 %v845, 0.0
        %v878 = vmax.f32 %v846, 0.0
        %v879 = vmax.f32 %v847, 0.0
        %v880 = vmax.f32 %v848, 0.0
        %v881 = vmax.f32 %v849, 0.0
        %v882 = vmax.f32 %v850, 0.0
        %v883 = vmax.f32 %v851, 0.0
        %v884 = vmax.f32 %v852, 0.0
        %v885 = vmax.f32 %v853, 0.0
        %v886 = vmax.f32 %v854, 0.0
        %v887 = vmax.f32 %v855, 0.0
        %v888 = vmax.f32 %v856, 0.0
        %v889 = vmax.f32 %v857, 0.0
        %v890 = vmax.f32 %v858, 0.0
        %v891 = vmax.f32 %v859, 0.0
        %v892 = vmax.f32 %v860, 0.0
        %v893 = vmax.f32 %v861, 0.0
        %v894 = vmax.f32 %v862, 0.0
        %v895 = vmax.f32 %v863, 0.0
        %v896 = vmax.f32 %v864, 0.0
        %v897 = vmax.f32 %v865, 0.0
        %v898 = vmax.f32 %v866, 0.0
        %v899 = vmax.f32 %v867, 0.0
        %v900 = vmax.f32 %v868, 0.0
        %v901 = vmax.f32 %v869, 0.0
        %v902 = vmax.f32 %v870, 0.0
        %v903 = vpack.c.bf16 %v872, %v871
        %v904 = vpack.c.bf16 %v874, %v873
        %v905 = vpack.c.bf16 %v876, %v875
        %v906 = vpack.c.bf16 %v878, %v877
        %v907 = vpack.c.bf16 %v880, %v879
        %v908 = vpack.c.bf16 %v882, %v881
        %v909 = vpack.c.bf16 %v884, %v883
        %v910 = vpack.c.bf16 %v886, %v885
        %v911 = vpack.c.bf16 %v888, %v887
        %v912 = vpack.c.bf16 %v890, %v889
        %v913 = vpack.c.bf16 %v892, %v891
        %v914 = vpack.c.bf16 %v894, %v893
        %v915 = vpack.c.bf16 %v896, %v895
        %v916 = vpack.c.bf16 %v898, %v897
        %v917 = vpack.c.bf16 %v900, %v899
        %v918 = vpack.c.bf16 %v902, %v901
        %v935 = vunpack.c.l.b16 %v903
        %v936 = vunpack.c.h.b16 %v903
        %v937 = vunpack.c.l.b16 %v904
        %v938 = vunpack.c.h.b16 %v904
        %v939 = vunpack.c.l.b16 %v905
        %v940 = vunpack.c.h.b16 %v905
        %v941 = vunpack.c.l.b16 %v906
        %v942 = vunpack.c.h.b16 %v906
        %v943 = vunpack.c.l.b16 %v907
        %v944 = vunpack.c.h.b16 %v907
        %v945 = vunpack.c.l.b16 %v908
        %v946 = vunpack.c.h.b16 %v908
        %v947 = vunpack.c.l.b16 %v909
        %v948 = vunpack.c.h.b16 %v909
        %v949 = vunpack.c.l.b16 %v910
        %v950 = vunpack.c.h.b16 %v910
        %v951 = vunpack.c.l.b16 %v911
        %v952 = vunpack.c.h.b16 %v911
        %v953 = vunpack.c.l.b16 %v912
        %v954 = vunpack.c.h.b16 %v912
        %v955 = vunpack.c.l.b16 %v913
        %v956 = vunpack.c.h.b16 %v913
        %v957 = vunpack.c.l.b16 %v914
        %v958 = vunpack.c.h.b16 %v914
        %v959 = vunpack.c.l.b16 %v915
        %v960 = vunpack.c.h.b16 %v915
        %v961 = vunpack.c.l.b16 %v916
        %v962 = vunpack.c.h.b16 %v916
        %v963 = vunpack.c.l.b16 %v917
        %v964 = vunpack.c.h.b16 %v917
        %v965 = vunpack.c.l.b16 %v918
        %v966 = vunpack.c.h.b16 %v918
        %v967 = vpack.c.b16 %v935, %v935
        %v968 = vpack.c.b16 %v936, %v936
        %v969 = vpack.c.b16 %v937, %v937
        %v970 = vpack.c.b16 %v938, %v938
        %v971 = vpack.c.b16 %v939, %v939
        %v972 = vpack.c.b16 %v940, %v940
        %v973 = vpack.c.b16 %v941, %v941
        %v974 = vpack.c.b16 %v942, %v942
        %v975 = vpack.c.b16 %v943, %v943
        %v976 = vpack.c.b16 %v944, %v944
        %v977 = vpack.c.b16 %v945, %v945
        %v978 = vpack.c.b16 %v946, %v946
        %v979 = vpack.c.b16 %v947, %v947
        %v980 = vpack.c.b16 %v948, %v948
        %v981 = vpack.c.b16 %v949, %v949
        %v982 = vpack.c.b16 %v950, %v950
        %v983 = vpack.c.b16 %v951, %v951
        %v984 = vpack.c.b16 %v952, %v952
        %v985 = vpack.c.b16 %v953, %v953
        %v986 = vpack.c.b16 %v954, %v954
        %v987 = vpack.c.b16 %v955, %v955
        %v988 = vpack.c.b16 %v956, %v956
        %v989 = vpack.c.b16 %v957, %v957
        %v990 = vpack.c.b16 %v958, %v958
        %v991 = vpack.c.b16 %v959, %v959
        %v992 = vpack.c.b16 %v960, %v960
        %v993 = vpack.c.b16 %v961, %v961
        %v994 = vpack.c.b16 %v962, %v962
        %v995 = vpack.c.b16 %v963, %v963
        %v996 = vpack.c.b16 %v964, %v964
        %v997 = vpack.c.b16 %v965, %v965
        %v998 = vpack.c.b16 %v966, %v966
        %1031 = vst.msk [vmem:[#allocation2 + $0x10] sm:$0xf] %vm752, %v967
        %1032 = vst.msk [vmem:[#allocation2 + $0x14] sm:$0xf] %vm752, %v968
        %1033 = vst.msk [vmem:[#allocation2 + $0x18] sm:$0xf] %vm752, %v969
        %1034 = vst.msk [vmem:[#allocation2 + $0x1c] sm:$0xf] %vm752, %v970
        %1035 = vst.msk [vmem:[#allocation2 + $0x20] sm:$0xf] %vm752, %v971
        %1036 = vst.msk [vmem:[#allocation2 + $0x24] sm:$0xf] %vm752, %v972
        %1037 = vst.msk [vmem:[#allocation2 + $0x28] sm:$0xf] %vm752, %v973
        %1038 = vst.msk [vmem:[#allocation2 + $0x2c] sm:$0xf] %vm752, %v974
        %1039 = vst.msk [vmem:[#allocation2 + $0x30] sm:$0xf] %vm752, %v975
        %1040 = vst.msk [vmem:[#allocation2 + $0x34] sm:$0xf] %vm752, %v976
        %1041 = vst.msk [vmem:[#allocation2 + $0x38] sm:$0xf] %vm752, %v977
        %1042 = vst.msk [vmem:[#allocation2 + $0x3c] sm:$0xf] %vm752, %v978
        %1043 = vst.msk [vmem:[#allocation2 + $0x40] sm:$0xf] %vm752, %v979
        %1044 = vst.msk [vmem:[#allocation2 + $0x44] sm:$0xf] %vm752, %v980
        %1045 = vst.msk [vmem:[#allocation2 + $0x48] sm:$0xf] %vm752, %v981
        %1046 = vst.msk [vmem:[#allocation2 + $0x4c] sm:$0xf] %vm752, %v982
        %1047 = vst.msk [vmem:[#allocation2 + $0x50] sm:$0xf] %vm752, %v983
        %1048 = vst.msk [vmem:[#allocation2 + $0x54] sm:$0xf] %vm752, %v984
        %1049 = vst.msk [vmem:[#allocation2 + $0x58] sm:$0xf] %vm752, %v985
        %1050 = vst.msk [vmem:[#allocation2 + $0x5c] sm:$0xf] %vm752, %v986
        %1051 = vst.msk [vmem:[#allocation2 + $0x60] sm:$0xf] %vm752, %v987
        %1052 = vst.msk [vmem:[#allocation2 + $0x64] sm:$0xf] %vm752, %v988
        %1053 = vst.msk [vmem:[#allocation2 + $0x68] sm:$0xf] %vm752, %v989
        %1054 = vst.msk [vmem:[#allocation2 + $0x6c] sm:$0xf] %vm752, %v990
        %1055 = vst.msk [vmem:[#allocation2 + $0x70] sm:$0xf] %vm752, %v991
        %1056 = vst.msk [vmem:[#allocation2 + $0x74] sm:$0xf] %vm752, %v992
        %1057 = vst.msk [vmem:[#allocation2 + $0x78] sm:$0xf] %vm752, %v993
        %1058 = vst.msk [vmem:[#allocation2 + $0x7c] sm:$0xf] %vm752, %v994
        %1059 = vst.msk [vmem:[#allocation2 + $0x80] sm:$0xf] %vm752, %v995
        %1060 = vst.msk [vmem:[#allocation2 + $0x84] sm:$0xf] %vm752, %v996
        %1061 = vst.msk [vmem:[#allocation2 + $0x88] sm:$0xf] %vm752, %v997
        %1062 = vst.msk [vmem:[#allocation2 + $0x8c] sm:$0xf] %vm752, %v998
        %v1063 = vld [vmem:[#allocation2 + $0x4] sm:$0x8]
        %v1064 = vld [vmem:[#allocation2 + $0x8] sm:$0xf]
        %v1065 = vld [vmem:[#allocation2 + $0xc] sm:$0xf]
        %v1066 = vld [vmem:[#allocation2 + $0x10] sm:$0xf]
        %v1067 = vld [vmem:[#allocation2 + $0x14] sm:$0xf]
        %v1068 = vld [vmem:[#allocation2 + $0x18] sm:$0xf]
        %v1069 = vld [vmem:[#allocation2 + $0x1c] sm:$0xf]
        %v1070 = vld [vmem:[#allocation2 + $0x20] sm:$0xf]
        %v1071 = vld [vmem:[#allocation2 + $0x24] sm:$0xf]
        %v1072 = vld [vmem:[#allocation2 + $0x28] sm:$0xf]
        %v1073 = vld [vmem:[#allocation2 + $0x2c] sm:$0xf]
        %v1074 = vld [vmem:[#allocation2 + $0x30] sm:$0xf]
        %v1075 = vld [vmem:[#allocation2 + $0x34] sm:$0xf]
        %v1076 = vld [vmem:[#allocation2 + $0x38] sm:$0xf]
        %v1077 = vld [vmem:[#allocation2 + $0x3c] sm:$0xf]
        %v1078 = vld [vmem:[#allocation2 + $0x40] sm:$0xf]
        %v1079 = vld [vmem:[#allocation2 + $0x44] sm:$0xf]
        %v1080 = vld [vmem:[#allocation2 + $0x48] sm:$0xf]
        %v1081 = vld [vmem:[#allocation2 + $0x4c] sm:$0xf]
        %v1082 = vld [vmem:[#allocation2 + $0x50] sm:$0xf]
        %v1083 = vld [vmem:[#allocation2 + $0x54] sm:$0xf]
        %v1084 = vld [vmem:[#allocation2 + $0x58] sm:$0xf]
        %v1085 = vld [vmem:[#allocation2 + $0x5c] sm:$0xf]
        %v1086 = vld [vmem:[#allocation2 + $0x60] sm:$0xf]
        %v1087 = vld [vmem:[#allocation2 + $0x64] sm:$0xf]
        %v1088 = vld [vmem:[#allocation2 + $0x68] sm:$0xf]
        %v1089 = vld [vmem:[#allocation2 + $0x6c] sm:$0xf]
        %v1090 = vld [vmem:[#allocation2 + $0x70] sm:$0xf]
        %v1091 = vld [vmem:[#allocation2 + $0x74] sm:$0xf]
        %v1092 = vld [vmem:[#allocation2 + $0x78] sm:$0xf]
        %v1093 = vld [vmem:[#allocation2 + $0x7c] sm:$0xf]
        %v1094 = vld [vmem:[#allocation2 + $0x80] sm:$0xf]
        %v1095 = vld [vmem:[#allocation2 + $0x84] sm:$0xf]
        %v1113 = vunpack.c.l.s4 839922192
        %v1114 = vunpack.c.0.s8 %v1113
        %v1115 = vlaneseq
        %v1116 = vshrl.u32 %v1115, 7
        %v1117 = vsub.s32 %v1114, %v1116
        %v1118 = vrot.slane %v560, %v1117
        %v1120 = vunpack.c.l.s4 1985246804
        %v1121 = vunpack.c.0.s8 %v1120
        %v1122 = vlaneseq
        %v1123 = vshrl.u32 %v1122, 7
        %v1124 = vsub.s32 %v1121, %v1123
        %v1125 = vrot.slane %v560, %v1124
        %v1127 = vunpack.c.l.s4 839922192
        %v1128 = vunpack.c.0.s8 %v1127
        %v1129 = vlaneseq
        %v1130 = vshrl.u32 %v1129, 7
        %v1131 = vsub.s32 %v1128, %v1130
        %v1132 = vrot.slane %v561, %v1131
        %v1134 = vunpack.c.l.s4 1985246804
        %v1135 = vunpack.c.0.s8 %v1134
        %v1136 = vlaneseq
        %v1137 = vshrl.u32 %v1136, 7
        %v1138 = vsub.s32 %v1135, %v1137
        %v1139 = vrot.slane %v561, %v1138
        %v1141 = vunpack.c.l.s4 839922192
        %v1142 = vunpack.c.0.s8 %v1141
        %v1143 = vlaneseq
        %v1144 = vshrl.u32 %v1143, 7
        %v1145 = vsub.s32 %v1142, %v1144
        %v1146 = vrot.slane %v562, %v1145
        %v1148 = vunpack.c.l.s4 1985246804
        %v1149 = vunpack.c.0.s8 %v1148
        %v1150 = vlaneseq
        %v1151 = vshrl.u32 %v1150, 7
        %v1152 = vsub.s32 %v1149, %v1151
        %v1153 = vrot.slane %v562, %v1152
        %v1155 = vunpack.c.l.s4 839922192
        %v1156 = vunpack.c.0.s8 %v1155
        %v1157 = vlaneseq
        %v1158 = vshrl.u32 %v1157, 7
        %v1159 = vsub.s32 %v1156, %v1158
        %v1160 = vrot.slane %v563, %v1159
        %v1162 = vunpack.c.l.s4 1985246804
        %v1163 = vunpack.c.0.s8 %v1162
        %v1164 = vlaneseq
        %v1165 = vshrl.u32 %v1164, 7
        %v1166 = vsub.s32 %v1163, %v1165
        %v1167 = vrot.slane %v563, %v1166
        %v1169 = vunpack.c.l.s4 839922192
        %v1170 = vunpack.c.0.s8 %v1169
        %v1171 = vlaneseq
        %v1172 = vshrl.u32 %v1171, 7
        %v1173 = vsub.s32 %v1170, %v1172
        %v1174 = vrot.slane %v564, %v1173
        %v1176 = vunpack.c.l.s4 1985246804
        %v1177 = vunpack.c.0.s8 %v1176
        %v1178 = vlaneseq
        %v1179 = vshrl.u32 %v1178, 7
        %v1180 = vsub.s32 %v1177, %v1179
        %v1181 = vrot.slane %v564, %v1180
        %v1183 = vunpack.c.l.s4 839922192
        %v1184 = vunpack.c.0.s8 %v1183
        %v1185 = vlaneseq
        %v1186 = vshrl.u32 %v1185, 7
        %v1187 = vsub.s32 %v1184, %v1186
        %v1188 = vrot.slane %v565, %v1187
        %v1190 = vunpack.c.l.s4 1985246804
        %v1191 = vunpack.c.0.s8 %v1190
        %v1192 = vlaneseq
        %v1193 = vshrl.u32 %v1192, 7
        %v1194 = vsub.s32 %v1191, %v1193
        %v1195 = vrot.slane %v565, %v1194
        %v1197 = vunpack.c.l.s4 839922192
        %v1198 = vunpack.c.0.s8 %v1197
        %v1199 = vlaneseq
        %v1200 = vshrl.u32 %v1199, 7
        %v1201 = vsub.s32 %v1198, %v1200
        %v1202 = vrot.slane %v566, %v1201
        %v1204 = vunpack.c.l.s4 1985246804
        %v1205 = vunpack.c.0.s8 %v1204
        %v1206 = vlaneseq
        %v1207 = vshrl.u32 %v1206, 7
        %v1208 = vsub.s32 %v1205, %v1207
        %v1209 = vrot.slane %v566, %v1208
        %v1211 = vunpack.c.l.s4 839922192
        %v1212 = vunpack.c.0.s8 %v1211
        %v1213 = vlaneseq
        %v1214 = vshrl.u32 %v1213, 7
        %v1215 = vsub.s32 %v1212, %v1214
        %v1216 = vrot.slane %v567, %v1215
        %v1218 = vunpack.c.l.s4 1985246804
        %v1219 = vunpack.c.0.s8 %v1218
        %v1220 = vlaneseq
        %v1221 = vshrl.u32 %v1220, 7
        %v1222 = vsub.s32 %v1219, %v1221
        %v1223 = vrot.slane %v567, %v1222
        %v1225 = vunpack.c.l.s4 839922192
        %v1226 = vunpack.c.0.s8 %v1225
        %v1227 = vlaneseq
        %v1228 = vshrl.u32 %v1227, 7
        %v1229 = vsub.s32 %v1226, %v1228
        %v1230 = vrot.slane %v568, %v1229
        %v1232 = vunpack.c.l.s4 1985246804
        %v1233 = vunpack.c.0.s8 %v1232
        %v1234 = vlaneseq
        %v1235 = vshrl.u32 %v1234, 7
        %v1236 = vsub.s32 %v1233, %v1235
        %v1237 = vrot.slane %v568, %v1236
        %v1239 = vunpack.c.l.s4 839922192
        %v1240 = vunpack.c.0.s8 %v1239
        %v1241 = vlaneseq
        %v1242 = vshrl.u32 %v1241, 7
        %v1243 = vsub.s32 %v1240, %v1242
        %v1244 = vrot.slane %v569, %v1243
        %v1246 = vunpack.c.l.s4 1985246804
        %v1247 = vunpack.c.0.s8 %v1246
        %v1248 = vlaneseq
        %v1249 = vshrl.u32 %v1248, 7
        %v1250 = vsub.s32 %v1247, %v1249
        %v1251 = vrot.slane %v569, %v1250
        %v1253 = vunpack.c.l.s4 839922192
        %v1254 = vunpack.c.0.s8 %v1253
        %v1255 = vlaneseq
        %v1256 = vshrl.u32 %v1255, 7
        %v1257 = vsub.s32 %v1254, %v1256
        %v1258 = vrot.slane %v570, %v1257
        %v1260 = vunpack.c.l.s4 1985246804
        %v1261 = vunpack.c.0.s8 %v1260
        %v1262 = vlaneseq
        %v1263 = vshrl.u32 %v1262, 7
        %v1264 = vsub.s32 %v1261, %v1263
        %v1265 = vrot.slane %v570, %v1264
        %v1267 = vunpack.c.l.s4 839922192
        %v1268 = vunpack.c.0.s8 %v1267
        %v1269 = vlaneseq
        %v1270 = vshrl.u32 %v1269, 7
        %v1271 = vsub.s32 %v1268, %v1270
        %v1272 = vrot.slane %v571, %v1271
        %v1274 = vunpack.c.l.s4 1985246804
        %v1275 = vunpack.c.0.s8 %v1274
        %v1276 = vlaneseq
        %v1277 = vshrl.u32 %v1276, 7
        %v1278 = vsub.s32 %v1275, %v1277
        %v1279 = vrot.slane %v571, %v1278
        %v1281 = vunpack.c.l.s4 839922192
        %v1282 = vunpack.c.0.s8 %v1281
        %v1283 = vlaneseq
        %v1284 = vshrl.u32 %v1283, 7
        %v1285 = vsub.s32 %v1282, %v1284
        %v1286 = vrot.slane %v572, %v1285
        %v1288 = vunpack.c.l.s4 1985246804
        %v1289 = vunpack.c.0.s8 %v1288
        %v1290 = vlaneseq
        %v1291 = vshrl.u32 %v1290, 7
        %v1292 = vsub.s32 %v1289, %v1291
        %v1293 = vrot.slane %v572, %v1292
        %v1295 = vunpack.c.l.s4 839922192
        %v1296 = vunpack.c.0.s8 %v1295
        %v1297 = vlaneseq
        %v1298 = vshrl.u32 %v1297, 7
        %v1299 = vsub.s32 %v1296, %v1298
        %v1300 = vrot.slane %v573, %v1299
        %v1302 = vunpack.c.l.s4 1985246804
        %v1303 = vunpack.c.0.s8 %v1302
        %v1304 = vlaneseq
        %v1305 = vshrl.u32 %v1304, 7
        %v1306 = vsub.s32 %v1303, %v1305
        %v1307 = vrot.slane %v573, %v1306
        %v1309 = vunpack.c.l.s4 839922192
        %v1310 = vunpack.c.0.s8 %v1309
        %v1311 = vlaneseq
        %v1312 = vshrl.u32 %v1311, 7
        %v1313 = vsub.s32 %v1310, %v1312
        %v1314 = vrot.slane %v574, %v1313
        %v1316 = vunpack.c.l.s4 1985246804
        %v1317 = vunpack.c.0.s8 %v1316
        %v1318 = vlaneseq
        %v1319 = vshrl.u32 %v1318, 7
        %v1320 = vsub.s32 %v1317, %v1319
        %v1321 = vrot.slane %v574, %v1320
        %v1323 = vunpack.c.l.s4 839922192
        %v1324 = vunpack.c.0.s8 %v1323
        %v1325 = vlaneseq
        %v1326 = vshrl.u32 %v1325, 7
        %v1327 = vsub.s32 %v1324, %v1326
        %v1328 = vrot.slane %v575, %v1327
        %v1330 = vunpack.c.l.s4 1985246804
        %v1331 = vunpack.c.0.s8 %v1330
        %v1332 = vlaneseq
        %v1333 = vshrl.u32 %v1332, 7
        %v1334 = vsub.s32 %v1331, %v1333
        %v1335 = vrot.slane %v575, %v1334
        %vm1336 = vsmask.f32 3328
        %vm1337 = vsmask.f32 7440
        %vm1338 = vmor %vm1336, %vm1337
        %v1340 = vshll.u32 %v1118, 16
        %v1342 = vrot.slane %v1340, 5
        %v1343 = vshrl.u32 %v1118, 16
        %v1345 = vrot.slane %v1343, 4
        %v1346 = vor.u32 %v1345, %v1342
        %v1347 = vrot.slane %v1346, 4
        %v1349 = vshll.u32 %v1125, 16
        %v1351 = vrot.slane %v1349, 5
        %v1352 = vsel %vm1338, %v1347, %v1351
        %v1353 = vshrl.u32 %v1125, 16
        %v1355 = vrot.slane %v1353, 4
        %v1356 = vor.u32 %v1355, %v1351
        %v1357 = vrot.slane %v1356, 4
        %v1359 = vshll.u32 %v1132, 16
        %v1361 = vrot.slane %v1359, 5
        %v1362 = vsel %vm1338, %v1357, %v1361
        %v1363 = vshrl.u32 %v1132, 16
        %v1365 = vrot.slane %v1363, 4
        %v1366 = vor.u32 %v1365, %v1361
        %v1367 = vrot.slane %v1366, 4
        %v1369 = vshll.u32 %v1139, 16
        %v1371 = vrot.slane %v1369, 5
        %v1372 = vsel %vm1338, %v1367, %v1371
        %v1373 = vshrl.u32 %v1139, 16
        %v1375 = vrot.slane %v1373, 4
        %v1376 = vor.u32 %v1375, %v1371
        %v1377 = vrot.slane %v1376, 4
        %v1379 = vshll.u32 %v1146, 16
        %v1381 = vrot.slane %v1379, 5
        %v1382 = vsel %vm1338, %v1377, %v1381
        %v1383 = vshrl.u32 %v1146, 16
        %v1385 = vrot.slane %v1383, 4
        %v1386 = vor.u32 %v1385, %v1381
        %v1387 = vrot.slane %v1386, 4
        %v1389 = vshll.u32 %v1153, 16
        %v1391 = vrot.slane %v1389, 5
        %v1392 = vsel %vm1338, %v1387, %v1391
        %v1393 = vshrl.u32 %v1153, 16
        %v1395 = vrot.slane %v1393, 4
        %v1396 = vor.u32 %v1395, %v1391
        %v1397 = vrot.slane %v1396, 4
        %v1399 = vshll.u32 %v1160, 16
        %v1401 = vrot.slane %v1399, 5
        %v1402 = vsel %vm1338, %v1397, %v1401
        %v1403 = vshrl.u32 %v1160, 16
        %v1405 = vrot.slane %v1403, 4
        %v1406 = vor.u32 %v1405, %v1401
        %v1407 = vrot.slane %v1406, 4
        %v1409 = vshll.u32 %v1167, 16
        %v1411 = vrot.slane %v1409, 5
        %v1412 = vsel %vm1338, %v1407, %v1411
        %v1413 = vshrl.u32 %v1167, 16
        %v1415 = vrot.slane %v1413, 4
        %v1416 = vor.u32 %v1415, %v1411
        %v1417 = vrot.slane %v1416, 4
        %v1419 = vshll.u32 %v1174, 16
        %v1421 = vrot.slane %v1419, 5
        %v1422 = vsel %vm1338, %v1417, %v1421
        %v1423 = vshrl.u32 %v1174, 16
        %v1425 = vrot.slane %v1423, 4
        %v1426 = vor.u32 %v1425, %v1421
        %v1427 = vrot.slane %v1426, 4
        %v1429 = vshll.u32 %v1181, 16
        %v1431 = vrot.slane %v1429, 5
        %v1432 = vsel %vm1338, %v1427, %v1431
        %v1433 = vshrl.u32 %v1181, 16
        %v1435 = vrot.slane %v1433, 4
        %v1436 = vor.u32 %v1435, %v1431
        %v1437 = vrot.slane %v1436, 4
        %v1439 = vshll.u32 %v1188, 16
        %v1441 = vrot.slane %v1439, 5
        %v1442 = vsel %vm1338, %v1437, %v1441
        %v1443 = vshrl.u32 %v1188, 16
        %v1445 = vrot.slane %v1443, 4
        %v1446 = vor.u32 %v1445, %v1441
        %v1447 = vrot.slane %v1446, 4
        %v1449 = vshll.u32 %v1195, 16
        %v1451 = vrot.slane %v1449, 5
        %v1452 = vsel %vm1338, %v1447, %v1451
        %v1453 = vshrl.u32 %v1195, 16
        %v1455 = vrot.slane %v1453, 4
        %v1456 = vor.u32 %v1455, %v1451
        %v1457 = vrot.slane %v1456, 4
        %v1459 = vshll.u32 %v1202, 16
        %v1461 = vrot.slane %v1459, 5
        %v1462 = vsel %vm1338, %v1457, %v1461
        %v1463 = vshrl.u32 %v1202, 16
        %v1465 = vrot.slane %v1463, 4
        %v1466 = vor.u32 %v1465, %v1461
        %v1467 = vrot.slane %v1466, 4
        %v1469 = vshll.u32 %v1209, 16
        %v1471 = vrot.slane %v1469, 5
        %v1472 = vsel %vm1338, %v1467, %v1471
        %v1473 = vshrl.u32 %v1209, 16
        %v1475 = vrot.slane %v1473, 4
        %v1476 = vor.u32 %v1475, %v1471
        %v1477 = vrot.slane %v1476, 4
        %v1479 = vshll.u32 %v1216, 16
        %v1481 = vrot.slane %v1479, 5
        %v1482 = vsel %vm1338, %v1477, %v1481
        %v1483 = vshrl.u32 %v1216, 16
        %v1485 = vrot.slane %v1483, 4
        %v1486 = vor.u32 %v1485, %v1481
        %v1487 = vrot.slane %v1486, 4
        %v1489 = vshll.u32 %v1223, 16
        %v1491 = vrot.slane %v1489, 5
        %v1492 = vsel %vm1338, %v1487, %v1491
        %v1493 = vshrl.u32 %v1223, 16
        %v1495 = vrot.slane %v1493, 4
        %v1496 = vor.u32 %v1495, %v1491
        %v1497 = vrot.slane %v1496, 4
        %v1499 = vshll.u32 %v1230, 16
        %v1501 = vrot.slane %v1499, 5
        %v1502 = vsel %vm1338, %v1497, %v1501
        %v1503 = vshrl.u32 %v1230, 16
        %v1505 = vrot.slane %v1503, 4
        %v1506 = vor.u32 %v1505, %v1501
        %v1507 = vrot.slane %v1506, 4
        %v1509 = vshll.u32 %v1237, 16
        %v1511 = vrot.slane %v1509, 5
        %v1512 = vsel %vm1338, %v1507, %v1511
        %v1513 = vshrl.u32 %v1237, 16
        %v1515 = vrot.slane %v1513, 4
        %v1516 = vor.u32 %v1515, %v1511
        %v1517 = vrot.slane %v1516, 4
        %v1519 = vshll.u32 %v1244, 16
        %v1521 = vrot.slane %v1519, 5
        %v1522 = vsel %vm1338, %v1517, %v1521
        %v1523 = vshrl.u32 %v1244, 16
        %v1525 = vrot.slane %v1523, 4
        %v1526 = vor.u32 %v1525, %v1521
        %v1527 = vrot.slane %v1526, 4
        %v1529 = vshll.u32 %v1251, 16
        %v1531 = vrot.slane %v1529, 5
        %v1532 = vsel %vm1338, %v1527, %v1531
        %v1533 = vshrl.u32 %v1251, 16
        %v1535 = vrot.slane %v1533, 4
        %v1536 = vor.u32 %v1535, %v1531
        %v1537 = vrot.slane %v1536, 4
        %v1539 = vshll.u32 %v1258, 16
        %v1541 = vrot.slane %v1539, 5
        %v1542 = vsel %vm1338, %v1537, %v1541
        %v1543 = vshrl.u32 %v1258, 16
        %v1545 = vrot.slane %v1543, 4
        %v1546 = vor.u32 %v1545, %v1541
        %v1547 = vrot.slane %v1546, 4
        %v1549 = vshll.u32 %v1265, 16
        %v1551 = vrot.slane %v1549, 5
        %v1552 = vsel %vm1338, %v1547, %v1551
        %v1553 = vshrl.u32 %v1265, 16
        %v1555 = vrot.slane %v1553, 4
        %v1556 = vor.u32 %v1555, %v1551
        %v1557 = vrot.slane %v1556, 4
        %v1559 = vshll.u32 %v1272, 16
        %v1561 = vrot.slane %v1559, 5
        %v1562 = vsel %vm1338, %v1557, %v1561
        %v1563 = vshrl.u32 %v1272, 16
        %v1565 = vrot.slane %v1563, 4
        %v1566 = vor.u32 %v1565, %v1561
        %v1567 = vrot.slane %v1566, 4
        %v1569 = vshll.u32 %v1279, 16
        %v1571 = vrot.slane %v1569, 5
        %v1572 = vsel %vm1338, %v1567, %v1571
        %v1573 = vshrl.u32 %v1279, 16
        %v1575 = vrot.slane %v1573, 4
        %v1576 = vor.u32 %v1575, %v1571
        %v1577 = vrot.slane %v1576, 4
        %v1579 = vshll.u32 %v1286, 16
        %v1581 = vrot.slane %v1579, 5
        %v1582 = vsel %vm1338, %v1577, %v1581
        %v1583 = vshrl.u32 %v1286, 16
        %v1585 = vrot.slane %v1583, 4
        %v1586 = vor.u32 %v1585, %v1581
        %v1587 = vrot.slane %v1586, 4
        %v1589 = vshll.u32 %v1293, 16
        %v1591 = vrot.slane %v1589, 5
        %v1592 = vsel %vm1338, %v1587, %v1591
        %v1593 = vshrl.u32 %v1293, 16
        %v1595 = vrot.slane %v1593, 4
        %v1596 = vor.u32 %v1595, %v1591
        %v1597 = vrot.slane %v1596, 4
        %v1599 = vshll.u32 %v1300, 16
        %v1601 = vrot.slane %v1599, 5
        %v1602 = vsel %vm1338, %v1597, %v1601
        %v1603 = vshrl.u32 %v1300, 16
        %v1605 = vrot.slane %v1603, 4
        %v1606 = vor.u32 %v1605, %v1601
        %v1607 = vrot.slane %v1606, 4
        %v1609 = vshll.u32 %v1307, 16
        %v1611 = vrot.slane %v1609, 5
        %v1612 = vsel %vm1338, %v1607, %v1611
        %v1613 = vshrl.u32 %v1307, 16
        %v1615 = vrot.slane %v1613, 4
        %v1616 = vor.u32 %v1615, %v1611
        %v1617 = vrot.slane %v1616, 4
        %v1619 = vshll.u32 %v1314, 16
        %v1621 = vrot.slane %v1619, 5
        %v1622 = vsel %vm1338, %v1617, %v1621
        %v1623 = vshrl.u32 %v1314, 16
        %v1625 = vrot.slane %v1623, 4
        %v1626 = vor.u32 %v1625, %v1621
        %v1627 = vrot.slane %v1626, 4
        %v1629 = vshll.u32 %v1321, 16
        %v1631 = vrot.slane %v1629, 5
        %v1632 = vsel %vm1338, %v1627, %v1631
        %v1633 = vshrl.u32 %v1321, 16
        %v1635 = vrot.slane %v1633, 4
        %v1636 = vor.u32 %v1635, %v1631
        %v1637 = vrot.slane %v1636, 4
        %v1639 = vshll.u32 %v1328, 16
        %v1641 = vrot.slane %v1639, 5
        %v1642 = vsel %vm1338, %v1637, %v1641
        %v1643 = vshrl.u32 %v1328, 16
        %v1645 = vrot.slane %v1643, 4
        %v1646 = vor.u32 %v1645, %v1641
        %v1647 = vrot.slane %v1646, 4
        %v1649 = vshll.u32 %v1335, 16
        %v1651 = vrot.slane %v1649, 5
        %v1652 = vsel %vm1338, %v1647, %v1651
        %v1653 = vshrl.u32 %v1335, 16
        %v1655 = vrot.slane %v1653, 4
        %v1656 = vor.u32 %v1655, %v1651
        %v1657 = vrot.slane %v1656, 4
        %v1691 = vmul.bf16 %v1063, %v1342
        %v1692 = vmul.bf16 %v1064, %v1352
        %v1693 = vmul.bf16 %v1065, %v1362
        %v1694 = vmul.bf16 %v1066, %v1372
        %v1695 = vmul.bf16 %v1067, %v1382
        %v1696 = vmul.bf16 %v1068, %v1392
        %v1697 = vmul.bf16 %v1069, %v1402
        %v1698 = vmul.bf16 %v1070, %v1412
        %v1699 = vmul.bf16 %v1071, %v1422
        %v1700 = vmul.bf16 %v1072, %v1432
        %v1701 = vmul.bf16 %v1073, %v1442
        %v1702 = vmul.bf16 %v1074, %v1452
        %v1703 = vmul.bf16 %v1075, %v1462
        %v1704 = vmul.bf16 %v1076, %v1472
        %v1705 = vmul.bf16 %v1077, %v1482
        %v1706 = vmul.bf16 %v1078, %v1492
        %v1707 = vmul.bf16 %v1079, %v1502
        %v1708 = vmul.bf16 %v1080, %v1512
        %v1709 = vmul.bf16 %v1081, %v1522
        %v1710 = vmul.bf16 %v1082, %v1532
        %v1711 = vmul.bf16 %v1083, %v1542
        %v1712 = vmul.bf16 %v1084, %v1552
        %v1713 = vmul.bf16 %v1085, %v1562
        %v1714 = vmul.bf16 %v1086, %v1572
        %v1715 = vmul.bf16 %v1087, %v1582
        %v1716 = vmul.bf16 %v1088, %v1592
        %v1717 = vmul.bf16 %v1089, %v1602
        %v1718 = vmul.bf16 %v1090, %v1612
        %v1719 = vmul.bf16 %v1091, %v1622
        %v1720 = vmul.bf16 %v1092, %v1632
        %v1721 = vmul.bf16 %v1093, %v1642
        %v1722 = vmul.bf16 %v1094, %v1652
        %v1723 = vmul.bf16 %v1095, %v1657
        %vm1724 = vsmask.f32 256
        %vm1725 = vsmask.f32 4368
        %vm1726 = vmor %vm1724, %vm1725
        %v1728 = vshrl.u32 %v1691, 16
        %v1730 = vrot.slane %v1728, 7
        %v1731 = vrot.slane %v1730, 4
        %v1733 = vshrl.u32 %v1692, 16
        %v1735 = vrot.slane %v1733, 7
        %v1736 = vshll.u32 %v1692, 16
        %v1738 = vor.u32 %v1735, %v1736
        %v1739 = vsel %vm1726, %v1731, %v1738
        %v1740 = vrot.slane %v1735, 4
        %v1742 = vshrl.u32 %v1693, 16
        %v1744 = vrot.slane %v1742, 7
        %v1745 = vshll.u32 %v1693, 16
        %v1747 = vor.u32 %v1744, %v1745
        %v1748 = vsel %vm1726, %v1740, %v1747
        %v1749 = vrot.slane %v1744, 4
        %v1751 = vshrl.u32 %v1694, 16
        %v1753 = vrot.slane %v1751, 7
        %v1754 = vshll.u32 %v1694, 16
        %v1756 = vor.u32 %v1753, %v1754
        %v1757 = vsel %vm1726, %v1749, %v1756
        %v1758 = vrot.slane %v1753, 4
        %v1760 = vshrl.u32 %v1695, 16
        %v1762 = vrot.slane %v1760, 7
        %v1763 = vshll.u32 %v1695, 16
        %v1765 = vor.u32 %v1762, %v1763
        %v1766 = vsel %vm1726, %v1758, %v1765
        %v1767 = vrot.slane %v1762, 4
        %v1769 = vshrl.u32 %v1696, 16
        %v1771 = vrot.slane %v1769, 7
        %v1772 = vshll.u32 %v1696, 16
        %v1774 = vor.u32 %v1771, %v1772
        %v1775 = vsel %vm1726, %v1767, %v1774
        %v1776 = vrot.slane %v1771, 4
        %v1778 = vshrl.u32 %v1697, 16
        %v1780 = vrot.slane %v1778, 7
        %v1781 = vshll.u32 %v1697, 16
        %v1783 = vor.u32 %v1780, %v1781
        %v1784 = vsel %vm1726, %v1776, %v1783
        %v1785 = vrot.slane %v1780, 4
        %v1787 = vshrl.u32 %v1698, 16
        %v1789 = vrot.slane %v1787, 7
        %v1790 = vshll.u32 %v1698, 16
        %v1792 = vor.u32 %v1789, %v1790
        %v1793 = vsel %vm1726, %v1785, %v1792
        %v1794 = vrot.slane %v1789, 4
        %v1796 = vshrl.u32 %v1699, 16
        %v1798 = vrot.slane %v1796, 7
        %v1799 = vshll.u32 %v1699, 16
        %v1801 = vor.u32 %v1798, %v1799
        %v1802 = vsel %vm1726, %v1794, %v1801
        %v1803 = vrot.slane %v1798, 4
        %v1805 = vshrl.u32 %v1700, 16
        %v1807 = vrot.slane %v1805, 7
        %v1808 = vshll.u32 %v1700, 16
        %v1810 = vor.u32 %v1807, %v1808
        %v1811 = vsel %vm1726, %v1803, %v1810
        %v1812 = vrot.slane %v1807, 4
        %v1814 = vshrl.u32 %v1701, 16
        %v1816 = vrot.slane %v1814, 7
        %v1817 = vshll.u32 %v1701, 16
        %v1819 = vor.u32 %v1816, %v1817
        %v1820 = vsel %vm1726, %v1812, %v1819
        %v1821 = vrot.slane %v1816, 4
        %v1823 = vshrl.u32 %v1702, 16
        %v1825 = vrot.slane %v1823, 7
        %v1826 = vshll.u32 %v1702, 16
        %v1828 = vor.u32 %v1825, %v1826
        %v1829 = vsel %vm1726, %v1821, %v1828
        %v1830 = vrot.slane %v1825, 4
        %v1832 = vshrl.u32 %v1703, 16
        %v1834 = vrot.slane %v1832, 7
        %v1835 = vshll.u32 %v1703, 16
        %v1837 = vor.u32 %v1834, %v1835
        %v1838 = vsel %vm1726, %v1830, %v1837
        %v1839 = vrot.slane %v1834, 4
        %v1841 = vshrl.u32 %v1704, 16
        %v1843 = vrot.slane %v1841, 7
        %v1844 = vshll.u32 %v1704, 16
        %v1846 = vor.u32 %v1843, %v1844
        %v1847 = vsel %vm1726, %v1839, %v1846
        %v1848 = vrot.slane %v1843, 4
        %v1850 = vshrl.u32 %v1705, 16
        %v1852 = vrot.slane %v1850, 7
        %v1853 = vshll.u32 %v1705, 16
        %v1855 = vor.u32 %v1852, %v1853
        %v1856 = vsel %vm1726, %v1848, %v1855
        %v1857 = vrot.slane %v1852, 4
        %v1859 = vshrl.u32 %v1706, 16
        %v1861 = vrot.slane %v1859, 7
        %v1862 = vshll.u32 %v1706, 16
        %v1864 = vor.u32 %v1861, %v1862
        %v1865 = vsel %vm1726, %v1857, %v1864
        %v1866 = vrot.slane %v1861, 4
        %v1868 = vshrl.u32 %v1707, 16
        %v1870 = vrot.slane %v1868, 7
        %v1871 = vshll.u32 %v1707, 16
        %v1873 = vor.u32 %v1870, %v1871
        %v1874 = vsel %vm1726, %v1866, %v1873
        %v1875 = vrot.slane %v1870, 4
        %v1877 = vshrl.u32 %v1708, 16
        %v1879 = vrot.slane %v1877, 7
        %v1880 = vshll.u32 %v1708, 16
        %v1882 = vor.u32 %v1879, %v1880
        %v1883 = vsel %vm1726, %v1875, %v1882
        %v1884 = vrot.slane %v1879, 4
        %v1886 = vshrl.u32 %v1709, 16
        %v1888 = vrot.slane %v1886, 7
        %v1889 = vshll.u32 %v1709, 16
        %v1891 = vor.u32 %v1888, %v1889
        %v1892 = vsel %vm1726, %v1884, %v1891
        %v1893 = vrot.slane %v1888, 4
        %v1895 = vshrl.u32 %v1710, 16
        %v1897 = vrot.slane %v1895, 7
        %v1898 = vshll.u32 %v1710, 16
        %v1900 = vor.u32 %v1897, %v1898
        %v1901 = vsel %vm1726, %v1893, %v1900
        %v1902 = vrot.slane %v1897, 4
        %v1904 = vshrl.u32 %v1711, 16
        %v1906 = vrot.slane %v1904, 7
        %v1907 = vshll.u32 %v1711, 16
        %v1909 = vor.u32 %v1906, %v1907
        %v1910 = vsel %vm1726, %v1902, %v1909
        %v1911 = vrot.slane %v1906, 4
        %v1913 = vshrl.u32 %v1712, 16
        %v1915 = vrot.slane %v1913, 7
        %v1916 = vshll.u32 %v1712, 16
        %v1918 = vor.u32 %v1915, %v1916
        %v1919 = vsel %vm1726, %v1911, %v1918
        %v1920 = vrot.slane %v1915, 4
        %v1922 = vshrl.u32 %v1713, 16
        %v1924 = vrot.slane %v1922, 7
        %v1925 = vshll.u32 %v1713, 16
        %v1927 = vor.u32 %v1924, %v1925
        %v1928 = vsel %vm1726, %v1920, %v1927
        %v1929 = vrot.slane %v1924, 4
        %v1931 = vshrl.u32 %v1714, 16
        %v1933 = vrot.slane %v1931, 7
        %v1934 = vshll.u32 %v1714, 16
        %v1936 = vor.u32 %v1933, %v1934
        %v1937 = vsel %vm1726, %v1929, %v1936
        %v1938 = vrot.slane %v1933, 4
        %v1940 = vshrl.u32 %v1715, 16
        %v1942 = vrot.slane %v1940, 7
        %v1943 = vshll.u32 %v1715, 16
        %v1945 = vor.u32 %v1942, %v1943
        %v1946 = vsel %vm1726, %v1938, %v1945
        %v1947 = vrot.slane %v1942, 4
        %v1949 = vshrl.u32 %v1716, 16
        %v1951 = vrot.slane %v1949, 7
        %v1952 = vshll.u32 %v1716, 16
        %v1954 = vor.u32 %v1951, %v1952
        %v1955 = vsel %vm1726, %v1947, %v1954
        %v1956 = vrot.slane %v1951, 4
        %v1958 = vshrl.u32 %v1717, 16
        %v1960 = vrot.slane %v1958, 7
        %v1961 = vshll.u32 %v1717, 16
        %v1963 = vor.u32 %v1960, %v1961
        %v1964 = vsel %vm1726, %v1956, %v1963
        %v1965 = vrot.slane %v1960, 4
        %v1967 = vshrl.u32 %v1718, 16
        %v1969 = vrot.slane %v1967, 7
        %v1970 = vshll.u32 %v1718, 16
        %v1972 = vor.u32 %v1969, %v1970
        %v1973 = vsel %vm1726, %v1965, %v1972
        %v1974 = vrot.slane %v1969, 4
        %v1976 = vshrl.u32 %v1719, 16
        %v1978 = vrot.slane %v1976, 7
        %v1979 = vshll.u32 %v1719, 16
        %v1981 = vor.u32 %v1978, %v1979
        %v1982 = vsel %vm1726, %v1974, %v1981
        %v1983 = vrot.slane %v1978, 4
        %v1985 = vshrl.u32 %v1720, 16
        %v1987 = vrot.slane %v1985, 7
        %v1988 = vshll.u32 %v1720, 16
        %v1990 = vor.u32 %v1987, %v1988
        %v1991 = vsel %vm1726, %v1983, %v1990
        %v1992 = vrot.slane %v1987, 4
        %v1994 = vshrl.u32 %v1721, 16
        %v1996 = vrot.slane %v1994, 7
        %v1997 = vshll.u32 %v1721, 16
        %v1999 = vor.u32 %v1996, %v1997
        %v2000 = vsel %vm1726, %v1992, %v1999
        %v2001 = vrot.slane %v1996, 4
        %v2003 = vshrl.u32 %v1722, 16
        %v2005 = vrot.slane %v2003, 7
        %v2006 = vshll.u32 %v1722, 16
        %v2008 = vor.u32 %v2005, %v2006
        %v2009 = vsel %vm1726, %v2001, %v2008
        %v2010 = vrot.slane %v2005, 4
        %v2012 = vshrl.u32 %v1723, 16
        %v2014 = vrot.slane %v2012, 7
        %v2015 = vshll.u32 %v1723, 16
        %v2017 = vor.u32 %v2014, %v2015
        %v2018 = vsel %vm1726, %v2010, %v2017
        %2051 = vst.msk [vmem:[#allocation3] sm:$0xf] %vm752, %v1739
        %2052 = vst.msk [vmem:[#allocation3 + $0xc] sm:$0xf] %vm752, %v1748
        %2053 = vst.msk [vmem:[#allocation3 + $0x18] sm:$0xf] %vm752, %v1757
        %2054 = vst.msk [vmem:[#allocation3 + $0x24] sm:$0xf] %vm752, %v1766
        %2055 = vst.msk [vmem:[#allocation3 + $0x30] sm:$0xf] %vm752, %v1775
        %2056 = vst.msk [vmem:[#allocation3 + $0x3c] sm:$0xf] %vm752, %v1784
        %2057 = vst.msk [vmem:[#allocation3 + $0x48] sm:$0xf] %vm752, %v1793
        %2058 = vst.msk [vmem:[#allocation3 + $0x54] sm:$0xf] %vm752, %v1802
        %2059 = vst.msk [vmem:[#allocation3 + $0x60] sm:$0xf] %vm752, %v1811
        %2060 = vst.msk [vmem:[#allocation3 + $0x6c] sm:$0xf] %vm752, %v1820
        %2061 = vst.msk [vmem:[#allocation3 + $0x78] sm:$0xf] %vm752, %v1829
        %2062 = vst.msk [vmem:[#allocation3 + $0x84] sm:$0xf] %vm752, %v1838
        %2063 = vst.msk [vmem:[#allocation3 + $0x90] sm:$0xf] %vm752, %v1847
        %2064 = vst.msk [vmem:[#allocation3 + $0x9c] sm:$0xf] %vm752, %v1856
        %2065 = vst.msk [vmem:[#allocation3 + $0xa8] sm:$0xf] %vm752, %v1865
        %2066 = vst.msk [vmem:[#allocation3 + $0xb4] sm:$0xf] %vm752, %v1874
        %2067 = vst.msk [vmem:[#allocation3 + $0xc0] sm:$0xf] %vm752, %v1883
        %2068 = vst.msk [vmem:[#allocation3 + $0xcc] sm:$0xf] %vm752, %v1892
        %2069 = vst.msk [vmem:[#allocation3 + $0xd8] sm:$0xf] %vm752, %v1901
        %2070 = vst.msk [vmem:[#allocation3 + $0xe4] sm:$0xf] %vm752, %v1910
        %2071 = vst.msk [vmem:[#allocation3 + $0xf0] sm:$0xf] %vm752, %v1919
        %2072 = vst.msk [vmem:[#allocation3 + $0xfc] sm:$0xf] %vm752, %v1928
        %2073 = vst.msk [vmem:[#allocation3 + $0x108] sm:$0xf] %vm752, %v1937
        %2074 = vst.msk [vmem:[#allocation3 + $0x114] sm:$0xf] %vm752, %v1946
        %2075 = vst.msk [vmem:[#allocation3 + $0x120] sm:$0xf] %vm752, %v1955
        %2076 = vst.msk [vmem:[#allocation3 + $0x12c] sm:$0xf] %vm752, %v1964
        %2077 = vst.msk [vmem:[#allocation3 + $0x138] sm:$0xf] %vm752, %v1973
        %2078 = vst.msk [vmem:[#allocation3 + $0x144] sm:$0xf] %vm752, %v1982
        %2079 = vst.msk [vmem:[#allocation3 + $0x150] sm:$0xf] %vm752, %v1991
        %2080 = vst.msk [vmem:[#allocation3 + $0x15c] sm:$0xf] %vm752, %v2000
        %2081 = vst.msk [vmem:[#allocation3 + $0x168] sm:$0xf] %vm752, %v2009
        %2082 = vst.msk [vmem:[#allocation3 + $0x174] sm:$0xf] %vm752, %v2018
        %v2083 = vld [vmem:[#allocation2 + $0x8] sm:$0xf]
        %v2084 = vld [vmem:[#allocation2 + $0xc] sm:$0xf]
        %v2085 = vld [vmem:[#allocation2 + $0x10] sm:$0xf]
        %v2086 = vld [vmem:[#allocation2 + $0x14] sm:$0xf]
        %v2087 = vld [vmem:[#allocation2 + $0x18] sm:$0xf]
        %v2088 = vld [vmem:[#allocation2 + $0x1c] sm:$0xf]
        %v2089 = vld [vmem:[#allocation2 + $0x20] sm:$0xf]
        %v2090 = vld [vmem:[#allocation2 + $0x24] sm:$0xf]
        %v2091 = vld [vmem:[#allocation2 + $0x28] sm:$0xf]
        %v2092 = vld [vmem:[#allocation2 + $0x2c] sm:$0xf]
        %v2093 = vld [vmem:[#allocation2 + $0x30] sm:$0xf]
        %v2094 = vld [vmem:[#allocation2 + $0x34] sm:$0xf]
        %v2095 = vld [vmem:[#allocation2 + $0x38] sm:$0xf]
        %v2096 = vld [vmem:[#allocation2 + $0x3c] sm:$0xf]
        %v2097 = vld [vmem:[#allocation2 + $0x40] sm:$0xf]
        %v2098 = vld [vmem:[#allocation2 + $0x44] sm:$0xf]
        %v2099 = vld [vmem:[#allocation2 + $0x48] sm:$0xf]
        %v2100 = vld [vmem:[#allocation2 + $0x4c] sm:$0xf]
        %v2101 = vld [vmem:[#allocation2 + $0x50] sm:$0xf]
        %v2102 = vld [vmem:[#allocation2 + $0x54] sm:$0xf]
        %v2103 = vld [vmem:[#allocation2 + $0x58] sm:$0xf]
        %v2104 = vld [vmem:[#allocation2 + $0x5c] sm:$0xf]
        %v2105 = vld [vmem:[#allocation2 + $0x60] sm:$0xf]
        %v2106 = vld [vmem:[#allocation2 + $0x64] sm:$0xf]
        %v2107 = vld [vmem:[#allocation2 + $0x68] sm:$0xf]
        %v2108 = vld [vmem:[#allocation2 + $0x6c] sm:$0xf]
        %v2109 = vld [vmem:[#allocation2 + $0x70] sm:$0xf]
        %v2110 = vld [vmem:[#allocation2 + $0x74] sm:$0xf]
        %v2111 = vld [vmem:[#allocation2 + $0x78] sm:$0xf]
        %v2112 = vld [vmem:[#allocation2 + $0x7c] sm:$0xf]
        %v2113 = vld [vmem:[#allocation2 + $0x80] sm:$0xf]
        %v2114 = vld [vmem:[#allocation2 + $0x84] sm:$0xf]
        %2147 = vrot.lane.b32.xlu0 %v2083, 32
        %v2148 = vpop.permute.xlu0 %2147
        %2149 = vrot.lane.b32.xlu0 %v2084, 32
        %v2150 = vpop.permute.xlu0 %2149
        %2151 = vrot.lane.b32.xlu0 %v2085, 32
        %v2152 = vpop.permute.xlu0 %2151
        %2153 = vrot.lane.b32.xlu0 %v2086, 32
        %v2154 = vpop.permute.xlu0 %2153
        %2155 = vrot.lane.b32.xlu0 %v2087, 32
        %v2156 = vpop.permute.xlu0 %2155
        %2157 = vrot.lane.b32.xlu0 %v2088, 32
        %v2158 = vpop.permute.xlu0 %2157
        %2159 = vrot.lane.b32.xlu0 %v2089, 32
        %v2160 = vpop.permute.xlu0 %2159
        %2161 = vrot.lane.b32.xlu0 %v2090, 32
        %v2162 = vpop.permute.xlu0 %2161
        %2163 = vrot.lane.b32.xlu0 %v2091, 32
        %v2164 = vpop.permute.xlu0 %2163
        %2165 = vrot.lane.b32.xlu0 %v2092, 32
        %v2166 = vpop.permute.xlu0 %2165
        %2167 = vrot.lane.b32.xlu0 %v2093, 32
        %v2168 = vpop.permute.xlu0 %2167
        %2169 = vrot.lane.b32.xlu0 %v2094, 32
        %v2170 = vpop.permute.xlu0 %2169
        %2171 = vrot.lane.b32.xlu0 %v2095, 32
        %v2172 = vpop.permute.xlu0 %2171
        %2173 = vrot.lane.b32.xlu0 %v2096, 32
        %v2174 = vpop.permute.xlu0 %2173
        %2175 = vrot.lane.b32.xlu0 %v2097, 32
        %v2176 = vpop.permute.xlu0 %2175
        %2177 = vrot.lane.b32.xlu0 %v2098, 32
        %v2178 = vpop.permute.xlu0 %2177
        %2179 = vrot.lane.b32.xlu0 %v2099, 32
        %v2180 = vpop.permute.xlu0 %2179
        %2181 = vrot.lane.b32.xlu0 %v2100, 32
        %v2182 = vpop.permute.xlu0 %2181
        %2183 = vrot.lane.b32.xlu0 %v2101, 32
        %v2184 = vpop.permute.xlu0 %2183
        %2185 = vrot.lane.b32.xlu0 %v2102, 32
        %v2186 = vpop.permute.xlu0 %2185
        %2187 = vrot.lane.b32.xlu0 %v2103, 32
        %v2188 = vpop.permute.xlu0 %2187
        %2189 = vrot.lane.b32.xlu0 %v2104, 32
        %v2190 = vpop.permute.xlu0 %2189
        %2191 = vrot.lane.b32.xlu0 %v2105, 32
        %v2192 = vpop.permute.xlu0 %2191
        %2193 = vrot.lane.b32.xlu0 %v2106, 32
        %v2194 = vpop.permute.xlu0 %2193
        %2195 = vrot.lane.b32.xlu0 %v2107, 32
        %v2196 = vpop.permute.xlu0 %2195
        %2197 = vrot.lane.b32.xlu0 %v2108, 32
        %v2198 = vpop.permute.xlu0 %2197
        %2199 = vrot.lane.b32.xlu0 %v2109, 32
        %v2200 = vpop.permute.xlu0 %2199
        %2201 = vrot.lane.b32.xlu0 %v2110, 32
        %v2202 = vpop.permute.xlu0 %2201
        %2203 = vrot.lane.b32.xlu0 %v2111, 32
        %v2204 = vpop.permute.xlu0 %2203
        %2205 = vrot.lane.b32.xlu0 %v2112, 32
        %v2206 = vpop.permute.xlu0 %2205
        %2207 = vrot.lane.b32.xlu0 %v2113, 32
        %v2208 = vpop.permute.xlu0 %2207
        %2209 = vrot.lane.b32.xlu0 %v2114, 32
        %v2210 = vpop.permute.xlu0 %2209
        %vm2243 = vcmask 519424
        %2244 = vst.msk [vmem:[#allocation3] sm:$0xf] %vm2243, %v2148
        %2245 = vst.msk [vmem:[#allocation3 + $0xc] sm:$0xf] %vm2243, %v2150
        %2246 = vst.msk [vmem:[#allocation3 + $0x18] sm:$0xf] %vm2243, %v2152
        %2247 = vst.msk [vmem:[#allocation3 + $0x24] sm:$0xf] %vm2243, %v2154
        %2248 = vst.msk [vmem:[#allocation3 + $0x30] sm:$0xf] %vm2243, %v2156
        %2249 = vst.msk [vmem:[#allocation3 + $0x3c] sm:$0xf] %vm2243, %v2158
        %2250 = vst.msk [vmem:[#allocation3 + $0x48] sm:$0xf] %vm2243, %v2160
        %2251 = vst.msk [vmem:[#allocation3 + $0x54] sm:$0xf] %vm2243, %v2162
        %2252 = vst.msk [vmem:[#allocation3 + $0x60] sm:$0xf] %vm2243, %v2164
        %2253 = vst.msk [vmem:[#allocation3 + $0x6c] sm:$0xf] %vm2243, %v2166
        %2254 = vst.msk [vmem:[#allocation3 + $0x78] sm:$0xf] %vm2243, %v2168
        %2255 = vst.msk [vmem:[#allocation3 + $0x84] sm:$0xf] %vm2243, %v2170
        %2256 = vst.msk [vmem:[#allocation3 + $0x90] sm:$0xf] %vm2243, %v2172
        %2257 = vst.msk [vmem:[#allocation3 + $0x9c] sm:$0xf] %vm2243, %v2174
        %2258 = vst.msk [vmem:[#allocation3 + $0xa8] sm:$0xf] %vm2243, %v2176
        %2259 = vst.msk [vmem:[#allocation3 + $0xb4] sm:$0xf] %vm2243, %v2178
        %2260 = vst.msk [vmem:[#allocation3 + $0xc0] sm:$0xf] %vm2243, %v2180
        %2261 = vst.msk [vmem:[#allocation3 + $0xcc] sm:$0xf] %vm2243, %v2182
        %2262 = vst.msk [vmem:[#allocation3 + $0xd8] sm:$0xf] %vm2243, %v2184
        %2263 = vst.msk [vmem:[#allocation3 + $0xe4] sm:$0xf] %vm2243, %v2186
        %2264 = vst.msk [vmem:[#allocation3 + $0xf0] sm:$0xf] %vm2243, %v2188
        %2265 = vst.msk [vmem:[#allocation3 + $0xfc] sm:$0xf] %vm2243, %v2190
        %2266 = vst.msk [vmem:[#allocation3 + $0x108] sm:$0xf] %vm2243, %v2192
        %2267 = vst.msk [vmem:[#allocation3 + $0x114] sm:$0xf] %vm2243, %v2194
        %2268 = vst.msk [vmem:[#allocation3 + $0x120] sm:$0xf] %vm2243, %v2196
        %2269 = vst.msk [vmem:[#allocation3 + $0x12c] sm:$0xf] %vm2243, %v2198
        %2270 = vst.msk [vmem:[#allocation3 + $0x138] sm:$0xf] %vm2243, %v2200
        %2271 = vst.msk [vmem:[#allocation3 + $0x144] sm:$0xf] %vm2243, %v2202
        %2272 = vst.msk [vmem:[#allocation3 + $0x150] sm:$0xf] %vm2243, %v2204
        %2273 = vst.msk [vmem:[#allocation3 + $0x15c] sm:$0xf] %vm2243, %v2206
        %2274 = vst.msk [vmem:[#allocation3 + $0x168] sm:$0xf] %vm2243, %v2208
        %2275 = vst.msk [vmem:[#allocation3 + $0x174] sm:$0xf] %vm2243, %v2210
        %v2276 = vld [vmem:[#allocation2 + $0x8] sm:$0xf]
        %v2277 = vld [vmem:[#allocation2 + $0xc] sm:$0xf]
        %v2278 = vld [vmem:[#allocation2 + $0x10] sm:$0xf]
        %v2279 = vld [vmem:[#allocation2 + $0x14] sm:$0xf]
        %v2280 = vld [vmem:[#allocation2 + $0x18] sm:$0xf]
        %v2281 = vld [vmem:[#allocation2 + $0x1c] sm:$0xf]
        %v2282 = vld [vmem:[#allocation2 + $0x20] sm:$0xf]
        %v2283 = vld [vmem:[#allocation2 + $0x24] sm:$0xf]
        %v2284 = vld [vmem:[#allocation2 + $0x28] sm:$0xf]
        %v2285 = vld [vmem:[#allocation2 + $0x2c] sm:$0xf]
        %v2286 = vld [vmem:[#allocation2 + $0x30] sm:$0xf]
        %v2287 = vld [vmem:[#allocation2 + $0x34] sm:$0xf]
        %v2288 = vld [vmem:[#allocation2 + $0x38] sm:$0xf]
        %v2289 = vld [vmem:[#allocation2 + $0x3c] sm:$0xf]
        %v2290 = vld [vmem:[#allocation2 + $0x40] sm:$0xf]
        %v2291 = vld [vmem:[#allocation2 + $0x44] sm:$0xf]
        %v2292 = vld [vmem:[#allocation2 + $0x48] sm:$0xf]
        %v2293 = vld [vmem:[#allocation2 + $0x4c] sm:$0xf]
        %v2294 = vld [vmem:[#allocation2 + $0x50] sm:$0xf]
        %v2295 = vld [vmem:[#allocation2 + $0x54] sm:$0xf]
        %v2296 = vld [vmem:[#allocation2 + $0x58] sm:$0xf]
        %v2297 = vld [vmem:[#allocation2 + $0x5c] sm:$0xf]
        %v2298 = vld [vmem:[#allocation2 + $0x60] sm:$0xf]
        %v2299 = vld [vmem:[#allocation2 + $0x64] sm:$0xf]
        %v2300 = vld [vmem:[#allocation2 + $0x68] sm:$0xf]
        %v2301 = vld [vmem:[#allocation2 + $0x6c] sm:$0xf]
        %v2302 = vld [vmem:[#allocation2 + $0x70] sm:$0xf]
        %v2303 = vld [vmem:[#allocation2 + $0x74] sm:$0xf]
        %v2304 = vld [vmem:[#allocation2 + $0x78] sm:$0xf]
        %v2305 = vld [vmem:[#allocation2 + $0x7c] sm:$0xf]
        %v2306 = vld [vmem:[#allocation2 + $0x80] sm:$0xf]
        %v2307 = vld [vmem:[#allocation2 + $0x84] sm:$0xf]
        %v2308 = vld [vmem:[#allocation2 + $0x88] sm:$0x1]
        %v2326 = vunpack.c.l.s4 839922192
        %v2327 = vunpack.c.0.s8 %v2326
        %v2328 = vlaneseq
        %v2329 = vshrl.u32 %v2328, 7
        %v2330 = vsub.s32 %v2327, %v2329
        %v2331 = vrot.slane %v736, %v2330
        %v2333 = vunpack.c.l.s4 1985246804
        %v2334 = vunpack.c.0.s8 %v2333
        %v2335 = vlaneseq
        %v2336 = vshrl.u32 %v2335, 7
        %v2337 = vsub.s32 %v2334, %v2336
        %v2338 = vrot.slane %v736, %v2337
        %v2340 = vunpack.c.l.s4 839922192
        %v2341 = vunpack.c.0.s8 %v2340
        %v2342 = vlaneseq
        %v2343 = vshrl.u32 %v2342, 7
        %v2344 = vsub.s32 %v2341, %v2343
        %v2345 = vrot.slane %v737, %v2344
        %v2347 = vunpack.c.l.s4 1985246804
        %v2348 = vunpack.c.0.s8 %v2347
        %v2349 = vlaneseq
        %v2350 = vshrl.u32 %v2349, 7
        %v2351 = vsub.s32 %v2348, %v2350
        %v2352 = vrot.slane %v737, %v2351
        %v2354 = vunpack.c.l.s4 839922192
        %v2355 = vunpack.c.0.s8 %v2354
        %v2356 = vlaneseq
        %v2357 = vshrl.u32 %v2356, 7
        %v2358 = vsub.s32 %v2355, %v2357
        %v2359 = vrot.slane %v738, %v2358
        %v2361 = vunpack.c.l.s4 1985246804
        %v2362 = vunpack.c.0.s8 %v2361
        %v2363 = vlaneseq
        %v2364 = vshrl.u32 %v2363, 7
        %v2365 = vsub.s32 %v2362, %v2364
        %v2366 = vrot.slane %v738, %v2365
        %v2368 = vunpack.c.l.s4 839922192
        %v2369 = vunpack.c.0.s8 %v2368
        %v2370 = vlaneseq
        %v2371 = vshrl.u32 %v2370, 7
        %v2372 = vsub.s32 %v2369, %v2371
        %v2373 = vrot.slane %v739, %v2372
        %v2375 = vunpack.c.l.s4 1985246804
        %v2376 = vunpack.c.0.s8 %v2375
        %v2377 = vlaneseq
        %v2378 = vshrl.u32 %v2377, 7
        %v2379 = vsub.s32 %v2376, %v2378
        %v2380 = vrot.slane %v739, %v2379
        %v2382 = vunpack.c.l.s4 839922192
        %v2383 = vunpack.c.0.s8 %v2382
        %v2384 = vlaneseq
        %v2385 = vshrl.u32 %v2384, 7
        %v2386 = vsub.s32 %v2383, %v2385
        %v2387 = vrot.slane %v740, %v2386
        %v2389 = vunpack.c.l.s4 1985246804
        %v2390 = vunpack.c.0.s8 %v2389
        %v2391 = vlaneseq
        %v2392 = vshrl.u32 %v2391, 7
        %v2393 = vsub.s32 %v2390, %v2392
        %v2394 = vrot.slane %v740, %v2393
        %v2396 = vunpack.c.l.s4 839922192
        %v2397 = vunpack.c.0.s8 %v2396
        %v2398 = vlaneseq
        %v2399 = vshrl.u32 %v2398, 7
        %v2400 = vsub.s32 %v2397, %v2399
        %v2401 = vrot.slane %v741, %v2400
        %v2403 = vunpack.c.l.s4 1985246804
        %v2404 = vunpack.c.0.s8 %v2403
        %v2405 = vlaneseq
        %v2406 = vshrl.u32 %v2405, 7
        %v2407 = vsub.s32 %v2404, %v2406
        %v2408 = vrot.slane %v741, %v2407
        %v2410 = vunpack.c.l.s4 839922192
        %v2411 = vunpack.c.0.s8 %v2410
        %v2412 = vlaneseq
        %v2413 = vshrl.u32 %v2412, 7
        %v2414 = vsub.s32 %v2411, %v2413
        %v2415 = vrot.slane %v742, %v2414
        %v2417 = vunpack.c.l.s4 1985246804
        %v2418 = vunpack.c.0.s8 %v2417
        %v2419 = vlaneseq
        %v2420 = vshrl.u32 %v2419, 7
        %v2421 = vsub.s32 %v2418, %v2420
        %v2422 = vrot.slane %v742, %v2421
        %v2424 = vunpack.c.l.s4 839922192
        %v2425 = vunpack.c.0.s8 %v2424
        %v2426 = vlaneseq
        %v2427 = vshrl.u32 %v2426, 7
        %v2428 = vsub.s32 %v2425, %v2427
        %v2429 = vrot.slane %v743, %v2428
        %v2431 = vunpack.c.l.s4 1985246804
        %v2432 = vunpack.c.0.s8 %v2431
        %v2433 = vlaneseq
        %v2434 = vshrl.u32 %v2433, 7
        %v2435 = vsub.s32 %v2432, %v2434
        %v2436 = vrot.slane %v743, %v2435
        %v2438 = vunpack.c.l.s4 839922192
        %v2439 = vunpack.c.0.s8 %v2438
        %v2440 = vlaneseq
        %v2441 = vshrl.u32 %v2440, 7
        %v2442 = vsub.s32 %v2439, %v2441
        %v2443 = vrot.slane %v744, %v2442
        %v2445 = vunpack.c.l.s4 1985246804
        %v2446 = vunpack.c.0.s8 %v2445
        %v2447 = vlaneseq
        %v2448 = vshrl.u32 %v2447, 7
        %v2449 = vsub.s32 %v2446, %v2448
        %v2450 = vrot.slane %v744, %v2449
        %v2452 = vunpack.c.l.s4 839922192
        %v2453 = vunpack.c.0.s8 %v2452
        %v2454 = vlaneseq
        %v2455 = vshrl.u32 %v2454, 7
        %v2456 = vsub.s32 %v2453, %v2455
        %v2457 = vrot.slane %v745, %v2456
        %v2459 = vunpack.c.l.s4 1985246804
        %v2460 = vunpack.c.0.s8 %v2459
        %v2461 = vlaneseq
        %v2462 = vshrl.u32 %v2461, 7
        %v2463 = vsub.s32 %v2460, %v2462
        %v2464 = vrot.slane %v745, %v2463
        %v2466 = vunpack.c.l.s4 839922192
        %v2467 = vunpack.c.0.s8 %v2466
        %v2468 = vlaneseq
        %v2469 = vshrl.u32 %v2468, 7
        %v2470 = vsub.s32 %v2467, %v2469
        %v2471 = vrot.slane %v746, %v2470
        %v2473 = vunpack.c.l.s4 1985246804
        %v2474 = vunpack.c.0.s8 %v2473
        %v2475 = vlaneseq
        %v2476 = vshrl.u32 %v2475, 7
        %v2477 = vsub.s32 %v2474, %v2476
        %v2478 = vrot.slane %v746, %v2477
        %v2480 = vunpack.c.l.s4 839922192
        %v2481 = vunpack.c.0.s8 %v2480
        %v2482 = vlaneseq
        %v2483 = vshrl.u32 %v2482, 7
        %v2484 = vsub.s32 %v2481, %v2483
        %v2485 = vrot.slane %v747, %v2484
        %v2487 = vunpack.c.l.s4 1985246804
        %v2488 = vunpack.c.0.s8 %v2487
        %v2489 = vlaneseq
        %v2490 = vshrl.u32 %v2489, 7
        %v2491 = vsub.s32 %v2488, %v2490
        %v2492 = vrot.slane %v747, %v2491
        %v2494 = vunpack.c.l.s4 839922192
        %v2495 = vunpack.c.0.s8 %v2494
        %v2496 = vlaneseq
        %v2497 = vshrl.u32 %v2496, 7
        %v2498 = vsub.s32 %v2495, %v2497
        %v2499 = vrot.slane %v748, %v2498
        %v2501 = vunpack.c.l.s4 1985246804
        %v2502 = vunpack.c.0.s8 %v2501
        %v2503 = vlaneseq
        %v2504 = vshrl.u32 %v2503, 7
        %v2505 = vsub.s32 %v2502, %v2504
        %v2506 = vrot.slane %v748, %v2505
        %v2508 = vunpack.c.l.s4 839922192
        %v2509 = vunpack.c.0.s8 %v2508
        %v2510 = vlaneseq
        %v2511 = vshrl.u32 %v2510, 7
        %v2512 = vsub.s32 %v2509, %v2511
        %v2513 = vrot.slane %v749, %v2512
        %v2515 = vunpack.c.l.s4 1985246804
        %v2516 = vunpack.c.0.s8 %v2515
        %v2517 = vlaneseq
        %v2518 = vshrl.u32 %v2517, 7
        %v2519 = vsub.s32 %v2516, %v2518
        %v2520 = vrot.slane %v749, %v2519
        %v2522 = vunpack.c.l.s4 839922192
        %v2523 = vunpack.c.0.s8 %v2522
        %v2524 = vlaneseq
        %v2525 = vshrl.u32 %v2524, 7
        %v2526 = vsub.s32 %v2523, %v2525
        %v2527 = vrot.slane %v750, %v2526
        %v2529 = vunpack.c.l.s4 1985246804
        %v2530 = vunpack.c.0.s8 %v2529
        %v2531 = vlaneseq
        %v2532 = vshrl.u32 %v2531, 7
        %v2533 = vsub.s32 %v2530, %v2532
        %v2534 = vrot.slane %v750, %v2533
        %v2536 = vunpack.c.l.s4 839922192
        %v2537 = vunpack.c.0.s8 %v2536
        %v2538 = vlaneseq
        %v2539 = vshrl.u32 %v2538, 7
        %v2540 = vsub.s32 %v2537, %v2539
        %v2541 = vrot.slane %v751, %v2540
        %v2543 = vunpack.c.l.s4 1985246804
        %v2544 = vunpack.c.0.s8 %v2543
        %v2545 = vlaneseq
        %v2546 = vshrl.u32 %v2545, 7
        %v2547 = vsub.s32 %v2544, %v2546
        %v2548 = vrot.slane %v751, %v2547
        %v2550 = vshrl.u32 %v2331, 16
        %v2552 = vrot.slane %v2550, 7
        %v2553 = vshll.u32 %v2331, 16
        %v2555 = vor.u32 %v2552, %v2553
        %v2556 = vrot.slane %v2552, 4
        %v2558 = vshrl.u32 %v2338, 16
        %v2560 = vrot.slane %v2558, 7
        %v2561 = vshll.u32 %v2338, 16
        %v2563 = vor.u32 %v2560, %v2561
        %v2564 = vsel %vm1726, %v2556, %v2563
        %v2565 = vrot.slane %v2560, 4
        %v2567 = vshrl.u32 %v2345, 16
        %v2569 = vrot.slane %v2567, 7
        %v2570 = vshll.u32 %v2345, 16
        %v2572 = vor.u32 %v2569, %v2570
        %v2573 = vsel %vm1726, %v2565, %v2572
        %v2574 = vrot.slane %v2569, 4
        %v2576 = vshrl.u32 %v2352, 16
        %v2578 = vrot.slane %v2576, 7
        %v2579 = vshll.u32 %v2352, 16
        %v2581 = vor.u32 %v2578, %v2579
        %v2582 = vsel %vm1726, %v2574, %v2581
        %v2583 = vrot.slane %v2578, 4
        %v2585 = vshrl.u32 %v2359, 16
        %v2587 = vrot.slane %v2585, 7
        %v2588 = vshll.u32 %v2359, 16
        %v2590 = vor.u32 %v2587, %v2588
        %v2591 = vsel %vm1726, %v2583, %v2590
        %v2592 = vrot.slane %v2587, 4
        %v2594 = vshrl.u32 %v2366, 16
        %v2596 = vrot.slane %v2594, 7
        %v2597 = vshll.u32 %v2366, 16
        %v2599 = vor.u32 %v2596, %v2597
        %v2600 = vsel %vm1726, %v2592, %v2599
        %v2601 = vrot.slane %v2596, 4
        %v2603 = vshrl.u32 %v2373, 16
        %v2605 = vrot.slane %v2603, 7
        %v2606 = vshll.u32 %v2373, 16
        %v2608 = vor.u32 %v2605, %v2606
        %v2609 = vsel %vm1726, %v2601, %v2608
        %v2610 = vrot.slane %v2605, 4
        %v2612 = vshrl.u32 %v2380, 16
        %v2614 = vrot.slane %v2612, 7
        %v2615 = vshll.u32 %v2380, 16
        %v2617 = vor.u32 %v2614, %v2615
        %v2618 = vsel %vm1726, %v2610, %v2617
        %v2619 = vrot.slane %v2614, 4
        %v2621 = vshrl.u32 %v2387, 16
        %v2623 = vrot.slane %v2621, 7
        %v2624 = vshll.u32 %v2387, 16
        %v2626 = vor.u32 %v2623, %v2624
        %v2627 = vsel %vm1726, %v2619, %v2626
        %v2628 = vrot.slane %v2623, 4
        %v2630 = vshrl.u32 %v2394, 16
        %v2632 = vrot.slane %v2630, 7
        %v2633 = vshll.u32 %v2394, 16
        %v2635 = vor.u32 %v2632, %v2633
        %v2636 = vsel %vm1726, %v2628, %v2635
        %v2637 = vrot.slane %v2632, 4
        %v2639 = vshrl.u32 %v2401, 16
        %v2641 = vrot.slane %v2639, 7
        %v2642 = vshll.u32 %v2401, 16
        %v2644 = vor.u32 %v2641, %v2642
        %v2645 = vsel %vm1726, %v2637, %v2644
        %v2646 = vrot.slane %v2641, 4
        %v2648 = vshrl.u32 %v2408, 16
        %v2650 = vrot.slane %v2648, 7
        %v2651 = vshll.u32 %v2408, 16
        %v2653 = vor.u32 %v2650, %v2651
        %v2654 = vsel %vm1726, %v2646, %v2653
        %v2655 = vrot.slane %v2650, 4
        %v2657 = vshrl.u32 %v2415, 16
        %v2659 = vrot.slane %v2657, 7
        %v2660 = vshll.u32 %v2415, 16
        %v2662 = vor.u32 %v2659, %v2660
        %v2663 = vsel %vm1726, %v2655, %v2662
        %v2664 = vrot.slane %v2659, 4
        %v2666 = vshrl.u32 %v2422, 16
        %v2668 = vrot.slane %v2666, 7
        %v2669 = vshll.u32 %v2422, 16
        %v2671 = vor.u32 %v2668, %v2669
        %v2672 = vsel %vm1726, %v2664, %v2671
        %v2673 = vrot.slane %v2668, 4
        %v2675 = vshrl.u32 %v2429, 16
        %v2677 = vrot.slane %v2675, 7
        %v2678 = vshll.u32 %v2429, 16
        %v2680 = vor.u32 %v2677, %v2678
        %v2681 = vsel %vm1726, %v2673, %v2680
        %v2682 = vrot.slane %v2677, 4
        %v2684 = vshrl.u32 %v2436, 16
        %v2686 = vrot.slane %v2684, 7
        %v2687 = vshll.u32 %v2436, 16
        %v2689 = vor.u32 %v2686, %v2687
        %v2690 = vsel %vm1726, %v2682, %v2689
        %v2691 = vrot.slane %v2686, 4
        %v2693 = vshrl.u32 %v2443, 16
        %v2695 = vrot.slane %v2693, 7
        %v2696 = vshll.u32 %v2443, 16
        %v2698 = vor.u32 %v2695, %v2696
        %v2699 = vsel %vm1726, %v2691, %v2698
        %v2700 = vrot.slane %v2695, 4
        %v2702 = vshrl.u32 %v2450, 16
        %v2704 = vrot.slane %v2702, 7
        %v2705 = vshll.u32 %v2450, 16
        %v2707 = vor.u32 %v2704, %v2705
        %v2708 = vsel %vm1726, %v2700, %v2707
        %v2709 = vrot.slane %v2704, 4
        %v2711 = vshrl.u32 %v2457, 16
        %v2713 = vrot.slane %v2711, 7
        %v2714 = vshll.u32 %v2457, 16
        %v2716 = vor.u32 %v2713, %v2714
        %v2717 = vsel %vm1726, %v2709, %v2716
        %v2718 = vrot.slane %v2713, 4
        %v2720 = vshrl.u32 %v2464, 16
        %v2722 = vrot.slane %v2720, 7
        %v2723 = vshll.u32 %v2464, 16
        %v2725 = vor.u32 %v2722, %v2723
        %v2726 = vsel %vm1726, %v2718, %v2725
        %v2727 = vrot.slane %v2722, 4
        %v2729 = vshrl.u32 %v2471, 16
        %v2731 = vrot.slane %v2729, 7
        %v2732 = vshll.u32 %v2471, 16
        %v2734 = vor.u32 %v2731, %v2732
        %v2735 = vsel %vm1726, %v2727, %v2734
        %v2736 = vrot.slane %v2731, 4
        %v2738 = vshrl.u32 %v2478, 16
        %v2740 = vrot.slane %v2738, 7
        %v2741 = vshll.u32 %v2478, 16
        %v2743 = vor.u32 %v2740, %v2741
        %v2744 = vsel %vm1726, %v2736, %v2743
        %v2745 = vrot.slane %v2740, 4
        %v2747 = vshrl.u32 %v2485, 16
        %v2749 = vrot.slane %v2747, 7
        %v2750 = vshll.u32 %v2485, 16
        %v2752 = vor.u32 %v2749, %v2750
        %v2753 = vsel %vm1726, %v2745, %v2752
        %v2754 = vrot.slane %v2749, 4
        %v2756 = vshrl.u32 %v2492, 16
        %v2758 = vrot.slane %v2756, 7
        %v2759 = vshll.u32 %v2492, 16
        %v2761 = vor.u32 %v2758, %v2759
        %v2762 = vsel %vm1726, %v2754, %v2761
        %v2763 = vrot.slane %v2758, 4
        %v2765 = vshrl.u32 %v2499, 16
        %v2767 = vrot.slane %v2765, 7
        %v2768 = vshll.u32 %v2499, 16
        %v2770 = vor.u32 %v2767, %v2768
        %v2771 = vsel %vm1726, %v2763, %v2770
        %v2772 = vrot.slane %v2767, 4
        %v2774 = vshrl.u32 %v2506, 16
        %v2776 = vrot.slane %v2774, 7
        %v2777 = vshll.u32 %v2506, 16
        %v2779 = vor.u32 %v2776, %v2777
        %v2780 = vsel %vm1726, %v2772, %v2779
        %v2781 = vrot.slane %v2776, 4
        %v2783 = vshrl.u32 %v2513, 16
        %v2785 = vrot.slane %v2783, 7
        %v2786 = vshll.u32 %v2513, 16
        %v2788 = vor.u32 %v2785, %v2786
        %v2789 = vsel %vm1726, %v2781, %v2788
        %v2790 = vrot.slane %v2785, 4
        %v2792 = vshrl.u32 %v2520, 16
        %v2794 = vrot.slane %v2792, 7
        %v2795 = vshll.u32 %v2520, 16
        %v2797 = vor.u32 %v2794, %v2795
        %v2798 = vsel %vm1726, %v2790, %v2797
        %v2799 = vrot.slane %v2794, 4
        %v2801 = vshrl.u32 %v2527, 16
        %v2803 = vrot.slane %v2801, 7
        %v2804 = vshll.u32 %v2527, 16
        %v2806 = vor.u32 %v2803, %v2804
        %v2807 = vsel %vm1726, %v2799, %v2806
        %v2808 = vrot.slane %v2803, 4
        %v2810 = vshrl.u32 %v2534, 16
        %v2812 = vrot.slane %v2810, 7
        %v2813 = vshll.u32 %v2534, 16
        %v2815 = vor.u32 %v2812, %v2813
        %v2816 = vsel %vm1726, %v2808, %v2815
        %v2817 = vrot.slane %v2812, 4
        %v2819 = vshrl.u32 %v2541, 16
        %v2821 = vrot.slane %v2819, 7
        %v2822 = vshll.u32 %v2541, 16
        %v2824 = vor.u32 %v2821, %v2822
        %v2825 = vsel %vm1726, %v2817, %v2824
        %v2826 = vrot.slane %v2821, 4
        %v2828 = vshrl.u32 %v2548, 16
        %v2830 = vrot.slane %v2828, 7
        %v2831 = vshll.u32 %v2548, 16
        %v2833 = vor.u32 %v2830, %v2831
        %v2834 = vsel %vm1726, %v2826, %v2833
        %v2835 = vrot.slane %v2830, 4
        %v2869 = vmul.bf16 %v2276, %v2555
        %v2870 = vmul.bf16 %v2277, %v2564
        %v2871 = vmul.bf16 %v2278, %v2573
        %v2872 = vmul.bf16 %v2279, %v2582
        %v2873 = vmul.bf16 %v2280, %v2591
        %v2874 = vmul.bf16 %v2281, %v2600
        %v2875 = vmul.bf16 %v2282, %v2609
        %v2876 = vmul.bf16 %v2283, %v2618
        %v2877 = vmul.bf16 %v2284, %v2627
        %v2878 = vmul.bf16 %v2285, %v2636
        %v2879 = vmul.bf16 %v2286, %v2645
        %v2880 = vmul.bf16 %v2287, %v2654
        %v2881 = vmul.bf16 %v2288, %v2663
        %v2882 = vmul.bf16 %v2289, %v2672
        %v2883 = vmul.bf16 %v2290, %v2681
        %v2884 = vmul.bf16 %v2291, %v2690
        %v2885 = vmul.bf16 %v2292, %v2699
        %v2886 = vmul.bf16 %v2293, %v2708
        %v2887 = vmul.bf16 %v2294, %v2717
        %v2888 = vmul.bf16 %v2295, %v2726
        %v2889 = vmul.bf16 %v2296, %v2735
        %v2890 = vmul.bf16 %v2297, %v2744
        %v2891 = vmul.bf16 %v2298, %v2753
        %v2892 = vmul.bf16 %v2299, %v2762
        %v2893 = vmul.bf16 %v2300, %v2771
        %v2894 = vmul.bf16 %v2301, %v2780
        %v2895 = vmul.bf16 %v2302, %v2789
        %v2896 = vmul.bf16 %v2303, %v2798
        %v2897 = vmul.bf16 %v2304, %v2807
        %v2898 = vmul.bf16 %v2305, %v2816
        %v2899 = vmul.bf16 %v2306, %v2825
        %v2900 = vmul.bf16 %v2307, %v2834
        %v2901 = vmul.bf16 %v2308, %v2835
        %v2903 = vshrl.u32 %v2869, 16
        %v2905 = vrot.slane %v2903, 4
        %v2906 = vshll.u32 %v2869, 16
        %v2908 = vrot.slane %v2906, 5
        %v2909 = vor.u32 %v2905, %v2908
        %v2910 = vrot.slane %v2909, 4
        %v2912 = vshll.u32 %v2870, 16
        %v2914 = vrot.slane %v2912, 5
        %v2915 = vsel %vm1338, %v2910, %v2914
        %v2916 = vshrl.u32 %v2870, 16
        %v2918 = vrot.slane %v2916, 4
        %v2919 = vor.u32 %v2918, %v2914
        %v2920 = vrot.slane %v2919, 4
        %v2922 = vshll.u32 %v2871, 16
        %v2924 = vrot.slane %v2922, 5
        %v2925 = vsel %vm1338, %v2920, %v2924
        %v2926 = vshrl.u32 %v2871, 16
        %v2928 = vrot.slane %v2926, 4
        %v2929 = vor.u32 %v2928, %v2924
        %v2930 = vrot.slane %v2929, 4
        %v2932 = vshll.u32 %v2872, 16
        %v2934 = vrot.slane %v2932, 5
        %v2935 = vsel %vm1338, %v2930, %v2934
        %v2936 = vshrl.u32 %v2872, 16
        %v2938 = vrot.slane %v2936, 4
        %v2939 = vor.u32 %v2938, %v2934
        %v2940 = vrot.slane %v2939, 4
        %v2942 = vshll.u32 %v2873, 16
        %v2944 = vrot.slane %v2942, 5
        %v2945 = vsel %vm1338, %v2940, %v2944
        %v2946 = vshrl.u32 %v2873, 16
        %v2948 = vrot.slane %v2946, 4
        %v2949 = vor.u32 %v2948, %v2944
        %v2950 = vrot.slane %v2949, 4
        %v2952 = vshll.u32 %v2874, 16
        %v2954 = vrot.slane %v2952, 5
        %v2955 = vsel %vm1338, %v2950, %v2954
        %v2956 = vshrl.u32 %v2874, 16
        %v2958 = vrot.slane %v2956, 4
        %v2959 = vor.u32 %v2958, %v2954
        %v2960 = vrot.slane %v2959, 4
        %v2962 = vshll.u32 %v2875, 16
        %v2964 = vrot.slane %v2962, 5
        %v2965 = vsel %vm1338, %v2960, %v2964
        %v2966 = vshrl.u32 %v2875, 16
        %v2968 = vrot.slane %v2966, 4
        %v2969 = vor.u32 %v2968, %v2964
        %v2970 = vrot.slane %v2969, 4
        %v2972 = vshll.u32 %v2876, 16
        %v2974 = vrot.slane %v2972, 5
        %v2975 = vsel %vm1338, %v2970, %v2974
        %v2976 = vshrl.u32 %v2876, 16
        %v2978 = vrot.slane %v2976, 4
        %v2979 = vor.u32 %v2978, %v2974
        %v2980 = vrot.slane %v2979, 4
        %v2982 = vshll.u32 %v2877, 16
        %v2984 = vrot.slane %v2982, 5
        %v2985 = vsel %vm1338, %v2980, %v2984
        %v2986 = vshrl.u32 %v2877, 16
        %v2988 = vrot.slane %v2986, 4
        %v2989 = vor.u32 %v2988, %v2984
        %v2990 = vrot.slane %v2989, 4
        %v2992 = vshll.u32 %v2878, 16
        %v2994 = vrot.slane %v2992, 5
        %v2995 = vsel %vm1338, %v2990, %v2994
        %v2996 = vshrl.u32 %v2878, 16
        %v2998 = vrot.slane %v2996, 4
        %v2999 = vor.u32 %v2998, %v2994
        %v3000 = vrot.slane %v2999, 4
        %v3002 = vshll.u32 %v2879, 16
        %v3004 = vrot.slane %v3002, 5
        %v3005 = vsel %vm1338, %v3000, %v3004
        %v3006 = vshrl.u32 %v2879, 16
        %v3008 = vrot.slane %v3006, 4
        %v3009 = vor.u32 %v3008, %v3004
        %v3010 = vrot.slane %v3009, 4
        %v3012 = vshll.u32 %v2880, 16
        %v3014 = vrot.slane %v3012, 5
        %v3015 = vsel %vm1338, %v3010, %v3014
        %v3016 = vshrl.u32 %v2880, 16
        %v3018 = vrot.slane %v3016, 4
        %v3019 = vor.u32 %v3018, %v3014
        %v3020 = vrot.slane %v3019, 4
        %v3022 = vshll.u32 %v2881, 16
        %v3024 = vrot.slane %v3022, 5
        %v3025 = vsel %vm1338, %v3020, %v3024
        %v3026 = vshrl.u32 %v2881, 16
        %v3028 = vrot.slane %v3026, 4
        %v3029 = vor.u32 %v3028, %v3024
        %v3030 = vrot.slane %v3029, 4
        %v3032 = vshll.u32 %v2882, 16
        %v3034 = vrot.slane %v3032, 5
        %v3035 = vsel %vm1338, %v3030, %v3034
        %v3036 = vshrl.u32 %v2882, 16
        %v3038 = vrot.slane %v3036, 4
        %v3039 = vor.u32 %v3038, %v3034
        %v3040 = vrot.slane %v3039, 4
        %v3042 = vshll.u32 %v2883, 16
        %v3044 = vrot.slane %v3042, 5
        %v3045 = vsel %vm1338, %v3040, %v3044
        %v3046 = vshrl.u32 %v2883, 16
        %v3048 = vrot.slane %v3046, 4
        %v3049 = vor.u32 %v3048, %v3044
        %v3050 = vrot.slane %v3049, 4
        %v3052 = vshll.u32 %v2884, 16
        %v3054 = vrot.slane %v3052, 5
        %v3055 = vsel %vm1338, %v3050, %v3054
        %v3056 = vshrl.u32 %v2884, 16
        %v3058 = vrot.slane %v3056, 4
        %v3059 = vor.u32 %v3058, %v3054
        %v3060 = vrot.slane %v3059, 4
        %v3062 = vshll.u32 %v2885, 16
        %v3064 = vrot.slane %v3062, 5
        %v3065 = vsel %vm1338, %v3060, %v3064
        %v3066 = vshrl.u32 %v2885, 16
        %v3068 = vrot.slane %v3066, 4
        %v3069 = vor.u32 %v3068, %v3064
        %v3070 = vrot.slane %v3069, 4
        %v3072 = vshll.u32 %v2886, 16
        %v3074 = vrot.slane %v3072, 5
        %v3075 = vsel %vm1338, %v3070, %v3074
        %v3076 = vshrl.u32 %v2886, 16
        %v3078 = vrot.slane %v3076, 4
        %v3079 = vor.u32 %v3078, %v3074
        %v3080 = vrot.slane %v3079, 4
        %v3082 = vshll.u32 %v2887, 16
        %v3084 = vrot.slane %v3082, 5
        %v3085 = vsel %vm1338, %v3080, %v3084
        %v3086 = vshrl.u32 %v2887, 16
        %v3088 = vrot.slane %v3086, 4
        %v3089 = vor.u32 %v3088, %v3084
        %v3090 = vrot.slane %v3089, 4
        %v3092 = vshll.u32 %v2888, 16
        %v3094 = vrot.slane %v3092, 5
        %v3095 = vsel %vm1338, %v3090, %v3094
        %v3096 = vshrl.u32 %v2888, 16
        %v3098 = vrot.slane %v3096, 4
        %v3099 = vor.u32 %v3098, %v3094
        %v3100 = vrot.slane %v3099, 4
        %v3102 = vshll.u32 %v2889, 16
        %v3104 = vrot.slane %v3102, 5
        %v3105 = vsel %vm1338, %v3100, %v3104
        %v3106 = vshrl.u32 %v2889, 16
        %v3108 = vrot.slane %v3106, 4
        %v3109 = vor.u32 %v3108, %v3104
        %v3110 = vrot.slane %v3109, 4
        %v3112 = vshll.u32 %v2890, 16
        %v3114 = vrot.slane %v3112, 5
        %v3115 = vsel %vm1338, %v3110, %v3114
        %v3116 = vshrl.u32 %v2890, 16
        %v3118 = vrot.slane %v3116, 4
        %v3119 = vor.u32 %v3118, %v3114
        %v3120 = vrot.slane %v3119, 4
        %v3122 = vshll.u32 %v2891, 16
        %v3124 = vrot.slane %v3122, 5
        %v3125 = vsel %vm1338, %v3120, %v3124
        %v3126 = vshrl.u32 %v2891, 16
        %v3128 = vrot.slane %v3126, 4
        %v3129 = vor.u32 %v3128, %v3124
        %v3130 = vrot.slane %v3129, 4
        %v3132 = vshll.u32 %v2892, 16
        %v3134 = vrot.slane %v3132, 5
        %v3135 = vsel %vm1338, %v3130, %v3134
        %v3136 = vshrl.u32 %v2892, 16
        %v3138 = vrot.slane %v3136, 4
        %v3139 = vor.u32 %v3138, %v3134
        %v3140 = vrot.slane %v3139, 4
        %v3142 = vshll.u32 %v2893, 16
        %v3144 = vrot.slane %v3142, 5
        %v3145 = vsel %vm1338, %v3140, %v3144
        %v3146 = vshrl.u32 %v2893, 16
        %v3148 = vrot.slane %v3146, 4
        %v3149 = vor.u32 %v3148, %v3144
        %v3150 = vrot.slane %v3149, 4
        %v3152 = vshll.u32 %v2894, 16
        %v3154 = vrot.slane %v3152, 5
        %v3155 = vsel %vm1338, %v3150, %v3154
        %v3156 = vshrl.u32 %v2894, 16
        %v3158 = vrot.slane %v3156, 4
        %v3159 = vor.u32 %v3158, %v3154
        %v3160 = vrot.slane %v3159, 4
        %v3162 = vshll.u32 %v2895, 16
        %v3164 = vrot.slane %v3162, 5
        %v3165 = vsel %vm1338, %v3160, %v3164
        %v3166 = vshrl.u32 %v2895, 16
        %v3168 = vrot.slane %v3166, 4
        %v3169 = vor.u32 %v3168, %v3164
        %v3170 = vrot.slane %v3169, 4
        %v3172 = vshll.u32 %v2896, 16
        %v3174 = vrot.slane %v3172, 5
        %v3175 = vsel %vm1338, %v3170, %v3174
        %v3176 = vshrl.u32 %v2896, 16
        %v3178 = vrot.slane %v3176, 4
        %v3179 = vor.u32 %v3178, %v3174
        %v3180 = vrot.slane %v3179, 4
        %v3182 = vshll.u32 %v2897, 16
        %v3184 = vrot.slane %v3182, 5
        %v3185 = vsel %vm1338, %v3180, %v3184
        %v3186 = vshrl.u32 %v2897, 16
        %v3188 = vrot.slane %v3186, 4
        %v3189 = vor.u32 %v3188, %v3184
        %v3190 = vrot.slane %v3189, 4
        %v3192 = vshll.u32 %v2898, 16
        %v3194 = vrot.slane %v3192, 5
        %v3195 = vsel %vm1338, %v3190, %v3194
        %v3196 = vshrl.u32 %v2898, 16
        %v3198 = vrot.slane %v3196, 4
        %v3199 = vor.u32 %v3198, %v3194
        %v3200 = vrot.slane %v3199, 4
        %v3202 = vshll.u32 %v2899, 16
        %v3204 = vrot.slane %v3202, 5
        %v3205 = vsel %vm1338, %v3200, %v3204
        %v3206 = vshrl.u32 %v2899, 16
        %v3208 = vrot.slane %v3206, 4
        %v3209 = vor.u32 %v3208, %v3204
        %v3210 = vrot.slane %v3209, 4
        %v3212 = vshll.u32 %v2900, 16
        %v3214 = vrot.slane %v3212, 5
        %v3215 = vsel %vm1338, %v3210, %v3214
        %v3216 = vshrl.u32 %v2900, 16
        %v3218 = vrot.slane %v3216, 4
        %v3219 = vor.u32 %v3218, %v3214
        %v3220 = vrot.slane %v3219, 4
        %v3222 = vshll.u32 %v2901, 16
        %v3224 = vrot.slane %v3222, 5
        %v3225 = vsel %vm1338, %v3220, %v3224
        %3226 = vrot.lane.b32.xlu0 %v2915, 64
        %v3227 = vpop.permute.xlu0 %3226
        %3228 = vrot.lane.b32.xlu0 %v2925, 64
        %v3229 = vpop.permute.xlu0 %3228
        %3230 = vrot.lane.b32.xlu0 %v2935, 64
        %v3231 = vpop.permute.xlu0 %3230
        %3232 = vrot.lane.b32.xlu0 %v2945, 64
        %v3233 = vpop.permute.xlu0 %3232
        %3234 = vrot.lane.b32.xlu0 %v2955, 64
        %v3235 = vpop.permute.xlu0 %3234
        %3236 = vrot.lane.b32.xlu0 %v2965, 64
        %v3237 = vpop.permute.xlu0 %3236
        %3238 = vrot.lane.b32.xlu0 %v2975, 64
        %v3239 = vpop.permute.xlu0 %3238
        %3240 = vrot.lane.b32.xlu0 %v2985, 64
        %v3241 = vpop.permute.xlu0 %3240
        %3242 = vrot.lane.b32.xlu0 %v2995, 64
        %v3243 = vpop.permute.xlu0 %3242
        %3244 = vrot.lane.b32.xlu0 %v3005, 64
        %v3245 = vpop.permute.xlu0 %3244
        %3246 = vrot.lane.b32.xlu0 %v3015, 64
        %v3247 = vpop.permute.xlu0 %3246
        %3248 = vrot.lane.b32.xlu0 %v3025, 64
        %v3249 = vpop.permute.xlu0 %3248
        %3250 = vrot.lane.b32.xlu0 %v3035, 64
        %v3251 = vpop.permute.xlu0 %3250
        %3252 = vrot.lane.b32.xlu0 %v3045, 64
        %v3253 = vpop.permute.xlu0 %3252
        %3254 = vrot.lane.b32.xlu0 %v3055, 64
        %v3255 = vpop.permute.xlu0 %3254
        %3256 = vrot.lane.b32.xlu0 %v3065, 64
        %v3257 = vpop.permute.xlu0 %3256
        %3258 = vrot.lane.b32.xlu0 %v3075, 64
        %v3259 = vpop.permute.xlu0 %3258
        %3260 = vrot.lane.b32.xlu0 %v3085, 64
        %v3261 = vpop.permute.xlu0 %3260
        %3262 = vrot.lane.b32.xlu0 %v3095, 64
        %v3263 = vpop.permute.xlu0 %3262
        %3264 = vrot.lane.b32.xlu0 %v3105, 64
        %v3265 = vpop.permute.xlu0 %3264
        %3266 = vrot.lane.b32.xlu0 %v3115, 64
        %v3267 = vpop.permute.xlu0 %3266
        %3268 = vrot.lane.b32.xlu0 %v3125, 64
        %v3269 = vpop.permute.xlu0 %3268
        %3270 = vrot.lane.b32.xlu0 %v3135, 64
        %v3271 = vpop.permute.xlu0 %3270
        %3272 = vrot.lane.b32.xlu0 %v3145, 64
        %v3273 = vpop.permute.xlu0 %3272
        %3274 = vrot.lane.b32.xlu0 %v3155, 64
        %v3275 = vpop.permute.xlu0 %3274
        %3276 = vrot.lane.b32.xlu0 %v3165, 64
        %v3277 = vpop.permute.xlu0 %3276
        %3278 = vrot.lane.b32.xlu0 %v3175, 64
        %v3279 = vpop.permute.xlu0 %3278
        %3280 = vrot.lane.b32.xlu0 %v3185, 64
        %v3281 = vpop.permute.xlu0 %3280
        %3282 = vrot.lane.b32.xlu0 %v3195, 64
        %v3283 = vpop.permute.xlu0 %3282
        %3284 = vrot.lane.b32.xlu0 %v3205, 64
        %v3285 = vpop.permute.xlu0 %3284
        %3286 = vrot.lane.b32.xlu0 %v3215, 64
        %v3287 = vpop.permute.xlu0 %3286
        %3288 = vrot.lane.b32.xlu0 %v3225, 64
        %v3289 = vpop.permute.xlu0 %3288
        %vm3322 = vcmask 781824
        %3323 = vst.msk [vmem:[#allocation3] sm:$0xf] %vm3322, %v3227
        %3324 = vst.msk [vmem:[#allocation3 + $0xc] sm:$0xf] %vm3322, %v3229
        %3325 = vst.msk [vmem:[#allocation3 + $0x18] sm:$0xf] %vm3322, %v3231
        %3326 = vst.msk [vmem:[#allocation3 + $0x24] sm:$0xf] %vm3322, %v3233
        %3327 = vst.msk [vmem:[#allocation3 + $0x30] sm:$0xf] %vm3322, %v3235
        %3328 = vst.msk [vmem:[#allocation3 + $0x3c] sm:$0xf] %vm3322, %v3237
        %3329 = vst.msk [vmem:[#allocation3 + $0x48] sm:$0xf] %vm3322, %v3239
        %3330 = vst.msk [vmem:[#allocation3 + $0x54] sm:$0xf] %vm3322, %v3241
        %3331 = vst.msk [vmem:[#allocation3 + $0x60] sm:$0xf] %vm3322, %v3243
        %3332 = vst.msk [vmem:[#allocation3 + $0x6c] sm:$0xf] %vm3322, %v3245
        %3333 = vst.msk [vmem:[#allocation3 + $0x78] sm:$0xf] %vm3322, %v3247
        %3334 = vst.msk [vmem:[#allocation3 + $0x84] sm:$0xf] %vm3322, %v3249
        %3335 = vst.msk [vmem:[#allocation3 + $0x90] sm:$0xf] %vm3322, %v3251
        %3336 = vst.msk [vmem:[#allocation3 + $0x9c] sm:$0xf] %vm3322, %v3253
        %3337 = vst.msk [vmem:[#allocation3 + $0xa8] sm:$0xf] %vm3322, %v3255
        %3338 = vst.msk [vmem:[#allocation3 + $0xb4] sm:$0xf] %vm3322, %v3257
        %3339 = vst.msk [vmem:[#allocation3 + $0xc0] sm:$0xf] %vm3322, %v3259
        %3340 = vst.msk [vmem:[#allocation3 + $0xcc] sm:$0xf] %vm3322, %v3261
        %3341 = vst.msk [vmem:[#allocation3 + $0xd8] sm:$0xf] %vm3322, %v3263
        %3342 = vst.msk [vmem:[#allocation3 + $0xe4] sm:$0xf] %vm3322, %v3265
        %3343 = vst.msk [vmem:[#allocation3 + $0xf0] sm:$0xf] %vm3322, %v3267
        %3344 = vst.msk [vmem:[#allocation3 + $0xfc] sm:$0xf] %vm3322, %v3269
        %3345 = vst.msk [vmem:[#allocation3 + $0x108] sm:$0xf] %vm3322, %v3271
        %3346 = vst.msk [vmem:[#allocation3 + $0x114] sm:$0xf] %vm3322, %v3273
        %3347 = vst.msk [vmem:[#allocation3 + $0x120] sm:$0xf] %vm3322, %v3275
        %3348 = vst.msk [vmem:[#allocation3 + $0x12c] sm:$0xf] %vm3322, %v3277
        %3349 = vst.msk [vmem:[#allocation3 + $0x138] sm:$0xf] %vm3322, %v3279
        %3350 = vst.msk [vmem:[#allocation3 + $0x144] sm:$0xf] %vm3322, %v3281
        %3351 = vst.msk [vmem:[#allocation3 + $0x150] sm:$0xf] %vm3322, %v3283
        %3352 = vst.msk [vmem:[#allocation3 + $0x15c] sm:$0xf] %vm3322, %v3285
        %3353 = vst.msk [vmem:[#allocation3 + $0x168] sm:$0xf] %vm3322, %v3287
        %3354 = vst.msk [vmem:[#allocation3 + $0x174] sm:$0xf] %vm3322, %v3289
        %v3355 = vld [vmem:[#allocation2 + $0xc] sm:$0x8]
        %v3356 = vld [vmem:[#allocation2 + $0x10] sm:$0xf]
        %v3357 = vld [vmem:[#allocation2 + $0x14] sm:$0xf]
        %v3358 = vld [vmem:[#allocation2 + $0x18] sm:$0xf]
        %v3359 = vld [vmem:[#allocation2 + $0x1c] sm:$0xf]
        %v3360 = vld [vmem:[#allocation2 + $0x20] sm:$0xf]
        %v3361 = vld [vmem:[#allocation2 + $0x24] sm:$0xf]
        %v3362 = vld [vmem:[#allocation2 + $0x28] sm:$0xf]
        %v3363 = vld [vmem:[#allocation2 + $0x2c] sm:$0xf]
        %v3364 = vld [vmem:[#allocation2 + $0x30] sm:$0xf]
        %v3365 = vld [vmem:[#allocation2 + $0x34] sm:$0xf]
        %v3366 = vld [vmem:[#allocation2 + $0x38] sm:$0xf]
        %v3367 = vld [vmem:[#allocation2 + $0x3c] sm:$0xf]
        %v3368 = vld [vmem:[#allocation2 + $0x40] sm:$0xf]
        %v3369 = vld [vmem:[#allocation2 + $0x44] sm:$0xf]
        %v3370 = vld [vmem:[#allocation2 + $0x48] sm:$0xf]
        %v3371 = vld [vmem:[#allocation2 + $0x4c] sm:$0xf]
        %v3372 = vld [vmem:[#allocation2 + $0x50] sm:$0xf]
        %v3373 = vld [vmem:[#allocation2 + $0x54] sm:$0xf]
        %v3374 = vld [vmem:[#allocation2 + $0x58] sm:$0xf]
        %v3375 = vld [vmem:[#allocation2 + $0x5c] sm:$0xf]
        %v3376 = vld [vmem:[#allocation2 + $0x60] sm:$0xf]
        %v3377 = vld [vmem:[#allocation2 + $0x64] sm:$0xf]
        %v3378 = vld [vmem:[#allocation2 + $0x68] sm:$0xf]
        %v3379 = vld [vmem:[#allocation2 + $0x6c] sm:$0xf]
        %v3380 = vld [vmem:[#allocation2 + $0x70] sm:$0xf]
        %v3381 = vld [vmem:[#allocation2 + $0x74] sm:$0xf]
        %v3382 = vld [vmem:[#allocation2 + $0x78] sm:$0xf]
        %v3383 = vld [vmem:[#allocation2 + $0x7c] sm:$0xf]
        %v3384 = vld [vmem:[#allocation2 + $0x80] sm:$0xf]
        %v3385 = vld [vmem:[#allocation2 + $0x84] sm:$0xf]
        %v3386 = vld [vmem:[#allocation2 + $0x88] sm:$0xf]
        %v3387 = vld [vmem:[#allocation2 + $0x8c] sm:$0xf]
        %v3388 = vmul.bf16 %v3355, %v1342
        %v3389 = vmul.bf16 %v3356, %v1352
        %v3390 = vmul.bf16 %v3357, %v1362
        %v3391 = vmul.bf16 %v3358, %v1372
        %v3392 = vmul.bf16 %v3359, %v1382
        %v3393 = vmul.bf16 %v3360, %v1392
        %v3394 = vmul.bf16 %v3361, %v1402
        %v3395 = vmul.bf16 %v3362, %v1412
        %v3396 = vmul.bf16 %v3363, %v1422
        %v3397 = vmul.bf16 %v3364, %v1432
        %v3398 = vmul.bf16 %v3365, %v1442
        %v3399 = vmul.bf16 %v3366, %v1452
        %v3400 = vmul.bf16 %v3367, %v1462
        %v3401 = vmul.bf16 %v3368, %v1472
        %v3402 = vmul.bf16 %v3369, %v1482
        %v3403 = vmul.bf16 %v3370, %v1492
        %v3404 = vmul.bf16 %v3371, %v1502
        %v3405 = vmul.bf16 %v3372, %v1512
        %v3406 = vmul.bf16 %v3373, %v1522
        %v3407 = vmul.bf16 %v3374, %v1532
        %v3408 = vmul.bf16 %v3375, %v1542
        %v3409 = vmul.bf16 %v3376, %v1552
        %v3410 = vmul.bf16 %v3377, %v1562
        %v3411 = vmul.bf16 %v3378, %v1572
        %v3412 = vmul.bf16 %v3379, %v1582
        %v3413 = vmul.bf16 %v3380, %v1592
        %v3414 = vmul.bf16 %v3381, %v1602
        %v3415 = vmul.bf16 %v3382, %v1612
        %v3416 = vmul.bf16 %v3383, %v1622
        %v3417 = vmul.bf16 %v3384, %v1632
        %v3418 = vmul.bf16 %v3385, %v1642
        %v3419 = vmul.bf16 %v3386, %v1652
        %v3420 = vmul.bf16 %v3387, %v1657
        %v3422 = vshrl.u32 %v3388, 16
        %v3424 = vrot.slane %v3422, 7
        %v3425 = vrot.slane %v3424, 4
        %v3427 = vshrl.u32 %v3389, 16
        %v3429 = vrot.slane %v3427, 7
        %v3430 = vshll.u32 %v3389, 16
        %v3432 = vor.u32 %v3429, %v3430
        %v3433 = vsel %vm1726, %v3425, %v3432
        %v3434 = vrot.slane %v3429, 4
        %v3436 = vshrl.u32 %v3390, 16
        %v3438 = vrot.slane %v3436, 7
        %v3439 = vshll.u32 %v3390, 16
        %v3441 = vor.u32 %v3438, %v3439
        %v3442 = vsel %vm1726, %v3434, %v3441
        %v3443 = vrot.slane %v3438, 4
        %v3445 = vshrl.u32 %v3391, 16
        %v3447 = vrot.slane %v3445, 7
        %v3448 = vshll.u32 %v3391, 16
        %v3450 = vor.u32 %v3447, %v3448
        %v3451 = vsel %vm1726, %v3443, %v3450
        %v3452 = vrot.slane %v3447, 4
        %v3454 = vshrl.u32 %v3392, 16
        %v3456 = vrot.slane %v3454, 7
        %v3457 = vshll.u32 %v3392, 16
        %v3459 = vor.u32 %v3456, %v3457
        %v3460 = vsel %vm1726, %v3452, %v3459
        %v3461 = vrot.slane %v3456, 4
        %v3463 = vshrl.u32 %v3393, 16
        %v3465 = vrot.slane %v3463, 7
        %v3466 = vshll.u32 %v3393, 16
        %v3468 = vor.u32 %v3465, %v3466
        %v3469 = vsel %vm1726, %v3461, %v3468
        %v3470 = vrot.slane %v3465, 4
        %v3472 = vshrl.u32 %v3394, 16
        %v3474 = vrot.slane %v3472, 7
        %v3475 = vshll.u32 %v3394, 16
        %v3477 = vor.u32 %v3474, %v3475
        %v3478 = vsel %vm1726, %v3470, %v3477
        %v3479 = vrot.slane %v3474, 4
        %v3481 = vshrl.u32 %v3395, 16
        %v3483 = vrot.slane %v3481, 7
        %v3484 = vshll.u32 %v3395, 16
        %v3486 = vor.u32 %v3483, %v3484
        %v3487 = vsel %vm1726, %v3479, %v3486
        %v3488 = vrot.slane %v3483, 4
        %v3490 = vshrl.u32 %v3396, 16
        %v3492 = vrot.slane %v3490, 7
        %v3493 = vshll.u32 %v3396, 16
        %v3495 = vor.u32 %v3492, %v3493
        %v3496 = vsel %vm1726, %v3488, %v3495
        %v3497 = vrot.slane %v3492, 4
        %v3499 = vshrl.u32 %v3397, 16
        %v3501 = vrot.slane %v3499, 7
        %v3502 = vshll.u32 %v3397, 16
        %v3504 = vor.u32 %v3501, %v3502
        %v3505 = vsel %vm1726, %v3497, %v3504
        %v3506 = vrot.slane %v3501, 4
        %v3508 = vshrl.u32 %v3398, 16
        %v3510 = vrot.slane %v3508, 7
        %v3511 = vshll.u32 %v3398, 16
        %v3513 = vor.u32 %v3510, %v3511
        %v3514 = vsel %vm1726, %v3506, %v3513
        %v3515 = vrot.slane %v3510, 4
        %v3517 = vshrl.u32 %v3399, 16
        %v3519 = vrot.slane %v3517, 7
        %v3520 = vshll.u32 %v3399, 16
        %v3522 = vor.u32 %v3519, %v3520
        %v3523 = vsel %vm1726, %v3515, %v3522
        %v3524 = vrot.slane %v3519, 4
        %v3526 = vshrl.u32 %v3400, 16
        %v3528 = vrot.slane %v3526, 7
        %v3529 = vshll.u32 %v3400, 16
        %v3531 = vor.u32 %v3528, %v3529
        %v3532 = vsel %vm1726, %v3524, %v3531
        %v3533 = vrot.slane %v3528, 4
        %v3535 = vshrl.u32 %v3401, 16
        %v3537 = vrot.slane %v3535, 7
        %v3538 = vshll.u32 %v3401, 16
        %v3540 = vor.u32 %v3537, %v3538
        %v3541 = vsel %vm1726, %v3533, %v3540
        %v3542 = vrot.slane %v3537, 4
        %v3544 = vshrl.u32 %v3402, 16
        %v3546 = vrot.slane %v3544, 7
        %v3547 = vshll.u32 %v3402, 16
        %v3549 = vor.u32 %v3546, %v3547
        %v3550 = vsel %vm1726, %v3542, %v3549
        %v3551 = vrot.slane %v3546, 4
        %v3553 = vshrl.u32 %v3403, 16
        %v3555 = vrot.slane %v3553, 7
        %v3556 = vshll.u32 %v3403, 16
        %v3558 = vor.u32 %v3555, %v3556
        %v3559 = vsel %vm1726, %v3551, %v3558
        %v3560 = vrot.slane %v3555, 4
        %v3562 = vshrl.u32 %v3404, 16
        %v3564 = vrot.slane %v3562, 7
        %v3565 = vshll.u32 %v3404, 16
        %v3567 = vor.u32 %v3564, %v3565
        %v3568 = vsel %vm1726, %v3560, %v3567
        %v3569 = vrot.slane %v3564, 4
        %v3571 = vshrl.u32 %v3405, 16
        %v3573 = vrot.slane %v3571, 7
        %v3574 = vshll.u32 %v3405, 16
        %v3576 = vor.u32 %v3573, %v3574
        %v3577 = vsel %vm1726, %v3569, %v3576
        %v3578 = vrot.slane %v3573, 4
        %v3580 = vshrl.u32 %v3406, 16
        %v3582 = vrot.slane %v3580, 7
        %v3583 = vshll.u32 %v3406, 16
        %v3585 = vor.u32 %v3582, %v3583
        %v3586 = vsel %vm1726, %v3578, %v3585
        %v3587 = vrot.slane %v3582, 4
        %v3589 = vshrl.u32 %v3407, 16
        %v3591 = vrot.slane %v3589, 7
        %v3592 = vshll.u32 %v3407, 16
        %v3594 = vor.u32 %v3591, %v3592
        %v3595 = vsel %vm1726, %v3587, %v3594
        %v3596 = vrot.slane %v3591, 4
        %v3598 = vshrl.u32 %v3408, 16
        %v3600 = vrot.slane %v3598, 7
        %v3601 = vshll.u32 %v3408, 16
        %v3603 = vor.u32 %v3600, %v3601
        %v3604 = vsel %vm1726, %v3596, %v3603
        %v3605 = vrot.slane %v3600, 4
        %v3607 = vshrl.u32 %v3409, 16
        %v3609 = vrot.slane %v3607, 7
        %v3610 = vshll.u32 %v3409, 16
        %v3612 = vor.u32 %v3609, %v3610
        %v3613 = vsel %vm1726, %v3605, %v3612
        %v3614 = vrot.slane %v3609, 4
        %v3616 = vshrl.u32 %v3410, 16
        %v3618 = vrot.slane %v3616, 7
        %v3619 = vshll.u32 %v3410, 16
        %v3621 = vor.u32 %v3618, %v3619
        %v3622 = vsel %vm1726, %v3614, %v3621
        %v3623 = vrot.slane %v3618, 4
        %v3625 = vshrl.u32 %v3411, 16
        %v3627 = vrot.slane %v3625, 7
        %v3628 = vshll.u32 %v3411, 16
        %v3630 = vor.u32 %v3627, %v3628
        %v3631 = vsel %vm1726, %v3623, %v3630
        %v3632 = vrot.slane %v3627, 4
        %v3634 = vshrl.u32 %v3412, 16
        %v3636 = vrot.slane %v3634, 7
        %v3637 = vshll.u32 %v3412, 16
        %v3639 = vor.u32 %v3636, %v3637
        %v3640 = vsel %vm1726, %v3632, %v3639
        %v3641 = vrot.slane %v3636, 4
        %v3643 = vshrl.u32 %v3413, 16
        %v3645 = vrot.slane %v3643, 7
        %v3646 = vshll.u32 %v3413, 16
        %v3648 = vor.u32 %v3645, %v3646
        %v3649 = vsel %vm1726, %v3641, %v3648
        %v3650 = vrot.slane %v3645, 4
        %v3652 = vshrl.u32 %v3414, 16
        %v3654 = vrot.slane %v3652, 7
        %v3655 = vshll.u32 %v3414, 16
        %v3657 = vor.u32 %v3654, %v3655
        %v3658 = vsel %vm1726, %v3650, %v3657
        %v3659 = vrot.slane %v3654, 4
        %v3661 = vshrl.u32 %v3415, 16
        %v3663 = vrot.slane %v3661, 7
        %v3664 = vshll.u32 %v3415, 16
        %v3666 = vor.u32 %v3663, %v3664
        %v3667 = vsel %vm1726, %v3659, %v3666
        %v3668 = vrot.slane %v3663, 4
        %v3670 = vshrl.u32 %v3416, 16
        %v3672 = vrot.slane %v3670, 7
        %v3673 = vshll.u32 %v3416, 16
        %v3675 = vor.u32 %v3672, %v3673
        %v3676 = vsel %vm1726, %v3668, %v3675
        %v3677 = vrot.slane %v3672, 4
        %v3679 = vshrl.u32 %v3417, 16
        %v3681 = vrot.slane %v3679, 7
        %v3682 = vshll.u32 %v3417, 16
        %v3684 = vor.u32 %v3681, %v3682
        %v3685 = vsel %vm1726, %v3677, %v3684
        %v3686 = vrot.slane %v3681, 4
        %v3688 = vshrl.u32 %v3418, 16
        %v3690 = vrot.slane %v3688, 7
        %v3691 = vshll.u32 %v3418, 16
        %v3693 = vor.u32 %v3690, %v3691
        %v3694 = vsel %vm1726, %v3686, %v3693
        %v3695 = vrot.slane %v3690, 4
        %v3697 = vshrl.u32 %v3419, 16
        %v3699 = vrot.slane %v3697, 7
        %v3700 = vshll.u32 %v3419, 16
        %v3702 = vor.u32 %v3699, %v3700
        %v3703 = vsel %vm1726, %v3695, %v3702
        %v3704 = vrot.slane %v3699, 4
        %v3706 = vshrl.u32 %v3420, 16
        %v3708 = vrot.slane %v3706, 7
        %v3709 = vshll.u32 %v3420, 16
        %v3711 = vor.u32 %v3708, %v3709
        %v3712 = vsel %vm1726, %v3704, %v3711
        %3713 = vrot.lane.b32.xlu0 %v3433, 96
        %v3714 = vpop.permute.xlu0 %3713
        %3715 = vrot.lane.b32.xlu0 %v3442, 96
        %v3716 = vpop.permute.xlu0 %3715
        %3717 = vrot.lane.b32.xlu0 %v3451, 96
        %v3718 = vpop.permute.xlu0 %3717
        %3719 = vrot.lane.b32.xlu0 %v3460, 96
        %v3720 = vpop.permute.xlu0 %3719
        %3721 = vrot.lane.b32.xlu0 %v3469, 96
        %v3722 = vpop.permute.xlu0 %3721
        %3723 = vrot.lane.b32.xlu0 %v3478, 96
        %v3724 = vpop.permute.xlu0 %3723
        %3725 = vrot.lane.b32.xlu0 %v3487, 96
        %v3726 = vpop.permute.xlu0 %3725
        %3727 = vrot.lane.b32.xlu0 %v3496, 96
        %v3728 = vpop.permute.xlu0 %3727
        %3729 = vrot.lane.b32.xlu0 %v3505, 96
        %v3730 = vpop.permute.xlu0 %3729
        %3731 = vrot.lane.b32.xlu0 %v3514, 96
        %v3732 = vpop.permute.xlu0 %3731
        %3733 = vrot.lane.b32.xlu0 %v3523, 96
        %v3734 = vpop.permute.xlu0 %3733
        %3735 = vrot.lane.b32.xlu0 %v3532, 96
        %v3736 = vpop.permute.xlu0 %3735
        %3737 = vrot.lane.b32.xlu0 %v3541, 96
        %v3738 = vpop.permute.xlu0 %3737
        %3739 = vrot.lane.b32.xlu0 %v3550, 96
        %v3740 = vpop.permute.xlu0 %3739
        %3741 = vrot.lane.b32.xlu0 %v3559, 96
        %v3742 = vpop.permute.xlu0 %3741
        %3743 = vrot.lane.b32.xlu0 %v3568, 96
        %v3744 = vpop.permute.xlu0 %3743
        %3745 = vrot.lane.b32.xlu0 %v3577, 96
        %v3746 = vpop.permute.xlu0 %3745
        %3747 = vrot.lane.b32.xlu0 %v3586, 96
        %v3748 = vpop.permute.xlu0 %3747
        %3749 = vrot.lane.b32.xlu0 %v3595, 96
        %v3750 = vpop.permute.xlu0 %3749
        %3751 = vrot.lane.b32.xlu0 %v3604, 96
        %v3752 = vpop.permute.xlu0 %3751
        %3753 = vrot.lane.b32.xlu0 %v3613, 96
        %v3754 = vpop.permute.xlu0 %3753
        %3755 = vrot.lane.b32.xlu0 %v3622, 96
        %v3756 = vpop.permute.xlu0 %3755
        %3757 = vrot.lane.b32.xlu0 %v3631, 96
        %v3758 = vpop.permute.xlu0 %3757
        %3759 = vrot.lane.b32.xlu0 %v3640, 96
        %v3760 = vpop.permute.xlu0 %3759
        %3761 = vrot.lane.b32.xlu0 %v3649, 96
        %v3762 = vpop.permute.xlu0 %3761
        %3763 = vrot.lane.b32.xlu0 %v3658, 96
        %v3764 = vpop.permute.xlu0 %3763
        %3765 = vrot.lane.b32.xlu0 %v3667, 96
        %v3766 = vpop.permute.xlu0 %3765
        %3767 = vrot.lane.b32.xlu0 %v3676, 96
        %v3768 = vpop.permute.xlu0 %3767
        %3769 = vrot.lane.b32.xlu0 %v3685, 96
        %v3770 = vpop.permute.xlu0 %3769
        %3771 = vrot.lane.b32.xlu0 %v3694, 96
        %v3772 = vpop.permute.xlu0 %3771
        %3773 = vrot.lane.b32.xlu0 %v3703, 96
        %v3774 = vpop.permute.xlu0 %3773
        %3775 = vrot.lane.b32.xlu0 %v3712, 96
        %v3776 = vpop.permute.xlu0 %3775
        %vm3809 = vcmask 1044224
        %3810 = vst.msk [vmem:[#allocation3] sm:$0xf] %vm3809, %v3714
        %3811 = vst.msk [vmem:[#allocation3 + $0xc] sm:$0xf] %vm3809, %v3716
        %3812 = vst.msk [vmem:[#allocation3 + $0x18] sm:$0xf] %vm3809, %v3718
        %3813 = vst.msk [vmem:[#allocation3 + $0x24] sm:$0xf] %vm3809, %v3720
        %3814 = vst.msk [vmem:[#allocation3 + $0x30] sm:$0xf] %vm3809, %v3722
        %3815 = vst.msk [vmem:[#allocation3 + $0x3c] sm:$0xf] %vm3809, %v3724
        %3816 = vst.msk [vmem:[#allocation3 + $0x48] sm:$0xf] %vm3809, %v3726
        %3817 = vst.msk [vmem:[#allocation3 + $0x54] sm:$0xf] %vm3809, %v3728
        %3818 = vst.msk [vmem:[#allocation3 + $0x60] sm:$0xf] %vm3809, %v3730
        %3819 = vst.msk [vmem:[#allocation3 + $0x6c] sm:$0xf] %vm3809, %v3732
        %3820 = vst.msk [vmem:[#allocation3 + $0x78] sm:$0xf] %vm3809, %v3734
        %3821 = vst.msk [vmem:[#allocation3 + $0x84] sm:$0xf] %vm3809, %v3736
        %3822 = vst.msk [vmem:[#allocation3 + $0x90] sm:$0xf] %vm3809, %v3738
        %3823 = vst.msk [vmem:[#allocation3 + $0x9c] sm:$0xf] %vm3809, %v3740
        %3824 = vst.msk [vmem:[#allocation3 + $0xa8] sm:$0xf] %vm3809, %v3742
        %3825 = vst.msk [vmem:[#allocation3 + $0xb4] sm:$0xf] %vm3809, %v3744
        %3826 = vst.msk [vmem:[#allocation3 + $0xc0] sm:$0xf] %vm3809, %v3746
        %3827 = vst.msk [vmem:[#allocation3 + $0xcc] sm:$0xf] %vm3809, %v3748
        %3828 = vst.msk [vmem:[#allocation3 + $0xd8] sm:$0xf] %vm3809, %v3750
        %3829 = vst.msk [vmem:[#allocation3 + $0xe4] sm:$0xf] %vm3809, %v3752
        %3830 = vst.msk [vmem:[#allocation3 + $0xf0] sm:$0xf] %vm3809, %v3754
        %3831 = vst.msk [vmem:[#allocation3 + $0xfc] sm:$0xf] %vm3809, %v3756
        %3832 = vst.msk [vmem:[#allocation3 + $0x108] sm:$0xf] %vm3809, %v3758
        %3833 = vst.msk [vmem:[#allocation3 + $0x114] sm:$0xf] %vm3809, %v3760
        %3834 = vst.msk [vmem:[#allocation3 + $0x120] sm:$0xf] %vm3809, %v3762
        %3835 = vst.msk [vmem:[#allocation3 + $0x12c] sm:$0xf] %vm3809, %v3764
        %3836 = vst.msk [vmem:[#allocation3 + $0x138] sm:$0xf] %vm3809, %v3766
        %3837 = vst.msk [vmem:[#allocation3 + $0x144] sm:$0xf] %vm3809, %v3768
        %3838 = vst.msk [vmem:[#allocation3 + $0x150] sm:$0xf] %vm3809, %v3770
        %3839 = vst.msk [vmem:[#allocation3 + $0x15c] sm:$0xf] %vm3809, %v3772
        %3840 = vst.msk [vmem:[#allocation3 + $0x168] sm:$0xf] %vm3809, %v3774
        %3841 = vst.msk [vmem:[#allocation3 + $0x174] sm:$0xf] %vm3809, %v3776
        %v3842 = vld [vmem:[#allocation2 + $0x10] sm:$0xf]
        %v3843 = vld [vmem:[#allocation2 + $0x14] sm:$0xf]
        %v3844 = vld [vmem:[#allocation2 + $0x18] sm:$0xf]
        %v3845 = vld [vmem:[#allocation2 + $0x1c] sm:$0xf]
        %v3846 = vld [vmem:[#allocation2 + $0x20] sm:$0xf]
        %v3847 = vld [vmem:[#allocation2 + $0x24] sm:$0xf]
        %v3848 = vld [vmem:[#allocation2 + $0x28] sm:$0xf]
        %v3849 = vld [vmem:[#allocation2 + $0x2c] sm:$0xf]
        %v3850 = vld [vmem:[#allocation2 + $0x30] sm:$0xf]
        %v3851 = vld [vmem:[#allocation2 + $0x34] sm:$0xf]
        %v3852 = vld [vmem:[#allocation2 + $0x38] sm:$0xf]
        %v3853 = vld [vmem:[#allocation2 + $0x3c] sm:$0xf]
        %v3854 = vld [vmem:[#allocation2 + $0x40] sm:$0xf]
        %v3855 = vld [vmem:[#allocation2 + $0x44] sm:$0xf]
        %v3856 = vld [vmem:[#allocation2 + $0x48] sm:$0xf]
        %v3857 = vld [vmem:[#allocation2 + $0x4c] sm:$0xf]
        %v3858 = vld [vmem:[#allocation2 + $0x50] sm:$0xf]
        %v3859 = vld [vmem:[#allocation2 + $0x54] sm:$0xf]
        %v3860 = vld [vmem:[#allocation2 + $0x58] sm:$0xf]
        %v3861 = vld [vmem:[#allocation2 + $0x5c] sm:$0xf]
        %v3862 = vld [vmem:[#allocation2 + $0x60] sm:$0xf]
        %v3863 = vld [vmem:[#allocation2 + $0x64] sm:$0xf]
        %v3864 = vld [vmem:[#allocation2 + $0x68] sm:$0xf]
        %v3865 = vld [vmem:[#allocation2 + $0x6c] sm:$0xf]
        %v3866 = vld [vmem:[#allocation2 + $0x70] sm:$0xf]
        %v3867 = vld [vmem:[#allocation2 + $0x74] sm:$0xf]
        %v3868 = vld [vmem:[#allocation2 + $0x78] sm:$0xf]
        %v3869 = vld [vmem:[#allocation2 + $0x7c] sm:$0xf]
        %v3870 = vld [vmem:[#allocation2 + $0x80] sm:$0xf]
        %v3871 = vld [vmem:[#allocation2 + $0x84] sm:$0xf]
        %v3872 = vld [vmem:[#allocation2 + $0x88] sm:$0xf]
        %v3873 = vld [vmem:[#allocation2 + $0x8c] sm:$0xf]
        %3874 = vst.msk [vmem:[#allocation3 + $0x4] sm:$0xf] %vm752, %v3842
        %3875 = vst.msk [vmem:[#allocation3 + $0x10] sm:$0xf] %vm752, %v3843
        %3876 = vst.msk [vmem:[#allocation3 + $0x1c] sm:$0xf] %vm752, %v3844
        %3877 = vst.msk [vmem:[#allocation3 + $0x28] sm:$0xf] %vm752, %v3845
        %3878 = vst.msk [vmem:[#allocation3 + $0x34] sm:$0xf] %vm752, %v3846
        %3879 = vst.msk [vmem:[#allocation3 + $0x40] sm:$0xf] %vm752, %v3847
        %3880 = vst.msk [vmem:[#allocation3 + $0x4c] sm:$0xf] %vm752, %v3848
        %3881 = vst.msk [vmem:[#allocation3 + $0x58] sm:$0xf] %vm752, %v3849
        %3882 = vst.msk [vmem:[#allocation3 + $0x64] sm:$0xf] %vm752, %v3850
        %3883 = vst.msk [vmem:[#allocation3 + $0x70] sm:$0xf] %vm752, %v3851
        %3884 = vst.msk [vmem:[#allocation3 + $0x7c] sm:$0xf] %vm752, %v3852
        %3885 = vst.msk [vmem:[#allocation3 + $0x88] sm:$0xf] %vm752, %v3853
        %3886 = vst.msk [vmem:[#allocation3 + $0x94] sm:$0xf] %vm752, %v3854
        %3887 = vst.msk [vmem:[#allocation3 + $0xa0] sm:$0xf] %vm752, %v3855
        %3888 = vst.msk [vmem:[#allocation3 + $0xac] sm:$0xf] %vm752, %v3856
        %3889 = vst.msk [vmem:[#allocation3 + $0xb8] sm:$0xf] %vm752, %v3857
        %3890 = vst.msk [vmem:[#allocation3 + $0xc4] sm:$0xf] %vm752, %v3858
        %3891 = vst.msk [vmem:[#allocation3 + $0xd0] sm:$0xf] %vm752, %v3859
        %3892 = vst.msk [vmem:[#allocation3 + $0xdc] sm:$0xf] %vm752, %v3860
        %3893 = vst.msk [vmem:[#allocation3 + $0xe8] sm:$0xf] %vm752, %v3861
        %3894 = vst.msk [vmem:[#allocation3 + $0xf4] sm:$0xf] %vm752, %v3862
        %3895 = vst.msk [vmem:[#allocation3 + $0x100] sm:$0xf] %vm752, %v3863
        %3896 = vst.msk [vmem:[#allocation3 + $0x10c] sm:$0xf] %vm752, %v3864
        %3897 = vst.msk [vmem:[#allocation3 + $0x118] sm:$0xf] %vm752, %v3865
        %3898 = vst.msk [vmem:[#allocation3 + $0x124] sm:$0xf] %vm752, %v3866
        %3899 = vst.msk [vmem:[#allocation3 + $0x130] sm:$0xf] %vm752, %v3867
        %3900 = vst.msk [vmem:[#allocation3 + $0x13c] sm:$0xf] %vm752, %v3868
        %3901 = vst.msk [vmem:[#allocation3 + $0x148] sm:$0xf] %vm752, %v3869
        %3902 = vst.msk [vmem:[#allocation3 + $0x154] sm:$0xf] %vm752, %v3870
        %3903 = vst.msk [vmem:[#allocation3 + $0x160] sm:$0xf] %vm752, %v3871
        %3904 = vst.msk [vmem:[#allocation3 + $0x16c] sm:$0xf] %vm752, %v3872
        %3905 = vst.msk [vmem:[#allocation3 + $0x178] sm:$0xf] %vm752, %v3873
        %v3906 = vld [vmem:[#allocation2 + $0x10] sm:$0xf]
        %v3907 = vld [vmem:[#allocation2 + $0x14] sm:$0xf]
        %v3908 = vld [vmem:[#allocation2 + $0x18] sm:$0xf]
        %v3909 = vld [vmem:[#allocation2 + $0x1c] sm:$0xf]
        %v3910 = vld [vmem:[#allocation2 + $0x20] sm:$0xf]
        %v3911 = vld [vmem:[#allocation2 + $0x24] sm:$0xf]
        %v3912 = vld [vmem:[#allocation2 + $0x28] sm:$0xf]
        %v3913 = vld [vmem:[#allocation2 + $0x2c] sm:$0xf]
        %v3914 = vld [vmem:[#allocation2 + $0x30] sm:$0xf]
        %v3915 = vld [vmem:[#allocation2 + $0x34] sm:$0xf]
        %v3916 = vld [vmem:[#allocation2 + $0x38] sm:$0xf]
        %v3917 = vld [vmem:[#allocation2 + $0x3c] sm:$0xf]
        %v3918 = vld [vmem:[#allocation2 + $0x40] sm:$0xf]
        %v3919 = vld [vmem:[#allocation2 + $0x44] sm:$0xf]
        %v3920 = vld [vmem:[#allocation2 + $0x48] sm:$0xf]
        %v3921 = vld [vmem:[#allocation2 + $0x4c] sm:$0xf]
        %v3922 = vld [vmem:[#allocation2 + $0x50] sm:$0xf]
        %v3923 = vld [vmem:[#allocation2 + $0x54] sm:$0xf]
        %v3924 = vld [vmem:[#allocation2 + $0x58] sm:$0xf]
        %v3925 = vld [vmem:[#allocation2 + $0x5c] sm:$0xf]
        %v3926 = vld [vmem:[#allocation2 + $0x60] sm:$0xf]
        %v3927 = vld [vmem:[#allocation2 + $0x64] sm:$0xf]
        %v3928 = vld [vmem:[#allocation2 + $0x68] sm:$0xf]
        %v3929 = vld [vmem:[#allocation2 + $0x6c] sm:$0xf]
        %v3930 = vld [vmem:[#allocation2 + $0x70] sm:$0xf]
        %v3931 = vld [vmem:[#allocation2 + $0x74] sm:$0xf]
        %v3932 = vld [vmem:[#allocation2 + $0x78] sm:$0xf]
        %v3933 = vld [vmem:[#allocation2 + $0x7c] sm:$0xf]
        %v3934 = vld [vmem:[#allocation2 + $0x80] sm:$0xf]
        %v3935 = vld [vmem:[#allocation2 + $0x84] sm:$0xf]
        %v3936 = vld [vmem:[#allocation2 + $0x88] sm:$0xf]
        %v3937 = vld [vmem:[#allocation2 + $0x8c] sm:$0xf]
        %v3938 = vld [vmem:[#allocation2 + $0x90] sm:$0x1]
        %v3939 = vmul.bf16 %v3906, %v2555
        %v3940 = vmul.bf16 %v3907, %v2564
        %v3941 = vmul.bf16 %v3908, %v2573
        %v3942 = vmul.bf16 %v3909, %v2582
        %v3943 = vmul.bf16 %v3910, %v2591
        %v3944 = vmul.bf16 %v3911, %v2600
        %v3945 = vmul.bf16 %v3912, %v2609
        %v3946 = vmul.bf16 %v3913, %v2618
        %v3947 = vmul.bf16 %v3914, %v2627
        %v3948 = vmul.bf16 %v3915, %v2636
        %v3949 = vmul.bf16 %v3916, %v2645
        %v3950 = vmul.bf16 %v3917, %v2654
        %v3951 = vmul.bf16 %v3918, %v2663
        %v3952 = vmul.bf16 %v3919, %v2672
        %v3953 = vmul.bf16 %v3920, %v2681
        %v3954 = vmul.bf16 %v3921, %v2690
        %v3955 = vmul.bf16 %v3922, %v2699
        %v3956 = vmul.bf16 %v3923, %v2708
        %v3957 = vmul.bf16 %v3924, %v2717
        %v3958 = vmul.bf16 %v3925, %v2726
        %v3959 = vmul.bf16 %v3926, %v2735
        %v3960 = vmul.bf16 %v3927, %v2744
        %v3961 = vmul.bf16 %v3928, %v2753
        %v3962 = vmul.bf16 %v3929, %v2762
        %v3963 = vmul.bf16 %v3930, %v2771
        %v3964 = vmul.bf16 %v3931, %v2780
        %v3965 = vmul.bf16 %v3932, %v2789
        %v3966 = vmul.bf16 %v3933, %v2798
        %v3967 = vmul.bf16 %v3934, %v2807
        %v3968 = vmul.bf16 %v3935, %v2816
        %v3969 = vmul.bf16 %v3936, %v2825
        %v3970 = vmul.bf16 %v3937, %v2834
        %v3971 = vmul.bf16 %v3938, %v2835
        %v3973 = vshrl.u32 %v3939, 16
        %v3975 = vrot.slane %v3973, 4
        %v3976 = vshll.u32 %v3939, 16
        %v3978 = vrot.slane %v3976, 5
        %v3979 = vor.u32 %v3975, %v3978
        %v3980 = vrot.slane %v3979, 4
        %v3982 = vshll.u32 %v3940, 16
        %v3984 = vrot.slane %v3982, 5
        %v3985 = vsel %vm1338, %v3980, %v3984
        %v3986 = vshrl.u32 %v3940, 16
        %v3988 = vrot.slane %v3986, 4
        %v3989 = vor.u32 %v3988, %v3984
        %v3990 = vrot.slane %v3989, 4
        %v3992 = vshll.u32 %v3941, 16
        %v3994 = vrot.slane %v3992, 5
        %v3995 = vsel %vm1338, %v3990, %v3994
        %v3996 = vshrl.u32 %v3941, 16
        %v3998 = vrot.slane %v3996, 4
        %v3999 = vor.u32 %v3998, %v3994
        %v4000 = vrot.slane %v3999, 4
        %v4002 = vshll.u32 %v3942, 16
        %v4004 = vrot.slane %v4002, 5
        %v4005 = vsel %vm1338, %v4000, %v4004
        %v4006 = vshrl.u32 %v3942, 16
        %v4008 = vrot.slane %v4006, 4
        %v4009 = vor.u32 %v4008, %v4004
        %v4010 = vrot.slane %v4009, 4
        %v4012 = vshll.u32 %v3943, 16
        %v4014 = vrot.slane %v4012, 5
        %v4015 = vsel %vm1338, %v4010, %v4014
        %v4016 = vshrl.u32 %v3943, 16
        %v4018 = vrot.slane %v4016, 4
        %v4019 = vor.u32 %v4018, %v4014
        %v4020 = vrot.slane %v4019, 4
        %v4022 = vshll.u32 %v3944, 16
        %v4024 = vrot.slane %v4022, 5
        %v4025 = vsel %vm1338, %v4020, %v4024
        %v4026 = vshrl.u32 %v3944, 16
        %v4028 = vrot.slane %v4026, 4
        %v4029 = vor.u32 %v4028, %v4024
        %v4030 = vrot.slane %v4029, 4
        %v4032 = vshll.u32 %v3945, 16
        %v4034 = vrot.slane %v4032, 5
        %v4035 = vsel %vm1338, %v4030, %v4034
        %v4036 = vshrl.u32 %v3945, 16
        %v4038 = vrot.slane %v4036, 4
        %v4039 = vor.u32 %v4038, %v4034
        %v4040 = vrot.slane %v4039, 4
        %v4042 = vshll.u32 %v3946, 16
        %v4044 = vrot.slane %v4042, 5
        %v4045 = vsel %vm1338, %v4040, %v4044
        %v4046 = vshrl.u32 %v3946, 16
        %v4048 = vrot.slane %v4046, 4
        %v4049 = vor.u32 %v4048, %v4044
        %v4050 = vrot.slane %v4049, 4
        %v4052 = vshll.u32 %v3947, 16
        %v4054 = vrot.slane %v4052, 5
        %v4055 = vsel %vm1338, %v4050, %v4054
        %v4056 = vshrl.u32 %v3947, 16
        %v4058 = vrot.slane %v4056, 4
        %v4059 = vor.u32 %v4058, %v4054
        %v4060 = vrot.slane %v4059, 4
        %v4062 = vshll.u32 %v3948, 16
        %v4064 = vrot.slane %v4062, 5
        %v4065 = vsel %vm1338, %v4060, %v4064
        %v4066 = vshrl.u32 %v3948, 16
        %v4068 = vrot.slane %v4066, 4
        %v4069 = vor.u32 %v4068, %v4064
        %v4070 = vrot.slane %v4069, 4
        %v4072 = vshll.u32 %v3949, 16
        %v4074 = vrot.slane %v4072, 5
        %v4075 = vsel %vm1338, %v4070, %v4074
        %v4076 = vshrl.u32 %v3949, 16
        %v4078 = vrot.slane %v4076, 4
        %v4079 = vor.u32 %v4078, %v4074
        %v4080 = vrot.slane %v4079, 4
        %v4082 = vshll.u32 %v3950, 16
        %v4084 = vrot.slane %v4082, 5
        %v4085 = vsel %vm1338, %v4080, %v4084
        %v4086 = vshrl.u32 %v3950, 16
        %v4088 = vrot.slane %v4086, 4
        %v4089 = vor.u32 %v4088, %v4084
        %v4090 = vrot.slane %v4089, 4
        %v4092 = vshll.u32 %v3951, 16
        %v4094 = vrot.slane %v4092, 5
        %v4095 = vsel %vm1338, %v4090, %v4094
        %v4096 = vshrl.u32 %v3951, 16
        %v4098 = vrot.slane %v4096, 4
        %v4099 = vor.u32 %v4098, %v4094
        %v4100 = vrot.slane %v4099, 4
        %v4102 = vshll.u32 %v3952, 16
        %v4104 = vrot.slane %v4102, 5
        %v4105 = vsel %vm1338, %v4100, %v4104
        %v4106 = vshrl.u32 %v3952, 16
        %v4108 = vrot.slane %v4106, 4
        %v4109 = vor.u32 %v4108, %v4104
        %v4110 = vrot.slane %v4109, 4
        %v4112 = vshll.u32 %v3953, 16
        %v4114 = vrot.slane %v4112, 5
        %v4115 = vsel %vm1338, %v4110, %v4114
        %v4116 = vshrl.u32 %v3953, 16
        %v4118 = vrot.slane %v4116, 4
        %v4119 = vor.u32 %v4118, %v4114
        %v4120 = vrot.slane %v4119, 4
        %v4122 = vshll.u32 %v3954, 16
        %v4124 = vrot.slane %v4122, 5
        %v4125 = vsel %vm1338, %v4120, %v4124
        %v4126 = vshrl.u32 %v3954, 16
        %v4128 = vrot.slane %v4126, 4
        %v4129 = vor.u32 %v4128, %v4124
        %v4130 = vrot.slane %v4129, 4
        %v4132 = vshll.u32 %v3955, 16
        %v4134 = vrot.slane %v4132, 5
        %v4135 = vsel %vm1338, %v4130, %v4134
        %v4136 = vshrl.u32 %v3955, 16
        %v4138 = vrot.slane %v4136, 4
        %v4139 = vor.u32 %v4138, %v4134
        %v4140 = vrot.slane %v4139, 4
        %v4142 = vshll.u32 %v3956, 16
        %v4144 = vrot.slane %v4142, 5
        %v4145 = vsel %vm1338, %v4140, %v4144
        %v4146 = vshrl.u32 %v3956, 16
        %v4148 = vrot.slane %v4146, 4
        %v4149 = vor.u32 %v4148, %v4144
        %v4150 = vrot.slane %v4149, 4
        %v4152 = vshll.u32 %v3957, 16
        %v4154 = vrot.slane %v4152, 5
        %v4155 = vsel %vm1338, %v4150, %v4154
        %v4156 = vshrl.u32 %v3957, 16
        %v4158 = vrot.slane %v4156, 4
        %v4159 = vor.u32 %v4158, %v4154
        %v4160 = vrot.slane %v4159, 4
        %v4162 = vshll.u32 %v3958, 16
        %v4164 = vrot.slane %v4162, 5
        %v4165 = vsel %vm1338, %v4160, %v4164
        %v4166 = vshrl.u32 %v3958, 16
        %v4168 = vrot.slane %v4166, 4
        %v4169 = vor.u32 %v4168, %v4164
        %v4170 = vrot.slane %v4169, 4
        %v4172 = vshll.u32 %v3959, 16
        %v4174 = vrot.slane %v4172, 5
        %v4175 = vsel %vm1338, %v4170, %v4174
        %v4176 = vshrl.u32 %v3959, 16
        %v4178 = vrot.slane %v4176, 4
        %v4179 = vor.u32 %v4178, %v4174
        %v4180 = vrot.slane %v4179, 4
        %v4182 = vshll.u32 %v3960, 16
        %v4184 = vrot.slane %v4182, 5
        %v4185 = vsel %vm1338, %v4180, %v4184
        %v4186 = vshrl.u32 %v3960, 16
        %v4188 = vrot.slane %v4186, 4
        %v4189 = vor.u32 %v4188, %v4184
        %v4190 = vrot.slane %v4189, 4
        %v4192 = vshll.u32 %v3961, 16
        %v4194 = vrot.slane %v4192, 5
        %v4195 = vsel %vm1338, %v4190, %v4194
        %v4196 = vshrl.u32 %v3961, 16
        %v4198 = vrot.slane %v4196, 4
        %v4199 = vor.u32 %v4198, %v4194
        %v4200 = vrot.slane %v4199, 4
        %v4202 = vshll.u32 %v3962, 16
        %v4204 = vrot.slane %v4202, 5
        %v4205 = vsel %vm1338, %v4200, %v4204
        %v4206 = vshrl.u32 %v3962, 16
        %v4208 = vrot.slane %v4206, 4
        %v4209 = vor.u32 %v4208, %v4204
        %v4210 = vrot.slane %v4209, 4
        %v4212 = vshll.u32 %v3963, 16
        %v4214 = vrot.slane %v4212, 5
        %v4215 = vsel %vm1338, %v4210, %v4214
        %v4216 = vshrl.u32 %v3963, 16
        %v4218 = vrot.slane %v4216, 4
        %v4219 = vor.u32 %v4218, %v4214
        %v4220 = vrot.slane %v4219, 4
        %v4222 = vshll.u32 %v3964, 16
        %v4224 = vrot.slane %v4222, 5
        %v4225 = vsel %vm1338, %v4220, %v4224
        %v4226 = vshrl.u32 %v3964, 16
        %v4228 = vrot.slane %v4226, 4
        %v4229 = vor.u32 %v4228, %v4224
        %v4230 = vrot.slane %v4229, 4
        %v4232 = vshll.u32 %v3965, 16
        %v4234 = vrot.slane %v4232, 5
        %v4235 = vsel %vm1338, %v4230, %v4234
        %v4236 = vshrl.u32 %v3965, 16
        %v4238 = vrot.slane %v4236, 4
        %v4239 = vor.u32 %v4238, %v4234
        %v4240 = vrot.slane %v4239, 4
        %v4242 = vshll.u32 %v3966, 16
        %v4244 = vrot.slane %v4242, 5
        %v4245 = vsel %vm1338, %v4240, %v4244
        %v4246 = vshrl.u32 %v3966, 16
        %v4248 = vrot.slane %v4246, 4
        %v4249 = vor.u32 %v4248, %v4244
        %v4250 = vrot.slane %v4249, 4
        %v4252 = vshll.u32 %v3967, 16
        %v4254 = vrot.slane %v4252, 5
        %v4255 = vsel %vm1338, %v4250, %v4254
        %v4256 = vshrl.u32 %v3967, 16
        %v4258 = vrot.slane %v4256, 4
        %v4259 = vor.u32 %v4258, %v4254
        %v4260 = vrot.slane %v4259, 4
        %v4262 = vshll.u32 %v3968, 16
        %v4264 = vrot.slane %v4262, 5
        %v4265 = vsel %vm1338, %v4260, %v4264
        %v4266 = vshrl.u32 %v3968, 16
        %v4268 = vrot.slane %v4266, 4
        %v4269 = vor.u32 %v4268, %v4264
        %v4270 = vrot.slane %v4269, 4
        %v4272 = vshll.u32 %v3969, 16
        %v4274 = vrot.slane %v4272, 5
        %v4275 = vsel %vm1338, %v4270, %v4274
        %v4276 = vshrl.u32 %v3969, 16
        %v4278 = vrot.slane %v4276, 4
        %v4279 = vor.u32 %v4278, %v4274
        %v4280 = vrot.slane %v4279, 4
        %v4282 = vshll.u32 %v3970, 16
        %v4284 = vrot.slane %v4282, 5
        %v4285 = vsel %vm1338, %v4280, %v4284
        %v4286 = vshrl.u32 %v3970, 16
        %v4288 = vrot.slane %v4286, 4
        %v4289 = vor.u32 %v4288, %v4284
        %v4290 = vrot.slane %v4289, 4
        %v4292 = vshll.u32 %v3971, 16
        %v4294 = vrot.slane %v4292, 5
        %v4295 = vsel %vm1338, %v4290, %v4294
        %4296 = vrot.lane.b32.xlu0 %v3985, 32
        %v4297 = vpop.permute.xlu0 %4296
        %4298 = vrot.lane.b32.xlu0 %v3995, 32
        %v4299 = vpop.permute.xlu0 %4298
        %4300 = vrot.lane.b32.xlu0 %v4005, 32
        %v4301 = vpop.permute.xlu0 %4300
        %4302 = vrot.lane.b32.xlu0 %v4015, 32
        %v4303 = vpop.permute.xlu0 %4302
        %4304 = vrot.lane.b32.xlu0 %v4025, 32
        %v4305 = vpop.permute.xlu0 %4304
        %4306 = vrot.lane.b32.xlu0 %v4035, 32
        %v4307 = vpop.permute.xlu0 %4306
        %4308 = vrot.lane.b32.xlu0 %v4045, 32
        %v4309 = vpop.permute.xlu0 %4308
        %4310 = vrot.lane.b32.xlu0 %v4055, 32
        %v4311 = vpop.permute.xlu0 %4310
        %4312 = vrot.lane.b32.xlu0 %v4065, 32
        %v4313 = vpop.permute.xlu0 %4312
        %4314 = vrot.lane.b32.xlu0 %v4075, 32
        %v4315 = vpop.permute.xlu0 %4314
        %4316 = vrot.lane.b32.xlu0 %v4085, 32
        %v4317 = vpop.permute.xlu0 %4316
        %4318 = vrot.lane.b32.xlu0 %v4095, 32
        %v4319 = vpop.permute.xlu0 %4318
        %4320 = vrot.lane.b32.xlu0 %v4105, 32
        %v4321 = vpop.permute.xlu0 %4320
        %4322 = vrot.lane.b32.xlu0 %v4115, 32
        %v4323 = vpop.permute.xlu0 %4322
        %4324 = vrot.lane.b32.xlu0 %v4125, 32
        %v4325 = vpop.permute.xlu0 %4324
        %4326 = vrot.lane.b32.xlu0 %v4135, 32
        %v4327 = vpop.permute.xlu0 %4326
        %4328 = vrot.lane.b32.xlu0 %v4145, 32
        %v4329 = vpop.permute.xlu0 %4328
        %4330 = vrot.lane.b32.xlu0 %v4155, 32
        %v4331 = vpop.permute.xlu0 %4330
        %4332 = vrot.lane.b32.xlu0 %v4165, 32
        %v4333 = vpop.permute.xlu0 %4332
        %4334 = vrot.lane.b32.xlu0 %v4175, 32
        %v4335 = vpop.permute.xlu0 %4334
        %4336 = vrot.lane.b32.xlu0 %v4185, 32
        %v4337 = vpop.permute.xlu0 %4336
        %4338 = vrot.lane.b32.xlu0 %v4195, 32
        %v4339 = vpop.permute.xlu0 %4338
        %4340 = vrot.lane.b32.xlu0 %v4205, 32
        %v4341 = vpop.permute.xlu0 %4340
        %4342 = vrot.lane.b32.xlu0 %v4215, 32
        %v4343 = vpop.permute.xlu0 %4342
        %4344 = vrot.lane.b32.xlu0 %v4225, 32
        %v4345 = vpop.permute.xlu0 %4344
        %4346 = vrot.lane.b32.xlu0 %v4235, 32
        %v4347 = vpop.permute.xlu0 %4346
        %4348 = vrot.lane.b32.xlu0 %v4245, 32
        %v4349 = vpop.permute.xlu0 %4348
        %4350 = vrot.lane.b32.xlu0 %v4255, 32
        %v4351 = vpop.permute.xlu0 %4350
        %4352 = vrot.lane.b32.xlu0 %v4265, 32
        %v4353 = vpop.permute.xlu0 %4352
        %4354 = vrot.lane.b32.xlu0 %v4275, 32
        %v4355 = vpop.permute.xlu0 %4354
        %4356 = vrot.lane.b32.xlu0 %v4285, 32
        %v4357 = vpop.permute.xlu0 %4356
        %4358 = vrot.lane.b32.xlu0 %v4295, 32
        %v4359 = vpop.permute.xlu0 %4358
        %4392 = vst.msk [vmem:[#allocation3 + $0x4] sm:$0xf] %vm2243, %v4297
        %4393 = vst.msk [vmem:[#allocation3 + $0x10] sm:$0xf] %vm2243, %v4299
        %4394 = vst.msk [vmem:[#allocation3 + $0x1c] sm:$0xf] %vm2243, %v4301
        %4395 = vst.msk [vmem:[#allocation3 + $0x28] sm:$0xf] %vm2243, %v4303
        %4396 = vst.msk [vmem:[#allocation3 + $0x34] sm:$0xf] %vm2243, %v4305
        %4397 = vst.msk [vmem:[#allocation3 + $0x40] sm:$0xf] %vm2243, %v4307
        %4398 = vst.msk [vmem:[#allocation3 + $0x4c] sm:$0xf] %vm2243, %v4309
        %4399 = vst.msk [vmem:[#allocation3 + $0x58] sm:$0xf] %vm2243, %v4311
        %4400 = vst.msk [vmem:[#allocation3 + $0x64] sm:$0xf] %vm2243, %v4313
        %4401 = vst.msk [vmem:[#allocation3 + $0x70] sm:$0xf] %vm2243, %v4315
        %4402 = vst.msk [vmem:[#allocation3 + $0x7c] sm:$0xf] %vm2243, %v4317
        %4403 = vst.msk [vmem:[#allocation3 + $0x88] sm:$0xf] %vm2243, %v4319
        %4404 = vst.msk [vmem:[#allocation3 + $0x94] sm:$0xf] %vm2243, %v4321
        %4405 = vst.msk [vmem:[#allocation3 + $0xa0] sm:$0xf] %vm2243, %v4323
        %4406 = vst.msk [vmem:[#allocation3 + $0xac] sm:$0xf] %vm2243, %v4325
        %4407 = vst.msk [vmem:[#allocation3 + $0xb8] sm:$0xf] %vm2243, %v4327
        %4408 = vst.msk [vmem:[#allocation3 + $0xc4] sm:$0xf] %vm2243, %v4329
        %4409 = vst.msk [vmem:[#allocation3 + $0xd0] sm:$0xf] %vm2243, %v4331
        %4410 = vst.msk [vmem:[#allocation3 + $0xdc] sm:$0xf] %vm2243, %v4333
        %4411 = vst.msk [vmem:[#allocation3 + $0xe8] sm:$0xf] %vm2243, %v4335
        %4412 = vst.msk [vmem:[#allocation3 + $0xf4] sm:$0xf] %vm2243, %v4337
        %4413 = vst.msk [vmem:[#allocation3 + $0x100] sm:$0xf] %vm2243, %v4339
        %4414 = vst.msk [vmem:[#allocation3 + $0x10c] sm:$0xf] %vm2243, %v4341
        %4415 = vst.msk [vmem:[#allocation3 + $0x118] sm:$0xf] %vm2243, %v4343
        %4416 = vst.msk [vmem:[#allocation3 + $0x124] sm:$0xf] %vm2243, %v4345
        %4417 = vst.msk [vmem:[#allocation3 + $0x130] sm:$0xf] %vm2243, %v4347
        %4418 = vst.msk [vmem:[#allocation3 + $0x13c] sm:$0xf] %vm2243, %v4349
        %4419 = vst.msk [vmem:[#allocation3 + $0x148] sm:$0xf] %vm2243, %v4351
        %4420 = vst.msk [vmem:[#allocation3 + $0x154] sm:$0xf] %vm2243, %v4353
        %4421 = vst.msk [vmem:[#allocation3 + $0x160] sm:$0xf] %vm2243, %v4355
        %4422 = vst.msk [vmem:[#allocation3 + $0x16c] sm:$0xf] %vm2243, %v4357
        %4423 = vst.msk [vmem:[#allocation3 + $0x178] sm:$0xf] %vm2243, %v4359
        %v4424 = vld [vmem:[#allocation2 + $0x14] sm:$0x8]
        %v4425 = vld [vmem:[#allocation2 + $0x18] sm:$0xf]
        %v4426 = vld [vmem:[#allocation2 + $0x1c] sm:$0xf]
        %v4427 = vld [vmem:[#allocation2 + $0x20] sm:$0xf]
        %v4428 = vld [vmem:[#allocation2 + $0x24] sm:$0xf]
        %v4429 = vld [vmem:[#allocation2 + $0x28] sm:$0xf]
        %v4430 = vld [vmem:[#allocation2 + $0x2c] sm:$0xf]
        %v4431 = vld [vmem:[#allocation2 + $0x30] sm:$0xf]
        %v4432 = vld [vmem:[#allocation2 + $0x34] sm:$0xf]
        %v4433 = vld [vmem:[#allocation2 + $0x38] sm:$0xf]
        %v4434 = vld [vmem:[#allocation2 + $0x3c] sm:$0xf]
        %v4435 = vld [vmem:[#allocation2 + $0x40] sm:$0xf]
        %v4436 = vld [vmem:[#allocation2 + $0x44] sm:$0xf]
        %v4437 = vld [vmem:[#allocation2 + $0x48] sm:$0xf]
        %v4438 = vld [vmem:[#allocation2 + $0x4c] sm:$0xf]
        %v4439 = vld [vmem:[#allocation2 + $0x50] sm:$0xf]
        %v4440 = vld [vmem:[#allocation2 + $0x54] sm:$0xf]
        %v4441 = vld [vmem:[#allocation2 + $0x58] sm:$0xf]
        %v4442 = vld [vmem:[#allocation2 + $0x5c] sm:$0xf]
        %v4443 = vld [vmem:[#allocation2 + $0x60] sm:$0xf]
        %v4444 = vld [vmem:[#allocation2 + $0x64] sm:$0xf]
        %v4445 = vld [vmem:[#allocation2 + $0x68] sm:$0xf]
        %v4446 = vld [vmem:[#allocation2 + $0x6c] sm:$0xf]
        %v4447 = vld [vmem:[#allocation2 + $0x70] sm:$0xf]
        %v4448 = vld [vmem:[#allocation2 + $0x74] sm:$0xf]
        %v4449 = vld [vmem:[#allocation2 + $0x78] sm:$0xf]
        %v4450 = vld [vmem:[#allocation2 + $0x7c] sm:$0xf]
        %v4451 = vld [vmem:[#allocation2 + $0x80] sm:$0xf]
        %v4452 = vld [vmem:[#allocation2 + $0x84] sm:$0xf]
        %v4453 = vld [vmem:[#allocation2 + $0x88] sm:$0xf]
        %v4454 = vld [vmem:[#allocation2 + $0x8c] sm:$0xf]
        %v4455 = vld [vmem:[#allocation2 + $0x90] sm:$0xf]
        %v4456 = vld [vmem:[#allocation2 + $0x94] sm:$0xf]
        %v4457 = vmul.bf16 %v4424, %v1342
        %v4458 = vmul.bf16 %v4425, %v1352
        %v4459 = vmul.bf16 %v4426, %v1362
        %v4460 = vmul.bf16 %v4427, %v1372
        %v4461 = vmul.bf16 %v4428, %v1382
        %v4462 = vmul.bf16 %v4429, %v1392
        %v4463 = vmul.bf16 %v4430, %v1402
        %v4464 = vmul.bf16 %v4431, %v1412
        %v4465 = vmul.bf16 %v4432, %v1422
        %v4466 = vmul.bf16 %v4433, %v1432
        %v4467 = vmul.bf16 %v4434, %v1442
        %v4468 = vmul.bf16 %v4435, %v1452
        %v4469 = vmul.bf16 %v4436, %v1462
        %v4470 = vmul.bf16 %v4437, %v1472
        %v4471 = vmul.bf16 %v4438, %v1482
        %v4472 = vmul.bf16 %v4439, %v1492
        %v4473 = vmul.bf16 %v4440, %v1502
        %v4474 = vmul.bf16 %v4441, %v1512
        %v4475 = vmul.bf16 %v4442, %v1522
        %v4476 = vmul.bf16 %v4443, %v1532
        %v4477 = vmul.bf16 %v4444, %v1542
        %v4478 = vmul.bf16 %v4445, %v1552
        %v4479 = vmul.bf16 %v4446, %v1562
        %v4480 = vmul.bf16 %v4447, %v1572
        %v4481 = vmul.bf16 %v4448, %v1582
        %v4482 = vmul.bf16 %v4449, %v1592
        %v4483 = vmul.bf16 %v4450, %v1602
        %v4484 = vmul.bf16 %v4451, %v1612
        %v4485 = vmul.bf16 %v4452, %v1622
        %v4486 = vmul.bf16 %v4453, %v1632
        %v4487 = vmul.bf16 %v4454, %v1642
        %v4488 = vmul.bf16 %v4455, %v1652
        %v4489 = vmul.bf16 %v4456, %v1657
        %v4491 = vshrl.u32 %v4457, 16
        %v4493 = vrot.slane %v4491, 7
        %v4494 = vrot.slane %v4493, 4
        %v4496 = vshrl.u32 %v4458, 16
        %v4498 = vrot.slane %v4496, 7
        %v4499 = vshll.u32 %v4458, 16
        %v4501 = vor.u32 %v4498, %v4499
        %v4502 = vsel %vm1726, %v4494, %v4501
        %v4503 = vrot.slane %v4498, 4
        %v4505 = vshrl.u32 %v4459, 16
        %v4507 = vrot.slane %v4505, 7
        %v4508 = vshll.u32 %v4459, 16
        %v4510 = vor.u32 %v4507, %v4508
        %v4511 = vsel %vm1726, %v4503, %v4510
        %v4512 = vrot.slane %v4507, 4
        %v4514 = vshrl.u32 %v4460, 16
        %v4516 = vrot.slane %v4514, 7
        %v4517 = vshll.u32 %v4460, 16
        %v4519 = vor.u32 %v4516, %v4517
        %v4520 = vsel %vm1726, %v4512, %v4519
        %v4521 = vrot.slane %v4516, 4
        %v4523 = vshrl.u32 %v4461, 16
        %v4525 = vrot.slane %v4523, 7
        %v4526 = vshll.u32 %v4461, 16
        %v4528 = vor.u32 %v4525, %v4526
        %v4529 = vsel %vm1726, %v4521, %v4528
        %v4530 = vrot.slane %v4525, 4
        %v4532 = vshrl.u32 %v4462, 16
        %v4534 = vrot.slane %v4532, 7
        %v4535 = vshll.u32 %v4462, 16
        %v4537 = vor.u32 %v4534, %v4535
        %v4538 = vsel %vm1726, %v4530, %v4537
        %v4539 = vrot.slane %v4534, 4
        %v4541 = vshrl.u32 %v4463, 16
        %v4543 = vrot.slane %v4541, 7
        %v4544 = vshll.u32 %v4463, 16
        %v4546 = vor.u32 %v4543, %v4544
        %v4547 = vsel %vm1726, %v4539, %v4546
        %v4548 = vrot.slane %v4543, 4
        %v4550 = vshrl.u32 %v4464, 16
        %v4552 = vrot.slane %v4550, 7
        %v4553 = vshll.u32 %v4464, 16
        %v4555 = vor.u32 %v4552, %v4553
        %v4556 = vsel %vm1726, %v4548, %v4555
        %v4557 = vrot.slane %v4552, 4
        %v4559 = vshrl.u32 %v4465, 16
        %v4561 = vrot.slane %v4559, 7
        %v4562 = vshll.u32 %v4465, 16
        %v4564 = vor.u32 %v4561, %v4562
        %v4565 = vsel %vm1726, %v4557, %v4564
        %v4566 = vrot.slane %v4561, 4
        %v4568 = vshrl.u32 %v4466, 16
        %v4570 = vrot.slane %v4568, 7
        %v4571 = vshll.u32 %v4466, 16
        %v4573 = vor.u32 %v4570, %v4571
        %v4574 = vsel %vm1726, %v4566, %v4573
        %v4575 = vrot.slane %v4570, 4
        %v4577 = vshrl.u32 %v4467, 16
        %v4579 = vrot.slane %v4577, 7
        %v4580 = vshll.u32 %v4467, 16
        %v4582 = vor.u32 %v4579, %v4580
        %v4583 = vsel %vm1726, %v4575, %v4582
        %v4584 = vrot.slane %v4579, 4
        %v4586 = vshrl.u32 %v4468, 16
        %v4588 = vrot.slane %v4586, 7
        %v4589 = vshll.u32 %v4468, 16
        %v4591 = vor.u32 %v4588, %v4589
        %v4592 = vsel %vm1726, %v4584, %v4591
        %v4593 = vrot.slane %v4588, 4
        %v4595 = vshrl.u32 %v4469, 16
        %v4597 = vrot.slane %v4595, 7
        %v4598 = vshll.u32 %v4469, 16
        %v4600 = vor.u32 %v4597, %v4598
        %v4601 = vsel %vm1726, %v4593, %v4600
        %v4602 = vrot.slane %v4597, 4
        %v4604 = vshrl.u32 %v4470, 16
        %v4606 = vrot.slane %v4604, 7
        %v4607 = vshll.u32 %v4470, 16
        %v4609 = vor.u32 %v4606, %v4607
        %v4610 = vsel %vm1726, %v4602, %v4609
        %v4611 = vrot.slane %v4606, 4
        %v4613 = vshrl.u32 %v4471, 16
        %v4615 = vrot.slane %v4613, 7
        %v4616 = vshll.u32 %v4471, 16
        %v4618 = vor.u32 %v4615, %v4616
        %v4619 = vsel %vm1726, %v4611, %v4618
        %v4620 = vrot.slane %v4615, 4
        %v4622 = vshrl.u32 %v4472, 16
        %v4624 = vrot.slane %v4622, 7
        %v4625 = vshll.u32 %v4472, 16
        %v4627 = vor.u32 %v4624, %v4625
        %v4628 = vsel %vm1726, %v4620, %v4627
        %v4629 = vrot.slane %v4624, 4
        %v4631 = vshrl.u32 %v4473, 16
        %v4633 = vrot.slane %v4631, 7
        %v4634 = vshll.u32 %v4473, 16
        %v4636 = vor.u32 %v4633, %v4634
        %v4637 = vsel %vm1726, %v4629, %v4636
        %v4638 = vrot.slane %v4633, 4
        %v4640 = vshrl.u32 %v4474, 16
        %v4642 = vrot.slane %v4640, 7
        %v4643 = vshll.u32 %v4474, 16
        %v4645 = vor.u32 %v4642, %v4643
        %v4646 = vsel %vm1726, %v4638, %v4645
        %v4647 = vrot.slane %v4642, 4
        %v4649 = vshrl.u32 %v4475, 16
        %v4651 = vrot.slane %v4649, 7
        %v4652 = vshll.u32 %v4475, 16
        %v4654 = vor.u32 %v4651, %v4652
        %v4655 = vsel %vm1726, %v4647, %v4654
        %v4656 = vrot.slane %v4651, 4
        %v4658 = vshrl.u32 %v4476, 16
        %v4660 = vrot.slane %v4658, 7
        %v4661 = vshll.u32 %v4476, 16
        %v4663 = vor.u32 %v4660, %v4661
        %v4664 = vsel %vm1726, %v4656, %v4663
        %v4665 = vrot.slane %v4660, 4
        %v4667 = vshrl.u32 %v4477, 16
        %v4669 = vrot.slane %v4667, 7
        %v4670 = vshll.u32 %v4477, 16
        %v4672 = vor.u32 %v4669, %v4670
        %v4673 = vsel %vm1726, %v4665, %v4672
        %v4674 = vrot.slane %v4669, 4
        %v4676 = vshrl.u32 %v4478, 16
        %v4678 = vrot.slane %v4676, 7
        %v4679 = vshll.u32 %v4478, 16
        %v4681 = vor.u32 %v4678, %v4679
        %v4682 = vsel %vm1726, %v4674, %v4681
        %v4683 = vrot.slane %v4678, 4
        %v4685 = vshrl.u32 %v4479, 16
        %v4687 = vrot.slane %v4685, 7
        %v4688 = vshll.u32 %v4479, 16
        %v4690 = vor.u32 %v4687, %v4688
        %v4691 = vsel %vm1726, %v4683, %v4690
        %v4692 = vrot.slane %v4687, 4
        %v4694 = vshrl.u32 %v4480, 16
        %v4696 = vrot.slane %v4694, 7
        %v4697 = vshll.u32 %v4480, 16
        %v4699 = vor.u32 %v4696, %v4697
        %v4700 = vsel %vm1726, %v4692, %v4699
        %v4701 = vrot.slane %v4696, 4
        %v4703 = vshrl.u32 %v4481, 16
        %v4705 = vrot.slane %v4703, 7
        %v4706 = vshll.u32 %v4481, 16
        %v4708 = vor.u32 %v4705, %v4706
        %v4709 = vsel %vm1726, %v4701, %v4708
        %v4710 = vrot.slane %v4705, 4
        %v4712 = vshrl.u32 %v4482, 16
        %v4714 = vrot.slane %v4712, 7
        %v4715 = vshll.u32 %v4482, 16
        %v4717 = vor.u32 %v4714, %v4715
        %v4718 = vsel %vm1726, %v4710, %v4717
        %v4719 = vrot.slane %v4714, 4
        %v4721 = vshrl.u32 %v4483, 16
        %v4723 = vrot.slane %v4721, 7
        %v4724 = vshll.u32 %v4483, 16
        %v4726 = vor.u32 %v4723, %v4724
        %v4727 = vsel %vm1726, %v4719, %v4726
        %v4728 = vrot.slane %v4723, 4
        %v4730 = vshrl.u32 %v4484, 16
        %v4732 = vrot.slane %v4730, 7
        %v4733 = vshll.u32 %v4484, 16
        %v4735 = vor.u32 %v4732, %v4733
        %v4736 = vsel %vm1726, %v4728, %v4735
        %v4737 = vrot.slane %v4732, 4
        %v4739 = vshrl.u32 %v4485, 16
        %v4741 = vrot.slane %v4739, 7
        %v4742 = vshll.u32 %v4485, 16
        %v4744 = vor.u32 %v4741, %v4742
        %v4745 = vsel %vm1726, %v4737, %v4744
        %v4746 = vrot.slane %v4741, 4
        %v4748 = vshrl.u32 %v4486, 16
        %v4750 = vrot.slane %v4748, 7
        %v4751 = vshll.u32 %v4486, 16
        %v4753 = vor.u32 %v4750, %v4751
        %v4754 = vsel %vm1726, %v4746, %v4753
        %v4755 = vrot.slane %v4750, 4
        %v4757 = vshrl.u32 %v4487, 16
        %v4759 = vrot.slane %v4757, 7
        %v4760 = vshll.u32 %v4487, 16
        %v4762 = vor.u32 %v4759, %v4760
        %v4763 = vsel %vm1726, %v4755, %v4762
        %v4764 = vrot.slane %v4759, 4
        %v4766 = vshrl.u32 %v4488, 16
        %v4768 = vrot.slane %v4766, 7
        %v4769 = vshll.u32 %v4488, 16
        %v4771 = vor.u32 %v4768, %v4769
        %v4772 = vsel %vm1726, %v4764, %v4771
        %v4773 = vrot.slane %v4768, 4
        %v4775 = vshrl.u32 %v4489, 16
        %v4777 = vrot.slane %v4775, 7
        %v4778 = vshll.u32 %v4489, 16
        %v4780 = vor.u32 %v4777, %v4778
        %v4781 = vsel %vm1726, %v4773, %v4780
        %4782 = vrot.lane.b32.xlu0 %v4502, 64
        %v4783 = vpop.permute.xlu0 %4782
        %4784 = vrot.lane.b32.xlu0 %v4511, 64
        %v4785 = vpop.permute.xlu0 %4784
        %4786 = vrot.lane.b32.xlu0 %v4520, 64
        %v4787 = vpop.permute.xlu0 %4786
        %4788 = vrot.lane.b32.xlu0 %v4529, 64
        %v4789 = vpop.permute.xlu0 %4788
        %4790 = vrot.lane.b32.xlu0 %v4538, 64
        %v4791 = vpop.permute.xlu0 %4790
        %4792 = vrot.lane.b32.xlu0 %v4547, 64
        %v4793 = vpop.permute.xlu0 %4792
        %4794 = vrot.lane.b32.xlu0 %v4556, 64
        %v4795 = vpop.permute.xlu0 %4794
        %4796 = vrot.lane.b32.xlu0 %v4565, 64
        %v4797 = vpop.permute.xlu0 %4796
        %4798 = vrot.lane.b32.xlu0 %v4574, 64
        %v4799 = vpop.permute.xlu0 %4798
        %4800 = vrot.lane.b32.xlu0 %v4583, 64
        %v4801 = vpop.permute.xlu0 %4800
        %4802 = vrot.lane.b32.xlu0 %v4592, 64
        %v4803 = vpop.permute.xlu0 %4802
        %4804 = vrot.lane.b32.xlu0 %v4601, 64
        %v4805 = vpop.permute.xlu0 %4804
        %4806 = vrot.lane.b32.xlu0 %v4610, 64
        %v4807 = vpop.permute.xlu0 %4806
        %4808 = vrot.lane.b32.xlu0 %v4619, 64
        %v4809 = vpop.permute.xlu0 %4808
        %4810 = vrot.lane.b32.xlu0 %v4628, 64
        %v4811 = vpop.permute.xlu0 %4810
        %4812 = vrot.lane.b32.xlu0 %v4637, 64
        %v4813 = vpop.permute.xlu0 %4812
        %4814 = vrot.lane.b32.xlu0 %v4646, 64
        %v4815 = vpop.permute.xlu0 %4814
        %4816 = vrot.lane.b32.xlu0 %v4655, 64
        %v4817 = vpop.permute.xlu0 %4816
        %4818 = vrot.lane.b32.xlu0 %v4664, 64
        %v4819 = vpop.permute.xlu0 %4818
        %4820 = vrot.lane.b32.xlu0 %v4673, 64
        %v4821 = vpop.permute.xlu0 %4820
        %4822 = vrot.lane.b32.xlu0 %v4682, 64
        %v4823 = vpop.permute.xlu0 %4822
        %4824 = vrot.lane.b32.xlu0 %v4691, 64
        %v4825 = vpop.permute.xlu0 %4824
        %4826 = vrot.lane.b32.xlu0 %v4700, 64
        %v4827 = vpop.permute.xlu0 %4826
        %4828 = vrot.lane.b32.xlu0 %v4709, 64
        %v4829 = vpop.permute.xlu0 %4828
        %4830 = vrot.lane.b32.xlu0 %v4718, 64
        %v4831 = vpop.permute.xlu0 %4830
        %4832 = vrot.lane.b32.xlu0 %v4727, 64
        %v4833 = vpop.permute.xlu0 %4832
        %4834 = vrot.lane.b32.xlu0 %v4736, 64
        %v4835 = vpop.permute.xlu0 %4834
        %4836 = vrot.lane.b32.xlu0 %v4745, 64
        %v4837 = vpop.permute.xlu0 %4836
        %4838 = vrot.lane.b32.xlu0 %v4754, 64
        %v4839 = vpop.permute.xlu0 %4838
        %4840 = vrot.lane.b32.xlu0 %v4763, 64
        %v4841 = vpop.permute.xlu0 %4840
        %4842 = vrot.lane.b32.xlu0 %v4772, 64
        %v4843 = vpop.permute.xlu0 %4842
        %4844 = vrot.lane.b32.xlu0 %v4781, 64
        %v4845 = vpop.permute.xlu0 %4844
        %4878 = vst.msk [vmem:[#allocation3 + $0x4] sm:$0xf] %vm3322, %v4783
        %4879 = vst.msk [vmem:[#allocation3 + $0x10] sm:$0xf] %vm3322, %v4785
        %4880 = vst.msk [vmem:[#allocation3 + $0x1c] sm:$0xf] %vm3322, %v4787
        %4881 = vst.msk [vmem:[#allocation3 + $0x28] sm:$0xf] %vm3322, %v4789
        %4882 = vst.msk [vmem:[#allocation3 + $0x34] sm:$0xf] %vm3322, %v4791
        %4883 = vst.msk [vmem:[#allocation3 + $0x40] sm:$0xf] %vm3322, %v4793
        %4884 = vst.msk [vmem:[#allocation3 + $0x4c] sm:$0xf] %vm3322, %v4795
        %4885 = vst.msk [vmem:[#allocation3 + $0x58] sm:$0xf] %vm3322, %v4797
        %4886 = vst.msk [vmem:[#allocation3 + $0x64] sm:$0xf] %vm3322, %v4799
        %4887 = vst.msk [vmem:[#allocation3 + $0x70] sm:$0xf] %vm3322, %v4801
        %4888 = vst.msk [vmem:[#allocation3 + $0x7c] sm:$0xf] %vm3322, %v4803
        %4889 = vst.msk [vmem:[#allocation3 + $0x88] sm:$0xf] %vm3322, %v4805
        %4890 = vst.msk [vmem:[#allocation3 + $0x94] sm:$0xf] %vm3322, %v4807
        %4891 = vst.msk [vmem:[#allocation3 + $0xa0] sm:$0xf] %vm3322, %v4809
        %4892 = vst.msk [vmem:[#allocation3 + $0xac] sm:$0xf] %vm3322, %v4811
        %4893 = vst.msk [vmem:[#allocation3 + $0xb8] sm:$0xf] %vm3322, %v4813
        %4894 = vst.msk [vmem:[#allocation3 + $0xc4] sm:$0xf] %vm3322, %v4815
        %4895 = vst.msk [vmem:[#allocation3 + $0xd0] sm:$0xf] %vm3322, %v4817
        %4896 = vst.msk [vmem:[#allocation3 + $0xdc] sm:$0xf] %vm3322, %v4819
        %4897 = vst.msk [vmem:[#allocation3 + $0xe8] sm:$0xf] %vm3322, %v4821
        %4898 = vst.msk [vmem:[#allocation3 + $0xf4] sm:$0xf] %vm3322, %v4823
        %4899 = vst.msk [vmem:[#allocation3 + $0x100] sm:$0xf] %vm3322, %v4825
        %4900 = vst.msk [vmem:[#allocation3 + $0x10c] sm:$0xf] %vm3322, %v4827
        %4901 = vst.msk [vmem:[#allocation3 + $0x118] sm:$0xf] %vm3322, %v4829
        %4902 = vst.msk [vmem:[#allocation3 + $0x124] sm:$0xf] %vm3322, %v4831
        %4903 = vst.msk [vmem:[#allocation3 + $0x130] sm:$0xf] %vm3322, %v4833
        %4904 = vst.msk [vmem:[#allocation3 + $0x13c] sm:$0xf] %vm3322, %v4835
        %4905 = vst.msk [vmem:[#allocation3 + $0x148] sm:$0xf] %vm3322, %v4837
        %4906 = vst.msk [vmem:[#allocation3 + $0x154] sm:$0xf] %vm3322, %v4839
        %4907 = vst.msk [vmem:[#allocation3 + $0x160] sm:$0xf] %vm3322, %v4841
        %4908 = vst.msk [vmem:[#allocation3 + $0x16c] sm:$0xf] %vm3322, %v4843
        %4909 = vst.msk [vmem:[#allocation3 + $0x178] sm:$0xf] %vm3322, %v4845
        %v4910 = vld [vmem:[#allocation2 + $0x18] sm:$0xf]
        %v4911 = vld [vmem:[#allocation2 + $0x1c] sm:$0xf]
        %v4912 = vld [vmem:[#allocation2 + $0x20] sm:$0xf]
        %v4913 = vld [vmem:[#allocation2 + $0x24] sm:$0xf]
        %v4914 = vld [vmem:[#allocation2 + $0x28] sm:$0xf]
        %v4915 = vld [vmem:[#allocation2 + $0x2c] sm:$0xf]
        %v4916 = vld [vmem:[#allocation2 + $0x30] sm:$0xf]
        %v4917 = vld [vmem:[#allocation2 + $0x34] sm:$0xf]
        %v4918 = vld [vmem:[#allocation2 + $0x38] sm:$0xf]
        %v4919 = vld [vmem:[#allocation2 + $0x3c] sm:$0xf]
        %v4920 = vld [vmem:[#allocation2 + $0x40] sm:$0xf]
        %v4921 = vld [vmem:[#allocation2 + $0x44] sm:$0xf]
        %v4922 = vld [vmem:[#allocation2 + $0x48] sm:$0xf]
        %v4923 = vld [vmem:[#allocation2 + $0x4c] sm:$0xf]
        %v4924 = vld [vmem:[#allocation2 + $0x50] sm:$0xf]
        %v4925 = vld [vmem:[#allocation2 + $0x54] sm:$0xf]
        %v4926 = vld [vmem:[#allocation2 + $0x58] sm:$0xf]
        %v4927 = vld [vmem:[#allocation2 + $0x5c] sm:$0xf]
        %v4928 = vld [vmem:[#allocation2 + $0x60] sm:$0xf]
        %v4929 = vld [vmem:[#allocation2 + $0x64] sm:$0xf]
        %v4930 = vld [vmem:[#allocation2 + $0x68] sm:$0xf]
        %v4931 = vld [vmem:[#allocation2 + $0x6c] sm:$0xf]
        %v4932 = vld [vmem:[#allocation2 + $0x70] sm:$0xf]
        %v4933 = vld [vmem:[#allocation2 + $0x74] sm:$0xf]
        %v4934 = vld [vmem:[#allocation2 + $0x78] sm:$0xf]
        %v4935 = vld [vmem:[#allocation2 + $0x7c] sm:$0xf]
        %v4936 = vld [vmem:[#allocation2 + $0x80] sm:$0xf]
        %v4937 = vld [vmem:[#allocation2 + $0x84] sm:$0xf]
        %v4938 = vld [vmem:[#allocation2 + $0x88] sm:$0xf]
        %v4939 = vld [vmem:[#allocation2 + $0x8c] sm:$0xf]
        %v4940 = vld [vmem:[#allocation2 + $0x90] sm:$0xf]
        %v4941 = vld [vmem:[#allocation2 + $0x94] sm:$0xf]
        %4974 = vrot.lane.b32.xlu0 %v4910, 96
        %v4975 = vpop.permute.xlu0 %4974
        %4976 = vrot.lane.b32.xlu0 %v4911, 96
        %v4977 = vpop.permute.xlu0 %4976
        %4978 = vrot.lane.b32.xlu0 %v4912, 96
        %v4979 = vpop.permute.xlu0 %4978
        %4980 = vrot.lane.b32.xlu0 %v4913, 96
        %v4981 = vpop.permute.xlu0 %4980
        %4982 = vrot.lane.b32.xlu0 %v4914, 96
        %v4983 = vpop.permute.xlu0 %4982
        %4984 = vrot.lane.b32.xlu0 %v4915, 96
        %v4985 = vpop.permute.xlu0 %4984
        %4986 = vrot.lane.b32.xlu0 %v4916, 96
        %v4987 = vpop.permute.xlu0 %4986
        %4988 = vrot.lane.b32.xlu0 %v4917, 96
        %v4989 = vpop.permute.xlu0 %4988
        %4990 = vrot.lane.b32.xlu0 %v4918, 96
        %v4991 = vpop.permute.xlu0 %4990
        %4992 = vrot.lane.b32.xlu0 %v4919, 96
        %v4993 = vpop.permute.xlu0 %4992
        %4994 = vrot.lane.b32.xlu0 %v4920, 96
        %v4995 = vpop.permute.xlu0 %4994
        %4996 = vrot.lane.b32.xlu0 %v4921, 96
        %v4997 = vpop.permute.xlu0 %4996
        %4998 = vrot.lane.b32.xlu0 %v4922, 96
        %v4999 = vpop.permute.xlu0 %4998
        %5000 = vrot.lane.b32.xlu0 %v4923, 96
        %v5001 = vpop.permute.xlu0 %5000
        %5002 = vrot.lane.b32.xlu0 %v4924, 96
        %v5003 = vpop.permute.xlu0 %5002
        %5004 = vrot.lane.b32.xlu0 %v4925, 96
        %v5005 = vpop.permute.xlu0 %5004
        %5006 = vrot.lane.b32.xlu0 %v4926, 96
        %v5007 = vpop.permute.xlu0 %5006
        %5008 = vrot.lane.b32.xlu0 %v4927, 96
        %v5009 = vpop.permute.xlu0 %5008
        %5010 = vrot.lane.b32.xlu0 %v4928, 96
        %v5011 = vpop.permute.xlu0 %5010
        %5012 = vrot.lane.b32.xlu0 %v4929, 96
        %v5013 = vpop.permute.xlu0 %5012
        %5014 = vrot.lane.b32.xlu0 %v4930, 96
        %v5015 = vpop.permute.xlu0 %5014
        %5016 = vrot.lane.b32.xlu0 %v4931, 96
        %v5017 = vpop.permute.xlu0 %5016
        %5018 = vrot.lane.b32.xlu0 %v4932, 96
        %v5019 = vpop.permute.xlu0 %5018
        %5020 = vrot.lane.b32.xlu0 %v4933, 96
        %v5021 = vpop.permute.xlu0 %5020
        %5022 = vrot.lane.b32.xlu0 %v4934, 96
        %v5023 = vpop.permute.xlu0 %5022
        %5024 = vrot.lane.b32.xlu0 %v4935, 96
        %v5025 = vpop.permute.xlu0 %5024
        %5026 = vrot.lane.b32.xlu0 %v4936, 96
        %v5027 = vpop.permute.xlu0 %5026
        %5028 = vrot.lane.b32.xlu0 %v4937, 96
        %v5029 = vpop.permute.xlu0 %5028
        %5030 = vrot.lane.b32.xlu0 %v4938, 96
        %v5031 = vpop.permute.xlu0 %5030
        %5032 = vrot.lane.b32.xlu0 %v4939, 96
        %v5033 = vpop.permute.xlu0 %5032
        %5034 = vrot.lane.b32.xlu0 %v4940, 96
        %v5035 = vpop.permute.xlu0 %5034
        %5036 = vrot.lane.b32.xlu0 %v4941, 96
        %v5037 = vpop.permute.xlu0 %5036
        %5070 = vst.msk [vmem:[#allocation3 + $0x4] sm:$0xf] %vm3809, %v4975
        %5071 = vst.msk [vmem:[#allocation3 + $0x10] sm:$0xf] %vm3809, %v4977
        %5072 = vst.msk [vmem:[#allocation3 + $0x1c] sm:$0xf] %vm3809, %v4979
        %5073 = vst.msk [vmem:[#allocation3 + $0x28] sm:$0xf] %vm3809, %v4981
        %5074 = vst.msk [vmem:[#allocation3 + $0x34] sm:$0xf] %vm3809, %v4983
        %5075 = vst.msk [vmem:[#allocation3 + $0x40] sm:$0xf] %vm3809, %v4985
        %5076 = vst.msk [vmem:[#allocation3 + $0x4c] sm:$0xf] %vm3809, %v4987
        %5077 = vst.msk [vmem:[#allocation3 + $0x58] sm:$0xf] %vm3809, %v4989
        %5078 = vst.msk [vmem:[#allocation3 + $0x64] sm:$0xf] %vm3809, %v4991
        %5079 = vst.msk [vmem:[#allocation3 + $0x70] sm:$0xf] %vm3809, %v4993
        %5080 = vst.msk [vmem:[#allocation3 + $0x7c] sm:$0xf] %vm3809, %v4995
        %5081 = vst.msk [vmem:[#allocation3 + $0x88] sm:$0xf] %vm3809, %v4997
        %5082 = vst.msk [vmem:[#allocation3 + $0x94] sm:$0xf] %vm3809, %v4999
        %5083 = vst.msk [vmem:[#allocation3 + $0xa0] sm:$0xf] %vm3809, %v5001
        %5084 = vst.msk [vmem:[#allocation3 + $0xac] sm:$0xf] %vm3809, %v5003
        %5085 = vst.msk [vmem:[#allocation3 + $0xb8] sm:$0xf] %vm3809, %v5005
        %5086 = vst.msk [vmem:[#allocation3 + $0xc4] sm:$0xf] %vm3809, %v5007
        %5087 = vst.msk [vmem:[#allocation3 + $0xd0] sm:$0xf] %vm3809, %v5009
        %5088 = vst.msk [vmem:[#allocation3 + $0xdc] sm:$0xf] %vm3809, %v5011
        %5089 = vst.msk [vmem:[#allocation3 + $0xe8] sm:$0xf] %vm3809, %v5013
        %5090 = vst.msk [vmem:[#allocation3 + $0xf4] sm:$0xf] %vm3809, %v5015
        %5091 = vst.msk [vmem:[#allocation3 + $0x100] sm:$0xf] %vm3809, %v5017
        %5092 = vst.msk [vmem:[#allocation3 + $0x10c] sm:$0xf] %vm3809, %v5019
        %5093 = vst.msk [vmem:[#allocation3 + $0x118] sm:$0xf] %vm3809, %v5021
        %5094 = vst.msk [vmem:[#allocation3 + $0x124] sm:$0xf] %vm3809, %v5023
        %5095 = vst.msk [vmem:[#allocation3 + $0x130] sm:$0xf] %vm3809, %v5025
        %5096 = vst.msk [vmem:[#allocation3 + $0x13c] sm:$0xf] %vm3809, %v5027
        %5097 = vst.msk [vmem:[#allocation3 + $0x148] sm:$0xf] %vm3809, %v5029
        %5098 = vst.msk [vmem:[#allocation3 + $0x154] sm:$0xf] %vm3809, %v5031
        %5099 = vst.msk [vmem:[#allocation3 + $0x160] sm:$0xf] %vm3809, %v5033
        %5100 = vst.msk [vmem:[#allocation3 + $0x16c] sm:$0xf] %vm3809, %v5035
        %5101 = vst.msk [vmem:[#allocation3 + $0x178] sm:$0xf] %vm3809, %v5037
        %v5102 = vld [vmem:[#allocation2 + $0x18] sm:$0xf]
        %v5103 = vld [vmem:[#allocation2 + $0x1c] sm:$0xf]
        %v5104 = vld [vmem:[#allocation2 + $0x20] sm:$0xf]
        %v5105 = vld [vmem:[#allocation2 + $0x24] sm:$0xf]
        %v5106 = vld [vmem:[#allocation2 + $0x28] sm:$0xf]
        %v5107 = vld [vmem:[#allocation2 + $0x2c] sm:$0xf]
        %v5108 = vld [vmem:[#allocation2 + $0x30] sm:$0xf]
        %v5109 = vld [vmem:[#allocation2 + $0x34] sm:$0xf]
        %v5110 = vld [vmem:[#allocation2 + $0x38] sm:$0xf]
        %v5111 = vld [vmem:[#allocation2 + $0x3c] sm:$0xf]
        %v5112 = vld [vmem:[#allocation2 + $0x40] sm:$0xf]
        %v5113 = vld [vmem:[#allocation2 + $0x44] sm:$0xf]
        %v5114 = vld [vmem:[#allocation2 + $0x48] sm:$0xf]
        %v5115 = vld [vmem:[#allocation2 + $0x4c] sm:$0xf]
        %v5116 = vld [vmem:[#allocation2 + $0x50] sm:$0xf]
        %v5117 = vld [vmem:[#allocation2 + $0x54] sm:$0xf]
        %v5118 = vld [vmem:[#allocation2 + $0x58] sm:$0xf]
        %v5119 = vld [vmem:[#allocation2 + $0x5c] sm:$0xf]
        %v5120 = vld [vmem:[#allocation2 + $0x60] sm:$0xf]
        %v5121 = vld [vmem:[#allocation2 + $0x64] sm:$0xf]
        %v5122 = vld [vmem:[#allocation2 + $0x68] sm:$0xf]
        %v5123 = vld [vmem:[#allocation2 + $0x6c] sm:$0xf]
        %v5124 = vld [vmem:[#allocation2 + $0x70] sm:$0xf]
        %v5125 = vld [vmem:[#allocation2 + $0x74] sm:$0xf]
        %v5126 = vld [vmem:[#allocation2 + $0x78] sm:$0xf]
        %v5127 = vld [vmem:[#allocation2 + $0x7c] sm:$0xf]
        %v5128 = vld [vmem:[#allocation2 + $0x80] sm:$0xf]
        %v5129 = vld [vmem:[#allocation2 + $0x84] sm:$0xf]
        %v5130 = vld [vmem:[#allocation2 + $0x88] sm:$0xf]
        %v5131 = vld [vmem:[#allocation2 + $0x8c] sm:$0xf]
        %v5132 = vld [vmem:[#allocation2 + $0x90] sm:$0xf]
        %v5133 = vld [vmem:[#allocation2 + $0x94] sm:$0xf]
        %v5134 = vld [vmem:[#allocation2 + $0x98] sm:$0x1]
        %v5135 = vmul.bf16 %v5102, %v2555
        %v5136 = vmul.bf16 %v5103, %v2564
        %v5137 = vmul.bf16 %v5104, %v2573
        %v5138 = vmul.bf16 %v5105, %v2582
        %v5139 = vmul.bf16 %v5106, %v2591
        %v5140 = vmul.bf16 %v5107, %v2600
        %v5141 = vmul.bf16 %v5108, %v2609
        %v5142 = vmul.bf16 %v5109, %v2618
        %v5143 = vmul.bf16 %v5110, %v2627
        %v5144 = vmul.bf16 %v5111, %v2636
        %v5145 = vmul.bf16 %v5112, %v2645
        %v5146 = vmul.bf16 %v5113, %v2654
        %v5147 = vmul.bf16 %v5114, %v2663
        %v5148 = vmul.bf16 %v5115, %v2672
        %v5149 = vmul.bf16 %v5116, %v2681
        %v5150 = vmul.bf16 %v5117, %v2690
        %v5151 = vmul.bf16 %v5118, %v2699
        %v5152 = vmul.bf16 %v5119, %v2708
        %v5153 = vmul.bf16 %v5120, %v2717
        %v5154 = vmul.bf16 %v5121, %v2726
        %v5155 = vmul.bf16 %v5122, %v2735
        %v5156 = vmul.bf16 %v5123, %v2744
        %v5157 = vmul.bf16 %v5124, %v2753
        %v5158 = vmul.bf16 %v5125, %v2762
        %v5159 = vmul.bf16 %v5126, %v2771
        %v5160 = vmul.bf16 %v5127, %v2780
        %v5161 = vmul.bf16 %v5128, %v2789
        %v5162 = vmul.bf16 %v5129, %v2798
        %v5163 = vmul.bf16 %v5130, %v2807
        %v5164 = vmul.bf16 %v5131, %v2816
        %v5165 = vmul.bf16 %v5132, %v2825
        %v5166 = vmul.bf16 %v5133, %v2834
        %v5167 = vmul.bf16 %v5134, %v2835
        %v5169 = vshrl.u32 %v5135, 16
        %v5171 = vrot.slane %v5169, 4
        %v5172 = vshll.u32 %v5135, 16
        %v5174 = vrot.slane %v5172, 5
        %v5175 = vor.u32 %v5171, %v5174
        %v5176 = vrot.slane %v5175, 4
        %v5178 = vshll.u32 %v5136, 16
        %v5180 = vrot.slane %v5178, 5
        %v5181 = vsel %vm1338, %v5176, %v5180
        %v5182 = vshrl.u32 %v5136, 16
        %v5184 = vrot.slane %v5182, 4
        %v5185 = vor.u32 %v5184, %v5180
        %v5186 = vrot.slane %v5185, 4
        %v5188 = vshll.u32 %v5137, 16
        %v5190 = vrot.slane %v5188, 5
        %v5191 = vsel %vm1338, %v5186, %v5190
        %v5192 = vshrl.u32 %v5137, 16
        %v5194 = vrot.slane %v5192, 4
        %v5195 = vor.u32 %v5194, %v5190
        %v5196 = vrot.slane %v5195, 4
        %v5198 = vshll.u32 %v5138, 16
        %v5200 = vrot.slane %v5198, 5
        %v5201 = vsel %vm1338, %v5196, %v5200
        %v5202 = vshrl.u32 %v5138, 16
        %v5204 = vrot.slane %v5202, 4
        %v5205 = vor.u32 %v5204, %v5200
        %v5206 = vrot.slane %v5205, 4
        %v5208 = vshll.u32 %v5139, 16
        %v5210 = vrot.slane %v5208, 5
        %v5211 = vsel %vm1338, %v5206, %v5210
        %v5212 = vshrl.u32 %v5139, 16
        %v5214 = vrot.slane %v5212, 4
        %v5215 = vor.u32 %v5214, %v5210
        %v5216 = vrot.slane %v5215, 4
        %v5218 = vshll.u32 %v5140, 16
        %v5220 = vrot.slane %v5218, 5
        %v5221 = vsel %vm1338, %v5216, %v5220
        %v5222 = vshrl.u32 %v5140, 16
        %v5224 = vrot.slane %v5222, 4
        %v5225 = vor.u32 %v5224, %v5220
        %v5226 = vrot.slane %v5225, 4
        %v5228 = vshll.u32 %v5141, 16
        %v5230 = vrot.slane %v5228, 5
        %v5231 = vsel %vm1338, %v5226, %v5230
        %v5232 = vshrl.u32 %v5141, 16
        %v5234 = vrot.slane %v5232, 4
        %v5235 = vor.u32 %v5234, %v5230
        %v5236 = vrot.slane %v5235, 4
        %v5238 = vshll.u32 %v5142, 16
        %v5240 = vrot.slane %v5238, 5
        %v5241 = vsel %vm1338, %v5236, %v5240
        %v5242 = vshrl.u32 %v5142, 16
        %v5244 = vrot.slane %v5242, 4
        %v5245 = vor.u32 %v5244, %v5240
        %v5246 = vrot.slane %v5245, 4
        %v5248 = vshll.u32 %v5143, 16
        %v5250 = vrot.slane %v5248, 5
        %v5251 = vsel %vm1338, %v5246, %v5250
        %v5252 = vshrl.u32 %v5143, 16
        %v5254 = vrot.slane %v5252, 4
        %v5255 = vor.u32 %v5254, %v5250
        %v5256 = vrot.slane %v5255, 4
        %v5258 = vshll.u32 %v5144, 16
        %v5260 = vrot.slane %v5258, 5
        %v5261 = vsel %vm1338, %v5256, %v5260
        %v5262 = vshrl.u32 %v5144, 16
        %v5264 = vrot.slane %v5262, 4
        %v5265 = vor.u32 %v5264, %v5260
        %v5266 = vrot.slane %v5265, 4
        %v5268 = vshll.u32 %v5145, 16
        %v5270 = vrot.slane %v5268, 5
        %v5271 = vsel %vm1338, %v5266, %v5270
        %v5272 = vshrl.u32 %v5145, 16
        %v5274 = vrot.slane %v5272, 4
        %v5275 = vor.u32 %v5274, %v5270
        %v5276 = vrot.slane %v5275, 4
        %v5278 = vshll.u32 %v5146, 16
        %v5280 = vrot.slane %v5278, 5
        %v5281 = vsel %vm1338, %v5276, %v5280
        %v5282 = vshrl.u32 %v5146, 16
        %v5284 = vrot.slane %v5282, 4
        %v5285 = vor.u32 %v5284, %v5280
        %v5286 = vrot.slane %v5285, 4
        %v5288 = vshll.u32 %v5147, 16
        %v5290 = vrot.slane %v5288, 5
        %v5291 = vsel %vm1338, %v5286, %v5290
        %v5292 = vshrl.u32 %v5147, 16
        %v5294 = vrot.slane %v5292, 4
        %v5295 = vor.u32 %v5294, %v5290
        %v5296 = vrot.slane %v5295, 4
        %v5298 = vshll.u32 %v5148, 16
        %v5300 = vrot.slane %v5298, 5
        %v5301 = vsel %vm1338, %v5296, %v5300
        %v5302 = vshrl.u32 %v5148, 16
        %v5304 = vrot.slane %v5302, 4
        %v5305 = vor.u32 %v5304, %v5300
        %v5306 = vrot.slane %v5305, 4
        %v5308 = vshll.u32 %v5149, 16
        %v5310 = vrot.slane %v5308, 5
        %v5311 = vsel %vm1338, %v5306, %v5310
        %v5312 = vshrl.u32 %v5149, 16
        %v5314 = vrot.slane %v5312, 4
        %v5315 = vor.u32 %v5314, %v5310
        %v5316 = vrot.slane %v5315, 4
        %v5318 = vshll.u32 %v5150, 16
        %v5320 = vrot.slane %v5318, 5
        %v5321 = vsel %vm1338, %v5316, %v5320
        %v5322 = vshrl.u32 %v5150, 16
        %v5324 = vrot.slane %v5322, 4
        %v5325 = vor.u32 %v5324, %v5320
        %v5326 = vrot.slane %v5325, 4
        %v5328 = vshll.u32 %v5151, 16
        %v5330 = vrot.slane %v5328, 5
        %v5331 = vsel %vm1338, %v5326, %v5330
        %v5332 = vshrl.u32 %v5151, 16
        %v5334 = vrot.slane %v5332, 4
        %v5335 = vor.u32 %v5334, %v5330
        %v5336 = vrot.slane %v5335, 4
        %v5338 = vshll.u32 %v5152, 16
        %v5340 = vrot.slane %v5338, 5
        %v5341 = vsel %vm1338, %v5336, %v5340
        %v5342 = vshrl.u32 %v5152, 16
        %v5344 = vrot.slane %v5342, 4
        %v5345 = vor.u32 %v5344, %v5340
        %v5346 = vrot.slane %v5345, 4
        %v5348 = vshll.u32 %v5153, 16
        %v5350 = vrot.slane %v5348, 5
        %v5351 = vsel %vm1338, %v5346, %v5350
        %v5352 = vshrl.u32 %v5153, 16
        %v5354 = vrot.slane %v5352, 4
        %v5355 = vor.u32 %v5354, %v5350
        %v5356 = vrot.slane %v5355, 4
        %v5358 = vshll.u32 %v5154, 16
        %v5360 = vrot.slane %v5358, 5
        %v5361 = vsel %vm1338, %v5356, %v5360
        %v5362 = vshrl.u32 %v5154, 16
        %v5364 = vrot.slane %v5362, 4
        %v5365 = vor.u32 %v5364, %v5360
        %v5366 = vrot.slane %v5365, 4
        %v5368 = vshll.u32 %v5155, 16
        %v5370 = vrot.slane %v5368, 5
        %v5371 = vsel %vm1338, %v5366, %v5370
        %v5372 = vshrl.u32 %v5155, 16
        %v5374 = vrot.slane %v5372, 4
        %v5375 = vor.u32 %v5374, %v5370
        %v5376 = vrot.slane %v5375, 4
        %v5378 = vshll.u32 %v5156, 16
        %v5380 = vrot.slane %v5378, 5
        %v5381 = vsel %vm1338, %v5376, %v5380
        %v5382 = vshrl.u32 %v5156, 16
        %v5384 = vrot.slane %v5382, 4
        %v5385 = vor.u32 %v5384, %v5380
        %v5386 = vrot.slane %v5385, 4
        %v5388 = vshll.u32 %v5157, 16
        %v5390 = vrot.slane %v5388, 5
        %v5391 = vsel %vm1338, %v5386, %v5390
        %v5392 = vshrl.u32 %v5157, 16
        %v5394 = vrot.slane %v5392, 4
        %v5395 = vor.u32 %v5394, %v5390
        %v5396 = vrot.slane %v5395, 4
        %v5398 = vshll.u32 %v5158, 16
        %v5400 = vrot.slane %v5398, 5
        %v5401 = vsel %vm1338, %v5396, %v5400
        %v5402 = vshrl.u32 %v5158, 16
        %v5404 = vrot.slane %v5402, 4
        %v5405 = vor.u32 %v5404, %v5400
        %v5406 = vrot.slane %v5405, 4
        %v5408 = vshll.u32 %v5159, 16
        %v5410 = vrot.slane %v5408, 5
        %v5411 = vsel %vm1338, %v5406, %v5410
        %v5412 = vshrl.u32 %v5159, 16
        %v5414 = vrot.slane %v5412, 4
        %v5415 = vor.u32 %v5414, %v5410
        %v5416 = vrot.slane %v5415, 4
        %v5418 = vshll.u32 %v5160, 16
        %v5420 = vrot.slane %v5418, 5
        %v5421 = vsel %vm1338, %v5416, %v5420
        %v5422 = vshrl.u32 %v5160, 16
        %v5424 = vrot.slane %v5422, 4
        %v5425 = vor.u32 %v5424, %v5420
        %v5426 = vrot.slane %v5425, 4
        %v5428 = vshll.u32 %v5161, 16
        %v5430 = vrot.slane %v5428, 5
        %v5431 = vsel %vm1338, %v5426, %v5430
        %v5432 = vshrl.u32 %v5161, 16
        %v5434 = vrot.slane %v5432, 4
        %v5435 = vor.u32 %v5434, %v5430
        %v5436 = vrot.slane %v5435, 4
        %v5438 = vshll.u32 %v5162, 16
        %v5440 = vrot.slane %v5438, 5
        %v5441 = vsel %vm1338, %v5436, %v5440
        %v5442 = vshrl.u32 %v5162, 16
        %v5444 = vrot.slane %v5442, 4
        %v5445 = vor.u32 %v5444, %v5440
        %v5446 = vrot.slane %v5445, 4
        %v5448 = vshll.u32 %v5163, 16
        %v5450 = vrot.slane %v5448, 5
        %v5451 = vsel %vm1338, %v5446, %v5450
        %v5452 = vshrl.u32 %v5163, 16
        %v5454 = vrot.slane %v5452, 4
        %v5455 = vor.u32 %v5454, %v5450
        %v5456 = vrot.slane %v5455, 4
        %v5458 = vshll.u32 %v5164, 16
        %v5460 = vrot.slane %v5458, 5
        %v5461 = vsel %vm1338, %v5456, %v5460
        %v5462 = vshrl.u32 %v5164, 16
        %v5464 = vrot.slane %v5462, 4
        %v5465 = vor.u32 %v5464, %v5460
        %v5466 = vrot.slane %v5465, 4
        %v5468 = vshll.u32 %v5165, 16
        %v5470 = vrot.slane %v5468, 5
        %v5471 = vsel %vm1338, %v5466, %v5470
        %v5472 = vshrl.u32 %v5165, 16
        %v5474 = vrot.slane %v5472, 4
        %v5475 = vor.u32 %v5474, %v5470
        %v5476 = vrot.slane %v5475, 4
        %v5478 = vshll.u32 %v5166, 16
        %v5480 = vrot.slane %v5478, 5
        %v5481 = vsel %vm1338, %v5476, %v5480
        %v5482 = vshrl.u32 %v5166, 16
        %v5484 = vrot.slane %v5482, 4
        %v5485 = vor.u32 %v5484, %v5480
        %v5486 = vrot.slane %v5485, 4
        %v5488 = vshll.u32 %v5167, 16
        %v5490 = vrot.slane %v5488, 5
        %v5491 = vsel %vm1338, %v5486, %v5490
        %5524 = vst.msk [vmem:[#allocation3 + $0x8] sm:$0xf] %vm752, %v5181
        %5525 = vst.msk [vmem:[#allocation3 + $0x14] sm:$0xf] %vm752, %v5191
        %5526 = vst.msk [vmem:[#allocation3 + $0x20] sm:$0xf] %vm752, %v5201
        %5527 = vst.msk [vmem:[#allocation3 + $0x2c] sm:$0xf] %vm752, %v5211
        %5528 = vst.msk [vmem:[#allocation3 + $0x38] sm:$0xf] %vm752, %v5221
        %5529 = vst.msk [vmem:[#allocation3 + $0x44] sm:$0xf] %vm752, %v5231
        %5530 = vst.msk [vmem:[#allocation3 + $0x50] sm:$0xf] %vm752, %v5241
        %5531 = vst.msk [vmem:[#allocation3 + $0x5c] sm:$0xf] %vm752, %v5251
        %5532 = vst.msk [vmem:[#allocation3 + $0x68] sm:$0xf] %vm752, %v5261
        %5533 = vst.msk [vmem:[#allocation3 + $0x74] sm:$0xf] %vm752, %v5271
        %5534 = vst.msk [vmem:[#allocation3 + $0x80] sm:$0xf] %vm752, %v5281
        %5535 = vst.msk [vmem:[#allocation3 + $0x8c] sm:$0xf] %vm752, %v5291
        %5536 = vst.msk [vmem:[#allocation3 + $0x98] sm:$0xf] %vm752, %v5301
        %5537 = vst.msk [vmem:[#allocation3 + $0xa4] sm:$0xf] %vm752, %v5311
        %5538 = vst.msk [vmem:[#allocation3 + $0xb0] sm:$0xf] %vm752, %v5321
        %5539 = vst.msk [vmem:[#allocation3 + $0xbc] sm:$0xf] %vm752, %v5331
        %5540 = vst.msk [vmem:[#allocation3 + $0xc8] sm:$0xf] %vm752, %v5341
        %5541 = vst.msk [vmem:[#allocation3 + $0xd4] sm:$0xf] %vm752, %v5351
        %5542 = vst.msk [vmem:[#allocation3 + $0xe0] sm:$0xf] %vm752, %v5361
        %5543 = vst.msk [vmem:[#allocation3 + $0xec] sm:$0xf] %vm752, %v5371
        %5544 = vst.msk [vmem:[#allocation3 + $0xf8] sm:$0xf] %vm752, %v5381
        %5545 = vst.msk [vmem:[#allocation3 + $0x104] sm:$0xf] %vm752, %v5391
        %5546 = vst.msk [vmem:[#allocation3 + $0x110] sm:$0xf] %vm752, %v5401
        %5547 = vst.msk [vmem:[#allocation3 + $0x11c] sm:$0xf] %vm752, %v5411
        %5548 = vst.msk [vmem:[#allocation3 + $0x128] sm:$0xf] %vm752, %v5421
        %5549 = vst.msk [vmem:[#allocation3 + $0x134] sm:$0xf] %vm752, %v5431
        %5550 = vst.msk [vmem:[#allocation3 + $0x140] sm:$0xf] %vm752, %v5441
        %5551 = vst.msk [vmem:[#allocation3 + $0x14c] sm:$0xf] %vm752, %v5451
        %5552 = vst.msk [vmem:[#allocation3 + $0x158] sm:$0xf] %vm752, %v5461
        %5553 = vst.msk [vmem:[#allocation3 + $0x164] sm:$0xf] %vm752, %v5471
        %5554 = vst.msk [vmem:[#allocation3 + $0x170] sm:$0xf] %vm752, %v5481
        %5555 = vst.msk [vmem:[#allocation3 + $0x17c] sm:$0xf] %vm752, %v5491
        %v5556 = vld [vmem:[#allocation3] sm:$0xff]
        %v5557 = vld [vmem:[#allocation3 + $0x8] sm:$0xf]
        %v5558 = vld [vmem:[#allocation3 + $0xc] sm:$0xff]
        %v5559 = vld [vmem:[#allocation3 + $0x14] sm:$0xf]
        %v5560 = vld [vmem:[#allocation3 + $0x18] sm:$0xff]
        %v5561 = vld [vmem:[#allocation3 + $0x20] sm:$0xf]
        %v5562 = vld [vmem:[#allocation3 + $0x24] sm:$0xff]
        %v5563 = vld [vmem:[#allocation3 + $0x2c] sm:$0xf]
        %v5564 = vld [vmem:[#allocation3 + $0x30] sm:$0xff]
        %v5565 = vld [vmem:[#allocation3 + $0x38] sm:$0xf]
        %v5566 = vld [vmem:[#allocation3 + $0x3c] sm:$0xff]
        %v5567 = vld [vmem:[#allocation3 + $0x44] sm:$0xf]
        %v5568 = vld [vmem:[#allocation3 + $0x48] sm:$0xff]
        %v5569 = vld [vmem:[#allocation3 + $0x50] sm:$0xf]
        %v5570 = vld [vmem:[#allocation3 + $0x54] sm:$0xff]
        %v5571 = vld [vmem:[#allocation3 + $0x5c] sm:$0xf]
        %v5572 = vld [vmem:[#allocation3 + $0x60] sm:$0xff]
        %v5573 = vld [vmem:[#allocation3 + $0x68] sm:$0xf]
        %v5574 = vld [vmem:[#allocation3 + $0x6c] sm:$0xff]
        %v5575 = vld [vmem:[#allocation3 + $0x74] sm:$0xf]
        %v5576 = vld [vmem:[#allocation3 + $0x78] sm:$0xff]
        %v5577 = vld [vmem:[#allocation3 + $0x80] sm:$0xf]
        %v5578 = vld [vmem:[#allocation3 + $0x84] sm:$0xff]
        %v5579 = vld [vmem:[#allocation3 + $0x8c] sm:$0xf]
        %v5580 = vld [vmem:[#allocation3 + $0x90] sm:$0xff]
        %v5581 = vld [vmem:[#allocation3 + $0x98] sm:$0xf]
        %v5582 = vld [vmem:[#allocation3 + $0x9c] sm:$0xff]
        %v5583 = vld [vmem:[#allocation3 + $0xa4] sm:$0xf]
        %v5584 = vld [vmem:[#allocation3 + $0xa8] sm:$0xff]
        %v5585 = vld [vmem:[#allocation3 + $0xb0] sm:$0xf]
        %v5586 = vld [vmem:[#allocation3 + $0xb4] sm:$0xff]
        %v5587 = vld [vmem:[#allocation3 + $0xbc] sm:$0xf]
        %v5588 = vld [vmem:[#allocation3 + $0xc0] sm:$0xff]
        %v5589 = vld [vmem:[#allocation3 + $0xc8] sm:$0xf]
        %v5590 = vld [vmem:[#allocation3 + $0xcc] sm:$0xff]
        %v5591 = vld [vmem:[#allocation3 + $0xd4] sm:$0xf]
        %v5592 = vld [vmem:[#allocation3 + $0xd8] sm:$0xff]
        %v5593 = vld [vmem:[#allocation3 + $0xe0] sm:$0xf]
        %v5594 = vld [vmem:[#allocation3 + $0xe4] sm:$0xff]
        %v5595 = vld [vmem:[#allocation3 + $0xec] sm:$0xf]
        %v5596 = vld [vmem:[#allocation3 + $0xf0] sm:$0xff]
        %v5597 = vld [vmem:[#allocation3 + $0xf8] sm:$0xf]
        %v5598 = vld [vmem:[#allocation3 + $0xfc] sm:$0xff]
        %v5599 = vld [vmem:[#allocation3 + $0x104] sm:$0xf]
        %v5600 = vld [vmem:[#allocation3 + $0x108] sm:$0xff]
        %v5601 = vld [vmem:[#allocation3 + $0x110] sm:$0xf]
        %v5602 = vld [vmem:[#allocation3 + $0x114] sm:$0xff]
        %v5603 = vld [vmem:[#allocation3 + $0x11c] sm:$0xf]
        %v5604 = vld [vmem:[#allocation3 + $0x120] sm:$0xff]
        %v5605 = vld [vmem:[#allocation3 + $0x128] sm:$0xf]
        %v5606 = vld [vmem:[#allocation3 + $0x12c] sm:$0xff]
        %v5607 = vld [vmem:[#allocation3 + $0x134] sm:$0xf]
        %v5608 = vld [vmem:[#allocation3 + $0x138] sm:$0xff]
        %v5609 = vld [vmem:[#allocation3 + $0x140] sm:$0xf]
        %v5610 = vld [vmem:[#allocation3 + $0x144] sm:$0xff]
        %v5611 = vld [vmem:[#allocation3 + $0x14c] sm:$0xf]
        %v5612 = vld [vmem:[#allocation3 + $0x150] sm:$0xff]
        %v5613 = vld [vmem:[#allocation3 + $0x158] sm:$0xf]
        %v5614 = vld [vmem:[#allocation3 + $0x15c] sm:$0xff]
        %v5615 = vld [vmem:[#allocation3 + $0x164] sm:$0xf]
        %v5616 = vld [vmem:[#allocation3 + $0x168] sm:$0xff]
        %v5617 = vld [vmem:[#allocation3 + $0x170] sm:$0xf]
        %v5618 = vld [vmem:[#allocation3 + $0x174] sm:$0xff]
        %v5619 = vld [vmem:[#allocation3 + $0x17c] sm:$0xf]
        %v5620 = vld [vmem:[%s3] sm:$0xf]
        %v5621 = vld [vmem:[%s3 + $0x4] sm:$0xf]
        %v5622 = vld [vmem:[%s3 + $0x8] sm:$0xf]
        %v5623 = vld [vmem:[%s3 + $0xc] sm:$0xf]
        %v5624 = vld [vmem:[%s3 + $0x10] sm:$0xf]
        %v5625 = vld [vmem:[%s3 + $0x14] sm:$0xf]
        %v5626 = vld [vmem:[%s3 + $0x18] sm:$0xf]
        %v5627 = vld [vmem:[%s3 + $0x1c] sm:$0xf]
        %v5628 = vld [vmem:[%s3 + $0x20] sm:$0xf]
        %v5629 = vld [vmem:[%s3 + $0x24] sm:$0xf]
        %v5630 = vld [vmem:[%s3 + $0x28] sm:$0xf]
        %v5631 = vld [vmem:[%s3 + $0x2c] sm:$0xf]
        %v5632 = vld [vmem:[%s3 + $0x30] sm:$0xf]
        %v5633 = vld [vmem:[%s3 + $0x34] sm:$0xf]
        %v5634 = vld [vmem:[%s3 + $0x38] sm:$0xf]
        %v5635 = vld [vmem:[%s3 + $0x3c] sm:$0xf]
        %v5636 = vld [vmem:[%s3 + $0x40] sm:$0xf]
        %v5637 = vld [vmem:[%s3 + $0x44] sm:$0xf]
        %v5638 = vld [vmem:[%s3 + $0x48] sm:$0xf]
        %v5639 = vld [vmem:[%s3 + $0x4c] sm:$0xf]
        %v5640 = vld [vmem:[%s3 + $0x50] sm:$0xf]
        %v5641 = vld [vmem:[%s3 + $0x54] sm:$0xf]
        %v5642 = vld [vmem:[%s3 + $0x58] sm:$0xf]
        %v5643 = vld [vmem:[%s3 + $0x5c] sm:$0xf]
        %v5644 = vld [vmem:[%s3 + $0x60] sm:$0xf]
        %v5645 = vld [vmem:[%s3 + $0x64] sm:$0xf]
        %v5646 = vld [vmem:[%s3 + $0x68] sm:$0xf]
        %v5647 = vld [vmem:[%s3 + $0x6c] sm:$0xf]
        %v5648 = vld [vmem:[%s3 + $0x70] sm:$0xf]
        %v5649 = vld [vmem:[%s3 + $0x74] sm:$0xf]
        %v5650 = vld [vmem:[%s3 + $0x78] sm:$0xf]
        %v5651 = vld [vmem:[%s3 + $0x7c] sm:$0xf]
        %v5652 = vld [vmem:[%s3 + $0x80] sm:$0xf]
        %v5653 = vld [vmem:[%s3 + $0x84] sm:$0xf]
        %v5654 = vld [vmem:[%s3 + $0x88] sm:$0xf]
        %v5655 = vld [vmem:[%s3 + $0x8c] sm:$0xf]
        %v5656 = vld [vmem:[%s4] sm:$0x1]
        %v5658 = vlaneseq
        %v5659 = vshrl.u32 %v5658, 7
        %v5660 = vsub.s32 0, %v5659
        %v5661 = vrot.slane %v5656, %v5660
        %v5727 = vunpack.c.l.b16 %v5556
        %v5728 = vunpack.c.h.b16 %v5556
        %v5729 = vunpack.c.l.b16 %v5557
        %v5730 = vunpack.c.l.b16 %v5558
        %v5731 = vunpack.c.h.b16 %v5558
        %v5732 = vunpack.c.l.b16 %v5559
        %v5733 = vunpack.c.l.b16 %v5560
        %v5734 = vunpack.c.h.b16 %v5560
        %v5735 = vunpack.c.l.b16 %v5561
        %v5736 = vunpack.c.l.b16 %v5562
        %v5737 = vunpack.c.h.b16 %v5562
        %v5738 = vunpack.c.l.b16 %v5563
        %v5739 = vunpack.c.l.b16 %v5564
        %v5740 = vunpack.c.h.b16 %v5564
        %v5741 = vunpack.c.l.b16 %v5565
        %v5742 = vunpack.c.l.b16 %v5566
        %v5743 = vunpack.c.h.b16 %v5566
        %v5744 = vunpack.c.l.b16 %v5567
        %v5745 = vunpack.c.l.b16 %v5568
        %v5746 = vunpack.c.h.b16 %v5568
        %v5747 = vunpack.c.l.b16 %v5569
        %v5748 = vunpack.c.l.b16 %v5570
        %v5749 = vunpack.c.h.b16 %v5570
        %v5750 = vunpack.c.l.b16 %v5571
        %v5751 = vunpack.c.l.b16 %v5572
        %v5752 = vunpack.c.h.b16 %v5572
        %v5753 = vunpack.c.l.b16 %v5573
        %v5754 = vunpack.c.l.b16 %v5574
        %v5755 = vunpack.c.h.b16 %v5574
        %v5756 = vunpack.c.l.b16 %v5575
        %v5757 = vunpack.c.l.b16 %v5576
        %v5758 = vunpack.c.h.b16 %v5576
        %v5759 = vunpack.c.l.b16 %v5577
        %v5760 = vunpack.c.l.b16 %v5578
        %v5761 = vunpack.c.h.b16 %v5578
        %v5762 = vunpack.c.l.b16 %v5579
        %v5763 = vunpack.c.l.b16 %v5580
        %v5764 = vunpack.c.h.b16 %v5580
        %v5765 = vunpack.c.l.b16 %v5581
        %v5766 = vunpack.c.l.b16 %v5582
        %v5767 = vunpack.c.h.b16 %v5582
        %v5768 = vunpack.c.l.b16 %v5583
        %v5769 = vunpack.c.l.b16 %v5584
        %v5770 = vunpack.c.h.b16 %v5584
        %v5771 = vunpack.c.l.b16 %v5585
        %v5772 = vunpack.c.l.b16 %v5586
        %v5773 = vunpack.c.h.b16 %v5586
        %v5774 = vunpack.c.l.b16 %v5587
        %v5775 = vunpack.c.l.b16 %v5588
        %v5776 = vunpack.c.h.b16 %v5588
        %v5777 = vunpack.c.l.b16 %v5589
        %v5778 = vunpack.c.l.b16 %v5590
        %v5779 = vunpack.c.h.b16 %v5590
        %v5780 = vunpack.c.l.b16 %v5591
        %v5781 = vunpack.c.l.b16 %v5592
        %v5782 = vunpack.c.h.b16 %v5592
        %v5783 = vunpack.c.l.b16 %v5593
        %v5784 = vunpack.c.l.b16 %v5594
        %v5785 = vunpack.c.h.b16 %v5594
        %v5786 = vunpack.c.l.b16 %v5595
        %v5787 = vunpack.c.l.b16 %v5596
        %v5788 = vunpack.c.h.b16 %v5596
        %v5789 = vunpack.c.l.b16 %v5597
        %v5790 = vunpack.c.l.b16 %v5598
        %v5791 = vunpack.c.h.b16 %v5598
        %v5792 = vunpack.c.l.b16 %v5599
        %v5793 = vunpack.c.l.b16 %v5600
        %v5794 = vunpack.c.h.b16 %v5600
        %v5795 = vunpack.c.l.b16 %v5601
        %v5796 = vunpack.c.l.b16 %v5602
        %v5797 = vunpack.c.h.b16 %v5602
        %v5798 = vunpack.c.l.b16 %v5603
        %v5799 = vunpack.c.l.b16 %v5604
        %v5800 = vunpack.c.h.b16 %v5604
        %v5801 = vunpack.c.l.b16 %v5605
        %v5802 = vunpack.c.l.b16 %v5606
        %v5803 = vunpack.c.h.b16 %v5606
        %v5804 = vunpack.c.l.b16 %v5607
        %v5805 = vunpack.c.l.b16 %v5608
        %v5806 = vunpack.c.h.b16 %v5608
        %v5807 = vunpack.c.l.b16 %v5609
        %v5808 = vunpack.c.l.b16 %v5610
        %v5809 = vunpack.c.h.b16 %v5610
        %v5810 = vunpack.c.l.b16 %v5611
        %v5811 = vunpack.c.l.b16 %v5612
        %v5812 = vunpack.c.h.b16 %v5612
        %v5813 = vunpack.c.l.b16 %v5613
        %v5814 = vunpack.c.l.b16 %v5614
        %v5815 = vunpack.c.h.b16 %v5614
        %v5816 = vunpack.c.l.b16 %v5615
        %v5817 = vunpack.c.l.b16 %v5616
        %v5818 = vunpack.c.h.b16 %v5616
        %v5819 = vunpack.c.l.b16 %v5617
        %v5820 = vunpack.c.l.b16 %v5618
        %v5821 = vunpack.c.h.b16 %v5618
        %v5822 = vunpack.c.l.b16 %v5619
        %v5823 = vpack.c.b16 %v5730, %v5727
        %v5824 = vpack.c.b16 %v5731, %v5728
        %v5825 = vpack.c.b16 %v5732, %v5729
        %v5826 = vpack.c.b16 %v5736, %v5733
        %v5827 = vpack.c.b16 %v5737, %v5734
        %v5828 = vpack.c.b16 %v5738, %v5735
        %v5829 = vpack.c.b16 %v5742, %v5739
        %v5830 = vpack.c.b16 %v5743, %v5740
        %v5831 = vpack.c.b16 %v5744, %v5741
        %v5832 = vpack.c.b16 %v5748, %v5745
        %v5833 = vpack.c.b16 %v5749, %v5746
        %v5834 = vpack.c.b16 %v5750, %v5747
        %v5835 = vpack.c.b16 %v5754, %v5751
        %v5836 = vpack.c.b16 %v5755, %v5752
        %v5837 = vpack.c.b16 %v5756, %v5753
        %v5838 = vpack.c.b16 %v5760, %v5757
        %v5839 = vpack.c.b16 %v5761, %v5758
        %v5840 = vpack.c.b16 %v5762, %v5759
        %v5841 = vpack.c.b16 %v5766, %v5763
        %v5842 = vpack.c.b16 %v5767, %v5764
        %v5843 = vpack.c.b16 %v5768, %v5765
        %v5844 = vpack.c.b16 %v5772, %v5769
        %v5845 = vpack.c.b16 %v5773, %v5770
        %v5846 = vpack.c.b16 %v5774, %v5771
        %v5847 = vpack.c.b16 %v5778, %v5775
        %v5848 = vpack.c.b16 %v5779, %v5776
        %v5849 = vpack.c.b16 %v5780, %v5777
        %v5850 = vpack.c.b16 %v5784, %v5781
        %v5851 = vpack.c.b16 %v5785, %v5782
        %v5852 = vpack.c.b16 %v5786, %v5783
        %v5853 = vpack.c.b16 %v5790, %v5787
        %v5854 = vpack.c.b16 %v5791, %v5788
        %v5855 = vpack.c.b16 %v5792, %v5789
        %v5856 = vpack.c.b16 %v5796, %v5793
        %v5857 = vpack.c.b16 %v5797, %v5794
        %v5858 = vpack.c.b16 %v5798, %v5795
        %v5859 = vpack.c.b16 %v5802, %v5799
        %v5860 = vpack.c.b16 %v5803, %v5800
        %v5861 = vpack.c.b16 %v5804, %v5801
        %v5862 = vpack.c.b16 %v5808, %v5805
        %v5863 = vpack.c.b16 %v5809, %v5806
        %v5864 = vpack.c.b16 %v5810, %v5807
        %v5865 = vpack.c.b16 %v5814, %v5811
        %v5866 = vpack.c.b16 %v5815, %v5812
        %v5867 = vpack.c.b16 %v5816, %v5813
        %v5868 = vpack.c.b16 %v5820, %v5817
        %v5869 = vpack.c.b16 %v5821, %v5818
        %v5870 = vpack.c.b16 %v5822, %v5819
        %v5939 = vunpack.c.l.b16 %v5620
        %v5940 = vunpack.c.l.b16 %v5621
        %v5941 = vunpack.c.l.b16 %v5622
        %v5942 = vunpack.c.l.b16 %v5623
        %v5943 = vunpack.c.l.b16 %v5624
        %v5944 = vunpack.c.l.b16 %v5625
        %v5945 = vunpack.c.l.b16 %v5626
        %v5946 = vunpack.c.l.b16 %v5627
        %v5947 = vunpack.c.l.b16 %v5628
        %v5948 = vunpack.c.l.b16 %v5629
        %v5949 = vunpack.c.l.b16 %v5630
        %v5950 = vunpack.c.l.b16 %v5631
        %v5951 = vunpack.c.l.b16 %v5632
        %v5952 = vunpack.c.l.b16 %v5633
        %v5953 = vunpack.c.l.b16 %v5634
        %v5954 = vunpack.c.l.b16 %v5635
        %v5955 = vunpack.c.l.b16 %v5636
        %v5956 = vunpack.c.l.b16 %v5637
        %v5957 = vunpack.c.l.b16 %v5638
        %v5958 = vunpack.c.l.b16 %v5639
        %v5959 = vunpack.c.l.b16 %v5640
        %v5960 = vunpack.c.l.b16 %v5641
        %v5961 = vunpack.c.l.b16 %v5642
        %v5962 = vunpack.c.l.b16 %v5643
        %v5963 = vunpack.c.l.b16 %v5644
        %v5964 = vunpack.c.l.b16 %v5645
        %v5965 = vunpack.c.l.b16 %v5646
        %v5966 = vunpack.c.l.b16 %v5647
        %v5967 = vunpack.c.l.b16 %v5648
        %v5968 = vunpack.c.l.b16 %v5649
        %v5969 = vunpack.c.l.b16 %v5650
        %v5970 = vunpack.c.l.b16 %v5651
        %v5971 = vunpack.c.l.b16 %v5652
        %v5972 = vunpack.c.l.b16 %v5653
        %v5973 = vunpack.c.l.b16 %v5654
        %v5974 = vunpack.c.l.b16 %v5655
        %v5975 = vpack.c.b16 %v5940, %v5939
        %v5976 = vpack.c.b16 %v5942, %v5941
        %v5977 = vpack.c.b16 %v5944, %v5943
        %v5978 = vpack.c.b16 %v5946, %v5945
        %v5979 = vpack.c.b16 %v5948, %v5947
        %v5980 = vpack.c.b16 %v5950, %v5949
        %v5981 = vpack.c.b16 %v5952, %v5951
        %v5982 = vpack.c.b16 %v5954, %v5953
        %v5983 = vpack.c.b16 %v5956, %v5955
        %v5984 = vpack.c.b16 %v5958, %v5957
        %v5985 = vpack.c.b16 %v5960, %v5959
        %v5986 = vpack.c.b16 %v5962, %v5961
        %v5987 = vpack.c.b16 %v5964, %v5963
        %v5988 = vpack.c.b16 %v5966, %v5965
        %v5989 = vpack.c.b16 %v5968, %v5967
        %v5990 = vpack.c.b16 %v5970, %v5969
        %v5991 = vpack.c.b16 %v5972, %v5971
        %v5992 = vpack.c.b16 %v5974, %v5973
        %vm6011 = vcmask 261120
        %v6013 = vsel %vm6011, %v5825, 0
        %v6016 = vsel %vm6011, %v5828, 0
        %v6019 = vsel %vm6011, %v5831, 0
        %v6022 = vsel %vm6011, %v5834, 0
        %v6025 = vsel %vm6011, %v5837, 0
        %v6028 = vsel %vm6011, %v5840, 0
        %v6031 = vsel %vm6011, %v5843, 0
        %v6034 = vsel %vm6011, %v5846, 0
        %v6037 = vsel %vm6011, %v5849, 0
        %v6040 = vsel %vm6011, %v5852, 0
        %v6043 = vsel %vm6011, %v5855, 0
        %v6046 = vsel %vm6011, %v5858, 0
        %v6049 = vsel %vm6011, %v5861, 0
        %v6052 = vsel %vm6011, %v5864, 0
        %v6055 = vsel %vm6011, %v5867, 0
        %v6058 = vsel %vm6011, %v5870, 0
        %6060 = vmatprep.subr.bf16.mxu0 0
        %6061 = vmatpush1.bf16.msra.mxu0 %v5982
        %6062 = vmatprep.subr.bf16.mxu0 0
        %6063 = vmatpush1.bf16.msra.mxu0 %v5981
        %6064 = vmatprep.subr.bf16.mxu0 0
        %6065 = vmatpush1.bf16.msra.mxu0 %v5980
        %6066 = vmatprep.subr.bf16.mxu0 0
        %6067 = vmatpush1.bf16.msra.mxu0 %v5979
        %6068 = vmatprep.subr.bf16.mxu0 0
        %6069 = vmatpush1.bf16.msra.mxu0 %v5978
        %6070 = vmatprep.subr.bf16.mxu0 0
        %6071 = vmatpush1.bf16.msra.mxu0 %v5977
        %6072 = vmatprep.subr.bf16.mxu0 0
        %6073 = vmatpush1.bf16.msra.mxu0 %v5976
        %6074 = vmatprep.subr.bf16.mxu0 0
        %6075 = vmatpush1.bf16.msra.mxu0 %v5975
        %6076 = vmatprep.subr.bf16.mxu0 0
        %6077 = vmatpush2.bf16.msra.mxu0 %v5990
        %6078 = vmatprep.subr.bf16.mxu0 0
        %6079 = vmatpush2.bf16.msra.mxu0 %v5989
        %6080 = vmatprep.subr.bf16.mxu0 0
        %6081 = vmatpush2.bf16.msra.mxu0 %v5988
        %6082 = vmatprep.subr.bf16.mxu0 0
        %6083 = vmatpush2.bf16.msra.mxu0 %v5987
        %6084 = vmatprep.subr.bf16.mxu0 0
        %6085 = vmatpush2.bf16.msra.mxu0 %v5986
        %6086 = vmatprep.subr.bf16.mxu0 0
        %6087 = vmatpush2.bf16.msra.mxu0 %v5985
        %6088 = vmatprep.subr.bf16.mxu0 0
        %6089 = vmatpush2.bf16.msra.mxu0 %v5984
        %6090 = vmatprep.subr.bf16.mxu0 0
        %6091 = vmatpush2.bf16.msra.mxu0 %v5983
        %6092 = vmatprep.mubr.bf16.mxu0 %v5824
        %6093 = vmatmul.mubr.bf16.gmra.mxu0 %v5823
        %v6094 = vpop.f32.mrf.mxu0
        %v6095 = vadd.f32 %v5661, %v6094
        %v6096 = vpop.f32.mrf.mxu0
        %v6097 = vpop.f32.mrf.mxu0
        %v6098 = vadd.f32 %v5661, %v6097
        %v6099 = vpop.f32.mrf.mxu0
        %6100 = vmatprep.mubr.bf16.mxu0 %v5827
        %6101 = vmatmul.mubr.bf16.gmra.mxu0 %v5826
        %v6102 = vpop.f32.mrf.mxu0
        %v6103 = vadd.f32 %v5661, %v6102
        %v6104 = vpop.f32.mrf.mxu0
        %v6105 = vpop.f32.mrf.mxu0
        %v6106 = vadd.f32 %v5661, %v6105
        %v6107 = vpop.f32.mrf.mxu0
        %6108 = vmatprep.mubr.bf16.mxu0 %v5830
        %6109 = vmatmul.mubr.bf16.gmra.mxu0 %v5829
        %v6110 = vpop.f32.mrf.mxu0
        %v6111 = vadd.f32 %v5661, %v6110
        %v6112 = vpop.f32.mrf.mxu0
        %v6113 = vpop.f32.mrf.mxu0
        %v6114 = vadd.f32 %v5661, %v6113
        %v6115 = vpop.f32.mrf.mxu0
        %6116 = vmatprep.mubr.bf16.mxu0 %v5833
        %6117 = vmatmul.mubr.bf16.gmra.mxu0 %v5832
        %v6118 = vpop.f32.mrf.mxu0
        %v6119 = vadd.f32 %v5661, %v6118
        %v6120 = vpop.f32.mrf.mxu0
        %v6121 = vpop.f32.mrf.mxu0
        %v6122 = vadd.f32 %v5661, %v6121
        %v6123 = vpop.f32.mrf.mxu0
        %6124 = vmatprep.mubr.bf16.mxu0 %v5836
        %6125 = vmatmul.mubr.bf16.gmra.mxu0 %v5835
        %v6126 = vpop.f32.mrf.mxu0
        %v6127 = vadd.f32 %v5661, %v6126
        %v6128 = vpop.f32.mrf.mxu0
        %v6129 = vpop.f32.mrf.mxu0
        %v6130 = vadd.f32 %v5661, %v6129
        %v6131 = vpop.f32.mrf.mxu0
        %6132 = vmatprep.mubr.bf16.mxu0 %v5839
        %6133 = vmatmul.mubr.bf16.gmra.mxu0 %v5838
        %v6134 = vpop.f32.mrf.mxu0
        %v6135 = vadd.f32 %v5661, %v6134
        %v6136 = vpop.f32.mrf.mxu0
        %v6137 = vpop.f32.mrf.mxu0
        %v6138 = vadd.f32 %v5661, %v6137
        %v6139 = vpop.f32.mrf.mxu0
        %6140 = vmatprep.mubr.bf16.mxu0 %v5842
        %6141 = vmatmul.mubr.bf16.gmra.mxu0 %v5841
        %v6142 = vpop.f32.mrf.mxu0
        %v6143 = vadd.f32 %v5661, %v6142
        %v6144 = vpop.f32.mrf.mxu0
        %v6145 = vpop.f32.mrf.mxu0
        %v6146 = vadd.f32 %v5661, %v6145
        %v6147 = vpop.f32.mrf.mxu0
        %6148 = vmatprep.mubr.bf16.mxu0 %v5845
        %6149 = vmatmul.mubr.bf16.gmra.mxu0 %v5844
        %v6150 = vpop.f32.mrf.mxu0
        %v6151 = vadd.f32 %v5661, %v6150
        %v6152 = vpop.f32.mrf.mxu0
        %v6153 = vpop.f32.mrf.mxu0
        %v6154 = vadd.f32 %v5661, %v6153
        %v6155 = vpop.f32.mrf.mxu0
        %6156 = vmatprep.mubr.bf16.mxu0 %v5848
        %6157 = vmatmul.mubr.bf16.gmra.mxu0 %v5847
        %v6158 = vpop.f32.mrf.mxu0
        %v6159 = vadd.f32 %v5661, %v6158
        %v6160 = vpop.f32.mrf.mxu0
        %v6161 = vpop.f32.mrf.mxu0
        %v6162 = vadd.f32 %v5661, %v6161
        %v6163 = vpop.f32.mrf.mxu0
        %6164 = vmatprep.mubr.bf16.mxu0 %v5851
        %6165 = vmatmul.mubr.bf16.gmra.mxu0 %v5850
        %v6166 = vpop.f32.mrf.mxu0
        %v6167 = vadd.f32 %v5661, %v6166
        %v6168 = vpop.f32.mrf.mxu0
        %v6169 = vpop.f32.mrf.mxu0
        %v6170 = vadd.f32 %v5661, %v6169
        %v6171 = vpop.f32.mrf.mxu0
        %6172 = vmatprep.mubr.bf16.mxu0 %v5854
        %6173 = vmatmul.mubr.bf16.gmra.mxu0 %v5853
        %v6174 = vpop.f32.mrf.mxu0
        %v6175 = vadd.f32 %v5661, %v6174
        %v6176 = vpop.f32.mrf.mxu0
        %v6177 = vpop.f32.mrf.mxu0
        %v6178 = vadd.f32 %v5661, %v6177
        %v6179 = vpop.f32.mrf.mxu0
        %6180 = vmatprep.mubr.bf16.mxu0 %v5857
        %6181 = vmatmul.mubr.bf16.gmra.mxu0 %v5856
        %v6182 = vpop.f32.mrf.mxu0
        %v6183 = vadd.f32 %v5661, %v6182
        %v6184 = vpop.f32.mrf.mxu0
        %v6185 = vpop.f32.mrf.mxu0
        %v6186 = vadd.f32 %v5661, %v6185
        %v6187 = vpop.f32.mrf.mxu0
        %6188 = vmatprep.mubr.bf16.mxu0 %v5860
        %6189 = vmatmul.mubr.bf16.gmra.mxu0 %v5859
        %v6190 = vpop.f32.mrf.mxu0
        %v6191 = vadd.f32 %v5661, %v6190
        %v6192 = vpop.f32.mrf.mxu0
        %v6193 = vpop.f32.mrf.mxu0
        %v6194 = vadd.f32 %v5661, %v6193
        %v6195 = vpop.f32.mrf.mxu0
        %6196 = vmatprep.mubr.bf16.mxu0 %v5863
        %6197 = vmatmul.mubr.bf16.gmra.mxu0 %v5862
        %v6198 = vpop.f32.mrf.mxu0
        %v6199 = vadd.f32 %v5661, %v6198
        %v6200 = vpop.f32.mrf.mxu0
        %v6201 = vpop.f32.mrf.mxu0
        %v6202 = vadd.f32 %v5661, %v6201
        %v6203 = vpop.f32.mrf.mxu0
        %6204 = vmatprep.mubr.bf16.mxu0 %v5866
        %6205 = vmatmul.mubr.bf16.gmra.mxu0 %v5865
        %v6206 = vpop.f32.mrf.mxu0
        %v6207 = vadd.f32 %v5661, %v6206
        %v6208 = vpop.f32.mrf.mxu0
        %v6209 = vpop.f32.mrf.mxu0
        %v6210 = vadd.f32 %v5661, %v6209
        %v6211 = vpop.f32.mrf.mxu0
        %6212 = vmatprep.mubr.bf16.mxu0 %v5869
        %6213 = vmatmul.mubr.bf16.gmra.mxu0 %v5868
        %v6214 = vpop.f32.mrf.mxu0
        %v6215 = vadd.f32 %v5661, %v6214
        %v6216 = vpop.f32.mrf.mxu0
        %v6217 = vpop.f32.mrf.mxu0
        %v6218 = vadd.f32 %v5661, %v6217
        %v6219 = vpop.f32.mrf.mxu0
        %6220 = vdwg.mxu0
        %6221 = vmatprep.subr.bf16.mxu0 0
        %6222 = vmatpush1.bf16.msra.mxu0 0
        %6223 = vmatprep.subr.bf16.mxu0 0
        %6224 = vmatpush1.bf16.msra.mxu0 0
        %6225 = vmatprep.subr.bf16.mxu0 0
        %6226 = vmatpush1.bf16.msra.mxu0 0
        %6227 = vmatprep.subr.bf16.mxu0 0
        %6228 = vmatpush1.bf16.msra.mxu0 0
        %6229 = vmatprep.subr.bf16.mxu0 0
        %6230 = vmatpush1.bf16.msra.mxu0 0
        %6231 = vmatprep.subr.bf16.mxu0 0
        %6232 = vmatpush1.bf16.msra.mxu0 0
        %6233 = vmatprep.subr.bf16.mxu0 0
        %6234 = vmatpush1.bf16.msra.mxu0 %v5992
        %6235 = vmatprep.subr.bf16.mxu0 0
        %6236 = vmatpush1.bf16.msra.mxu0 %v5991
        %6237 = vmatprep.subr.bf16.mxu0 0
        %6238 = vmatpush2.bf16.msra.mxu0 0
        %6239 = vmatprep.subr.bf16.mxu0 0
        %6240 = vmatpush2.bf16.msra.mxu0 0
        %6241 = vmatprep.subr.bf16.mxu0 0
        %6242 = vmatpush2.bf16.msra.mxu0 0
        %6243 = vmatprep.subr.bf16.mxu0 0
        %6244 = vmatpush2.bf16.msra.mxu0 0
        %6245 = vmatprep.subr.bf16.mxu0 0
        %6246 = vmatpush2.bf16.msra.mxu0 0
        %6247 = vmatprep.subr.bf16.mxu0 0
        %6248 = vmatpush2.bf16.msra.mxu0 0
        %6249 = vmatprep.subr.bf16.mxu0 0
        %6250 = vmatpush2.bf16.msra.mxu0 0
        %6251 = vmatprep.subr.bf16.mxu0 0
        %6252 = vmatpush2.bf16.msra.mxu0 0
        %6253 = vmatprep.mubr.bf16.mxu0 0
        %6254 = vmatmul.mubr.bf16.gmra.mxu0 %v6013
        %v6255 = vpop.f32.mrf.mxu0
        %v6256 = vadd.f32 %v6095, %v6255
        %v6257 = vpop.f32.mrf.mxu0
        %v6258 = vpop.f32.mrf.mxu0
        %v6259 = vadd.f32 %v6098, %v6258
        %v6260 = vpop.f32.mrf.mxu0
        %6261 = vmatprep.mubr.bf16.mxu0 0
        %6262 = vmatmul.mubr.bf16.gmra.mxu0 %v6016
        %v6263 = vpop.f32.mrf.mxu0
        %v6264 = vadd.f32 %v6103, %v6263
        %v6265 = vpop.f32.mrf.mxu0
        %v6266 = vpop.f32.mrf.mxu0
        %v6267 = vadd.f32 %v6106, %v6266
        %v6268 = vpop.f32.mrf.mxu0
        %6269 = vmatprep.mubr.bf16.mxu0 0
        %6270 = vmatmul.mubr.bf16.gmra.mxu0 %v6019
        %v6271 = vpop.f32.mrf.mxu0
        %v6272 = vadd.f32 %v6111, %v6271
        %v6273 = vpop.f32.mrf.mxu0
        %v6274 = vpop.f32.mrf.mxu0
        %v6275 = vadd.f32 %v6114, %v6274
        %v6276 = vpop.f32.mrf.mxu0
        %6277 = vmatprep.mubr.bf16.mxu0 0
        %6278 = vmatmul.mubr.bf16.gmra.mxu0 %v6022
        %v6279 = vpop.f32.mrf.mxu0
        %v6280 = vadd.f32 %v6119, %v6279
        %v6281 = vpop.f32.mrf.mxu0
        %v6282 = vpop.f32.mrf.mxu0
        %v6283 = vadd.f32 %v6122, %v6282
        %v6284 = vpop.f32.mrf.mxu0
        %6285 = vmatprep.mubr.bf16.mxu0 0
        %6286 = vmatmul.mubr.bf16.gmra.mxu0 %v6025
        %v6287 = vpop.f32.mrf.mxu0
        %v6288 = vadd.f32 %v6127, %v6287
        %v6289 = vpop.f32.mrf.mxu0
        %v6290 = vpop.f32.mrf.mxu0
        %v6291 = vadd.f32 %v6130, %v6290
        %v6292 = vpop.f32.mrf.mxu0
        %6293 = vmatprep.mubr.bf16.mxu0 0
        %6294 = vmatmul.mubr.bf16.gmra.mxu0 %v6028
        %v6295 = vpop.f32.mrf.mxu0
        %v6296 = vadd.f32 %v6135, %v6295
        %v6297 = vpop.f32.mrf.mxu0
        %v6298 = vpop.f32.mrf.mxu0
        %v6299 = vadd.f32 %v6138, %v6298
        %v6300 = vpop.f32.mrf.mxu0
        %6301 = vmatprep.mubr.bf16.mxu0 0
        %6302 = vmatmul.mubr.bf16.gmra.mxu0 %v6031
        %v6303 = vpop.f32.mrf.mxu0
        %v6304 = vadd.f32 %v6143, %v6303
        %v6305 = vpop.f32.mrf.mxu0
        %v6306 = vpop.f32.mrf.mxu0
        %v6307 = vadd.f32 %v6146, %v6306
        %v6308 = vpop.f32.mrf.mxu0
        %6309 = vmatprep.mubr.bf16.mxu0 0
        %6310 = vmatmul.mubr.bf16.gmra.mxu0 %v6034
        %v6311 = vpop.f32.mrf.mxu0
        %v6312 = vadd.f32 %v6151, %v6311
        %v6313 = vpop.f32.mrf.mxu0
        %v6314 = vpop.f32.mrf.mxu0
        %v6315 = vadd.f32 %v6154, %v6314
        %v6316 = vpop.f32.mrf.mxu0
        %6317 = vmatprep.mubr.bf16.mxu0 0
        %6318 = vmatmul.mubr.bf16.gmra.mxu0 %v6037
        %v6319 = vpop.f32.mrf.mxu0
        %v6320 = vadd.f32 %v6159, %v6319
        %v6321 = vpop.f32.mrf.mxu0
        %v6322 = vpop.f32.mrf.mxu0
        %v6323 = vadd.f32 %v6162, %v6322
        %v6324 = vpop.f32.mrf.mxu0
        %6325 = vmatprep.mubr.bf16.mxu0 0
        %6326 = vmatmul.mubr.bf16.gmra.mxu0 %v6040
        %v6327 = vpop.f32.mrf.mxu0
        %v6328 = vadd.f32 %v6167, %v6327
        %v6329 = vpop.f32.mrf.mxu0
        %v6330 = vpop.f32.mrf.mxu0
        %v6331 = vadd.f32 %v6170, %v6330
        %v6332 = vpop.f32.mrf.mxu0
        %6333 = vmatprep.mubr.bf16.mxu0 0
        %6334 = vmatmul.mubr.bf16.gmra.mxu0 %v6043
        %v6335 = vpop.f32.mrf.mxu0
        %v6336 = vadd.f32 %v6175, %v6335
        %v6337 = vpop.f32.mrf.mxu0
        %v6338 = vpop.f32.mrf.mxu0
        %v6339 = vadd.f32 %v6178, %v6338
        %v6340 = vpop.f32.mrf.mxu0
        %6341 = vmatprep.mubr.bf16.mxu0 0
        %6342 = vmatmul.mubr.bf16.gmra.mxu0 %v6046
        %v6343 = vpop.f32.mrf.mxu0
        %v6344 = vadd.f32 %v6183, %v6343
        %v6345 = vpop.f32.mrf.mxu0
        %v6346 = vpop.f32.mrf.mxu0
        %v6347 = vadd.f32 %v6186, %v6346
        %v6348 = vpop.f32.mrf.mxu0
        %6349 = vmatprep.mubr.bf16.mxu0 0
        %6350 = vmatmul.mubr.bf16.gmra.mxu0 %v6049
        %v6351 = vpop.f32.mrf.mxu0
        %v6352 = vadd.f32 %v6191, %v6351
        %v6353 = vpop.f32.mrf.mxu0
        %v6354 = vpop.f32.mrf.mxu0
        %v6355 = vadd.f32 %v6194, %v6354
        %v6356 = vpop.f32.mrf.mxu0
        %6357 = vmatprep.mubr.bf16.mxu0 0
        %6358 = vmatmul.mubr.bf16.gmra.mxu0 %v6052
        %v6359 = vpop.f32.mrf.mxu0
        %v6360 = vadd.f32 %v6199, %v6359
        %v6361 = vpop.f32.mrf.mxu0
        %v6362 = vpop.f32.mrf.mxu0
        %v6363 = vadd.f32 %v6202, %v6362
        %v6364 = vpop.f32.mrf.mxu0
        %6365 = vmatprep.mubr.bf16.mxu0 0
        %6366 = vmatmul.mubr.bf16.gmra.mxu0 %v6055
        %v6367 = vpop.f32.mrf.mxu0
        %v6368 = vadd.f32 %v6207, %v6367
        %v6369 = vpop.f32.mrf.mxu0
        %v6370 = vpop.f32.mrf.mxu0
        %v6371 = vadd.f32 %v6210, %v6370
        %v6372 = vpop.f32.mrf.mxu0
        %6373 = vmatprep.mubr.bf16.mxu0 0
        %6374 = vmatmul.mubr.bf16.gmra.mxu0 %v6058
        %v6375 = vpop.f32.mrf.mxu0
        %v6376 = vadd.f32 %v6215, %v6375
        %v6377 = vpop.f32.mrf.mxu0
        %v6378 = vpop.f32.mrf.mxu0
        %v6379 = vadd.f32 %v6218, %v6378
        %v6380 = vpop.f32.mrf.mxu0
        %6381 = vdwg.mxu0
        %v6382 = vld [vmem:[%s5] sm:$0x1]
        %v6384 = vlaneseq
        %v6385 = vshrl.u32 %v6384, 7
        %v6386 = vsub.s32 0, %v6385
        %v6387 = vrot.slane %v6382, %v6386
        %v6389 = vmul.f32 %v6256, %v6387
        %v6390 = vmul.f32 %v6259, %v6387
        %v6391 = vmul.f32 %v6264, %v6387
        %v6392 = vmul.f32 %v6267, %v6387
        %v6393 = vmul.f32 %v6272, %v6387
        %v6394 = vmul.f32 %v6275, %v6387
        %v6395 = vmul.f32 %v6280, %v6387
        %v6396 = vmul.f32 %v6283, %v6387
        %v6397 = vmul.f32 %v6288, %v6387
        %v6398 = vmul.f32 %v6291, %v6387
        %v6399 = vmul.f32 %v6296, %v6387
        %v6400 = vmul.f32 %v6299, %v6387
        %v6401 = vmul.f32 %v6304, %v6387
        %v6402 = vmul.f32 %v6307, %v6387
        %v6403 = vmul.f32 %v6312, %v6387
        %v6404 = vmul.f32 %v6315, %v6387
        %v6405 = vmul.f32 %v6320, %v6387
        %v6406 = vmul.f32 %v6323, %v6387
        %v6407 = vmul.f32 %v6328, %v6387
        %v6408 = vmul.f32 %v6331, %v6387
        %v6409 = vmul.f32 %v6336, %v6387
        %v6410 = vmul.f32 %v6339, %v6387
        %v6411 = vmul.f32 %v6344, %v6387
        %v6412 = vmul.f32 %v6347, %v6387
        %v6413 = vmul.f32 %v6352, %v6387
        %v6414 = vmul.f32 %v6355, %v6387
        %v6415 = vmul.f32 %v6360, %v6387
        %v6416 = vmul.f32 %v6363, %v6387
        %v6417 = vmul.f32 %v6368, %v6387
        %v6418 = vmul.f32 %v6371, %v6387
        %v6419 = vmul.f32 %v6376, %v6387
        %v6420 = vmul.f32 %v6379, %v6387
        %v6421 = vld [vmem:[%s6] sm:$0x1]
        %v6423 = vlaneseq
        %v6424 = vshrl.u32 %v6423, 7
        %v6425 = vsub.s32 0, %v6424
        %v6426 = vrot.slane %v6421, %v6425
        %v6428 = vadd.f32 %v6389, %v6426
        %v6429 = vadd.f32 %v6390, %v6426
        %v6430 = vadd.f32 %v6391, %v6426
        %v6431 = vadd.f32 %v6392, %v6426
        %v6432 = vadd.f32 %v6393, %v6426
        %v6433 = vadd.f32 %v6394, %v6426
        %v6434 = vadd.f32 %v6395, %v6426
        %v6435 = vadd.f32 %v6396, %v6426
        %v6436 = vadd.f32 %v6397, %v6426
        %v6437 = vadd.f32 %v6398, %v6426
        %v6438 = vadd.f32 %v6399, %v6426
        %v6439 = vadd.f32 %v6400, %v6426
        %v6440 = vadd.f32 %v6401, %v6426
        %v6441 = vadd.f32 %v6402, %v6426
        %v6442 = vadd.f32 %v6403, %v6426
        %v6443 = vadd.f32 %v6404, %v6426
        %v6444 = vadd.f32 %v6405, %v6426
        %v6445 = vadd.f32 %v6406, %v6426
        %v6446 = vadd.f32 %v6407, %v6426
        %v6447 = vadd.f32 %v6408, %v6426
        %v6448 = vadd.f32 %v6409, %v6426
        %v6449 = vadd.f32 %v6410, %v6426
        %v6450 = vadd.f32 %v6411, %v6426
        %v6451 = vadd.f32 %v6412, %v6426
        %v6452 = vadd.f32 %v6413, %v6426
        %v6453 = vadd.f32 %v6414, %v6426
        %v6454 = vadd.f32 %v6415, %v6426
        %v6455 = vadd.f32 %v6416, %v6426
        %v6456 = vadd.f32 %v6417, %v6426
        %v6457 = vadd.f32 %v6418, %v6426
        %v6458 = vadd.f32 %v6419, %v6426
        %v6459 = vadd.f32 %v6420, %v6426
        %v6460 = vmax.f32 %v6428, 0.0
        %v6461 = vmax.f32 %v6429, 0.0
        %v6462 = vmax.f32 %v6430, 0.0
        %v6463 = vmax.f32 %v6431, 0.0
        %v6464 = vmax.f32 %v6432, 0.0
        %v6465 = vmax.f32 %v6433, 0.0
        %v6466 = vmax.f32 %v6434, 0.0
        %v6467 = vmax.f32 %v6435, 0.0
        %v6468 = vmax.f32 %v6436, 0.0
        %v6469 = vmax.f32 %v6437, 0.0
        %v6470 = vmax.f32 %v6438, 0.0
        %v6471 = vmax.f32 %v6439, 0.0
        %v6472 = vmax.f32 %v6440, 0.0
        %v6473 = vmax.f32 %v6441, 0.0
        %v6474 = vmax.f32 %v6442, 0.0
        %v6475 = vmax.f32 %v6443, 0.0
        %v6476 = vmax.f32 %v6444, 0.0
        %v6477 = vmax.f32 %v6445, 0.0
        %v6478 = vmax.f32 %v6446, 0.0
        %v6479 = vmax.f32 %v6447, 0.0
        %v6480 = vmax.f32 %v6448, 0.0
        %v6481 = vmax.f32 %v6449, 0.0
        %v6482 = vmax.f32 %v6450, 0.0
        %v6483 = vmax.f32 %v6451, 0.0
        %v6484 = vmax.f32 %v6452, 0.0
        %v6485 = vmax.f32 %v6453, 0.0
        %v6486 = vmax.f32 %v6454, 0.0
        %v6487 = vmax.f32 %v6455, 0.0
        %v6488 = vmax.f32 %v6456, 0.0
        %v6489 = vmax.f32 %v6457, 0.0
        %v6490 = vmax.f32 %v6458, 0.0
        %v6491 = vmax.f32 %v6459, 0.0
        %v6492 = vpack.c.bf16 %v6461, %v6460
        %v6493 = vpack.c.bf16 %v6463, %v6462
        %v6494 = vpack.c.bf16 %v6465, %v6464
        %v6495 = vpack.c.bf16 %v6467, %v6466
        %v6496 = vpack.c.bf16 %v6469, %v6468
        %v6497 = vpack.c.bf16 %v6471, %v6470
        %v6498 = vpack.c.bf16 %v6473, %v6472
        %v6499 = vpack.c.bf16 %v6475, %v6474
        %v6500 = vpack.c.bf16 %v6477, %v6476
        %v6501 = vpack.c.bf16 %v6479, %v6478
        %v6502 = vpack.c.bf16 %v6481, %v6480
        %v6503 = vpack.c.bf16 %v6483, %v6482
        %v6504 = vpack.c.bf16 %v6485, %v6484
        %v6505 = vpack.c.bf16 %v6487, %v6486
        %v6506 = vpack.c.bf16 %v6489, %v6488
        %v6507 = vpack.c.bf16 %v6491, %v6490
        %v6524 = vunpack.c.l.b16 %v6492
        %v6525 = vunpack.c.h.b16 %v6492
        %v6526 = vunpack.c.l.b16 %v6493
        %v6527 = vunpack.c.h.b16 %v6493
        %v6528 = vunpack.c.l.b16 %v6494
        %v6529 = vunpack.c.h.b16 %v6494
        %v6530 = vunpack.c.l.b16 %v6495
        %v6531 = vunpack.c.h.b16 %v6495
        %v6532 = vunpack.c.l.b16 %v6496
        %v6533 = vunpack.c.h.b16 %v6496
        %v6534 = vunpack.c.l.b16 %v6497
        %v6535 = vunpack.c.h.b16 %v6497
        %v6536 = vunpack.c.l.b16 %v6498
        %v6537 = vunpack.c.h.b16 %v6498
        %v6538 = vunpack.c.l.b16 %v6499
        %v6539 = vunpack.c.h.b16 %v6499
        %v6540 = vunpack.c.l.b16 %v6500
        %v6541 = vunpack.c.h.b16 %v6500
        %v6542 = vunpack.c.l.b16 %v6501
        %v6543 = vunpack.c.h.b16 %v6501
        %v6544 = vunpack.c.l.b16 %v6502
        %v6545 = vunpack.c.h.b16 %v6502
        %v6546 = vunpack.c.l.b16 %v6503
        %v6547 = vunpack.c.h.b16 %v6503
        %v6548 = vunpack.c.l.b16 %v6504
        %v6549 = vunpack.c.h.b16 %v6504
        %v6550 = vunpack.c.l.b16 %v6505
        %v6551 = vunpack.c.h.b16 %v6505
        %v6552 = vunpack.c.l.b16 %v6506
        %v6553 = vunpack.c.h.b16 %v6506
        %v6554 = vunpack.c.l.b16 %v6507
        %v6555 = vunpack.c.h.b16 %v6507
        %v6556 = vpack.c.b16 %v6524, %v6524
        %v6557 = vpack.c.b16 %v6525, %v6525
        %v6558 = vpack.c.b16 %v6526, %v6526
        %v6559 = vpack.c.b16 %v6527, %v6527
        %v6560 = vpack.c.b16 %v6528, %v6528
        %v6561 = vpack.c.b16 %v6529, %v6529
        %v6562 = vpack.c.b16 %v6530, %v6530
        %v6563 = vpack.c.b16 %v6531, %v6531
        %v6564 = vpack.c.b16 %v6532, %v6532
        %v6565 = vpack.c.b16 %v6533, %v6533
        %v6566 = vpack.c.b16 %v6534, %v6534
        %v6567 = vpack.c.b16 %v6535, %v6535
        %v6568 = vpack.c.b16 %v6536, %v6536
        %v6569 = vpack.c.b16 %v6537, %v6537
        %v6570 = vpack.c.b16 %v6538, %v6538
        %v6571 = vpack.c.b16 %v6539, %v6539
        %v6572 = vpack.c.b16 %v6540, %v6540
        %v6573 = vpack.c.b16 %v6541, %v6541
        %v6574 = vpack.c.b16 %v6542, %v6542
        %v6575 = vpack.c.b16 %v6543, %v6543
        %v6576 = vpack.c.b16 %v6544, %v6544
        %v6577 = vpack.c.b16 %v6545, %v6545
        %v6578 = vpack.c.b16 %v6546, %v6546
        %v6579 = vpack.c.b16 %v6547, %v6547
        %v6580 = vpack.c.b16 %v6548, %v6548
        %v6581 = vpack.c.b16 %v6549, %v6549
        %v6582 = vpack.c.b16 %v6550, %v6550
        %v6583 = vpack.c.b16 %v6551, %v6551
        %v6584 = vpack.c.b16 %v6552, %v6552
        %v6585 = vpack.c.b16 %v6553, %v6553
        %v6586 = vpack.c.b16 %v6554, %v6554
        %v6587 = vpack.c.b16 %v6555, %v6555
        %6620 = vst.msk [vmem:[#allocation2 + $0x10] sm:$0xf] %vm752, %v6556
        %6621 = vst.msk [vmem:[#allocation2 + $0x14] sm:$0xf] %vm752, %v6557
        %6622 = vst.msk [vmem:[#allocation2 + $0x18] sm:$0xf] %vm752, %v6558
        %6623 = vst.msk [vmem:[#allocation2 + $0x1c] sm:$0xf] %vm752, %v6559
        %6624 = vst.msk [vmem:[#allocation2 + $0x20] sm:$0xf] %vm752, %v6560
        %6625 = vst.msk [vmem:[#allocation2 + $0x24] sm:$0xf] %vm752, %v6561
        %6626 = vst.msk [vmem:[#allocation2 + $0x28] sm:$0xf] %vm752, %v6562
        %6627 = vst.msk [vmem:[#allocation2 + $0x2c] sm:$0xf] %vm752, %v6563
        %6628 = vst.msk [vmem:[#allocation2 + $0x30] sm:$0xf] %vm752, %v6564
        %6629 = vst.msk [vmem:[#allocation2 + $0x34] sm:$0xf] %vm752, %v6565
        %6630 = vst.msk [vmem:[#allocation2 + $0x38] sm:$0xf] %vm752, %v6566
        %6631 = vst.msk [vmem:[#allocation2 + $0x3c] sm:$0xf] %vm752, %v6567
        %6632 = vst.msk [vmem:[#allocation2 + $0x40] sm:$0xf] %vm752, %v6568
        %6633 = vst.msk [vmem:[#allocation2 + $0x44] sm:$0xf] %vm752, %v6569
        %6634 = vst.msk [vmem:[#allocation2 + $0x48] sm:$0xf] %vm752, %v6570
        %6635 = vst.msk [vmem:[#allocation2 + $0x4c] sm:$0xf] %vm752, %v6571
        %6636 = vst.msk [vmem:[#allocation2 + $0x50] sm:$0xf] %vm752, %v6572
        %6637 = vst.msk [vmem:[#allocation2 + $0x54] sm:$0xf] %vm752, %v6573
        %6638 = vst.msk [vmem:[#allocation2 + $0x58] sm:$0xf] %vm752, %v6574
        %6639 = vst.msk [vmem:[#allocation2 + $0x5c] sm:$0xf] %vm752, %v6575
        %6640 = vst.msk [vmem:[#allocation2 + $0x60] sm:$0xf] %vm752, %v6576
        %6641 = vst.msk [vmem:[#allocation2 + $0x64] sm:$0xf] %vm752, %v6577
        %6642 = vst.msk [vmem:[#allocation2 + $0x68] sm:$0xf] %vm752, %v6578
        %6643 = vst.msk [vmem:[#allocation2 + $0x6c] sm:$0xf] %vm752, %v6579
        %6644 = vst.msk [vmem:[#allocation2 + $0x70] sm:$0xf] %vm752, %v6580
        %6645 = vst.msk [vmem:[#allocation2 + $0x74] sm:$0xf] %vm752, %v6581
        %6646 = vst.msk [vmem:[#allocation2 + $0x78] sm:$0xf] %vm752, %v6582
        %6647 = vst.msk [vmem:[#allocation2 + $0x7c] sm:$0xf] %vm752, %v6583
        %6648 = vst.msk [vmem:[#allocation2 + $0x80] sm:$0xf] %vm752, %v6584
        %6649 = vst.msk [vmem:[#allocation2 + $0x84] sm:$0xf] %vm752, %v6585
        %6650 = vst.msk [vmem:[#allocation2 + $0x88] sm:$0xf] %vm752, %v6586
        %6651 = vst.msk [vmem:[#allocation2 + $0x8c] sm:$0xf] %vm752, %v6587
        %v6652 = vld [vmem:[#allocation2 + $0x4] sm:$0x8]
        %v6653 = vld [vmem:[#allocation2 + $0x8] sm:$0xf]
        %v6654 = vld [vmem:[#allocation2 + $0xc] sm:$0xf]
        %v6655 = vld [vmem:[#allocation2 + $0x10] sm:$0xf]
        %v6656 = vld [vmem:[#allocation2 + $0x14] sm:$0xf]
        %v6657 = vld [vmem:[#allocation2 + $0x18] sm:$0xf]
        %v6658 = vld [vmem:[#allocation2 + $0x1c] sm:$0xf]
        %v6659 = vld [vmem:[#allocation2 + $0x20] sm:$0xf]
        %v6660 = vld [vmem:[#allocation2 + $0x24] sm:$0xf]
        %v6661 = vld [vmem:[#allocation2 + $0x28] sm:$0xf]
        %v6662 = vld [vmem:[#allocation2 + $0x2c] sm:$0xf]
        %v6663 = vld [vmem:[#allocation2 + $0x30] sm:$0xf]
        %v6664 = vld [vmem:[#allocation2 + $0x34] sm:$0xf]
        %v6665 = vld [vmem:[#allocation2 + $0x38] sm:$0xf]
        %v6666 = vld [vmem:[#allocation2 + $0x3c] sm:$0xf]
        %v6667 = vld [vmem:[#allocation2 + $0x40] sm:$0xf]
        %v6668 = vld [vmem:[#allocation2 + $0x44] sm:$0xf]
        %v6669 = vld [vmem:[#allocation2 + $0x48] sm:$0xf]
        %v6670 = vld [vmem:[#allocation2 + $0x4c] sm:$0xf]
        %v6671 = vld [vmem:[#allocation2 + $0x50] sm:$0xf]
        %v6672 = vld [vmem:[#allocation2 + $0x54] sm:$0xf]
        %v6673 = vld [vmem:[#allocation2 + $0x58] sm:$0xf]
        %v6674 = vld [vmem:[#allocation2 + $0x5c] sm:$0xf]
        %v6675 = vld [vmem:[#allocation2 + $0x60] sm:$0xf]
        %v6676 = vld [vmem:[#allocation2 + $0x64] sm:$0xf]
        %v6677 = vld [vmem:[#allocation2 + $0x68] sm:$0xf]
        %v6678 = vld [vmem:[#allocation2 + $0x6c] sm:$0xf]
        %v6679 = vld [vmem:[#allocation2 + $0x70] sm:$0xf]
        %v6680 = vld [vmem:[#allocation2 + $0x74] sm:$0xf]
        %v6681 = vld [vmem:[#allocation2 + $0x78] sm:$0xf]
        %v6682 = vld [vmem:[#allocation2 + $0x7c] sm:$0xf]
        %v6683 = vld [vmem:[#allocation2 + $0x80] sm:$0xf]
        %v6684 = vld [vmem:[#allocation2 + $0x84] sm:$0xf]
        %v6685 = vmul.bf16 %v6652, %v1342
        %v6686 = vmul.bf16 %v6653, %v1352
        %v6687 = vmul.bf16 %v6654, %v1362
        %v6688 = vmul.bf16 %v6655, %v1372
        %v6689 = vmul.bf16 %v6656, %v1382
        %v6690 = vmul.bf16 %v6657, %v1392
        %v6691 = vmul.bf16 %v6658, %v1402
        %v6692 = vmul.bf16 %v6659, %v1412
        %v6693 = vmul.bf16 %v6660, %v1422
        %v6694 = vmul.bf16 %v6661, %v1432
        %v6695 = vmul.bf16 %v6662, %v1442
        %v6696 = vmul.bf16 %v6663, %v1452
        %v6697 = vmul.bf16 %v6664, %v1462
        %v6698 = vmul.bf16 %v6665, %v1472
        %v6699 = vmul.bf16 %v6666, %v1482
        %v6700 = vmul.bf16 %v6667, %v1492
        %v6701 = vmul.bf16 %v6668, %v1502
        %v6702 = vmul.bf16 %v6669, %v1512
        %v6703 = vmul.bf16 %v6670, %v1522
        %v6704 = vmul.bf16 %v6671, %v1532
        %v6705 = vmul.bf16 %v6672, %v1542
        %v6706 = vmul.bf16 %v6673, %v1552
        %v6707 = vmul.bf16 %v6674, %v1562
        %v6708 = vmul.bf16 %v6675, %v1572
        %v6709 = vmul.bf16 %v6676, %v1582
        %v6710 = vmul.bf16 %v6677, %v1592
        %v6711 = vmul.bf16 %v6678, %v1602
        %v6712 = vmul.bf16 %v6679, %v1612
        %v6713 = vmul.bf16 %v6680, %v1622
        %v6714 = vmul.bf16 %v6681, %v1632
        %v6715 = vmul.bf16 %v6682, %v1642
        %v6716 = vmul.bf16 %v6683, %v1652
        %v6717 = vmul.bf16 %v6684, %v1657
        %v6719 = vshrl.u32 %v6685, 16
        %v6721 = vrot.slane %v6719, 7
        %v6722 = vrot.slane %v6721, 4
        %v6724 = vshrl.u32 %v6686, 16
        %v6726 = vrot.slane %v6724, 7
        %v6727 = vshll.u32 %v6686, 16
        %v6729 = vor.u32 %v6726, %v6727
        %v6730 = vsel %vm1726, %v6722, %v6729
        %v6731 = vrot.slane %v6726, 4
        %v6733 = vshrl.u32 %v6687, 16
        %v6735 = vrot.slane %v6733, 7
        %v6736 = vshll.u32 %v6687, 16
        %v6738 = vor.u32 %v6735, %v6736
        %v6739 = vsel %vm1726, %v6731, %v6738
        %v6740 = vrot.slane %v6735, 4
        %v6742 = vshrl.u32 %v6688, 16
        %v6744 = vrot.slane %v6742, 7
        %v6745 = vshll.u32 %v6688, 16
        %v6747 = vor.u32 %v6744, %v6745
        %v6748 = vsel %vm1726, %v6740, %v6747
        %v6749 = vrot.slane %v6744, 4
        %v6751 = vshrl.u32 %v6689, 16
        %v6753 = vrot.slane %v6751, 7
        %v6754 = vshll.u32 %v6689, 16
        %v6756 = vor.u32 %v6753, %v6754
        %v6757 = vsel %vm1726, %v6749, %v6756
        %v6758 = vrot.slane %v6753, 4
        %v6760 = vshrl.u32 %v6690, 16
        %v6762 = vrot.slane %v6760, 7
        %v6763 = vshll.u32 %v6690, 16
        %v6765 = vor.u32 %v6762, %v6763
        %v6766 = vsel %vm1726, %v6758, %v6765
        %v6767 = vrot.slane %v6762, 4
        %v6769 = vshrl.u32 %v6691, 16
        %v6771 = vrot.slane %v6769, 7
        %v6772 = vshll.u32 %v6691, 16
        %v6774 = vor.u32 %v6771, %v6772
        %v6775 = vsel %vm1726, %v6767, %v6774
        %v6776 = vrot.slane %v6771, 4
        %v6778 = vshrl.u32 %v6692, 16
        %v6780 = vrot.slane %v6778, 7
        %v6781 = vshll.u32 %v6692, 16
        %v6783 = vor.u32 %v6780, %v6781
        %v6784 = vsel %vm1726, %v6776, %v6783
        %v6785 = vrot.slane %v6780, 4
        %v6787 = vshrl.u32 %v6693, 16
        %v6789 = vrot.slane %v6787, 7
        %v6790 = vshll.u32 %v6693, 16
        %v6792 = vor.u32 %v6789, %v6790
        %v6793 = vsel %vm1726, %v6785, %v6792
        %v6794 = vrot.slane %v6789, 4
        %v6796 = vshrl.u32 %v6694, 16
        %v6798 = vrot.slane %v6796, 7
        %v6799 = vshll.u32 %v6694, 16
        %v6801 = vor.u32 %v6798, %v6799
        %v6802 = vsel %vm1726, %v6794, %v6801
        %v6803 = vrot.slane %v6798, 4
        %v6805 = vshrl.u32 %v6695, 16
        %v6807 = vrot.slane %v6805, 7
        %v6808 = vshll.u32 %v6695, 16
        %v6810 = vor.u32 %v6807, %v6808
        %v6811 = vsel %vm1726, %v6803, %v6810
        %v6812 = vrot.slane %v6807, 4
        %v6814 = vshrl.u32 %v6696, 16
        %v6816 = vrot.slane %v6814, 7
        %v6817 = vshll.u32 %v6696, 16
        %v6819 = vor.u32 %v6816, %v6817
        %v6820 = vsel %vm1726, %v6812, %v6819
        %v6821 = vrot.slane %v6816, 4
        %v6823 = vshrl.u32 %v6697, 16
        %v6825 = vrot.slane %v6823, 7
        %v6826 = vshll.u32 %v6697, 16
        %v6828 = vor.u32 %v6825, %v6826
        %v6829 = vsel %vm1726, %v6821, %v6828
        %v6830 = vrot.slane %v6825, 4
        %v6832 = vshrl.u32 %v6698, 16
        %v6834 = vrot.slane %v6832, 7
        %v6835 = vshll.u32 %v6698, 16
        %v6837 = vor.u32 %v6834, %v6835
        %v6838 = vsel %vm1726, %v6830, %v6837
        %v6839 = vrot.slane %v6834, 4
        %v6841 = vshrl.u32 %v6699, 16
        %v6843 = vrot.slane %v6841, 7
        %v6844 = vshll.u32 %v6699, 16
        %v6846 = vor.u32 %v6843, %v6844
        %v6847 = vsel %vm1726, %v6839, %v6846
        %v6848 = vrot.slane %v6843, 4
        %v6850 = vshrl.u32 %v6700, 16
        %v6852 = vrot.slane %v6850, 7
        %v6853 = vshll.u32 %v6700, 16
        %v6855 = vor.u32 %v6852, %v6853
        %v6856 = vsel %vm1726, %v6848, %v6855
        %v6857 = vrot.slane %v6852, 4
        %v6859 = vshrl.u32 %v6701, 16
        %v6861 = vrot.slane %v6859, 7
        %v6862 = vshll.u32 %v6701, 16
        %v6864 = vor.u32 %v6861, %v6862
        %v6865 = vsel %vm1726, %v6857, %v6864
        %v6866 = vrot.slane %v6861, 4
        %v6868 = vshrl.u32 %v6702, 16
        %v6870 = vrot.slane %v6868, 7
        %v6871 = vshll.u32 %v6702, 16
        %v6873 = vor.u32 %v6870, %v6871
        %v6874 = vsel %vm1726, %v6866, %v6873
        %v6875 = vrot.slane %v6870, 4
        %v6877 = vshrl.u32 %v6703, 16
        %v6879 = vrot.slane %v6877, 7
        %v6880 = vshll.u32 %v6703, 16
        %v6882 = vor.u32 %v6879, %v6880
        %v6883 = vsel %vm1726, %v6875, %v6882
        %v6884 = vrot.slane %v6879, 4
        %v6886 = vshrl.u32 %v6704, 16
        %v6888 = vrot.slane %v6886, 7
        %v6889 = vshll.u32 %v6704, 16
        %v6891 = vor.u32 %v6888, %v6889
        %v6892 = vsel %vm1726, %v6884, %v6891
        %v6893 = vrot.slane %v6888, 4
        %v6895 = vshrl.u32 %v6705, 16
        %v6897 = vrot.slane %v6895, 7
        %v6898 = vshll.u32 %v6705, 16
        %v6900 = vor.u32 %v6897, %v6898
        %v6901 = vsel %vm1726, %v6893, %v6900
        %v6902 = vrot.slane %v6897, 4
        %v6904 = vshrl.u32 %v6706, 16
        %v6906 = vrot.slane %v6904, 7
        %v6907 = vshll.u32 %v6706, 16
        %v6909 = vor.u32 %v6906, %v6907
        %v6910 = vsel %vm1726, %v6902, %v6909
        %v6911 = vrot.slane %v6906, 4
        %v6913 = vshrl.u32 %v6707, 16
        %v6915 = vrot.slane %v6913, 7
        %v6916 = vshll.u32 %v6707, 16
        %v6918 = vor.u32 %v6915, %v6916
        %v6919 = vsel %vm1726, %v6911, %v6918
        %v6920 = vrot.slane %v6915, 4
        %v6922 = vshrl.u32 %v6708, 16
        %v6924 = vrot.slane %v6922, 7
        %v6925 = vshll.u32 %v6708, 16
        %v6927 = vor.u32 %v6924, %v6925
        %v6928 = vsel %vm1726, %v6920, %v6927
        %v6929 = vrot.slane %v6924, 4
        %v6931 = vshrl.u32 %v6709, 16
        %v6933 = vrot.slane %v6931, 7
        %v6934 = vshll.u32 %v6709, 16
        %v6936 = vor.u32 %v6933, %v6934
        %v6937 = vsel %vm1726, %v6929, %v6936
        %v6938 = vrot.slane %v6933, 4
        %v6940 = vshrl.u32 %v6710, 16
        %v6942 = vrot.slane %v6940, 7
        %v6943 = vshll.u32 %v6710, 16
        %v6945 = vor.u32 %v6942, %v6943
        %v6946 = vsel %vm1726, %v6938, %v6945
        %v6947 = vrot.slane %v6942, 4
        %v6949 = vshrl.u32 %v6711, 16
        %v6951 = vrot.slane %v6949, 7
        %v6952 = vshll.u32 %v6711, 16
        %v6954 = vor.u32 %v6951, %v6952
        %v6955 = vsel %vm1726, %v6947, %v6954
        %v6956 = vrot.slane %v6951, 4
        %v6958 = vshrl.u32 %v6712, 16
        %v6960 = vrot.slane %v6958, 7
        %v6961 = vshll.u32 %v6712, 16
        %v6963 = vor.u32 %v6960, %v6961
        %v6964 = vsel %vm1726, %v6956, %v6963
        %v6965 = vrot.slane %v6960, 4
        %v6967 = vshrl.u32 %v6713, 16
        %v6969 = vrot.slane %v6967, 7
        %v6970 = vshll.u32 %v6713, 16
        %v6972 = vor.u32 %v6969, %v6970
        %v6973 = vsel %vm1726, %v6965, %v6972
        %v6974 = vrot.slane %v6969, 4
        %v6976 = vshrl.u32 %v6714, 16
        %v6978 = vrot.slane %v6976, 7
        %v6979 = vshll.u32 %v6714, 16
        %v6981 = vor.u32 %v6978, %v6979
        %v6982 = vsel %vm1726, %v6974, %v6981
        %v6983 = vrot.slane %v6978, 4
        %v6985 = vshrl.u32 %v6715, 16
        %v6987 = vrot.slane %v6985, 7
        %v6988 = vshll.u32 %v6715, 16
        %v6990 = vor.u32 %v6987, %v6988
        %v6991 = vsel %vm1726, %v6983, %v6990
        %v6992 = vrot.slane %v6987, 4
        %v6994 = vshrl.u32 %v6716, 16
        %v6996 = vrot.slane %v6994, 7
        %v6997 = vshll.u32 %v6716, 16
        %v6999 = vor.u32 %v6996, %v6997
        %v7000 = vsel %vm1726, %v6992, %v6999
        %v7001 = vrot.slane %v6996, 4
        %v7003 = vshrl.u32 %v6717, 16
        %v7005 = vrot.slane %v7003, 7
        %v7006 = vshll.u32 %v6717, 16
        %v7008 = vor.u32 %v7005, %v7006
        %v7009 = vsel %vm1726, %v7001, %v7008
        %7042 = vst.msk [vmem:[#allocation3] sm:$0xf] %vm752, %v6730
        %7043 = vst.msk [vmem:[#allocation3 + $0xc] sm:$0xf] %vm752, %v6739
        %7044 = vst.msk [vmem:[#allocation3 + $0x18] sm:$0xf] %vm752, %v6748
        %7045 = vst.msk [vmem:[#allocation3 + $0x24] sm:$0xf] %vm752, %v6757
        %7046 = vst.msk [vmem:[#allocation3 + $0x30] sm:$0xf] %vm752, %v6766
        %7047 = vst.msk [vmem:[#allocation3 + $0x3c] sm:$0xf] %vm752, %v6775
        %7048 = vst.msk [vmem:[#allocation3 + $0x48] sm:$0xf] %vm752, %v6784
        %7049 = vst.msk [vmem:[#allocation3 + $0x54] sm:$0xf] %vm752, %v6793
        %7050 = vst.msk [vmem:[#allocation3 + $0x60] sm:$0xf] %vm752, %v6802
        %7051 = vst.msk [vmem:[#allocation3 + $0x6c] sm:$0xf] %vm752, %v6811
        %7052 = vst.msk [vmem:[#allocation3 + $0x78] sm:$0xf] %vm752, %v6820
        %7053 = vst.msk [vmem:[#allocation3 + $0x84] sm:$0xf] %vm752, %v6829
        %7054 = vst.msk [vmem:[#allocation3 + $0x90] sm:$0xf] %vm752, %v6838
        %7055 = vst.msk [vmem:[#allocation3 + $0x9c] sm:$0xf] %vm752, %v6847
        %7056 = vst.msk [vmem:[#allocation3 + $0xa8] sm:$0xf] %vm752, %v6856
        %7057 = vst.msk [vmem:[#allocation3 + $0xb4] sm:$0xf] %vm752, %v6865
        %7058 = vst.msk [vmem:[#allocation3 + $0xc0] sm:$0xf] %vm752, %v6874
        %7059 = vst.msk [vmem:[#allocation3 + $0xcc] sm:$0xf] %vm752, %v6883
        %7060 = vst.msk [vmem:[#allocation3 + $0xd8] sm:$0xf] %vm752, %v6892
        %7061 = vst.msk [vmem:[#allocation3 + $0xe4] sm:$0xf] %vm752, %v6901
        %7062 = vst.msk [vmem:[#allocation3 + $0xf0] sm:$0xf] %vm752, %v6910
        %7063 = vst.msk [vmem:[#allocation3 + $0xfc] sm:$0xf] %vm752, %v6919
        %7064 = vst.msk [vmem:[#allocation3 + $0x108] sm:$0xf] %vm752, %v6928
        %7065 = vst.msk [vmem:[#allocation3 + $0x114] sm:$0xf] %vm752, %v6937
        %7066 = vst.msk [vmem:[#allocation3 + $0x120] sm:$0xf] %vm752, %v6946
        %7067 = vst.msk [vmem:[#allocation3 + $0x12c] sm:$0xf] %vm752, %v6955
        %7068 = vst.msk [vmem:[#allocation3 + $0x138] sm:$0xf] %vm752, %v6964
        %7069 = vst.msk [vmem:[#allocation3 + $0x144] sm:$0xf] %vm752, %v6973
        %7070 = vst.msk [vmem:[#allocation3 + $0x150] sm:$0xf] %vm752, %v6982
        %7071 = vst.msk [vmem:[#allocation3 + $0x15c] sm:$0xf] %vm752, %v6991
        %7072 = vst.msk [vmem:[#allocation3 + $0x168] sm:$0xf] %vm752, %v7000
        %7073 = vst.msk [vmem:[#allocation3 + $0x174] sm:$0xf] %vm752, %v7009
        %v7074 = vld [vmem:[#allocation2 + $0x8] sm:$0xf]
        %v7075 = vld [vmem:[#allocation2 + $0xc] sm:$0xf]
        %v7076 = vld [vmem:[#allocation2 + $0x10] sm:$0xf]
        %v7077 = vld [vmem:[#allocation2 + $0x14] sm:$0xf]
        %v7078 = vld [vmem:[#allocation2 + $0x18] sm:$0xf]
        %v7079 = vld [vmem:[#allocation2 + $0x1c] sm:$0xf]
        %v7080 = vld [vmem:[#allocation2 + $0x20] sm:$0xf]
        %v7081 = vld [vmem:[#allocation2 + $0x24] sm:$0xf]
        %v7082 = vld [vmem:[#allocation2 + $0x28] sm:$0xf]
        %v7083 = vld [vmem:[#allocation2 + $0x2c] sm:$0xf]
        %v7084 = vld [vmem:[#allocation2 + $0x30] sm:$0xf]
        %v7085 = vld [vmem:[#allocation2 + $0x34] sm:$0xf]
        %v7086 = vld [vmem:[#allocation2 + $0x38] sm:$0xf]
        %v7087 = vld [vmem:[#allocation2 + $0x3c] sm:$0xf]
        %v7088 = vld [vmem:[#allocation2 + $0x40] sm:$0xf]
        %v7089 = vld [vmem:[#allocation2 + $0x44] sm:$0xf]
        %v7090 = vld [vmem:[#allocation2 + $0x48] sm:$0xf]
        %v7091 = vld [vmem:[#allocation2 + $0x4c] sm:$0xf]
        %v7092 = vld [vmem:[#allocation2 + $0x50] sm:$0xf]
        %v7093 = vld [vmem:[#allocation2 + $0x54] sm:$0xf]
        %v7094 = vld [vmem:[#allocation2 + $0x58] sm:$0xf]
        %v7095 = vld [vmem:[#allocation2 + $0x5c] sm:$0xf]
        %v7096 = vld [vmem:[#allocation2 + $0x60] sm:$0xf]
        %v7097 = vld [vmem:[#allocation2 + $0x64] sm:$0xf]
        %v7098 = vld [vmem:[#allocation2 + $0x68] sm:$0xf]
        %v7099 = vld [vmem:[#allocation2 + $0x6c] sm:$0xf]
        %v7100 = vld [vmem:[#allocation2 + $0x70] sm:$0xf]
        %v7101 = vld [vmem:[#allocation2 + $0x74] sm:$0xf]
        %v7102 = vld [vmem:[#allocation2 + $0x78] sm:$0xf]
        %v7103 = vld [vmem:[#allocation2 + $0x7c] sm:$0xf]
        %v7104 = vld [vmem:[#allocation2 + $0x80] sm:$0xf]
        %v7105 = vld [vmem:[#allocation2 + $0x84] sm:$0xf]
        %7138 = vrot.lane.b32.xlu0 %v7074, 32
        %v7139 = vpop.permute.xlu0 %7138
        %7140 = vrot.lane.b32.xlu0 %v7075, 32
        %v7141 = vpop.permute.xlu0 %7140
        %7142 = vrot.lane.b32.xlu0 %v7076, 32
        %v7143 = vpop.permute.xlu0 %7142
        %7144 = vrot.lane.b32.xlu0 %v7077, 32
        %v7145 = vpop.permute.xlu0 %7144
        %7146 = vrot.lane.b32.xlu0 %v7078, 32
        %v7147 = vpop.permute.xlu0 %7146
        %7148 = vrot.lane.b32.xlu0 %v7079, 32
        %v7149 = vpop.permute.xlu0 %7148
        %7150 = vrot.lane.b32.xlu0 %v7080, 32
        %v7151 = vpop.permute.xlu0 %7150
        %7152 = vrot.lane.b32.xlu0 %v7081, 32
        %v7153 = vpop.permute.xlu0 %7152
        %7154 = vrot.lane.b32.xlu0 %v7082, 32
        %v7155 = vpop.permute.xlu0 %7154
        %7156 = vrot.lane.b32.xlu0 %v7083, 32
        %v7157 = vpop.permute.xlu0 %7156
        %7158 = vrot.lane.b32.xlu0 %v7084, 32
        %v7159 = vpop.permute.xlu0 %7158
        %7160 = vrot.lane.b32.xlu0 %v7085, 32
        %v7161 = vpop.permute.xlu0 %7160
        %7162 = vrot.lane.b32.xlu0 %v7086, 32
        %v7163 = vpop.permute.xlu0 %7162
        %7164 = vrot.lane.b32.xlu0 %v7087, 32
        %v7165 = vpop.permute.xlu0 %7164
        %7166 = vrot.lane.b32.xlu0 %v7088, 32
        %v7167 = vpop.permute.xlu0 %7166
        %7168 = vrot.lane.b32.xlu0 %v7089, 32
        %v7169 = vpop.permute.xlu0 %7168
        %7170 = vrot.lane.b32.xlu0 %v7090, 32
        %v7171 = vpop.permute.xlu0 %7170
        %7172 = vrot.lane.b32.xlu0 %v7091, 32
        %v7173 = vpop.permute.xlu0 %7172
        %7174 = vrot.lane.b32.xlu0 %v7092, 32
        %v7175 = vpop.permute.xlu0 %7174
        %7176 = vrot.lane.b32.xlu0 %v7093, 32
        %v7177 = vpop.permute.xlu0 %7176
        %7178 = vrot.lane.b32.xlu0 %v7094, 32
        %v7179 = vpop.permute.xlu0 %7178
        %7180 = vrot.lane.b32.xlu0 %v7095, 32
        %v7181 = vpop.permute.xlu0 %7180
        %7182 = vrot.lane.b32.xlu0 %v7096, 32
        %v7183 = vpop.permute.xlu0 %7182
        %7184 = vrot.lane.b32.xlu0 %v7097, 32
        %v7185 = vpop.permute.xlu0 %7184
        %7186 = vrot.lane.b32.xlu0 %v7098, 32
        %v7187 = vpop.permute.xlu0 %7186
        %7188 = vrot.lane.b32.xlu0 %v7099, 32
        %v7189 = vpop.permute.xlu0 %7188
        %7190 = vrot.lane.b32.xlu0 %v7100, 32
        %v7191 = vpop.permute.xlu0 %7190
        %7192 = vrot.lane.b32.xlu0 %v7101, 32
        %v7193 = vpop.permute.xlu0 %7192
        %7194 = vrot.lane.b32.xlu0 %v7102, 32
        %v7195 = vpop.permute.xlu0 %7194
        %7196 = vrot.lane.b32.xlu0 %v7103, 32
        %v7197 = vpop.permute.xlu0 %7196
        %7198 = vrot.lane.b32.xlu0 %v7104, 32
        %v7199 = vpop.permute.xlu0 %7198
        %7200 = vrot.lane.b32.xlu0 %v7105, 32
        %v7201 = vpop.permute.xlu0 %7200
        %7234 = vst.msk [vmem:[#allocation3] sm:$0xf] %vm2243, %v7139
        %7235 = vst.msk [vmem:[#allocation3 + $0xc] sm:$0xf] %vm2243, %v7141
        %7236 = vst.msk [vmem:[#allocation3 + $0x18] sm:$0xf] %vm2243, %v7143
        %7237 = vst.msk [vmem:[#allocation3 + $0x24] sm:$0xf] %vm2243, %v7145
        %7238 = vst.msk [vmem:[#allocation3 + $0x30] sm:$0xf] %vm2243, %v7147
        %7239 = vst.msk [vmem:[#allocation3 + $0x3c] sm:$0xf] %vm2243, %v7149
        %7240 = vst.msk [vmem:[#allocation3 + $0x48] sm:$0xf] %vm2243, %v7151
        %7241 = vst.msk [vmem:[#allocation3 + $0x54] sm:$0xf] %vm2243, %v7153
        %7242 = vst.msk [vmem:[#allocation3 + $0x60] sm:$0xf] %vm2243, %v7155
        %7243 = vst.msk [vmem:[#allocation3 + $0x6c] sm:$0xf] %vm2243, %v7157
        %7244 = vst.msk [vmem:[#allocation3 + $0x78] sm:$0xf] %vm2243, %v7159
        %7245 = vst.msk [vmem:[#allocation3 + $0x84] sm:$0xf] %vm2243, %v7161
        %7246 = vst.msk [vmem:[#allocation3 + $0x90] sm:$0xf] %vm2243, %v7163
        %7247 = vst.msk [vmem:[#allocation3 + $0x9c] sm:$0xf] %vm2243, %v7165
        %7248 = vst.msk [vmem:[#allocation3 + $0xa8] sm:$0xf] %vm2243, %v7167
        %7249 = vst.msk [vmem:[#allocation3 + $0xb4] sm:$0xf] %vm2243, %v7169
        %7250 = vst.msk [vmem:[#allocation3 + $0xc0] sm:$0xf] %vm2243, %v7171
        %7251 = vst.msk [vmem:[#allocation3 + $0xcc] sm:$0xf] %vm2243, %v7173
        %7252 = vst.msk [vmem:[#allocation3 + $0xd8] sm:$0xf] %vm2243, %v7175
        %7253 = vst.msk [vmem:[#allocation3 + $0xe4] sm:$0xf] %vm2243, %v7177
        %7254 = vst.msk [vmem:[#allocation3 + $0xf0] sm:$0xf] %vm2243, %v7179
        %7255 = vst.msk [vmem:[#allocation3 + $0xfc] sm:$0xf] %vm2243, %v7181
        %7256 = vst.msk [vmem:[#allocation3 + $0x108] sm:$0xf] %vm2243, %v7183
        %7257 = vst.msk [vmem:[#allocation3 + $0x114] sm:$0xf] %vm2243, %v7185
        %7258 = vst.msk [vmem:[#allocation3 + $0x120] sm:$0xf] %vm2243, %v7187
        %7259 = vst.msk [vmem:[#allocation3 + $0x12c] sm:$0xf] %vm2243, %v7189
        %7260 = vst.msk [vmem:[#allocation3 + $0x138] sm:$0xf] %vm2243, %v7191
        %7261 = vst.msk [vmem:[#allocation3 + $0x144] sm:$0xf] %vm2243, %v7193
        %7262 = vst.msk [vmem:[#allocation3 + $0x150] sm:$0xf] %vm2243, %v7195
        %7263 = vst.msk [vmem:[#allocation3 + $0x15c] sm:$0xf] %vm2243, %v7197
        %7264 = vst.msk [vmem:[#allocation3 + $0x168] sm:$0xf] %vm2243, %v7199
        %7265 = vst.msk [vmem:[#allocation3 + $0x174] sm:$0xf] %vm2243, %v7201
        %v7266 = vld [vmem:[#allocation2 + $0x8] sm:$0xf]
        %v7267 = vld [vmem:[#allocation2 + $0xc] sm:$0xf]
        %v7268 = vld [vmem:[#allocation2 + $0x10] sm:$0xf]
        %v7269 = vld [vmem:[#allocation2 + $0x14] sm:$0xf]
        %v7270 = vld [vmem:[#allocation2 + $0x18] sm:$0xf]
        %v7271 = vld [vmem:[#allocation2 + $0x1c] sm:$0xf]
        %v7272 = vld [vmem:[#allocation2 + $0x20] sm:$0xf]
        %v7273 = vld [vmem:[#allocation2 + $0x24] sm:$0xf]
        %v7274 = vld [vmem:[#allocation2 + $0x28] sm:$0xf]
        %v7275 = vld [vmem:[#allocation2 + $0x2c] sm:$0xf]
        %v7276 = vld [vmem:[#allocation2 + $0x30] sm:$0xf]
        %v7277 = vld [vmem:[#allocation2 + $0x34] sm:$0xf]
        %v7278 = vld [vmem:[#allocation2 + $0x38] sm:$0xf]
        %v7279 = vld [vmem:[#allocation2 + $0x3c] sm:$0xf]
        %v7280 = vld [vmem:[#allocation2 + $0x40] sm:$0xf]
        %v7281 = vld [vmem:[#allocation2 + $0x44] sm:$0xf]
        %v7282 = vld [vmem:[#allocation2 + $0x48] sm:$0xf]
        %v7283 = vld [vmem:[#allocation2 + $0x4c] sm:$0xf]
        %v7284 = vld [vmem:[#allocation2 + $0x50] sm:$0xf]
        %v7285 = vld [vmem:[#allocation2 + $0x54] sm:$0xf]
        %v7286 = vld [vmem:[#allocation2 + $0x58] sm:$0xf]
        %v7287 = vld [vmem:[#allocation2 + $0x5c] sm:$0xf]
        %v7288 = vld [vmem:[#allocation2 + $0x60] sm:$0xf]
        %v7289 = vld [vmem:[#allocation2 + $0x64] sm:$0xf]
        %v7290 = vld [vmem:[#allocation2 + $0x68] sm:$0xf]
        %v7291 = vld [vmem:[#allocation2 + $0x6c] sm:$0xf]
        %v7292 = vld [vmem:[#allocation2 + $0x70] sm:$0xf]
        %v7293 = vld [vmem:[#allocation2 + $0x74] sm:$0xf]
        %v7294 = vld [vmem:[#allocation2 + $0x78] sm:$0xf]
        %v7295 = vld [vmem:[#allocation2 + $0x7c] sm:$0xf]
        %v7296 = vld [vmem:[#allocation2 + $0x80] sm:$0xf]
        %v7297 = vld [vmem:[#allocation2 + $0x84] sm:$0xf]
        %v7298 = vld [vmem:[#allocation2 + $0x88] sm:$0x1]
        %v7299 = vmul.bf16 %v7266, %v2555
        %v7300 = vmul.bf16 %v7267, %v2564
        %v7301 = vmul.bf16 %v7268, %v2573
        %v7302 = vmul.bf16 %v7269, %v2582
        %v7303 = vmul.bf16 %v7270, %v2591
        %v7304 = vmul.bf16 %v7271, %v2600
        %v7305 = vmul.bf16 %v7272, %v2609
        %v7306 = vmul.bf16 %v7273, %v2618
        %v7307 = vmul.bf16 %v7274, %v2627
        %v7308 = vmul.bf16 %v7275, %v2636
        %v7309 = vmul.bf16 %v7276, %v2645
        %v7310 = vmul.bf16 %v7277, %v2654
        %v7311 = vmul.bf16 %v7278, %v2663
        %v7312 = vmul.bf16 %v7279, %v2672
        %v7313 = vmul.bf16 %v7280, %v2681
        %v7314 = vmul.bf16 %v7281, %v2690
        %v7315 = vmul.bf16 %v7282, %v2699
        %v7316 = vmul.bf16 %v7283, %v2708
        %v7317 = vmul.bf16 %v7284, %v2717
        %v7318 = vmul.bf16 %v7285, %v2726
        %v7319 = vmul.bf16 %v7286, %v2735
        %v7320 = vmul.bf16 %v7287, %v2744
        %v7321 = vmul.bf16 %v7288, %v2753
        %v7322 = vmul.bf16 %v7289, %v2762
        %v7323 = vmul.bf16 %v7290, %v2771
        %v7324 = vmul.bf16 %v7291, %v2780
        %v7325 = vmul.bf16 %v7292, %v2789
        %v7326 = vmul.bf16 %v7293, %v2798
        %v7327 = vmul.bf16 %v7294, %v2807
        %v7328 = vmul.bf16 %v7295, %v2816
        %v7329 = vmul.bf16 %v7296, %v2825
        %v7330 = vmul.bf16 %v7297, %v2834
        %v7331 = vmul.bf16 %v7298, %v2835
        %v7333 = vshrl.u32 %v7299, 16
        %v7335 = vrot.slane %v7333, 4
        %v7336 = vshll.u32 %v7299, 16
        %v7338 = vrot.slane %v7336, 5
        %v7339 = vor.u32 %v7335, %v7338
        %v7340 = vrot.slane %v7339, 4
        %v7342 = vshll.u32 %v7300, 16
        %v7344 = vrot.slane %v7342, 5
        %v7345 = vsel %vm1338, %v7340, %v7344
        %v7346 = vshrl.u32 %v7300, 16
        %v7348 = vrot.slane %v7346, 4
        %v7349 = vor.u32 %v7348, %v7344
        %v7350 = vrot.slane %v7349, 4
        %v7352 = vshll.u32 %v7301, 16
        %v7354 = vrot.slane %v7352, 5
        %v7355 = vsel %vm1338, %v7350, %v7354
        %v7356 = vshrl.u32 %v7301, 16
        %v7358 = vrot.slane %v7356, 4
        %v7359 = vor.u32 %v7358, %v7354
        %v7360 = vrot.slane %v7359, 4
        %v7362 = vshll.u32 %v7302, 16
        %v7364 = vrot.slane %v7362, 5
        %v7365 = vsel %vm1338, %v7360, %v7364
        %v7366 = vshrl.u32 %v7302, 16
        %v7368 = vrot.slane %v7366, 4
        %v7369 = vor.u32 %v7368, %v7364
        %v7370 = vrot.slane %v7369, 4
        %v7372 = vshll.u32 %v7303, 16
        %v7374 = vrot.slane %v7372, 5
        %v7375 = vsel %vm1338, %v7370, %v7374
        %v7376 = vshrl.u32 %v7303, 16
        %v7378 = vrot.slane %v7376, 4
        %v7379 = vor.u32 %v7378, %v7374
        %v7380 = vrot.slane %v7379, 4
        %v7382 = vshll.u32 %v7304, 16
        %v7384 = vrot.slane %v7382, 5
        %v7385 = vsel %vm1338, %v7380, %v7384
        %v7386 = vshrl.u32 %v7304, 16
        %v7388 = vrot.slane %v7386, 4
        %v7389 = vor.u32 %v7388, %v7384
        %v7390 = vrot.slane %v7389, 4
        %v7392 = vshll.u32 %v7305, 16
        %v7394 = vrot.slane %v7392, 5
        %v7395 = vsel %vm1338, %v7390, %v7394
        %v7396 = vshrl.u32 %v7305, 16
        %v7398 = vrot.slane %v7396, 4
        %v7399 = vor.u32 %v7398, %v7394
        %v7400 = vrot.slane %v7399, 4
        %v7402 = vshll.u32 %v7306, 16
        %v7404 = vrot.slane %v7402, 5
        %v7405 = vsel %vm1338, %v7400, %v7404
        %v7406 = vshrl.u32 %v7306, 16
        %v7408 = vrot.slane %v7406, 4
        %v7409 = vor.u32 %v7408, %v7404
        %v7410 = vrot.slane %v7409, 4
        %v7412 = vshll.u32 %v7307, 16
        %v7414 = vrot.slane %v7412, 5
        %v7415 = vsel %vm1338, %v7410, %v7414
        %v7416 = vshrl.u32 %v7307, 16
        %v7418 = vrot.slane %v7416, 4
        %v7419 = vor.u32 %v7418, %v7414
        %v7420 = vrot.slane %v7419, 4
        %v7422 = vshll.u32 %v7308, 16
        %v7424 = vrot.slane %v7422, 5
        %v7425 = vsel %vm1338, %v7420, %v7424
        %v7426 = vshrl.u32 %v7308, 16
        %v7428 = vrot.slane %v7426, 4
        %v7429 = vor.u32 %v7428, %v7424
        %v7430 = vrot.slane %v7429, 4
        %v7432 = vshll.u32 %v7309, 16
        %v7434 = vrot.slane %v7432, 5
        %v7435 = vsel %vm1338, %v7430, %v7434
        %v7436 = vshrl.u32 %v7309, 16
        %v7438 = vrot.slane %v7436, 4
        %v7439 = vor.u32 %v7438, %v7434
        %v7440 = vrot.slane %v7439, 4
        %v7442 = vshll.u32 %v7310, 16
        %v7444 = vrot.slane %v7442, 5
        %v7445 = vsel %vm1338, %v7440, %v7444
        %v7446 = vshrl.u32 %v7310, 16
        %v7448 = vrot.slane %v7446, 4
        %v7449 = vor.u32 %v7448, %v7444
        %v7450 = vrot.slane %v7449, 4
        %v7452 = vshll.u32 %v7311, 16
        %v7454 = vrot.slane %v7452, 5
        %v7455 = vsel %vm1338, %v7450, %v7454
        %v7456 = vshrl.u32 %v7311, 16
        %v7458 = vrot.slane %v7456, 4
        %v7459 = vor.u32 %v7458, %v7454
        %v7460 = vrot.slane %v7459, 4
        %v7462 = vshll.u32 %v7312, 16
        %v7464 = vrot.slane %v7462, 5
        %v7465 = vsel %vm1338, %v7460, %v7464
        %v7466 = vshrl.u32 %v7312, 16
        %v7468 = vrot.slane %v7466, 4
        %v7469 = vor.u32 %v7468, %v7464
        %v7470 = vrot.slane %v7469, 4
        %v7472 = vshll.u32 %v7313, 16
        %v7474 = vrot.slane %v7472, 5
        %v7475 = vsel %vm1338, %v7470, %v7474
        %v7476 = vshrl.u32 %v7313, 16
        %v7478 = vrot.slane %v7476, 4
        %v7479 = vor.u32 %v7478, %v7474
        %v7480 = vrot.slane %v7479, 4
        %v7482 = vshll.u32 %v7314, 16
        %v7484 = vrot.slane %v7482, 5
        %v7485 = vsel %vm1338, %v7480, %v7484
        %v7486 = vshrl.u32 %v7314, 16
        %v7488 = vrot.slane %v7486, 4
        %v7489 = vor.u32 %v7488, %v7484
        %v7490 = vrot.slane %v7489, 4
        %v7492 = vshll.u32 %v7315, 16
        %v7494 = vrot.slane %v7492, 5
        %v7495 = vsel %vm1338, %v7490, %v7494
        %v7496 = vshrl.u32 %v7315, 16
        %v7498 = vrot.slane %v7496, 4
        %v7499 = vor.u32 %v7498, %v7494
        %v7500 = vrot.slane %v7499, 4
        %v7502 = vshll.u32 %v7316, 16
        %v7504 = vrot.slane %v7502, 5
        %v7505 = vsel %vm1338, %v7500, %v7504
        %v7506 = vshrl.u32 %v7316, 16
        %v7508 = vrot.slane %v7506, 4
        %v7509 = vor.u32 %v7508, %v7504
        %v7510 = vrot.slane %v7509, 4
        %v7512 = vshll.u32 %v7317, 16
        %v7514 = vrot.slane %v7512, 5
        %v7515 = vsel %vm1338, %v7510, %v7514
        %v7516 = vshrl.u32 %v7317, 16
        %v7518 = vrot.slane %v7516, 4
        %v7519 = vor.u32 %v7518, %v7514
        %v7520 = vrot.slane %v7519, 4
        %v7522 = vshll.u32 %v7318, 16
        %v7524 = vrot.slane %v7522, 5
        %v7525 = vsel %vm1338, %v7520, %v7524
        %v7526 = vshrl.u32 %v7318, 16
        %v7528 = vrot.slane %v7526, 4
        %v7529 = vor.u32 %v7528, %v7524
        %v7530 = vrot.slane %v7529, 4
        %v7532 = vshll.u32 %v7319, 16
        %v7534 = vrot.slane %v7532, 5
        %v7535 = vsel %vm1338, %v7530, %v7534
        %v7536 = vshrl.u32 %v7319, 16
        %v7538 = vrot.slane %v7536, 4
        %v7539 = vor.u32 %v7538, %v7534
        %v7540 = vrot.slane %v7539, 4
        %v7542 = vshll.u32 %v7320, 16
        %v7544 = vrot.slane %v7542, 5
        %v7545 = vsel %vm1338, %v7540, %v7544
        %v7546 = vshrl.u32 %v7320, 16
        %v7548 = vrot.slane %v7546, 4
        %v7549 = vor.u32 %v7548, %v7544
        %v7550 = vrot.slane %v7549, 4
        %v7552 = vshll.u32 %v7321, 16
        %v7554 = vrot.slane %v7552, 5
        %v7555 = vsel %vm1338, %v7550, %v7554
        %v7556 = vshrl.u32 %v7321, 16
        %v7558 = vrot.slane %v7556, 4
        %v7559 = vor.u32 %v7558, %v7554
        %v7560 = vrot.slane %v7559, 4
        %v7562 = vshll.u32 %v7322, 16
        %v7564 = vrot.slane %v7562, 5
        %v7565 = vsel %vm1338, %v7560, %v7564
        %v7566 = vshrl.u32 %v7322, 16
        %v7568 = vrot.slane %v7566, 4
        %v7569 = vor.u32 %v7568, %v7564
        %v7570 = vrot.slane %v7569, 4
        %v7572 = vshll.u32 %v7323, 16
        %v7574 = vrot.slane %v7572, 5
        %v7575 = vsel %vm1338, %v7570, %v7574
        %v7576 = vshrl.u32 %v7323, 16
        %v7578 = vrot.slane %v7576, 4
        %v7579 = vor.u32 %v7578, %v7574
        %v7580 = vrot.slane %v7579, 4
        %v7582 = vshll.u32 %v7324, 16
        %v7584 = vrot.slane %v7582, 5
        %v7585 = vsel %vm1338, %v7580, %v7584
        %v7586 = vshrl.u32 %v7324, 16
        %v7588 = vrot.slane %v7586, 4
        %v7589 = vor.u32 %v7588, %v7584
        %v7590 = vrot.slane %v7589, 4
        %v7592 = vshll.u32 %v7325, 16
        %v7594 = vrot.slane %v7592, 5
        %v7595 = vsel %vm1338, %v7590, %v7594
        %v7596 = vshrl.u32 %v7325, 16
        %v7598 = vrot.slane %v7596, 4
        %v7599 = vor.u32 %v7598, %v7594
        %v7600 = vrot.slane %v7599, 4
        %v7602 = vshll.u32 %v7326, 16
        %v7604 = vrot.slane %v7602, 5
        %v7605 = vsel %vm1338, %v7600, %v7604
        %v7606 = vshrl.u32 %v7326, 16
        %v7608 = vrot.slane %v7606, 4
        %v7609 = vor.u32 %v7608, %v7604
        %v7610 = vrot.slane %v7609, 4
        %v7612 = vshll.u32 %v7327, 16
        %v7614 = vrot.slane %v7612, 5
        %v7615 = vsel %vm1338, %v7610, %v7614
        %v7616 = vshrl.u32 %v7327, 16
        %v7618 = vrot.slane %v7616, 4
        %v7619 = vor.u32 %v7618, %v7614
        %v7620 = vrot.slane %v7619, 4
        %v7622 = vshll.u32 %v7328, 16
        %v7624 = vrot.slane %v7622, 5
        %v7625 = vsel %vm1338, %v7620, %v7624
        %v7626 = vshrl.u32 %v7328, 16
        %v7628 = vrot.slane %v7626, 4
        %v7629 = vor.u32 %v7628, %v7624
        %v7630 = vrot.slane %v7629, 4
        %v7632 = vshll.u32 %v7329, 16
        %v7634 = vrot.slane %v7632, 5
        %v7635 = vsel %vm1338, %v7630, %v7634
        %v7636 = vshrl.u32 %v7329, 16
        %v7638 = vrot.slane %v7636, 4
        %v7639 = vor.u32 %v7638, %v7634
        %v7640 = vrot.slane %v7639, 4
        %v7642 = vshll.u32 %v7330, 16
        %v7644 = vrot.slane %v7642, 5
        %v7645 = vsel %vm1338, %v7640, %v7644
        %v7646 = vshrl.u32 %v7330, 16
        %v7648 = vrot.slane %v7646, 4
        %v7649 = vor.u32 %v7648, %v7644
        %v7650 = vrot.slane %v7649, 4
        %v7652 = vshll.u32 %v7331, 16
        %v7654 = vrot.slane %v7652, 5
        %v7655 = vsel %vm1338, %v7650, %v7654
        %7656 = vrot.lane.b32.xlu0 %v7345, 64
        %v7657 = vpop.permute.xlu0 %7656
        %7658 = vrot.lane.b32.xlu0 %v7355, 64
        %v7659 = vpop.permute.xlu0 %7658
        %7660 = vrot.lane.b32.xlu0 %v7365, 64
        %v7661 = vpop.permute.xlu0 %7660
        %7662 = vrot.lane.b32.xlu0 %v7375, 64
        %v7663 = vpop.permute.xlu0 %7662
        %7664 = vrot.lane.b32.xlu0 %v7385, 64
        %v7665 = vpop.permute.xlu0 %7664
        %7666 = vrot.lane.b32.xlu0 %v7395, 64
        %v7667 = vpop.permute.xlu0 %7666
        %7668 = vrot.lane.b32.xlu0 %v7405, 64
        %v7669 = vpop.permute.xlu0 %7668
        %7670 = vrot.lane.b32.xlu0 %v7415, 64
        %v7671 = vpop.permute.xlu0 %7670
        %7672 = vrot.lane.b32.xlu0 %v7425, 64
        %v7673 = vpop.permute.xlu0 %7672
        %7674 = vrot.lane.b32.xlu0 %v7435, 64
        %v7675 = vpop.permute.xlu0 %7674
        %7676 = vrot.lane.b32.xlu0 %v7445, 64
        %v7677 = vpop.permute.xlu0 %7676
        %7678 = vrot.lane.b32.xlu0 %v7455, 64
        %v7679 = vpop.permute.xlu0 %7678
        %7680 = vrot.lane.b32.xlu0 %v7465, 64
        %v7681 = vpop.permute.xlu0 %7680
        %7682 = vrot.lane.b32.xlu0 %v7475, 64
        %v7683 = vpop.permute.xlu0 %7682
        %7684 = vrot.lane.b32.xlu0 %v7485, 64
        %v7685 = vpop.permute.xlu0 %7684
        %7686 = vrot.lane.b32.xlu0 %v7495, 64
        %v7687 = vpop.permute.xlu0 %7686
        %7688 = vrot.lane.b32.xlu0 %v7505, 64
        %v7689 = vpop.permute.xlu0 %7688
        %7690 = vrot.lane.b32.xlu0 %v7515, 64
        %v7691 = vpop.permute.xlu0 %7690
        %7692 = vrot.lane.b32.xlu0 %v7525, 64
        %v7693 = vpop.permute.xlu0 %7692
        %7694 = vrot.lane.b32.xlu0 %v7535, 64
        %v7695 = vpop.permute.xlu0 %7694
        %7696 = vrot.lane.b32.xlu0 %v7545, 64
        %v7697 = vpop.permute.xlu0 %7696
        %7698 = vrot.lane.b32.xlu0 %v7555, 64
        %v7699 = vpop.permute.xlu0 %7698
        %7700 = vrot.lane.b32.xlu0 %v7565, 64
        %v7701 = vpop.permute.xlu0 %7700
        %7702 = vrot.lane.b32.xlu0 %v7575, 64
        %v7703 = vpop.permute.xlu0 %7702
        %7704 = vrot.lane.b32.xlu0 %v7585, 64
        %v7705 = vpop.permute.xlu0 %7704
        %7706 = vrot.lane.b32.xlu0 %v7595, 64
        %v7707 = vpop.permute.xlu0 %7706
        %7708 = vrot.lane.b32.xlu0 %v7605, 64
        %v7709 = vpop.permute.xlu0 %7708
        %7710 = vrot.lane.b32.xlu0 %v7615, 64
        %v7711 = vpop.permute.xlu0 %7710
        %7712 = vrot.lane.b32.xlu0 %v7625, 64
        %v7713 = vpop.permute.xlu0 %7712
        %7714 = vrot.lane.b32.xlu0 %v7635, 64
        %v7715 = vpop.permute.xlu0 %7714
        %7716 = vrot.lane.b32.xlu0 %v7645, 64
        %v7717 = vpop.permute.xlu0 %7716
        %7718 = vrot.lane.b32.xlu0 %v7655, 64
        %v7719 = vpop.permute.xlu0 %7718
        %7752 = vst.msk [vmem:[#allocation3] sm:$0xf] %vm3322, %v7657
        %7753 = vst.msk [vmem:[#allocation3 + $0xc] sm:$0xf] %vm3322, %v7659
        %7754 = vst.msk [vmem:[#allocation3 + $0x18] sm:$0xf] %vm3322, %v7661
        %7755 = vst.msk [vmem:[#allocation3 + $0x24] sm:$0xf] %vm3322, %v7663
        %7756 = vst.msk [vmem:[#allocation3 + $0x30] sm:$0xf] %vm3322, %v7665
        %7757 = vst.msk [vmem:[#allocation3 + $0x3c] sm:$0xf] %vm3322, %v7667
        %7758 = vst.msk [vmem:[#allocation3 + $0x48] sm:$0xf] %vm3322, %v7669
        %7759 = vst.msk [vmem:[#allocation3 + $0x54] sm:$0xf] %vm3322, %v7671
        %7760 = vst.msk [vmem:[#allocation3 + $0x60] sm:$0xf] %vm3322, %v7673
        %7761 = vst.msk [vmem:[#allocation3 + $0x6c] sm:$0xf] %vm3322, %v7675
        %7762 = vst.msk [vmem:[#allocation3 + $0x78] sm:$0xf] %vm3322, %v7677
        %7763 = vst.msk [vmem:[#allocation3 + $0x84] sm:$0xf] %vm3322, %v7679
        %7764 = vst.msk [vmem:[#allocation3 + $0x90] sm:$0xf] %vm3322, %v7681
        %7765 = vst.msk [vmem:[#allocation3 + $0x9c] sm:$0xf] %vm3322, %v7683
        %7766 = vst.msk [vmem:[#allocation3 + $0xa8] sm:$0xf] %vm3322, %v7685
        %7767 = vst.msk [vmem:[#allocation3 + $0xb4] sm:$0xf] %vm3322, %v7687
        %7768 = vst.msk [vmem:[#allocation3 + $0xc0] sm:$0xf] %vm3322, %v7689
        %7769 = vst.msk [vmem:[#allocation3 + $0xcc] sm:$0xf] %vm3322, %v7691
        %7770 = vst.msk [vmem:[#allocation3 + $0xd8] sm:$0xf] %vm3322, %v7693
        %7771 = vst.msk [vmem:[#allocation3 + $0xe4] sm:$0xf] %vm3322, %v7695
        %7772 = vst.msk [vmem:[#allocation3 + $0xf0] sm:$0xf] %vm3322, %v7697
        %7773 = vst.msk [vmem:[#allocation3 + $0xfc] sm:$0xf] %vm3322, %v7699
        %7774 = vst.msk [vmem:[#allocation3 + $0x108] sm:$0xf] %vm3322, %v7701
        %7775 = vst.msk [vmem:[#allocation3 + $0x114] sm:$0xf] %vm3322, %v7703
        %7776 = vst.msk [vmem:[#allocation3 + $0x120] sm:$0xf] %vm3322, %v7705
        %7777 = vst.msk [vmem:[#allocation3 + $0x12c] sm:$0xf] %vm3322, %v7707
        %7778 = vst.msk [vmem:[#allocation3 + $0x138] sm:$0xf] %vm3322, %v7709
        %7779 = vst.msk [vmem:[#allocation3 + $0x144] sm:$0xf] %vm3322, %v7711
        %7780 = vst.msk [vmem:[#allocation3 + $0x150] sm:$0xf] %vm3322, %v7713
        %7781 = vst.msk [vmem:[#allocation3 + $0x15c] sm:$0xf] %vm3322, %v7715
        %7782 = vst.msk [vmem:[#allocation3 + $0x168] sm:$0xf] %vm3322, %v7717
        %7783 = vst.msk [vmem:[#allocation3 + $0x174] sm:$0xf] %vm3322, %v7719
        %v7784 = vld [vmem:[#allocation2 + $0xc] sm:$0x8]
        %v7785 = vld [vmem:[#allocation2 + $0x10] sm:$0xf]
        %v7786 = vld [vmem:[#allocation2 + $0x14] sm:$0xf]
        %v7787 = vld [vmem:[#allocation2 + $0x18] sm:$0xf]
        %v7788 = vld [vmem:[#allocation2 + $0x1c] sm:$0xf]
        %v7789 = vld [vmem:[#allocation2 + $0x20] sm:$0xf]
        %v7790 = vld [vmem:[#allocation2 + $0x24] sm:$0xf]
        %v7791 = vld [vmem:[#allocation2 + $0x28] sm:$0xf]
        %v7792 = vld [vmem:[#allocation2 + $0x2c] sm:$0xf]
        %v7793 = vld [vmem:[#allocation2 + $0x30] sm:$0xf]
        %v7794 = vld [vmem:[#allocation2 + $0x34] sm:$0xf]
        %v7795 = vld [vmem:[#allocation2 + $0x38] sm:$0xf]
        %v7796 = vld [vmem:[#allocation2 + $0x3c] sm:$0xf]
        %v7797 = vld [vmem:[#allocation2 + $0x40] sm:$0xf]
        %v7798 = vld [vmem:[#allocation2 + $0x44] sm:$0xf]
        %v7799 = vld [vmem:[#allocation2 + $0x48] sm:$0xf]
        %v7800 = vld [vmem:[#allocation2 + $0x4c] sm:$0xf]
        %v7801 = vld [vmem:[#allocation2 + $0x50] sm:$0xf]
        %v7802 = vld [vmem:[#allocation2 + $0x54] sm:$0xf]
        %v7803 = vld [vmem:[#allocation2 + $0x58] sm:$0xf]
        %v7804 = vld [vmem:[#allocation2 + $0x5c] sm:$0xf]
        %v7805 = vld [vmem:[#allocation2 + $0x60] sm:$0xf]
        %v7806 = vld [vmem:[#allocation2 + $0x64] sm:$0xf]
        %v7807 = vld [vmem:[#allocation2 + $0x68] sm:$0xf]
        %v7808 = vld [vmem:[#allocation2 + $0x6c] sm:$0xf]
        %v7809 = vld [vmem:[#allocation2 + $0x70] sm:$0xf]
        %v7810 = vld [vmem:[#allocation2 + $0x74] sm:$0xf]
        %v7811 = vld [vmem:[#allocation2 + $0x78] sm:$0xf]
        %v7812 = vld [vmem:[#allocation2 + $0x7c] sm:$0xf]
        %v7813 = vld [vmem:[#allocation2 + $0x80] sm:$0xf]
        %v7814 = vld [vmem:[#allocation2 + $0x84] sm:$0xf]
        %v7815 = vld [vmem:[#allocation2 + $0x88] sm:$0xf]
        %v7816 = vld [vmem:[#allocation2 + $0x8c] sm:$0xf]
        %v7817 = vmul.bf16 %v7784, %v1342
        %v7818 = vmul.bf16 %v7785, %v1352
        %v7819 = vmul.bf16 %v7786, %v1362
        %v7820 = vmul.bf16 %v7787, %v1372
        %v7821 = vmul.bf16 %v7788, %v1382
        %v7822 = vmul.bf16 %v7789, %v1392
        %v7823 = vmul.bf16 %v7790, %v1402
        %v7824 = vmul.bf16 %v7791, %v1412
        %v7825 = vmul.bf16 %v7792, %v1422
        %v7826 = vmul.bf16 %v7793, %v1432
        %v7827 = vmul.bf16 %v7794, %v1442
        %v7828 = vmul.bf16 %v7795, %v1452
        %v7829 = vmul.bf16 %v7796, %v1462
        %v7830 = vmul.bf16 %v7797, %v1472
        %v7831 = vmul.bf16 %v7798, %v1482
        %v7832 = vmul.bf16 %v7799, %v1492
        %v7833 = vmul.bf16 %v7800, %v1502
        %v7834 = vmul.bf16 %v7801, %v1512
        %v7835 = vmul.bf16 %v7802, %v1522
        %v7836 = vmul.bf16 %v7803, %v1532
        %v7837 = vmul.bf16 %v7804, %v1542
        %v7838 = vmul.bf16 %v7805, %v1552
        %v7839 = vmul.bf16 %v7806, %v1562
        %v7840 = vmul.bf16 %v7807, %v1572
        %v7841 = vmul.bf16 %v7808, %v1582
        %v7842 = vmul.bf16 %v7809, %v1592
        %v7843 = vmul.bf16 %v7810, %v1602
        %v7844 = vmul.bf16 %v7811, %v1612
        %v7845 = vmul.bf16 %v7812, %v1622
        %v7846 = vmul.bf16 %v7813, %v1632
        %v7847 = vmul.bf16 %v7814, %v1642
        %v7848 = vmul.bf16 %v7815, %v1652
        %v7849 = vmul.bf16 %v7816, %v1657
        %v7851 = vshrl.u32 %v7817, 16
        %v7853 = vrot.slane %v7851, 7
        %v7854 = vrot.slane %v7853, 4
        %v7856 = vshrl.u32 %v7818, 16
        %v7858 = vrot.slane %v7856, 7
        %v7859 = vshll.u32 %v7818, 16
        %v7861 = vor.u32 %v7858, %v7859
        %v7862 = vsel %vm1726, %v7854, %v7861
        %v7863 = vrot.slane %v7858, 4
        %v7865 = vshrl.u32 %v7819, 16
        %v7867 = vrot.slane %v7865, 7
        %v7868 = vshll.u32 %v7819, 16
        %v7870 = vor.u32 %v7867, %v7868
        %v7871 = vsel %vm1726, %v7863, %v7870
        %v7872 = vrot.slane %v7867, 4
        %v7874 = vshrl.u32 %v7820, 16
        %v7876 = vrot.slane %v7874, 7
        %v7877 = vshll.u32 %v7820, 16
        %v7879 = vor.u32 %v7876, %v7877
        %v7880 = vsel %vm1726, %v7872, %v7879
        %v7881 = vrot.slane %v7876, 4
        %v7883 = vshrl.u32 %v7821, 16
        %v7885 = vrot.slane %v7883, 7
        %v7886 = vshll.u32 %v7821, 16
        %v7888 = vor.u32 %v7885, %v7886
        %v7889 = vsel %vm1726, %v7881, %v7888
        %v7890 = vrot.slane %v7885, 4
        %v7892 = vshrl.u32 %v7822, 16
        %v7894 = vrot.slane %v7892, 7
        %v7895 = vshll.u32 %v7822, 16
        %v7897 = vor.u32 %v7894, %v7895
        %v7898 = vsel %vm1726, %v7890, %v7897
        %v7899 = vrot.slane %v7894, 4
        %v7901 = vshrl.u32 %v7823, 16
        %v7903 = vrot.slane %v7901, 7
        %v7904 = vshll.u32 %v7823, 16
        %v7906 = vor.u32 %v7903, %v7904
        %v7907 = vsel %vm1726, %v7899, %v7906
        %v7908 = vrot.slane %v7903, 4
        %v7910 = vshrl.u32 %v7824, 16
        %v7912 = vrot.slane %v7910, 7
        %v7913 = vshll.u32 %v7824, 16
        %v7915 = vor.u32 %v7912, %v7913
        %v7916 = vsel %vm1726, %v7908, %v7915
        %v7917 = vrot.slane %v7912, 4
        %v7919 = vshrl.u32 %v7825, 16
        %v7921 = vrot.slane %v7919, 7
        %v7922 = vshll.u32 %v7825, 16
        %v7924 = vor.u32 %v7921, %v7922
        %v7925 = vsel %vm1726, %v7917, %v7924
        %v7926 = vrot.slane %v7921, 4
        %v7928 = vshrl.u32 %v7826, 16
        %v7930 = vrot.slane %v7928, 7
        %v7931 = vshll.u32 %v7826, 16
        %v7933 = vor.u32 %v7930, %v7931
        %v7934 = vsel %vm1726, %v7926, %v7933
        %v7935 = vrot.slane %v7930, 4
        %v7937 = vshrl.u32 %v7827, 16
        %v7939 = vrot.slane %v7937, 7
        %v7940 = vshll.u32 %v7827, 16
        %v7942 = vor.u32 %v7939, %v7940
        %v7943 = vsel %vm1726, %v7935, %v7942
        %v7944 = vrot.slane %v7939, 4
        %v7946 = vshrl.u32 %v7828, 16
        %v7948 = vrot.slane %v7946, 7
        %v7949 = vshll.u32 %v7828, 16
        %v7951 = vor.u32 %v7948, %v7949
        %v7952 = vsel %vm1726, %v7944, %v7951
        %v7953 = vrot.slane %v7948, 4
        %v7955 = vshrl.u32 %v7829, 16
        %v7957 = vrot.slane %v7955, 7
        %v7958 = vshll.u32 %v7829, 16
        %v7960 = vor.u32 %v7957, %v7958
        %v7961 = vsel %vm1726, %v7953, %v7960
        %v7962 = vrot.slane %v7957, 4
        %v7964 = vshrl.u32 %v7830, 16
        %v7966 = vrot.slane %v7964, 7
        %v7967 = vshll.u32 %v7830, 16
        %v7969 = vor.u32 %v7966, %v7967
        %v7970 = vsel %vm1726, %v7962, %v7969
        %v7971 = vrot.slane %v7966, 4
        %v7973 = vshrl.u32 %v7831, 16
        %v7975 = vrot.slane %v7973, 7
        %v7976 = vshll.u32 %v7831, 16
        %v7978 = vor.u32 %v7975, %v7976
        %v7979 = vsel %vm1726, %v7971, %v7978
        %v7980 = vrot.slane %v7975, 4
        %v7982 = vshrl.u32 %v7832, 16
        %v7984 = vrot.slane %v7982, 7
        %v7985 = vshll.u32 %v7832, 16
        %v7987 = vor.u32 %v7984, %v7985
        %v7988 = vsel %vm1726, %v7980, %v7987
        %v7989 = vrot.slane %v7984, 4
        %v7991 = vshrl.u32 %v7833, 16
        %v7993 = vrot.slane %v7991, 7
        %v7994 = vshll.u32 %v7833, 16
        %v7996 = vor.u32 %v7993, %v7994
        %v7997 = vsel %vm1726, %v7989, %v7996
        %v7998 = vrot.slane %v7993, 4
        %v8000 = vshrl.u32 %v7834, 16
        %v8002 = vrot.slane %v8000, 7
        %v8003 = vshll.u32 %v7834, 16
        %v8005 = vor.u32 %v8002, %v8003
        %v8006 = vsel %vm1726, %v7998, %v8005
        %v8007 = vrot.slane %v8002, 4
        %v8009 = vshrl.u32 %v7835, 16
        %v8011 = vrot.slane %v8009, 7
        %v8012 = vshll.u32 %v7835, 16
        %v8014 = vor.u32 %v8011, %v8012
        %v8015 = vsel %vm1726, %v8007, %v8014
        %v8016 = vrot.slane %v8011, 4
        %v8018 = vshrl.u32 %v7836, 16
        %v8020 = vrot.slane %v8018, 7
        %v8021 = vshll.u32 %v7836, 16
        %v8023 = vor.u32 %v8020, %v8021
        %v8024 = vsel %vm1726, %v8016, %v8023
        %v8025 = vrot.slane %v8020, 4
        %v8027 = vshrl.u32 %v7837, 16
        %v8029 = vrot.slane %v8027, 7
        %v8030 = vshll.u32 %v7837, 16
        %v8032 = vor.u32 %v8029, %v8030
        %v8033 = vsel %vm1726, %v8025, %v8032
        %v8034 = vrot.slane %v8029, 4
        %v8036 = vshrl.u32 %v7838, 16
        %v8038 = vrot.slane %v8036, 7
        %v8039 = vshll.u32 %v7838, 16
        %v8041 = vor.u32 %v8038, %v8039
        %v8042 = vsel %vm1726, %v8034, %v8041
        %v8043 = vrot.slane %v8038, 4
        %v8045 = vshrl.u32 %v7839, 16
        %v8047 = vrot.slane %v8045, 7
        %v8048 = vshll.u32 %v7839, 16
        %v8050 = vor.u32 %v8047, %v8048
        %v8051 = vsel %vm1726, %v8043, %v8050
        %v8052 = vrot.slane %v8047, 4
        %v8054 = vshrl.u32 %v7840, 16
        %v8056 = vrot.slane %v8054, 7
        %v8057 = vshll.u32 %v7840, 16
        %v8059 = vor.u32 %v8056, %v8057
        %v8060 = vsel %vm1726, %v8052, %v8059
        %v8061 = vrot.slane %v8056, 4
        %v8063 = vshrl.u32 %v7841, 16
        %v8065 = vrot.slane %v8063, 7
        %v8066 = vshll.u32 %v7841, 16
        %v8068 = vor.u32 %v8065, %v8066
        %v8069 = vsel %vm1726, %v8061, %v8068
        %v8070 = vrot.slane %v8065, 4
        %v8072 = vshrl.u32 %v7842, 16
        %v8074 = vrot.slane %v8072, 7
        %v8075 = vshll.u32 %v7842, 16
        %v8077 = vor.u32 %v8074, %v8075
        %v8078 = vsel %vm1726, %v8070, %v8077
        %v8079 = vrot.slane %v8074, 4
        %v8081 = vshrl.u32 %v7843, 16
        %v8083 = vrot.slane %v8081, 7
        %v8084 = vshll.u32 %v7843, 16
        %v8086 = vor.u32 %v8083, %v8084
        %v8087 = vsel %vm1726, %v8079, %v8086
        %v8088 = vrot.slane %v8083, 4
        %v8090 = vshrl.u32 %v7844, 16
        %v8092 = vrot.slane %v8090, 7
        %v8093 = vshll.u32 %v7844, 16
        %v8095 = vor.u32 %v8092, %v8093
        %v8096 = vsel %vm1726, %v8088, %v8095
        %v8097 = vrot.slane %v8092, 4
        %v8099 = vshrl.u32 %v7845, 16
        %v8101 = vrot.slane %v8099, 7
        %v8102 = vshll.u32 %v7845, 16
        %v8104 = vor.u32 %v8101, %v8102
        %v8105 = vsel %vm1726, %v8097, %v8104
        %v8106 = vrot.slane %v8101, 4
        %v8108 = vshrl.u32 %v7846, 16
        %v8110 = vrot.slane %v8108, 7
        %v8111 = vshll.u32 %v7846, 16
        %v8113 = vor.u32 %v8110, %v8111
        %v8114 = vsel %vm1726, %v8106, %v8113
        %v8115 = vrot.slane %v8110, 4
        %v8117 = vshrl.u32 %v7847, 16
        %v8119 = vrot.slane %v8117, 7
        %v8120 = vshll.u32 %v7847, 16
        %v8122 = vor.u32 %v8119, %v8120
        %v8123 = vsel %vm1726, %v8115, %v8122
        %v8124 = vrot.slane %v8119, 4
        %v8126 = vshrl.u32 %v7848, 16
        %v8128 = vrot.slane %v8126, 7
        %v8129 = vshll.u32 %v7848, 16
        %v8131 = vor.u32 %v8128, %v8129
        %v8132 = vsel %vm1726, %v8124, %v8131
        %v8133 = vrot.slane %v8128, 4
        %v8135 = vshrl.u32 %v7849, 16
        %v8137 = vrot.slane %v8135, 7
        %v8138 = vshll.u32 %v7849, 16
        %v8140 = vor.u32 %v8137, %v8138
        %v8141 = vsel %vm1726, %v8133, %v8140
        %8142 = vrot.lane.b32.xlu0 %v7862, 96
        %v8143 = vpop.permute.xlu0 %8142
        %8144 = vrot.lane.b32.xlu0 %v7871, 96
        %v8145 = vpop.permute.xlu0 %8144
        %8146 = vrot.lane.b32.xlu0 %v7880, 96
        %v8147 = vpop.permute.xlu0 %8146
        %8148 = vrot.lane.b32.xlu0 %v7889, 96
        %v8149 = vpop.permute.xlu0 %8148
        %8150 = vrot.lane.b32.xlu0 %v7898, 96
        %v8151 = vpop.permute.xlu0 %8150
        %8152 = vrot.lane.b32.xlu0 %v7907, 96
        %v8153 = vpop.permute.xlu0 %8152
        %8154 = vrot.lane.b32.xlu0 %v7916, 96
        %v8155 = vpop.permute.xlu0 %8154
        %8156 = vrot.lane.b32.xlu0 %v7925, 96
        %v8157 = vpop.permute.xlu0 %8156
        %8158 = vrot.lane.b32.xlu0 %v7934, 96
        %v8159 = vpop.permute.xlu0 %8158
        %8160 = vrot.lane.b32.xlu0 %v7943, 96
        %v8161 = vpop.permute.xlu0 %8160
        %8162 = vrot.lane.b32.xlu0 %v7952, 96
        %v8163 = vpop.permute.xlu0 %8162
        %8164 = vrot.lane.b32.xlu0 %v7961, 96
        %v8165 = vpop.permute.xlu0 %8164
        %8166 = vrot.lane.b32.xlu0 %v7970, 96
        %v8167 = vpop.permute.xlu0 %8166
        %8168 = vrot.lane.b32.xlu0 %v7979, 96
        %v8169 = vpop.permute.xlu0 %8168
        %8170 = vrot.lane.b32.xlu0 %v7988, 96
        %v8171 = vpop.permute.xlu0 %8170
        %8172 = vrot.lane.b32.xlu0 %v7997, 96
        %v8173 = vpop.permute.xlu0 %8172
        %8174 = vrot.lane.b32.xlu0 %v8006, 96
        %v8175 = vpop.permute.xlu0 %8174
        %8176 = vrot.lane.b32.xlu0 %v8015, 96
        %v8177 = vpop.permute.xlu0 %8176
        %8178 = vrot.lane.b32.xlu0 %v8024, 96
        %v8179 = vpop.permute.xlu0 %8178
        %8180 = vrot.lane.b32.xlu0 %v8033, 96
        %v8181 = vpop.permute.xlu0 %8180
        %8182 = vrot.lane.b32.xlu0 %v8042, 96
        %v8183 = vpop.permute.xlu0 %8182
        %8184 = vrot.lane.b32.xlu0 %v8051, 96
        %v8185 = vpop.permute.xlu0 %8184
        %8186 = vrot.lane.b32.xlu0 %v8060, 96
        %v8187 = vpop.permute.xlu0 %8186
        %8188 = vrot.lane.b32.xlu0 %v8069, 96
        %v8189 = vpop.permute.xlu0 %8188
        %8190 = vrot.lane.b32.xlu0 %v8078, 96
        %v8191 = vpop.permute.xlu0 %8190
        %8192 = vrot.lane.b32.xlu0 %v8087, 96
        %v8193 = vpop.permute.xlu0 %8192
        %8194 = vrot.lane.b32.xlu0 %v8096, 96
        %v8195 = vpop.permute.xlu0 %8194
        %8196 = vrot.lane.b32.xlu0 %v8105, 96
        %v8197 = vpop.permute.xlu0 %8196
        %8198 = vrot.lane.b32.xlu0 %v8114, 96
        %v8199 = vpop.permute.xlu0 %8198
        %8200 = vrot.lane.b32.xlu0 %v8123, 96
        %v8201 = vpop.permute.xlu0 %8200
        %8202 = vrot.lane.b32.xlu0 %v8132, 96
        %v8203 = vpop.permute.xlu0 %8202
        %8204 = vrot.lane.b32.xlu0 %v8141, 96
        %v8205 = vpop.permute.xlu0 %8204
        %8238 = vst.msk [vmem:[#allocation3] sm:$0xf] %vm3809, %v8143
        %8239 = vst.msk [vmem:[#allocation3 + $0xc] sm:$0xf] %vm3809, %v8145
        %8240 = vst.msk [vmem:[#allocation3 + $0x18] sm:$0xf] %vm3809, %v8147
        %8241 = vst.msk [vmem:[#allocation3 + $0x24] sm:$0xf] %vm3809, %v8149
        %8242 = vst.msk [vmem:[#allocation3 + $0x30] sm:$0xf] %vm3809, %v8151
        %8243 = vst.msk [vmem:[#allocation3 + $0x3c] sm:$0xf] %vm3809, %v8153
        %8244 = vst.msk [vmem:[#allocation3 + $0x48] sm:$0xf] %vm3809, %v8155
        %8245 = vst.msk [vmem:[#allocation3 + $0x54] sm:$0xf] %vm3809, %v8157
        %8246 = vst.msk [vmem:[#allocation3 + $0x60] sm:$0xf] %vm3809, %v8159
        %8247 = vst.msk [vmem:[#allocation3 + $0x6c] sm:$0xf] %vm3809, %v8161
        %8248 = vst.msk [vmem:[#allocation3 + $0x78] sm:$0xf] %vm3809, %v8163
        %8249 = vst.msk [vmem:[#allocation3 + $0x84] sm:$0xf] %vm3809, %v8165
        %8250 = vst.msk [vmem:[#allocation3 + $0x90] sm:$0xf] %vm3809, %v8167
        %8251 = vst.msk [vmem:[#allocation3 + $0x9c] sm:$0xf] %vm3809, %v8169
        %8252 = vst.msk [vmem:[#allocation3 + $0xa8] sm:$0xf] %vm3809, %v8171
        %8253 = vst.msk [vmem:[#allocation3 + $0xb4] sm:$0xf] %vm3809, %v8173
        %8254 = vst.msk [vmem:[#allocation3 + $0xc0] sm:$0xf] %vm3809, %v8175
        %8255 = vst.msk [vmem:[#allocation3 + $0xcc] sm:$0xf] %vm3809, %v8177
        %8256 = vst.msk [vmem:[#allocation3 + $0xd8] sm:$0xf] %vm3809, %v8179
        %8257 = vst.msk [vmem:[#allocation3 + $0xe4] sm:$0xf] %vm3809, %v8181
        %8258 = vst.msk [vmem:[#allocation3 + $0xf0] sm:$0xf] %vm3809, %v8183
        %8259 = vst.msk [vmem:[#allocation3 + $0xfc] sm:$0xf] %vm3809, %v8185
        %8260 = vst.msk [vmem:[#allocation3 + $0x108] sm:$0xf] %vm3809, %v8187
        %8261 = vst.msk [vmem:[#allocation3 + $0x114] sm:$0xf] %vm3809, %v8189
        %8262 = vst.msk [vmem:[#allocation3 + $0x120] sm:$0xf] %vm3809, %v8191
        %8263 = vst.msk [vmem:[#allocation3 + $0x12c] sm:$0xf] %vm3809, %v8193
        %8264 = vst.msk [vmem:[#allocation3 + $0x138] sm:$0xf] %vm3809, %v8195
        %8265 = vst.msk [vmem:[#allocation3 + $0x144] sm:$0xf] %vm3809, %v8197
        %8266 = vst.msk [vmem:[#allocation3 + $0x150] sm:$0xf] %vm3809, %v8199
        %8267 = vst.msk [vmem:[#allocation3 + $0x15c] sm:$0xf] %vm3809, %v8201
        %8268 = vst.msk [vmem:[#allocation3 + $0x168] sm:$0xf] %vm3809, %v8203
        %8269 = vst.msk [vmem:[#allocation3 + $0x174] sm:$0xf] %vm3809, %v8205
        %v8270 = vld [vmem:[#allocation2 + $0x10] sm:$0xf]
        %v8271 = vld [vmem:[#allocation2 + $0x14] sm:$0xf]
        %v8272 = vld [vmem:[#allocation2 + $0x18] sm:$0xf]
        %v8273 = vld [vmem:[#allocation2 + $0x1c] sm:$0xf]
        %v8274 = vld [vmem:[#allocation2 + $0x20] sm:$0xf]
        %v8275 = vld [vmem:[#allocation2 + $0x24] sm:$0xf]
        %v8276 = vld [vmem:[#allocation2 + $0x28] sm:$0xf]
        %v8277 = vld [vmem:[#allocation2 + $0x2c] sm:$0xf]
        %v8278 = vld [vmem:[#allocation2 + $0x30] sm:$0xf]
        %v8279 = vld [vmem:[#allocation2 + $0x34] sm:$0xf]
        %v8280 = vld [vmem:[#allocation2 + $0x38] sm:$0xf]
        %v8281 = vld [vmem:[#allocation2 + $0x3c] sm:$0xf]
        %v8282 = vld [vmem:[#allocation2 + $0x40] sm:$0xf]
        %v8283 = vld [vmem:[#allocation2 + $0x44] sm:$0xf]
        %v8284 = vld [vmem:[#allocation2 + $0x48] sm:$0xf]
        %v8285 = vld [vmem:[#allocation2 + $0x4c] sm:$0xf]
        %v8286 = vld [vmem:[#allocation2 + $0x50] sm:$0xf]
        %v8287 = vld [vmem:[#allocation2 + $0x54] sm:$0xf]
        %v8288 = vld [vmem:[#allocation2 + $0x58] sm:$0xf]
        %v8289 = vld [vmem:[#allocation2 + $0x5c] sm:$0xf]
        %v8290 = vld [vmem:[#allocation2 + $0x60] sm:$0xf]
        %v8291 = vld [vmem:[#allocation2 + $0x64] sm:$0xf]
        %v8292 = vld [vmem:[#allocation2 + $0x68] sm:$0xf]
        %v8293 = vld [vmem:[#allocation2 + $0x6c] sm:$0xf]
        %v8294 = vld [vmem:[#allocation2 + $0x70] sm:$0xf]
        %v8295 = vld [vmem:[#allocation2 + $0x74] sm:$0xf]
        %v8296 = vld [vmem:[#allocation2 + $0x78] sm:$0xf]
        %v8297 = vld [vmem:[#allocation2 + $0x7c] sm:$0xf]
        %v8298 = vld [vmem:[#allocation2 + $0x80] sm:$0xf]
        %v8299 = vld [vmem:[#allocation2 + $0x84] sm:$0xf]
        %v8300 = vld [vmem:[#allocation2 + $0x88] sm:$0xf]
        %v8301 = vld [vmem:[#allocation2 + $0x8c] sm:$0xf]
        %8302 = vst.msk [vmem:[#allocation3 + $0x4] sm:$0xf] %vm752, %v8270
        %8303 = vst.msk [vmem:[#allocation3 + $0x10] sm:$0xf] %vm752, %v8271
        %8304 = vst.msk [vmem:[#allocation3 + $0x1c] sm:$0xf] %vm752, %v8272
        %8305 = vst.msk [vmem:[#allocation3 + $0x28] sm:$0xf] %vm752, %v8273
        %8306 = vst.msk [vmem:[#allocation3 + $0x34] sm:$0xf] %vm752, %v8274
        %8307 = vst.msk [vmem:[#allocation3 + $0x40] sm:$0xf] %vm752, %v8275
        %8308 = vst.msk [vmem:[#allocation3 + $0x4c] sm:$0xf] %vm752, %v8276
        %8309 = vst.msk [vmem:[#allocation3 + $0x58] sm:$0xf] %vm752, %v8277
        %8310 = vst.msk [vmem:[#allocation3 + $0x64] sm:$0xf] %vm752, %v8278
        %8311 = vst.msk [vmem:[#allocation3 + $0x70] sm:$0xf] %vm752, %v8279
        %8312 = vst.msk [vmem:[#allocation3 + $0x7c] sm:$0xf] %vm752, %v8280
        %8313 = vst.msk [vmem:[#allocation3 + $0x88] sm:$0xf] %vm752, %v8281
        %8314 = vst.msk [vmem:[#allocation3 + $0x94] sm:$0xf] %vm752, %v8282
        %8315 = vst.msk [vmem:[#allocation3 + $0xa0] sm:$0xf] %vm752, %v8283
        %8316 = vst.msk [vmem:[#allocation3 + $0xac] sm:$0xf] %vm752, %v8284
        %8317 = vst.msk [vmem:[#allocation3 + $0xb8] sm:$0xf] %vm752, %v8285
        %8318 = vst.msk [vmem:[#allocation3 + $0xc4] sm:$0xf] %vm752, %v8286
        %8319 = vst.msk [vmem:[#allocation3 + $0xd0] sm:$0xf] %vm752, %v8287
        %8320 = vst.msk [vmem:[#allocation3 + $0xdc] sm:$0xf] %vm752, %v8288
        %8321 = vst.msk [vmem:[#allocation3 + $0xe8] sm:$0xf] %vm752, %v8289
        %8322 = vst.msk [vmem:[#allocation3 + $0xf4] sm:$0xf] %vm752, %v8290
        %8323 = vst.msk [vmem:[#allocation3 + $0x100] sm:$0xf] %vm752, %v8291
        %8324 = vst.msk [vmem:[#allocation3 + $0x10c] sm:$0xf] %vm752, %v8292
        %8325 = vst.msk [vmem:[#allocation3 + $0x118] sm:$0xf] %vm752, %v8293
        %8326 = vst.msk [vmem:[#allocation3 + $0x124] sm:$0xf] %vm752, %v8294
        %8327 = vst.msk [vmem:[#allocation3 + $0x130] sm:$0xf] %vm752, %v8295
        %8328 = vst.msk [vmem:[#allocation3 + $0x13c] sm:$0xf] %vm752, %v8296
        %8329 = vst.msk [vmem:[#allocation3 + $0x148] sm:$0xf] %vm752, %v8297
        %8330 = vst.msk [vmem:[#allocation3 + $0x154] sm:$0xf] %vm752, %v8298
        %8331 = vst.msk [vmem:[#allocation3 + $0x160] sm:$0xf] %vm752, %v8299
        %8332 = vst.msk [vmem:[#allocation3 + $0x16c] sm:$0xf] %vm752, %v8300
        %8333 = vst.msk [vmem:[#allocation3 + $0x178] sm:$0xf] %vm752, %v8301
        %v8334 = vld [vmem:[#allocation2 + $0x10] sm:$0xf]
        %v8335 = vld [vmem:[#allocation2 + $0x14] sm:$0xf]
        %v8336 = vld [vmem:[#allocation2 + $0x18] sm:$0xf]
        %v8337 = vld [vmem:[#allocation2 + $0x1c] sm:$0xf]
        %v8338 = vld [vmem:[#allocation2 + $0x20] sm:$0xf]
        %v8339 = vld [vmem:[#allocation2 + $0x24] sm:$0xf]
        %v8340 = vld [vmem:[#allocation2 + $0x28] sm:$0xf]
        %v8341 = vld [vmem:[#allocation2 + $0x2c] sm:$0xf]
        %v8342 = vld [vmem:[#allocation2 + $0x30] sm:$0xf]
        %v8343 = vld [vmem:[#allocation2 + $0x34] sm:$0xf]
        %v8344 = vld [vmem:[#allocation2 + $0x38] sm:$0xf]
        %v8345 = vld [vmem:[#allocation2 + $0x3c] sm:$0xf]
        %v8346 = vld [vmem:[#allocation2 + $0x40] sm:$0xf]
        %v8347 = vld [vmem:[#allocation2 + $0x44] sm:$0xf]
        %v8348 = vld [vmem:[#allocation2 + $0x48] sm:$0xf]
        %v8349 = vld [vmem:[#allocation2 + $0x4c] sm:$0xf]
        %v8350 = vld [vmem:[#allocation2 + $0x50] sm:$0xf]
        %v8351 = vld [vmem:[#allocation2 + $0x54] sm:$0xf]
        %v8352 = vld [vmem:[#allocation2 + $0x58] sm:$0xf]
        %v8353 = vld [vmem:[#allocation2 + $0x5c] sm:$0xf]
        %v8354 = vld [vmem:[#allocation2 + $0x60] sm:$0xf]
        %v8355 = vld [vmem:[#allocation2 + $0x64] sm:$0xf]
        %v8356 = vld [vmem:[#allocation2 + $0x68] sm:$0xf]
        %v8357 = vld [vmem:[#allocation2 + $0x6c] sm:$0xf]
        %v8358 = vld [vmem:[#allocation2 + $0x70] sm:$0xf]
        %v8359 = vld [vmem:[#allocation2 + $0x74] sm:$0xf]
        %v8360 = vld [vmem:[#allocation2 + $0x78] sm:$0xf]
        %v8361 = vld [vmem:[#allocation2 + $0x7c] sm:$0xf]
        %v8362 = vld [vmem:[#allocation2 + $0x80] sm:$0xf]
        %v8363 = vld [vmem:[#allocation2 + $0x84] sm:$0xf]
        %v8364 = vld [vmem:[#allocation2 + $0x88] sm:$0xf]
        %v8365 = vld [vmem:[#allocation2 + $0x8c] sm:$0xf]
        %v8366 = vld [vmem:[#allocation2 + $0x90] sm:$0x1]
        %v8367 = vmul.bf16 %v8334, %v2555
        %v8368 = vmul.bf16 %v8335, %v2564
        %v8369 = vmul.bf16 %v8336, %v2573
        %v8370 = vmul.bf16 %v8337, %v2582
        %v8371 = vmul.bf16 %v8338, %v2591
        %v8372 = vmul.bf16 %v8339, %v2600
        %v8373 = vmul.bf16 %v8340, %v2609
        %v8374 = vmul.bf16 %v8341, %v2618
        %v8375 = vmul.bf16 %v8342, %v2627
        %v8376 = vmul.bf16 %v8343, %v2636
        %v8377 = vmul.bf16 %v8344, %v2645
        %v8378 = vmul.bf16 %v8345, %v2654
        %v8379 = vmul.bf16 %v8346, %v2663
        %v8380 = vmul.bf16 %v8347, %v2672
        %v8381 = vmul.bf16 %v8348, %v2681
        %v8382 = vmul.bf16 %v8349, %v2690
        %v8383 = vmul.bf16 %v8350, %v2699
        %v8384 = vmul.bf16 %v8351, %v2708
        %v8385 = vmul.bf16 %v8352, %v2717
        %v8386 = vmul.bf16 %v8353, %v2726
        %v8387 = vmul.bf16 %v8354, %v2735
        %v8388 = vmul.bf16 %v8355, %v2744
        %v8389 = vmul.bf16 %v8356, %v2753
        %v8390 = vmul.bf16 %v8357, %v2762
        %v8391 = vmul.bf16 %v8358, %v2771
        %v8392 = vmul.bf16 %v8359, %v2780
        %v8393 = vmul.bf16 %v8360, %v2789
        %v8394 = vmul.bf16 %v8361, %v2798
        %v8395 = vmul.bf16 %v8362, %v2807
        %v8396 = vmul.bf16 %v8363, %v2816
        %v8397 = vmul.bf16 %v8364, %v2825
        %v8398 = vmul.bf16 %v8365, %v2834
        %v8399 = vmul.bf16 %v8366, %v2835
        %v8401 = vshrl.u32 %v8367, 16
        %v8403 = vrot.slane %v8401, 4
        %v8404 = vshll.u32 %v8367, 16
        %v8406 = vrot.slane %v8404, 5
        %v8407 = vor.u32 %v8403, %v8406
        %v8408 = vrot.slane %v8407, 4
        %v8410 = vshll.u32 %v8368, 16
        %v8412 = vrot.slane %v8410, 5
        %v8413 = vsel %vm1338, %v8408, %v8412
        %v8414 = vshrl.u32 %v8368, 16
        %v8416 = vrot.slane %v8414, 4
        %v8417 = vor.u32 %v8416, %v8412
        %v8418 = vrot.slane %v8417, 4
        %v8420 = vshll.u32 %v8369, 16
        %v8422 = vrot.slane %v8420, 5
        %v8423 = vsel %vm1338, %v8418, %v8422
        %v8424 = vshrl.u32 %v8369, 16
        %v8426 = vrot.slane %v8424, 4
        %v8427 = vor.u32 %v8426, %v8422
        %v8428 = vrot.slane %v8427, 4
        %v8430 = vshll.u32 %v8370, 16
        %v8432 = vrot.slane %v8430, 5
        %v8433 = vsel %vm1338, %v8428, %v8432
        %v8434 = vshrl.u32 %v8370, 16
        %v8436 = vrot.slane %v8434, 4
        %v8437 = vor.u32 %v8436, %v8432
        %v8438 = vrot.slane %v8437, 4
        %v8440 = vshll.u32 %v8371, 16
        %v8442 = vrot.slane %v8440, 5
        %v8443 = vsel %vm1338, %v8438, %v8442
        %v8444 = vshrl.u32 %v8371, 16
        %v8446 = vrot.slane %v8444, 4
        %v8447 = vor.u32 %v8446, %v8442
        %v8448 = vrot.slane %v8447, 4
        %v8450 = vshll.u32 %v8372, 16
        %v8452 = vrot.slane %v8450, 5
        %v8453 = vsel %vm1338, %v8448, %v8452
        %v8454 = vshrl.u32 %v8372, 16
        %v8456 = vrot.slane %v8454, 4
        %v8457 = vor.u32 %v8456, %v8452
        %v8458 = vrot.slane %v8457, 4
        %v8460 = vshll.u32 %v8373, 16
        %v8462 = vrot.slane %v8460, 5
        %v8463 = vsel %vm1338, %v8458, %v8462
        %v8464 = vshrl.u32 %v8373, 16
        %v8466 = vrot.slane %v8464, 4
        %v8467 = vor.u32 %v8466, %v8462
        %v8468 = vrot.slane %v8467, 4
        %v8470 = vshll.u32 %v8374, 16
        %v8472 = vrot.slane %v8470, 5
        %v8473 = vsel %vm1338, %v8468, %v8472
        %v8474 = vshrl.u32 %v8374, 16
        %v8476 = vrot.slane %v8474, 4
        %v8477 = vor.u32 %v8476, %v8472
        %v8478 = vrot.slane %v8477, 4
        %v8480 = vshll.u32 %v8375, 16
        %v8482 = vrot.slane %v8480, 5
        %v8483 = vsel %vm1338, %v8478, %v8482
        %v8484 = vshrl.u32 %v8375, 16
        %v8486 = vrot.slane %v8484, 4
        %v8487 = vor.u32 %v8486, %v8482
        %v8488 = vrot.slane %v8487, 4
        %v8490 = vshll.u32 %v8376, 16
        %v8492 = vrot.slane %v8490, 5
        %v8493 = vsel %vm1338, %v8488, %v8492
        %v8494 = vshrl.u32 %v8376, 16
        %v8496 = vrot.slane %v8494, 4
        %v8497 = vor.u32 %v8496, %v8492
        %v8498 = vrot.slane %v8497, 4
        %v8500 = vshll.u32 %v8377, 16
        %v8502 = vrot.slane %v8500, 5
        %v8503 = vsel %vm1338, %v8498, %v8502
        %v8504 = vshrl.u32 %v8377, 16
        %v8506 = vrot.slane %v8504, 4
        %v8507 = vor.u32 %v8506, %v8502
        %v8508 = vrot.slane %v8507, 4
        %v8510 = vshll.u32 %v8378, 16
        %v8512 = vrot.slane %v8510, 5
        %v8513 = vsel %vm1338, %v8508, %v8512
        %v8514 = vshrl.u32 %v8378, 16
        %v8516 = vrot.slane %v8514, 4
        %v8517 = vor.u32 %v8516, %v8512
        %v8518 = vrot.slane %v8517, 4
        %v8520 = vshll.u32 %v8379, 16
        %v8522 = vrot.slane %v8520, 5
        %v8523 = vsel %vm1338, %v8518, %v8522
        %v8524 = vshrl.u32 %v8379, 16
        %v8526 = vrot.slane %v8524, 4
        %v8527 = vor.u32 %v8526, %v8522
        %v8528 = vrot.slane %v8527, 4
        %v8530 = vshll.u32 %v8380, 16
        %v8532 = vrot.slane %v8530, 5
        %v8533 = vsel %vm1338, %v8528, %v8532
        %v8534 = vshrl.u32 %v8380, 16
        %v8536 = vrot.slane %v8534, 4
        %v8537 = vor.u32 %v8536, %v8532
        %v8538 = vrot.slane %v8537, 4
        %v8540 = vshll.u32 %v8381, 16
        %v8542 = vrot.slane %v8540, 5
        %v8543 = vsel %vm1338, %v8538, %v8542
        %v8544 = vshrl.u32 %v8381, 16
        %v8546 = vrot.slane %v8544, 4
        %v8547 = vor.u32 %v8546, %v8542
        %v8548 = vrot.slane %v8547, 4
        %v8550 = vshll.u32 %v8382, 16
        %v8552 = vrot.slane %v8550, 5
        %v8553 = vsel %vm1338, %v8548, %v8552
        %v8554 = vshrl.u32 %v8382, 16
        %v8556 = vrot.slane %v8554, 4
        %v8557 = vor.u32 %v8556, %v8552
        %v8558 = vrot.slane %v8557, 4
        %v8560 = vshll.u32 %v8383, 16
        %v8562 = vrot.slane %v8560, 5
        %v8563 = vsel %vm1338, %v8558, %v8562
        %v8564 = vshrl.u32 %v8383, 16
        %v8566 = vrot.slane %v8564, 4
        %v8567 = vor.u32 %v8566, %v8562
        %v8568 = vrot.slane %v8567, 4
        %v8570 = vshll.u32 %v8384, 16
        %v8572 = vrot.slane %v8570, 5
        %v8573 = vsel %vm1338, %v8568, %v8572
        %v8574 = vshrl.u32 %v8384, 16
        %v8576 = vrot.slane %v8574, 4
        %v8577 = vor.u32 %v8576, %v8572
        %v8578 = vrot.slane %v8577, 4
        %v8580 = vshll.u32 %v8385, 16
        %v8582 = vrot.slane %v8580, 5
        %v8583 = vsel %vm1338, %v8578, %v8582
        %v8584 = vshrl.u32 %v8385, 16
        %v8586 = vrot.slane %v8584, 4
        %v8587 = vor.u32 %v8586, %v8582
        %v8588 = vrot.slane %v8587, 4
        %v8590 = vshll.u32 %v8386, 16
        %v8592 = vrot.slane %v8590, 5
        %v8593 = vsel %vm1338, %v8588, %v8592
        %v8594 = vshrl.u32 %v8386, 16
        %v8596 = vrot.slane %v8594, 4
        %v8597 = vor.u32 %v8596, %v8592
        %v8598 = vrot.slane %v8597, 4
        %v8600 = vshll.u32 %v8387, 16
        %v8602 = vrot.slane %v8600, 5
        %v8603 = vsel %vm1338, %v8598, %v8602
        %v8604 = vshrl.u32 %v8387, 16
        %v8606 = vrot.slane %v8604, 4
        %v8607 = vor.u32 %v8606, %v8602
        %v8608 = vrot.slane %v8607, 4
        %v8610 = vshll.u32 %v8388, 16
        %v8612 = vrot.slane %v8610, 5
        %v8613 = vsel %vm1338, %v8608, %v8612
        %v8614 = vshrl.u32 %v8388, 16
        %v8616 = vrot.slane %v8614, 4
        %v8617 = vor.u32 %v8616, %v8612
        %v8618 = vrot.slane %v8617, 4
        %v8620 = vshll.u32 %v8389, 16
        %v8622 = vrot.slane %v8620, 5
        %v8623 = vsel %vm1338, %v8618, %v8622
        %v8624 = vshrl.u32 %v8389, 16
        %v8626 = vrot.slane %v8624, 4
        %v8627 = vor.u32 %v8626, %v8622
        %v8628 = vrot.slane %v8627, 4
        %v8630 = vshll.u32 %v8390, 16
        %v8632 = vrot.slane %v8630, 5
        %v8633 = vsel %vm1338, %v8628, %v8632
        %v8634 = vshrl.u32 %v8390, 16
        %v8636 = vrot.slane %v8634, 4
        %v8637 = vor.u32 %v8636, %v8632
        %v8638 = vrot.slane %v8637, 4
        %v8640 = vshll.u32 %v8391, 16
        %v8642 = vrot.slane %v8640, 5
        %v8643 = vsel %vm1338, %v8638, %v8642
        %v8644 = vshrl.u32 %v8391, 16
        %v8646 = vrot.slane %v8644, 4
        %v8647 = vor.u32 %v8646, %v8642
        %v8648 = vrot.slane %v8647, 4
        %v8650 = vshll.u32 %v8392, 16
        %v8652 = vrot.slane %v8650, 5
        %v8653 = vsel %vm1338, %v8648, %v8652
        %v8654 = vshrl.u32 %v8392, 16
        %v8656 = vrot.slane %v8654, 4
        %v8657 = vor.u32 %v8656, %v8652
        %v8658 = vrot.slane %v8657, 4
        %v8660 = vshll.u32 %v8393, 16
        %v8662 = vrot.slane %v8660, 5
        %v8663 = vsel %vm1338, %v8658, %v8662
        %v8664 = vshrl.u32 %v8393, 16
        %v8666 = vrot.slane %v8664, 4
        %v8667 = vor.u32 %v8666, %v8662
        %v8668 = vrot.slane %v8667, 4
        %v8670 = vshll.u32 %v8394, 16
        %v8672 = vrot.slane %v8670, 5
        %v8673 = vsel %vm1338, %v8668, %v8672
        %v8674 = vshrl.u32 %v8394, 16
        %v8676 = vrot.slane %v8674, 4
        %v8677 = vor.u32 %v8676, %v8672
        %v8678 = vrot.slane %v8677, 4
        %v8680 = vshll.u32 %v8395, 16
        %v8682 = vrot.slane %v8680, 5
        %v8683 = vsel %vm1338, %v8678, %v8682
        %v8684 = vshrl.u32 %v8395, 16
        %v8686 = vrot.slane %v8684, 4
        %v8687 = vor.u32 %v8686, %v8682
        %v8688 = vrot.slane %v8687, 4
        %v8690 = vshll.u32 %v8396, 16
        %v8692 = vrot.slane %v8690, 5
        %v8693 = vsel %vm1338, %v8688, %v8692
        %v8694 = vshrl.u32 %v8396, 16
        %v8696 = vrot.slane %v8694, 4
        %v8697 = vor.u32 %v8696, %v8692
        %v8698 = vrot.slane %v8697, 4
        %v8700 = vshll.u32 %v8397, 16
        %v8702 = vrot.slane %v8700, 5
        %v8703 = vsel %vm1338, %v8698, %v8702
        %v8704 = vshrl.u32 %v8397, 16
        %v8706 = vrot.slane %v8704, 4
        %v8707 = vor.u32 %v8706, %v8702
        %v8708 = vrot.slane %v8707, 4
        %v8710 = vshll.u32 %v8398, 16
        %v8712 = vrot.slane %v8710, 5
        %v8713 = vsel %vm1338, %v8708, %v8712
        %v8714 = vshrl.u32 %v8398, 16
        %v8716 = vrot.slane %v8714, 4
        %v8717 = vor.u32 %v8716, %v8712
        %v8718 = vrot.slane %v8717, 4
        %v8720 = vshll.u32 %v8399, 16
        %v8722 = vrot.slane %v8720, 5
        %v8723 = vsel %vm1338, %v8718, %v8722
        %8724 = vrot.lane.b32.xlu0 %v8413, 32
        %v8725 = vpop.permute.xlu0 %8724
        %8726 = vrot.lane.b32.xlu0 %v8423, 32
        %v8727 = vpop.permute.xlu0 %8726
        %8728 = vrot.lane.b32.xlu0 %v8433, 32
        %v8729 = vpop.permute.xlu0 %8728
        %8730 = vrot.lane.b32.xlu0 %v8443, 32
        %v8731 = vpop.permute.xlu0 %8730
        %8732 = vrot.lane.b32.xlu0 %v8453, 32
        %v8733 = vpop.permute.xlu0 %8732
        %8734 = vrot.lane.b32.xlu0 %v8463, 32
        %v8735 = vpop.permute.xlu0 %8734
        %8736 = vrot.lane.b32.xlu0 %v8473, 32
        %v8737 = vpop.permute.xlu0 %8736
        %8738 = vrot.lane.b32.xlu0 %v8483, 32
        %v8739 = vpop.permute.xlu0 %8738
        %8740 = vrot.lane.b32.xlu0 %v8493, 32
        %v8741 = vpop.permute.xlu0 %8740
        %8742 = vrot.lane.b32.xlu0 %v8503, 32
        %v8743 = vpop.permute.xlu0 %8742
        %8744 = vrot.lane.b32.xlu0 %v8513, 32
        %v8745 = vpop.permute.xlu0 %8744
        %8746 = vrot.lane.b32.xlu0 %v8523, 32
        %v8747 = vpop.permute.xlu0 %8746
        %8748 = vrot.lane.b32.xlu0 %v8533, 32
        %v8749 = vpop.permute.xlu0 %8748
        %8750 = vrot.lane.b32.xlu0 %v8543, 32
        %v8751 = vpop.permute.xlu0 %8750
        %8752 = vrot.lane.b32.xlu0 %v8553, 32
        %v8753 = vpop.permute.xlu0 %8752
        %8754 = vrot.lane.b32.xlu0 %v8563, 32
        %v8755 = vpop.permute.xlu0 %8754
        %8756 = vrot.lane.b32.xlu0 %v8573, 32
        %v8757 = vpop.permute.xlu0 %8756
        %8758 = vrot.lane.b32.xlu0 %v8583, 32
        %v8759 = vpop.permute.xlu0 %8758
        %8760 = vrot.lane.b32.xlu0 %v8593, 32
        %v8761 = vpop.permute.xlu0 %8760
        %8762 = vrot.lane.b32.xlu0 %v8603, 32
        %v8763 = vpop.permute.xlu0 %8762
        %8764 = vrot.lane.b32.xlu0 %v8613, 32
        %v8765 = vpop.permute.xlu0 %8764
        %8766 = vrot.lane.b32.xlu0 %v8623, 32
        %v8767 = vpop.permute.xlu0 %8766
        %8768 = vrot.lane.b32.xlu0 %v8633, 32
        %v8769 = vpop.permute.xlu0 %8768
        %8770 = vrot.lane.b32.xlu0 %v8643, 32
        %v8771 = vpop.permute.xlu0 %8770
        %8772 = vrot.lane.b32.xlu0 %v8653, 32
        %v8773 = vpop.permute.xlu0 %8772
        %8774 = vrot.lane.b32.xlu0 %v8663, 32
        %v8775 = vpop.permute.xlu0 %8774
        %8776 = vrot.lane.b32.xlu0 %v8673, 32
        %v8777 = vpop.permute.xlu0 %8776
        %8778 = vrot.lane.b32.xlu0 %v8683, 32
        %v8779 = vpop.permute.xlu0 %8778
        %8780 = vrot.lane.b32.xlu0 %v8693, 32
        %v8781 = vpop.permute.xlu0 %8780
        %8782 = vrot.lane.b32.xlu0 %v8703, 32
        %v8783 = vpop.permute.xlu0 %8782
        %8784 = vrot.lane.b32.xlu0 %v8713, 32
        %v8785 = vpop.permute.xlu0 %8784
        %8786 = vrot.lane.b32.xlu0 %v8723, 32
        %v8787 = vpop.permute.xlu0 %8786
        %8820 = vst.msk [vmem:[#allocation3 + $0x4] sm:$0xf] %vm2243, %v8725
        %8821 = vst.msk [vmem:[#allocation3 + $0x10] sm:$0xf] %vm2243, %v8727
        %8822 = vst.msk [vmem:[#allocation3 + $0x1c] sm:$0xf] %vm2243, %v8729
        %8823 = vst.msk [vmem:[#allocation3 + $0x28] sm:$0xf] %vm2243, %v8731
        %8824 = vst.msk [vmem:[#allocation3 + $0x34] sm:$0xf] %vm2243, %v8733
        %8825 = vst.msk [vmem:[#allocation3 + $0x40] sm:$0xf] %vm2243, %v8735
        %8826 = vst.msk [vmem:[#allocation3 + $0x4c] sm:$0xf] %vm2243, %v8737
        %8827 = vst.msk [vmem:[#allocation3 + $0x58] sm:$0xf] %vm2243, %v8739
        %8828 = vst.msk [vmem:[#allocation3 + $0x64] sm:$0xf] %vm2243, %v8741
        %8829 = vst.msk [vmem:[#allocation3 + $0x70] sm:$0xf] %vm2243, %v8743
        %8830 = vst.msk [vmem:[#allocation3 + $0x7c] sm:$0xf] %vm2243, %v8745
        %8831 = vst.msk [vmem:[#allocation3 + $0x88] sm:$0xf] %vm2243, %v8747
        %8832 = vst.msk [vmem:[#allocation3 + $0x94] sm:$0xf] %vm2243, %v8749
        %8833 = vst.msk [vmem:[#allocation3 + $0xa0] sm:$0xf] %vm2243, %v8751
        %8834 = vst.msk [vmem:[#allocation3 + $0xac] sm:$0xf] %vm2243, %v8753
        %8835 = vst.msk [vmem:[#allocation3 + $0xb8] sm:$0xf] %vm2243, %v8755
        %8836 = vst.msk [vmem:[#allocation3 + $0xc4] sm:$0xf] %vm2243, %v8757
        %8837 = vst.msk [vmem:[#allocation3 + $0xd0] sm:$0xf] %vm2243, %v8759
        %8838 = vst.msk [vmem:[#allocation3 + $0xdc] sm:$0xf] %vm2243, %v8761
        %8839 = vst.msk [vmem:[#allocation3 + $0xe8] sm:$0xf] %vm2243, %v8763
        %8840 = vst.msk [vmem:[#allocation3 + $0xf4] sm:$0xf] %vm2243, %v8765
        %8841 = vst.msk [vmem:[#allocation3 + $0x100] sm:$0xf] %vm2243, %v8767
        %8842 = vst.msk [vmem:[#allocation3 + $0x10c] sm:$0xf] %vm2243, %v8769
        %8843 = vst.msk [vmem:[#allocation3 + $0x118] sm:$0xf] %vm2243, %v8771
        %8844 = vst.msk [vmem:[#allocation3 + $0x124] sm:$0xf] %vm2243, %v8773
        %8845 = vst.msk [vmem:[#allocation3 + $0x130] sm:$0xf] %vm2243, %v8775
        %8846 = vst.msk [vmem:[#allocation3 + $0x13c] sm:$0xf] %vm2243, %v8777
        %8847 = vst.msk [vmem:[#allocation3 + $0x148] sm:$0xf] %vm2243, %v8779
        %8848 = vst.msk [vmem:[#allocation3 + $0x154] sm:$0xf] %vm2243, %v8781
        %8849 = vst.msk [vmem:[#allocation3 + $0x160] sm:$0xf] %vm2243, %v8783
        %8850 = vst.msk [vmem:[#allocation3 + $0x16c] sm:$0xf] %vm2243, %v8785
        %8851 = vst.msk [vmem:[#allocation3 + $0x178] sm:$0xf] %vm2243, %v8787
        %v8852 = vld [vmem:[#allocation2 + $0x14] sm:$0x8]
        %v8853 = vld [vmem:[#allocation2 + $0x18] sm:$0xf]
        %v8854 = vld [vmem:[#allocation2 + $0x1c] sm:$0xf]
        %v8855 = vld [vmem:[#allocation2 + $0x20] sm:$0xf]
        %v8856 = vld [vmem:[#allocation2 + $0x24] sm:$0xf]
        %v8857 = vld [vmem:[#allocation2 + $0x28] sm:$0xf]
        %v8858 = vld [vmem:[#allocation2 + $0x2c] sm:$0xf]
        %v8859 = vld [vmem:[#allocation2 + $0x30] sm:$0xf]
        %v8860 = vld [vmem:[#allocation2 + $0x34] sm:$0xf]
        %v8861 = vld [vmem:[#allocation2 + $0x38] sm:$0xf]
        %v8862 = vld [vmem:[#allocation2 + $0x3c] sm:$0xf]
        %v8863 = vld [vmem:[#allocation2 + $0x40] sm:$0xf]
        %v8864 = vld [vmem:[#allocation2 + $0x44] sm:$0xf]
        %v8865 = vld [vmem:[#allocation2 + $0x48] sm:$0xf]
        %v8866 = vld [vmem:[#allocation2 + $0x4c] sm:$0xf]
        %v8867 = vld [vmem:[#allocation2 + $0x50] sm:$0xf]
        %v8868 = vld [vmem:[#allocation2 + $0x54] sm:$0xf]
        %v8869 = vld [vmem:[#allocation2 + $0x58] sm:$0xf]
        %v8870 = vld [vmem:[#allocation2 + $0x5c] sm:$0xf]
        %v8871 = vld [vmem:[#allocation2 + $0x60] sm:$0xf]
        %v8872 = vld [vmem:[#allocation2 + $0x64] sm:$0xf]
        %v8873 = vld [vmem:[#allocation2 + $0x68] sm:$0xf]
        %v8874 = vld [vmem:[#allocation2 + $0x6c] sm:$0xf]
        %v8875 = vld [vmem:[#allocation2 + $0x70] sm:$0xf]
        %v8876 = vld [vmem:[#allocation2 + $0x74] sm:$0xf]
        %v8877 = vld [vmem:[#allocation2 + $0x78] sm:$0xf]
        %v8878 = vld [vmem:[#allocation2 + $0x7c] sm:$0xf]
        %v8879 = vld [vmem:[#allocation2 + $0x80] sm:$0xf]
        %v8880 = vld [vmem:[#allocation2 + $0x84] sm:$0xf]
        %v8881 = vld [vmem:[#allocation2 + $0x88] sm:$0xf]
        %v8882 = vld [vmem:[#allocation2 + $0x8c] sm:$0xf]
        %v8883 = vld [vmem:[#allocation2 + $0x90] sm:$0xf]
        %v8884 = vld [vmem:[#allocation2 + $0x94] sm:$0xf]
        %v8885 = vmul.bf16 %v8852, %v1342
        %v8886 = vmul.bf16 %v8853, %v1352
        %v8887 = vmul.bf16 %v8854, %v1362
        %v8888 = vmul.bf16 %v8855, %v1372
        %v8889 = vmul.bf16 %v8856, %v1382
        %v8890 = vmul.bf16 %v8857, %v1392
        %v8891 = vmul.bf16 %v8858, %v1402
        %v8892 = vmul.bf16 %v8859, %v1412
        %v8893 = vmul.bf16 %v8860, %v1422
        %v8894 = vmul.bf16 %v8861, %v1432
        %v8895 = vmul.bf16 %v8862, %v1442
        %v8896 = vmul.bf16 %v8863, %v1452
        %v8897 = vmul.bf16 %v8864, %v1462
        %v8898 = vmul.bf16 %v8865, %v1472
        %v8899 = vmul.bf16 %v8866, %v1482
        %v8900 = vmul.bf16 %v8867, %v1492
        %v8901 = vmul.bf16 %v8868, %v1502
        %v8902 = vmul.bf16 %v8869, %v1512
        %v8903 = vmul.bf16 %v8870, %v1522
        %v8904 = vmul.bf16 %v8871, %v1532
        %v8905 = vmul.bf16 %v8872, %v1542
        %v8906 = vmul.bf16 %v8873, %v1552
        %v8907 = vmul.bf16 %v8874, %v1562
        %v8908 = vmul.bf16 %v8875, %v1572
        %v8909 = vmul.bf16 %v8876, %v1582
        %v8910 = vmul.bf16 %v8877, %v1592
        %v8911 = vmul.bf16 %v8878, %v1602
        %v8912 = vmul.bf16 %v8879, %v1612
        %v8913 = vmul.bf16 %v8880, %v1622
        %v8914 = vmul.bf16 %v8881, %v1632
        %v8915 = vmul.bf16 %v8882, %v1642
        %v8916 = vmul.bf16 %v8883, %v1652
        %v8917 = vmul.bf16 %v8884, %v1657
        %v8919 = vshrl.u32 %v8885, 16
        %v8921 = vrot.slane %v8919, 7
        %v8922 = vrot.slane %v8921, 4
        %v8924 = vshrl.u32 %v8886, 16
        %v8926 = vrot.slane %v8924, 7
        %v8927 = vshll.u32 %v8886, 16
        %v8929 = vor.u32 %v8926, %v8927
        %v8930 = vsel %vm1726, %v8922, %v8929
        %v8931 = vrot.slane %v8926, 4
        %v8933 = vshrl.u32 %v8887, 16
        %v8935 = vrot.slane %v8933, 7
        %v8936 = vshll.u32 %v8887, 16
        %v8938 = vor.u32 %v8935, %v8936
        %v8939 = vsel %vm1726, %v8931, %v8938
        %v8940 = vrot.slane %v8935, 4
        %v8942 = vshrl.u32 %v8888, 16
        %v8944 = vrot.slane %v8942, 7
        %v8945 = vshll.u32 %v8888, 16
        %v8947 = vor.u32 %v8944, %v8945
        %v8948 = vsel %vm1726, %v8940, %v8947
        %v8949 = vrot.slane %v8944, 4
        %v8951 = vshrl.u32 %v8889, 16
        %v8953 = vrot.slane %v8951, 7
        %v8954 = vshll.u32 %v8889, 16
        %v8956 = vor.u32 %v8953, %v8954
        %v8957 = vsel %vm1726, %v8949, %v8956
        %v8958 = vrot.slane %v8953, 4
        %v8960 = vshrl.u32 %v8890, 16
        %v8962 = vrot.slane %v8960, 7
        %v8963 = vshll.u32 %v8890, 16
        %v8965 = vor.u32 %v8962, %v8963
        %v8966 = vsel %vm1726, %v8958, %v8965
        %v8967 = vrot.slane %v8962, 4
        %v8969 = vshrl.u32 %v8891, 16
        %v8971 = vrot.slane %v8969, 7
        %v8972 = vshll.u32 %v8891, 16
        %v8974 = vor.u32 %v8971, %v8972
        %v8975 = vsel %vm1726, %v8967, %v8974
        %v8976 = vrot.slane %v8971, 4
        %v8978 = vshrl.u32 %v8892, 16
        %v8980 = vrot.slane %v8978, 7
        %v8981 = vshll.u32 %v8892, 16
        %v8983 = vor.u32 %v8980, %v8981
        %v8984 = vsel %vm1726, %v8976, %v8983
        %v8985 = vrot.slane %v8980, 4
        %v8987 = vshrl.u32 %v8893, 16
        %v8989 = vrot.slane %v8987, 7
        %v8990 = vshll.u32 %v8893, 16
        %v8992 = vor.u32 %v8989, %v8990
        %v8993 = vsel %vm1726, %v8985, %v8992
        %v8994 = vrot.slane %v8989, 4
        %v8996 = vshrl.u32 %v8894, 16
        %v8998 = vrot.slane %v8996, 7
        %v8999 = vshll.u32 %v8894, 16
        %v9001 = vor.u32 %v8998, %v8999
        %v9002 = vsel %vm1726, %v8994, %v9001
        %v9003 = vrot.slane %v8998, 4
        %v9005 = vshrl.u32 %v8895, 16
        %v9007 = vrot.slane %v9005, 7
        %v9008 = vshll.u32 %v8895, 16
        %v9010 = vor.u32 %v9007, %v9008
        %v9011 = vsel %vm1726, %v9003, %v9010
        %v9012 = vrot.slane %v9007, 4
        %v9014 = vshrl.u32 %v8896, 16
        %v9016 = vrot.slane %v9014, 7
        %v9017 = vshll.u32 %v8896, 16
        %v9019 = vor.u32 %v9016, %v9017
        %v9020 = vsel %vm1726, %v9012, %v9019
        %v9021 = vrot.slane %v9016, 4
        %v9023 = vshrl.u32 %v8897, 16
        %v9025 = vrot.slane %v9023, 7
        %v9026 = vshll.u32 %v8897, 16
        %v9028 = vor.u32 %v9025, %v9026
        %v9029 = vsel %vm1726, %v9021, %v9028
        %v9030 = vrot.slane %v9025, 4
        %v9032 = vshrl.u32 %v8898, 16
        %v9034 = vrot.slane %v9032, 7
        %v9035 = vshll.u32 %v8898, 16
        %v9037 = vor.u32 %v9034, %v9035
        %v9038 = vsel %vm1726, %v9030, %v9037
        %v9039 = vrot.slane %v9034, 4
        %v9041 = vshrl.u32 %v8899, 16
        %v9043 = vrot.slane %v9041, 7
        %v9044 = vshll.u32 %v8899, 16
        %v9046 = vor.u32 %v9043, %v9044
        %v9047 = vsel %vm1726, %v9039, %v9046
        %v9048 = vrot.slane %v9043, 4
        %v9050 = vshrl.u32 %v8900, 16
        %v9052 = vrot.slane %v9050, 7
        %v9053 = vshll.u32 %v8900, 16
        %v9055 = vor.u32 %v9052, %v9053
        %v9056 = vsel %vm1726, %v9048, %v9055
        %v9057 = vrot.slane %v9052, 4
        %v9059 = vshrl.u32 %v8901, 16
        %v9061 = vrot.slane %v9059, 7
        %v9062 = vshll.u32 %v8901, 16
        %v9064 = vor.u32 %v9061, %v9062
        %v9065 = vsel %vm1726, %v9057, %v9064
        %v9066 = vrot.slane %v9061, 4
        %v9068 = vshrl.u32 %v8902, 16
        %v9070 = vrot.slane %v9068, 7
        %v9071 = vshll.u32 %v8902, 16
        %v9073 = vor.u32 %v9070, %v9071
        %v9074 = vsel %vm1726, %v9066, %v9073
        %v9075 = vrot.slane %v9070, 4
        %v9077 = vshrl.u32 %v8903, 16
        %v9079 = vrot.slane %v9077, 7
        %v9080 = vshll.u32 %v8903, 16
        %v9082 = vor.u32 %v9079, %v9080
        %v9083 = vsel %vm1726, %v9075, %v9082
        %v9084 = vrot.slane %v9079, 4
        %v9086 = vshrl.u32 %v8904, 16
        %v9088 = vrot.slane %v9086, 7
        %v9089 = vshll.u32 %v8904, 16
        %v9091 = vor.u32 %v9088, %v9089
        %v9092 = vsel %vm1726, %v9084, %v9091
        %v9093 = vrot.slane %v9088, 4
        %v9095 = vshrl.u32 %v8905, 16
        %v9097 = vrot.slane %v9095, 7
        %v9098 = vshll.u32 %v8905, 16
        %v9100 = vor.u32 %v9097, %v9098
        %v9101 = vsel %vm1726, %v9093, %v9100
        %v9102 = vrot.slane %v9097, 4
        %v9104 = vshrl.u32 %v8906, 16
        %v9106 = vrot.slane %v9104, 7
        %v9107 = vshll.u32 %v8906, 16
        %v9109 = vor.u32 %v9106, %v9107
        %v9110 = vsel %vm1726, %v9102, %v9109
        %v9111 = vrot.slane %v9106, 4
        %v9113 = vshrl.u32 %v8907, 16
        %v9115 = vrot.slane %v9113, 7
        %v9116 = vshll.u32 %v8907, 16
        %v9118 = vor.u32 %v9115, %v9116
        %v9119 = vsel %vm1726, %v9111, %v9118
        %v9120 = vrot.slane %v9115, 4
        %v9122 = vshrl.u32 %v8908, 16
        %v9124 = vrot.slane %v9122, 7
        %v9125 = vshll.u32 %v8908, 16
        %v9127 = vor.u32 %v9124, %v9125
        %v9128 = vsel %vm1726, %v9120, %v9127
        %v9129 = vrot.slane %v9124, 4
        %v9131 = vshrl.u32 %v8909, 16
        %v9133 = vrot.slane %v9131, 7
        %v9134 = vshll.u32 %v8909, 16
        %v9136 = vor.u32 %v9133, %v9134
        %v9137 = vsel %vm1726, %v9129, %v9136
        %v9138 = vrot.slane %v9133, 4
        %v9140 = vshrl.u32 %v8910, 16
        %v9142 = vrot.slane %v9140, 7
        %v9143 = vshll.u32 %v8910, 16
        %v9145 = vor.u32 %v9142, %v9143
        %v9146 = vsel %vm1726, %v9138, %v9145
        %v9147 = vrot.slane %v9142, 4
        %v9149 = vshrl.u32 %v8911, 16
        %v9151 = vrot.slane %v9149, 7
        %v9152 = vshll.u32 %v8911, 16
        %v9154 = vor.u32 %v9151, %v9152
        %v9155 = vsel %vm1726, %v9147, %v9154
        %v9156 = vrot.slane %v9151, 4
        %v9158 = vshrl.u32 %v8912, 16
        %v9160 = vrot.slane %v9158, 7
        %v9161 = vshll.u32 %v8912, 16
        %v9163 = vor.u32 %v9160, %v9161
        %v9164 = vsel %vm1726, %v9156, %v9163
        %v9165 = vrot.slane %v9160, 4
        %v9167 = vshrl.u32 %v8913, 16
        %v9169 = vrot.slane %v9167, 7
        %v9170 = vshll.u32 %v8913, 16
        %v9172 = vor.u32 %v9169, %v9170
        %v9173 = vsel %vm1726, %v9165, %v9172
        %v9174 = vrot.slane %v9169, 4
        %v9176 = vshrl.u32 %v8914, 16
        %v9178 = vrot.slane %v9176, 7
        %v9179 = vshll.u32 %v8914, 16
        %v9181 = vor.u32 %v9178, %v9179
        %v9182 = vsel %vm1726, %v9174, %v9181
        %v9183 = vrot.slane %v9178, 4
        %v9185 = vshrl.u32 %v8915, 16
        %v9187 = vrot.slane %v9185, 7
        %v9188 = vshll.u32 %v8915, 16
        %v9190 = vor.u32 %v9187, %v9188
        %v9191 = vsel %vm1726, %v9183, %v9190
        %v9192 = vrot.slane %v9187, 4
        %v9194 = vshrl.u32 %v8916, 16
        %v9196 = vrot.slane %v9194, 7
        %v9197 = vshll.u32 %v8916, 16
        %v9199 = vor.u32 %v9196, %v9197
        %v9200 = vsel %vm1726, %v9192, %v9199
        %v9201 = vrot.slane %v9196, 4
        %v9203 = vshrl.u32 %v8917, 16
        %v9205 = vrot.slane %v9203, 7
        %v9206 = vshll.u32 %v8917, 16
        %v9208 = vor.u32 %v9205, %v9206
        %v9209 = vsel %vm1726, %v9201, %v9208
        %9210 = vrot.lane.b32.xlu0 %v8930, 64
        %v9211 = vpop.permute.xlu0 %9210
        %9212 = vrot.lane.b32.xlu0 %v8939, 64
        %v9213 = vpop.permute.xlu0 %9212
        %9214 = vrot.lane.b32.xlu0 %v8948, 64
        %v9215 = vpop.permute.xlu0 %9214
        %9216 = vrot.lane.b32.xlu0 %v8957, 64
        %v9217 = vpop.permute.xlu0 %9216
        %9218 = vrot.lane.b32.xlu0 %v8966, 64
        %v9219 = vpop.permute.xlu0 %9218
        %9220 = vrot.lane.b32.xlu0 %v8975, 64
        %v9221 = vpop.permute.xlu0 %9220
        %9222 = vrot.lane.b32.xlu0 %v8984, 64
        %v9223 = vpop.permute.xlu0 %9222
        %9224 = vrot.lane.b32.xlu0 %v8993, 64
        %v9225 = vpop.permute.xlu0 %9224
        %9226 = vrot.lane.b32.xlu0 %v9002, 64
        %v9227 = vpop.permute.xlu0 %9226
        %9228 = vrot.lane.b32.xlu0 %v9011, 64
        %v9229 = vpop.permute.xlu0 %9228
        %9230 = vrot.lane.b32.xlu0 %v9020, 64
        %v9231 = vpop.permute.xlu0 %9230
        %9232 = vrot.lane.b32.xlu0 %v9029, 64
        %v9233 = vpop.permute.xlu0 %9232
        %9234 = vrot.lane.b32.xlu0 %v9038, 64
        %v9235 = vpop.permute.xlu0 %9234
        %9236 = vrot.lane.b32.xlu0 %v9047, 64
        %v9237 = vpop.permute.xlu0 %9236
        %9238 = vrot.lane.b32.xlu0 %v9056, 64
        %v9239 = vpop.permute.xlu0 %9238
        %9240 = vrot.lane.b32.xlu0 %v9065, 64
        %v9241 = vpop.permute.xlu0 %9240
        %9242 = vrot.lane.b32.xlu0 %v9074, 64
        %v9243 = vpop.permute.xlu0 %9242
        %9244 = vrot.lane.b32.xlu0 %v9083, 64
        %v9245 = vpop.permute.xlu0 %9244
        %9246 = vrot.lane.b32.xlu0 %v9092, 64
        %v9247 = vpop.permute.xlu0 %9246
        %9248 = vrot.lane.b32.xlu0 %v9101, 64
        %v9249 = vpop.permute.xlu0 %9248
        %9250 = vrot.lane.b32.xlu0 %v9110, 64
        %v9251 = vpop.permute.xlu0 %9250
        %9252 = vrot.lane.b32.xlu0 %v9119, 64
        %v9253 = vpop.permute.xlu0 %9252
        %9254 = vrot.lane.b32.xlu0 %v9128, 64
        %v9255 = vpop.permute.xlu0 %9254
        %9256 = vrot.lane.b32.xlu0 %v9137, 64
        %v9257 = vpop.permute.xlu0 %9256
        %9258 = vrot.lane.b32.xlu0 %v9146, 64
        %v9259 = vpop.permute.xlu0 %9258
        %9260 = vrot.lane.b32.xlu0 %v9155, 64
        %v9261 = vpop.permute.xlu0 %9260
        %9262 = vrot.lane.b32.xlu0 %v9164, 64
        %v9263 = vpop.permute.xlu0 %9262
        %9264 = vrot.lane.b32.xlu0 %v9173, 64
        %v9265 = vpop.permute.xlu0 %9264
        %9266 = vrot.lane.b32.xlu0 %v9182, 64
        %v9267 = vpop.permute.xlu0 %9266
        %9268 = vrot.lane.b32.xlu0 %v9191, 64
        %v9269 = vpop.permute.xlu0 %9268
        %9270 = vrot.lane.b32.xlu0 %v9200, 64
        %v9271 = vpop.permute.xlu0 %9270
        %9272 = vrot.lane.b32.xlu0 %v9209, 64
        %v9273 = vpop.permute.xlu0 %9272
        %9306 = vst.msk [vmem:[#allocation3 + $0x4] sm:$0xf] %vm3322, %v9211
        %9307 = vst.msk [vmem:[#allocation3 + $0x10] sm:$0xf] %vm3322, %v9213
        %9308 = vst.msk [vmem:[#allocation3 + $0x1c] sm:$0xf] %vm3322, %v9215
        %9309 = vst.msk [vmem:[#allocation3 + $0x28] sm:$0xf] %vm3322, %v9217
        %9310 = vst.msk [vmem:[#allocation3 + $0x34] sm:$0xf] %vm3322, %v9219
        %9311 = vst.msk [vmem:[#allocation3 + $0x40] sm:$0xf] %vm3322, %v9221
        %9312 = vst.msk [vmem:[#allocation3 + $0x4c] sm:$0xf] %vm3322, %v9223
        %9313 = vst.msk [vmem:[#allocation3 + $0x58] sm:$0xf] %vm3322, %v9225
        %9314 = vst.msk [vmem:[#allocation3 + $0x64] sm:$0xf] %vm3322, %v9227
        %9315 = vst.msk [vmem:[#allocation3 + $0x70] sm:$0xf] %vm3322, %v9229
        %9316 = vst.msk [vmem:[#allocation3 + $0x7c] sm:$0xf] %vm3322, %v9231
        %9317 = vst.msk [vmem:[#allocation3 + $0x88] sm:$0xf] %vm3322, %v9233
        %9318 = vst.msk [vmem:[#allocation3 + $0x94] sm:$0xf] %vm3322, %v9235
        %9319 = vst.msk [vmem:[#allocation3 + $0xa0] sm:$0xf] %vm3322, %v9237
        %9320 = vst.msk [vmem:[#allocation3 + $0xac] sm:$0xf] %vm3322, %v9239
        %9321 = vst.msk [vmem:[#allocation3 + $0xb8] sm:$0xf] %vm3322, %v9241
        %9322 = vst.msk [vmem:[#allocation3 + $0xc4] sm:$0xf] %vm3322, %v9243
        %9323 = vst.msk [vmem:[#allocation3 + $0xd0] sm:$0xf] %vm3322, %v9245
        %9324 = vst.msk [vmem:[#allocation3 + $0xdc] sm:$0xf] %vm3322, %v9247
        %9325 = vst.msk [vmem:[#allocation3 + $0xe8] sm:$0xf] %vm3322, %v9249
        %9326 = vst.msk [vmem:[#allocation3 + $0xf4] sm:$0xf] %vm3322, %v9251
        %9327 = vst.msk [vmem:[#allocation3 + $0x100] sm:$0xf] %vm3322, %v9253
        %9328 = vst.msk [vmem:[#allocation3 + $0x10c] sm:$0xf] %vm3322, %v9255
        %9329 = vst.msk [vmem:[#allocation3 + $0x118] sm:$0xf] %vm3322, %v9257
        %9330 = vst.msk [vmem:[#allocation3 + $0x124] sm:$0xf] %vm3322, %v9259
        %9331 = vst.msk [vmem:[#allocation3 + $0x130] sm:$0xf] %vm3322, %v9261
        %9332 = vst.msk [vmem:[#allocation3 + $0x13c] sm:$0xf] %vm3322, %v9263
        %9333 = vst.msk [vmem:[#allocation3 + $0x148] sm:$0xf] %vm3322, %v9265
        %9334 = vst.msk [vmem:[#allocation3 + $0x154] sm:$0xf] %vm3322, %v9267
        %9335 = vst.msk [vmem:[#allocation3 + $0x160] sm:$0xf] %vm3322, %v9269
        %9336 = vst.msk [vmem:[#allocation3 + $0x16c] sm:$0xf] %vm3322, %v9271
        %9337 = vst.msk [vmem:[#allocation3 + $0x178] sm:$0xf] %vm3322, %v9273
        %v9338 = vld [vmem:[#allocation2 + $0x18] sm:$0xf]
        %v9339 = vld [vmem:[#allocation2 + $0x1c] sm:$0xf]
        %v9340 = vld [vmem:[#allocation2 + $0x20] sm:$0xf]
        %v9341 = vld [vmem:[#allocation2 + $0x24] sm:$0xf]
        %v9342 = vld [vmem:[#allocation2 + $0x28] sm:$0xf]
        %v9343 = vld [vmem:[#allocation2 + $0x2c] sm:$0xf]
        %v9344 = vld [vmem:[#allocation2 + $0x30] sm:$0xf]
        %v9345 = vld [vmem:[#allocation2 + $0x34] sm:$0xf]
        %v9346 = vld [vmem:[#allocation2 + $0x38] sm:$0xf]
        %v9347 = vld [vmem:[#allocation2 + $0x3c] sm:$0xf]
        %v9348 = vld [vmem:[#allocation2 + $0x40] sm:$0xf]
        %v9349 = vld [vmem:[#allocation2 + $0x44] sm:$0xf]
        %v9350 = vld [vmem:[#allocation2 + $0x48] sm:$0xf]
        %v9351 = vld [vmem:[#allocation2 + $0x4c] sm:$0xf]
        %v9352 = vld [vmem:[#allocation2 + $0x50] sm:$0xf]
        %v9353 = vld [vmem:[#allocation2 + $0x54] sm:$0xf]
        %v9354 = vld [vmem:[#allocation2 + $0x58] sm:$0xf]
        %v9355 = vld [vmem:[#allocation2 + $0x5c] sm:$0xf]
        %v9356 = vld [vmem:[#allocation2 + $0x60] sm:$0xf]
        %v9357 = vld [vmem:[#allocation2 + $0x64] sm:$0xf]
        %v9358 = vld [vmem:[#allocation2 + $0x68] sm:$0xf]
        %v9359 = vld [vmem:[#allocation2 + $0x6c] sm:$0xf]
        %v9360 = vld [vmem:[#allocation2 + $0x70] sm:$0xf]
        %v9361 = vld [vmem:[#allocation2 + $0x74] sm:$0xf]
        %v9362 = vld [vmem:[#allocation2 + $0x78] sm:$0xf]
        %v9363 = vld [vmem:[#allocation2 + $0x7c] sm:$0xf]
        %v9364 = vld [vmem:[#allocation2 + $0x80] sm:$0xf]
        %v9365 = vld [vmem:[#allocation2 + $0x84] sm:$0xf]
        %v9366 = vld [vmem:[#allocation2 + $0x88] sm:$0xf]
        %v9367 = vld [vmem:[#allocation2 + $0x8c] sm:$0xf]
        %v9368 = vld [vmem:[#allocation2 + $0x90] sm:$0xf]
        %v9369 = vld [vmem:[#allocation2 + $0x94] sm:$0xf]
        %9402 = vrot.lane.b32.xlu0 %v9338, 96
        %v9403 = vpop.permute.xlu0 %9402
        %9404 = vrot.lane.b32.xlu0 %v9339, 96
        %v9405 = vpop.permute.xlu0 %9404
        %9406 = vrot.lane.b32.xlu0 %v9340, 96
        %v9407 = vpop.permute.xlu0 %9406
        %9408 = vrot.lane.b32.xlu0 %v9341, 96
        %v9409 = vpop.permute.xlu0 %9408
        %9410 = vrot.lane.b32.xlu0 %v9342, 96
        %v9411 = vpop.permute.xlu0 %9410
        %9412 = vrot.lane.b32.xlu0 %v9343, 96
        %v9413 = vpop.permute.xlu0 %9412
        %9414 = vrot.lane.b32.xlu0 %v9344, 96
        %v9415 = vpop.permute.xlu0 %9414
        %9416 = vrot.lane.b32.xlu0 %v9345, 96
        %v9417 = vpop.permute.xlu0 %9416
        %9418 = vrot.lane.b32.xlu0 %v9346, 96
        %v9419 = vpop.permute.xlu0 %9418
        %9420 = vrot.lane.b32.xlu0 %v9347, 96
        %v9421 = vpop.permute.xlu0 %9420
        %9422 = vrot.lane.b32.xlu0 %v9348, 96
        %v9423 = vpop.permute.xlu0 %9422
        %9424 = vrot.lane.b32.xlu0 %v9349, 96
        %v9425 = vpop.permute.xlu0 %9424
        %9426 = vrot.lane.b32.xlu0 %v9350, 96
        %v9427 = vpop.permute.xlu0 %9426
        %9428 = vrot.lane.b32.xlu0 %v9351, 96
        %v9429 = vpop.permute.xlu0 %9428
        %9430 = vrot.lane.b32.xlu0 %v9352, 96
        %v9431 = vpop.permute.xlu0 %9430
        %9432 = vrot.lane.b32.xlu0 %v9353, 96
        %v9433 = vpop.permute.xlu0 %9432
        %9434 = vrot.lane.b32.xlu0 %v9354, 96
        %v9435 = vpop.permute.xlu0 %9434
        %9436 = vrot.lane.b32.xlu0 %v9355, 96
        %v9437 = vpop.permute.xlu0 %9436
        %9438 = vrot.lane.b32.xlu0 %v9356, 96
        %v9439 = vpop.permute.xlu0 %9438
        %9440 = vrot.lane.b32.xlu0 %v9357, 96
        %v9441 = vpop.permute.xlu0 %9440
        %9442 = vrot.lane.b32.xlu0 %v9358, 96
        %v9443 = vpop.permute.xlu0 %9442
        %9444 = vrot.lane.b32.xlu0 %v9359, 96
        %v9445 = vpop.permute.xlu0 %9444
        %9446 = vrot.lane.b32.xlu0 %v9360, 96
        %v9447 = vpop.permute.xlu0 %9446
        %9448 = vrot.lane.b32.xlu0 %v9361, 96
        %v9449 = vpop.permute.xlu0 %9448
        %9450 = vrot.lane.b32.xlu0 %v9362, 96
        %v9451 = vpop.permute.xlu0 %9450
        %9452 = vrot.lane.b32.xlu0 %v9363, 96
        %v9453 = vpop.permute.xlu0 %9452
        %9454 = vrot.lane.b32.xlu0 %v9364, 96
        %v9455 = vpop.permute.xlu0 %9454
        %9456 = vrot.lane.b32.xlu0 %v9365, 96
        %v9457 = vpop.permute.xlu0 %9456
        %9458 = vrot.lane.b32.xlu0 %v9366, 96
        %v9459 = vpop.permute.xlu0 %9458
        %9460 = vrot.lane.b32.xlu0 %v9367, 96
        %v9461 = vpop.permute.xlu0 %9460
        %9462 = vrot.lane.b32.xlu0 %v9368, 96
        %v9463 = vpop.permute.xlu0 %9462
        %9464 = vrot.lane.b32.xlu0 %v9369, 96
        %v9465 = vpop.permute.xlu0 %9464
        %9498 = vst.msk [vmem:[#allocation3 + $0x4] sm:$0xf] %vm3809, %v9403
        %9499 = vst.msk [vmem:[#allocation3 + $0x10] sm:$0xf] %vm3809, %v9405
        %9500 = vst.msk [vmem:[#allocation3 + $0x1c] sm:$0xf] %vm3809, %v9407
        %9501 = vst.msk [vmem:[#allocation3 + $0x28] sm:$0xf] %vm3809, %v9409
        %9502 = vst.msk [vmem:[#allocation3 + $0x34] sm:$0xf] %vm3809, %v9411
        %9503 = vst.msk [vmem:[#allocation3 + $0x40] sm:$0xf] %vm3809, %v9413
        %9504 = vst.msk [vmem:[#allocation3 + $0x4c] sm:$0xf] %vm3809, %v9415
        %9505 = vst.msk [vmem:[#allocation3 + $0x58] sm:$0xf] %vm3809, %v9417
        %9506 = vst.msk [vmem:[#allocation3 + $0x64] sm:$0xf] %vm3809, %v9419
        %9507 = vst.msk [vmem:[#allocation3 + $0x70] sm:$0xf] %vm3809, %v9421
        %9508 = vst.msk [vmem:[#allocation3 + $0x7c] sm:$0xf] %vm3809, %v9423
        %9509 = vst.msk [vmem:[#allocation3 + $0x88] sm:$0xf] %vm3809, %v9425
        %9510 = vst.msk [vmem:[#allocation3 + $0x94] sm:$0xf] %vm3809, %v9427
        %9511 = vst.msk [vmem:[#allocation3 + $0xa0] sm:$0xf] %vm3809, %v9429
        %9512 = vst.msk [vmem:[#allocation3 + $0xac] sm:$0xf] %vm3809, %v9431
        %9513 = vst.msk [vmem:[#allocation3 + $0xb8] sm:$0xf] %vm3809, %v9433
        %9514 = vst.msk [vmem:[#allocation3 + $0xc4] sm:$0xf] %vm3809, %v9435
        %9515 = vst.msk [vmem:[#allocation3 + $0xd0] sm:$0xf] %vm3809, %v9437
        %9516 = vst.msk [vmem:[#allocation3 + $0xdc] sm:$0xf] %vm3809, %v9439
        %9517 = vst.msk [vmem:[#allocation3 + $0xe8] sm:$0xf] %vm3809, %v9441
        %9518 = vst.msk [vmem:[#allocation3 + $0xf4] sm:$0xf] %vm3809, %v9443
        %9519 = vst.msk [vmem:[#allocation3 + $0x100] sm:$0xf] %vm3809, %v9445
        %9520 = vst.msk [vmem:[#allocation3 + $0x10c] sm:$0xf] %vm3809, %v9447
        %9521 = vst.msk [vmem:[#allocation3 + $0x118] sm:$0xf] %vm3809, %v9449
        %9522 = vst.msk [vmem:[#allocation3 + $0x124] sm:$0xf] %vm3809, %v9451
        %9523 = vst.msk [vmem:[#allocation3 + $0x130] sm:$0xf] %vm3809, %v9453
        %9524 = vst.msk [vmem:[#allocation3 + $0x13c] sm:$0xf] %vm3809, %v9455
        %9525 = vst.msk [vmem:[#allocation3 + $0x148] sm:$0xf] %vm3809, %v9457
        %9526 = vst.msk [vmem:[#allocation3 + $0x154] sm:$0xf] %vm3809, %v9459
        %9527 = vst.msk [vmem:[#allocation3 + $0x160] sm:$0xf] %vm3809, %v9461
        %9528 = vst.msk [vmem:[#allocation3 + $0x16c] sm:$0xf] %vm3809, %v9463
        %9529 = vst.msk [vmem:[#allocation3 + $0x178] sm:$0xf] %vm3809, %v9465
        %v9530 = vld [vmem:[#allocation2 + $0x18] sm:$0xf]
        %v9531 = vld [vmem:[#allocation2 + $0x1c] sm:$0xf]
        %v9532 = vld [vmem:[#allocation2 + $0x20] sm:$0xf]
        %v9533 = vld [vmem:[#allocation2 + $0x24] sm:$0xf]
        %v9534 = vld [vmem:[#allocation2 + $0x28] sm:$0xf]
        %v9535 = vld [vmem:[#allocation2 + $0x2c] sm:$0xf]
        %v9536 = vld [vmem:[#allocation2 + $0x30] sm:$0xf]
        %v9537 = vld [vmem:[#allocation2 + $0x34] sm:$0xf]
        %v9538 = vld [vmem:[#allocation2 + $0x38] sm:$0xf]
        %v9539 = vld [vmem:[#allocation2 + $0x3c] sm:$0xf]
        %v9540 = vld [vmem:[#allocation2 + $0x40] sm:$0xf]
        %v9541 = vld [vmem:[#allocation2 + $0x44] sm:$0xf]
        %v9542 = vld [vmem:[#allocation2 + $0x48] sm:$0xf]
        %v9543 = vld [vmem:[#allocation2 + $0x4c] sm:$0xf]
        %v9544 = vld [vmem:[#allocation2 + $0x50] sm:$0xf]
        %v9545 = vld [vmem:[#allocation2 + $0x54] sm:$0xf]
        %v9546 = vld [vmem:[#allocation2 + $0x58] sm:$0xf]
        %v9547 = vld [vmem:[#allocation2 + $0x5c] sm:$0xf]
        %v9548 = vld [vmem:[#allocation2 + $0x60] sm:$0xf]
        %v9549 = vld [vmem:[#allocation2 + $0x64] sm:$0xf]
        %v9550 = vld [vmem:[#allocation2 + $0x68] sm:$0xf]
        %v9551 = vld [vmem:[#allocation2 + $0x6c] sm:$0xf]
        %v9552 = vld [vmem:[#allocation2 + $0x70] sm:$0xf]
        %v9553 = vld [vmem:[#allocation2 + $0x74] sm:$0xf]
        %v9554 = vld [vmem:[#allocation2 + $0x78] sm:$0xf]
        %v9555 = vld [vmem:[#allocation2 + $0x7c] sm:$0xf]
        %v9556 = vld [vmem:[#allocation2 + $0x80] sm:$0xf]
        %v9557 = vld [vmem:[#allocation2 + $0x84] sm:$0xf]
        %v9558 = vld [vmem:[#allocation2 + $0x88] sm:$0xf]
        %v9559 = vld [vmem:[#allocation2 + $0x8c] sm:$0xf]
        %v9560 = vld [vmem:[#allocation2 + $0x90] sm:$0xf]
        %v9561 = vld [vmem:[#allocation2 + $0x94] sm:$0xf]
        %v9562 = vld [vmem:[#allocation2 + $0x98] sm:$0x1]
        %v9563 = vmul.bf16 %v9530, %v2555
        %v9564 = vmul.bf16 %v9531, %v2564
        %v9565 = vmul.bf16 %v9532, %v2573
        %v9566 = vmul.bf16 %v9533, %v2582
        %v9567 = vmul.bf16 %v9534, %v2591
        %v9568 = vmul.bf16 %v9535, %v2600
        %v9569 = vmul.bf16 %v9536, %v2609
        %v9570 = vmul.bf16 %v9537, %v2618
        %v9571 = vmul.bf16 %v9538, %v2627
        %v9572 = vmul.bf16 %v9539, %v2636
        %v9573 = vmul.bf16 %v9540, %v2645
        %v9574 = vmul.bf16 %v9541, %v2654
        %v9575 = vmul.bf16 %v9542, %v2663
        %v9576 = vmul.bf16 %v9543, %v2672
        %v9577 = vmul.bf16 %v9544, %v2681
        %v9578 = vmul.bf16 %v9545, %v2690
        %v9579 = vmul.bf16 %v9546, %v2699
        %v9580 = vmul.bf16 %v9547, %v2708
        %v9581 = vmul.bf16 %v9548, %v2717
        %v9582 = vmul.bf16 %v9549, %v2726
        %v9583 = vmul.bf16 %v9550, %v2735
        %v9584 = vmul.bf16 %v9551, %v2744
        %v9585 = vmul.bf16 %v9552, %v2753
        %v9586 = vmul.bf16 %v9553, %v2762
        %v9587 = vmul.bf16 %v9554, %v2771
        %v9588 = vmul.bf16 %v9555, %v2780
        %v9589 = vmul.bf16 %v9556, %v2789
        %v9590 = vmul.bf16 %v9557, %v2798
        %v9591 = vmul.bf16 %v9558, %v2807
        %v9592 = vmul.bf16 %v9559, %v2816
        %v9593 = vmul.bf16 %v9560, %v2825
        %v9594 = vmul.bf16 %v9561, %v2834
        %v9595 = vmul.bf16 %v9562, %v2835
        %v9597 = vshrl.u32 %v9563, 16
        %v9599 = vrot.slane %v9597, 4
        %v9600 = vshll.u32 %v9563, 16
        %v9602 = vrot.slane %v9600, 5
        %v9603 = vor.u32 %v9599, %v9602
        %v9604 = vrot.slane %v9603, 4
        %v9606 = vshll.u32 %v9564, 16
        %v9608 = vrot.slane %v9606, 5
        %v9609 = vsel %vm1338, %v9604, %v9608
        %v9610 = vshrl.u32 %v9564, 16
        %v9612 = vrot.slane %v9610, 4
        %v9613 = vor.u32 %v9612, %v9608
        %v9614 = vrot.slane %v9613, 4
        %v9616 = vshll.u32 %v9565, 16
        %v9618 = vrot.slane %v9616, 5
        %v9619 = vsel %vm1338, %v9614, %v9618
        %v9620 = vshrl.u32 %v9565, 16
        %v9622 = vrot.slane %v9620, 4
        %v9623 = vor.u32 %v9622, %v9618
        %v9624 = vrot.slane %v9623, 4
        %v9626 = vshll.u32 %v9566, 16
        %v9628 = vrot.slane %v9626, 5
        %v9629 = vsel %vm1338, %v9624, %v9628
        %v9630 = vshrl.u32 %v9566, 16
        %v9632 = vrot.slane %v9630, 4
        %v9633 = vor.u32 %v9632, %v9628
        %v9634 = vrot.slane %v9633, 4
        %v9636 = vshll.u32 %v9567, 16
        %v9638 = vrot.slane %v9636, 5
        %v9639 = vsel %vm1338, %v9634, %v9638
        %v9640 = vshrl.u32 %v9567, 16
        %v9642 = vrot.slane %v9640, 4
        %v9643 = vor.u32 %v9642, %v9638
        %v9644 = vrot.slane %v9643, 4
        %v9646 = vshll.u32 %v9568, 16
        %v9648 = vrot.slane %v9646, 5
        %v9649 = vsel %vm1338, %v9644, %v9648
        %v9650 = vshrl.u32 %v9568, 16
        %v9652 = vrot.slane %v9650, 4
        %v9653 = vor.u32 %v9652, %v9648
        %v9654 = vrot.slane %v9653, 4
        %v9656 = vshll.u32 %v9569, 16
        %v9658 = vrot.slane %v9656, 5
        %v9659 = vsel %vm1338, %v9654, %v9658
        %v9660 = vshrl.u32 %v9569, 16
        %v9662 = vrot.slane %v9660, 4
        %v9663 = vor.u32 %v9662, %v9658
        %v9664 = vrot.slane %v9663, 4
        %v9666 = vshll.u32 %v9570, 16
        %v9668 = vrot.slane %v9666, 5
        %v9669 = vsel %vm1338, %v9664, %v9668
        %v9670 = vshrl.u32 %v9570, 16
        %v9672 = vrot.slane %v9670, 4
        %v9673 = vor.u32 %v9672, %v9668
        %v9674 = vrot.slane %v9673, 4
        %v9676 = vshll.u32 %v9571, 16
        %v9678 = vrot.slane %v9676, 5
        %v9679 = vsel %vm1338, %v9674, %v9678
        %v9680 = vshrl.u32 %v9571, 16
        %v9682 = vrot.slane %v9680, 4
        %v9683 = vor.u32 %v9682, %v9678
        %v9684 = vrot.slane %v9683, 4
        %v9686 = vshll.u32 %v9572, 16
        %v9688 = vrot.slane %v9686, 5
        %v9689 = vsel %vm1338, %v9684, %v9688
        %v9690 = vshrl.u32 %v9572, 16
        %v9692 = vrot.slane %v9690, 4
        %v9693 = vor.u32 %v9692, %v9688
        %v9694 = vrot.slane %v9693, 4
        %v9696 = vshll.u32 %v9573, 16
        %v9698 = vrot.slane %v9696, 5
        %v9699 = vsel %vm1338, %v9694, %v9698
        %v9700 = vshrl.u32 %v9573, 16
        %v9702 = vrot.slane %v9700, 4
        %v9703 = vor.u32 %v9702, %v9698
        %v9704 = vrot.slane %v9703, 4
        %v9706 = vshll.u32 %v9574, 16
        %v9708 = vrot.slane %v9706, 5
        %v9709 = vsel %vm1338, %v9704, %v9708
        %v9710 = vshrl.u32 %v9574, 16
        %v9712 = vrot.slane %v9710, 4
        %v9713 = vor.u32 %v9712, %v9708
        %v9714 = vrot.slane %v9713, 4
        %v9716 = vshll.u32 %v9575, 16
        %v9718 = vrot.slane %v9716, 5
        %v9719 = vsel %vm1338, %v9714, %v9718
        %v9720 = vshrl.u32 %v9575, 16
        %v9722 = vrot.slane %v9720, 4
        %v9723 = vor.u32 %v9722, %v9718
        %v9724 = vrot.slane %v9723, 4
        %v9726 = vshll.u32 %v9576, 16
        %v9728 = vrot.slane %v9726, 5
        %v9729 = vsel %vm1338, %v9724, %v9728
        %v9730 = vshrl.u32 %v9576, 16
        %v9732 = vrot.slane %v9730, 4
        %v9733 = vor.u32 %v9732, %v9728
        %v9734 = vrot.slane %v9733, 4
        %v9736 = vshll.u32 %v9577, 16
        %v9738 = vrot.slane %v9736, 5
        %v9739 = vsel %vm1338, %v9734, %v9738
        %v9740 = vshrl.u32 %v9577, 16
        %v9742 = vrot.slane %v9740, 4
        %v9743 = vor.u32 %v9742, %v9738
        %v9744 = vrot.slane %v9743, 4
        %v9746 = vshll.u32 %v9578, 16
        %v9748 = vrot.slane %v9746, 5
        %v9749 = vsel %vm1338, %v9744, %v9748
        %v9750 = vshrl.u32 %v9578, 16
        %v9752 = vrot.slane %v9750, 4
        %v9753 = vor.u32 %v9752, %v9748
        %v9754 = vrot.slane %v9753, 4
        %v9756 = vshll.u32 %v9579, 16
        %v9758 = vrot.slane %v9756, 5
        %v9759 = vsel %vm1338, %v9754, %v9758
        %v9760 = vshrl.u32 %v9579, 16
        %v9762 = vrot.slane %v9760, 4
        %v9763 = vor.u32 %v9762, %v9758
        %v9764 = vrot.slane %v9763, 4
        %v9766 = vshll.u32 %v9580, 16
        %v9768 = vrot.slane %v9766, 5
        %v9769 = vsel %vm1338, %v9764, %v9768
        %v9770 = vshrl.u32 %v9580, 16
        %v9772 = vrot.slane %v9770, 4
        %v9773 = vor.u32 %v9772, %v9768
        %v9774 = vrot.slane %v9773, 4
        %v9776 = vshll.u32 %v9581, 16
        %v9778 = vrot.slane %v9776, 5
        %v9779 = vsel %vm1338, %v9774, %v9778
        %v9780 = vshrl.u32 %v9581, 16
        %v9782 = vrot.slane %v9780, 4
        %v9783 = vor.u32 %v9782, %v9778
        %v9784 = vrot.slane %v9783, 4
        %v9786 = vshll.u32 %v9582, 16
        %v9788 = vrot.slane %v9786, 5
        %v9789 = vsel %vm1338, %v9784, %v9788
        %v9790 = vshrl.u32 %v9582, 16
        %v9792 = vrot.slane %v9790, 4
        %v9793 = vor.u32 %v9792, %v9788
        %v9794 = vrot.slane %v9793, 4
        %v9796 = vshll.u32 %v9583, 16
        %v9798 = vrot.slane %v9796, 5
        %v9799 = vsel %vm1338, %v9794, %v9798
        %v9800 = vshrl.u32 %v9583, 16
        %v9802 = vrot.slane %v9800, 4
        %v9803 = vor.u32 %v9802, %v9798
        %v9804 = vrot.slane %v9803, 4
        %v9806 = vshll.u32 %v9584, 16
        %v9808 = vrot.slane %v9806, 5
        %v9809 = vsel %vm1338, %v9804, %v9808
        %v9810 = vshrl.u32 %v9584, 16
        %v9812 = vrot.slane %v9810, 4
        %v9813 = vor.u32 %v9812, %v9808
        %v9814 = vrot.slane %v9813, 4
        %v9816 = vshll.u32 %v9585, 16
        %v9818 = vrot.slane %v9816, 5
        %v9819 = vsel %vm1338, %v9814, %v9818
        %v9820 = vshrl.u32 %v9585, 16
        %v9822 = vrot.slane %v9820, 4
        %v9823 = vor.u32 %v9822, %v9818
        %v9824 = vrot.slane %v9823, 4
        %v9826 = vshll.u32 %v9586, 16
        %v9828 = vrot.slane %v9826, 5
        %v9829 = vsel %vm1338, %v9824, %v9828
        %v9830 = vshrl.u32 %v9586, 16
        %v9832 = vrot.slane %v9830, 4
        %v9833 = vor.u32 %v9832, %v9828
        %v9834 = vrot.slane %v9833, 4
        %v9836 = vshll.u32 %v9587, 16
        %v9838 = vrot.slane %v9836, 5
        %v9839 = vsel %vm1338, %v9834, %v9838
        %v9840 = vshrl.u32 %v9587, 16
        %v9842 = vrot.slane %v9840, 4
        %v9843 = vor.u32 %v9842, %v9838
        %v9844 = vrot.slane %v9843, 4
        %v9846 = vshll.u32 %v9588, 16
        %v9848 = vrot.slane %v9846, 5
        %v9849 = vsel %vm1338, %v9844, %v9848
        %v9850 = vshrl.u32 %v9588, 16
        %v9852 = vrot.slane %v9850, 4
        %v9853 = vor.u32 %v9852, %v9848
        %v9854 = vrot.slane %v9853, 4
        %v9856 = vshll.u32 %v9589, 16
        %v9858 = vrot.slane %v9856, 5
        %v9859 = vsel %vm1338, %v9854, %v9858
        %v9860 = vshrl.u32 %v9589, 16
        %v9862 = vrot.slane %v9860, 4
        %v9863 = vor.u32 %v9862, %v9858
        %v9864 = vrot.slane %v9863, 4
        %v9866 = vshll.u32 %v9590, 16
        %v9868 = vrot.slane %v9866, 5
        %v9869 = vsel %vm1338, %v9864, %v9868
        %v9870 = vshrl.u32 %v9590, 16
        %v9872 = vrot.slane %v9870, 4
        %v9873 = vor.u32 %v9872, %v9868
        %v9874 = vrot.slane %v9873, 4
        %v9876 = vshll.u32 %v9591, 16
        %v9878 = vrot.slane %v9876, 5
        %v9879 = vsel %vm1338, %v9874, %v9878
        %v9880 = vshrl.u32 %v9591, 16
        %v9882 = vrot.slane %v9880, 4
        %v9883 = vor.u32 %v9882, %v9878
        %v9884 = vrot.slane %v9883, 4
        %v9886 = vshll.u32 %v9592, 16
        %v9888 = vrot.slane %v9886, 5
        %v9889 = vsel %vm1338, %v9884, %v9888
        %v9890 = vshrl.u32 %v9592, 16
        %v9892 = vrot.slane %v9890, 4
        %v9893 = vor.u32 %v9892, %v9888
        %v9894 = vrot.slane %v9893, 4
        %v9896 = vshll.u32 %v9593, 16
        %v9898 = vrot.slane %v9896, 5
        %v9899 = vsel %vm1338, %v9894, %v9898
        %v9900 = vshrl.u32 %v9593, 16
        %v9902 = vrot.slane %v9900, 4
        %v9903 = vor.u32 %v9902, %v9898
        %v9904 = vrot.slane %v9903, 4
        %v9906 = vshll.u32 %v9594, 16
        %v9908 = vrot.slane %v9906, 5
        %v9909 = vsel %vm1338, %v9904, %v9908
        %v9910 = vshrl.u32 %v9594, 16
        %v9912 = vrot.slane %v9910, 4
        %v9913 = vor.u32 %v9912, %v9908
        %v9914 = vrot.slane %v9913, 4
        %v9916 = vshll.u32 %v9595, 16
        %v9918 = vrot.slane %v9916, 5
        %v9919 = vsel %vm1338, %v9914, %v9918
        %9952 = vst.msk [vmem:[#allocation3 + $0x8] sm:$0xf] %vm752, %v9609
        %9953 = vst.msk [vmem:[#allocation3 + $0x14] sm:$0xf] %vm752, %v9619
        %9954 = vst.msk [vmem:[#allocation3 + $0x20] sm:$0xf] %vm752, %v9629
        %9955 = vst.msk [vmem:[#allocation3 + $0x2c] sm:$0xf] %vm752, %v9639
        %9956 = vst.msk [vmem:[#allocation3 + $0x38] sm:$0xf] %vm752, %v9649
        %9957 = vst.msk [vmem:[#allocation3 + $0x44] sm:$0xf] %vm752, %v9659
        %9958 = vst.msk [vmem:[#allocation3 + $0x50] sm:$0xf] %vm752, %v9669
        %9959 = vst.msk [vmem:[#allocation3 + $0x5c] sm:$0xf] %vm752, %v9679
        %9960 = vst.msk [vmem:[#allocation3 + $0x68] sm:$0xf] %vm752, %v9689
        %9961 = vst.msk [vmem:[#allocation3 + $0x74] sm:$0xf] %vm752, %v9699
        %9962 = vst.msk [vmem:[#allocation3 + $0x80] sm:$0xf] %vm752, %v9709
        %9963 = vst.msk [vmem:[#allocation3 + $0x8c] sm:$0xf] %vm752, %v9719
        %9964 = vst.msk [vmem:[#allocation3 + $0x98] sm:$0xf] %vm752, %v9729
        %9965 = vst.msk [vmem:[#allocation3 + $0xa4] sm:$0xf] %vm752, %v9739
        %9966 = vst.msk [vmem:[#allocation3 + $0xb0] sm:$0xf] %vm752, %v9749
        %9967 = vst.msk [vmem:[#allocation3 + $0xbc] sm:$0xf] %vm752, %v9759
        %9968 = vst.msk [vmem:[#allocation3 + $0xc8] sm:$0xf] %vm752, %v9769
        %9969 = vst.msk [vmem:[#allocation3 + $0xd4] sm:$0xf] %vm752, %v9779
        %9970 = vst.msk [vmem:[#allocation3 + $0xe0] sm:$0xf] %vm752, %v9789
        %9971 = vst.msk [vmem:[#allocation3 + $0xec] sm:$0xf] %vm752, %v9799
        %9972 = vst.msk [vmem:[#allocation3 + $0xf8] sm:$0xf] %vm752, %v9809
        %9973 = vst.msk [vmem:[#allocation3 + $0x104] sm:$0xf] %vm752, %v9819
        %9974 = vst.msk [vmem:[#allocation3 + $0x110] sm:$0xf] %vm752, %v9829
        %9975 = vst.msk [vmem:[#allocation3 + $0x11c] sm:$0xf] %vm752, %v9839
        %9976 = vst.msk [vmem:[#allocation3 + $0x128] sm:$0xf] %vm752, %v9849
        %9977 = vst.msk [vmem:[#allocation3 + $0x134] sm:$0xf] %vm752, %v9859
        %9978 = vst.msk [vmem:[#allocation3 + $0x140] sm:$0xf] %vm752, %v9869
        %9979 = vst.msk [vmem:[#allocation3 + $0x14c] sm:$0xf] %vm752, %v9879
        %9980 = vst.msk [vmem:[#allocation3 + $0x158] sm:$0xf] %vm752, %v9889
        %9981 = vst.msk [vmem:[#allocation3 + $0x164] sm:$0xf] %vm752, %v9899
        %9982 = vst.msk [vmem:[#allocation3 + $0x170] sm:$0xf] %vm752, %v9909
        %9983 = vst.msk [vmem:[#allocation3 + $0x17c] sm:$0xf] %vm752, %v9919
        %v9984 = vld [vmem:[#allocation3] sm:$0xff]
        %v9985 = vld [vmem:[#allocation3 + $0x8] sm:$0xf]
        %v9986 = vld [vmem:[#allocation3 + $0xc] sm:$0xff]
        %v9987 = vld [vmem:[#allocation3 + $0x14] sm:$0xf]
        %v9988 = vld [vmem:[#allocation3 + $0x18] sm:$0xff]
        %v9989 = vld [vmem:[#allocation3 + $0x20] sm:$0xf]
        %v9990 = vld [vmem:[#allocation3 + $0x24] sm:$0xff]
        %v9991 = vld [vmem:[#allocation3 + $0x2c] sm:$0xf]
        %v9992 = vld [vmem:[#allocation3 + $0x30] sm:$0xff]
        %v9993 = vld [vmem:[#allocation3 + $0x38] sm:$0xf]
        %v9994 = vld [vmem:[#allocation3 + $0x3c] sm:$0xff]
        %v9995 = vld [vmem:[#allocation3 + $0x44] sm:$0xf]
        %v9996 = vld [vmem:[#allocation3 + $0x48] sm:$0xff]
        %v9997 = vld [vmem:[#allocation3 + $0x50] sm:$0xf]
        %v9998 = vld [vmem:[#allocation3 + $0x54] sm:$0xff]
        %v9999 = vld [vmem:[#allocation3 + $0x5c] sm:$0xf]
        %v10000 = vld [vmem:[#allocation3 + $0x60] sm:$0xff]
        %v10001 = vld [vmem:[#allocation3 + $0x68] sm:$0xf]
        %v10002 = vld [vmem:[#allocation3 + $0x6c] sm:$0xff]
        %v10003 = vld [vmem:[#allocation3 + $0x74] sm:$0xf]
        %v10004 = vld [vmem:[#allocation3 + $0x78] sm:$0xff]
        %v10005 = vld [vmem:[#allocation3 + $0x80] sm:$0xf]
        %v10006 = vld [vmem:[#allocation3 + $0x84] sm:$0xff]
        %v10007 = vld [vmem:[#allocation3 + $0x8c] sm:$0xf]
        %v10008 = vld [vmem:[#allocation3 + $0x90] sm:$0xff]
        %v10009 = vld [vmem:[#allocation3 + $0x98] sm:$0xf]
        %v10010 = vld [vmem:[#allocation3 + $0x9c] sm:$0xff]
        %v10011 = vld [vmem:[#allocation3 + $0xa4] sm:$0xf]
        %v10012 = vld [vmem:[#allocation3 + $0xa8] sm:$0xff]
        %v10013 = vld [vmem:[#allocation3 + $0xb0] sm:$0xf]
        %v10014 = vld [vmem:[#allocation3 + $0xb4] sm:$0xff]
        %v10015 = vld [vmem:[#allocation3 + $0xbc] sm:$0xf]
        %v10016 = vld [vmem:[#allocation3 + $0xc0] sm:$0xff]
        %v10017 = vld [vmem:[#allocation3 + $0xc8] sm:$0xf]
        %v10018 = vld [vmem:[#allocation3 + $0xcc] sm:$0xff]
        %v10019 = vld [vmem:[#allocation3 + $0xd4] sm:$0xf]
        %v10020 = vld [vmem:[#allocation3 + $0xd8] sm:$0xff]
        %v10021 = vld [vmem:[#allocation3 + $0xe0] sm:$0xf]
        %v10022 = vld [vmem:[#allocation3 + $0xe4] sm:$0xff]
        %v10023 = vld [vmem:[#allocation3 + $0xec] sm:$0xf]
        %v10024 = vld [vmem:[#allocation3 + $0xf0] sm:$0xff]
        %v10025 = vld [vmem:[#allocation3 + $0xf8] sm:$0xf]
        %v10026 = vld [vmem:[#allocation3 + $0xfc] sm:$0xff]
        %v10027 = vld [vmem:[#allocation3 + $0x104] sm:$0xf]
        %v10028 = vld [vmem:[#allocation3 + $0x108] sm:$0xff]
        %v10029 = vld [vmem:[#allocation3 + $0x110] sm:$0xf]
        %v10030 = vld [vmem:[#allocation3 + $0x114] sm:$0xff]
        %v10031 = vld [vmem:[#allocation3 + $0x11c] sm:$0xf]
        %v10032 = vld [vmem:[#allocation3 + $0x120] sm:$0xff]
        %v10033 = vld [vmem:[#allocation3 + $0x128] sm:$0xf]
        %v10034 = vld [vmem:[#allocation3 + $0x12c] sm:$0xff]
        %v10035 = vld [vmem:[#allocation3 + $0x134] sm:$0xf]
        %v10036 = vld [vmem:[#allocation3 + $0x138] sm:$0xff]
        %v10037 = vld [vmem:[#allocation3 + $0x140] sm:$0xf]
        %v10038 = vld [vmem:[#allocation3 + $0x144] sm:$0xff]
        %v10039 = vld [vmem:[#allocation3 + $0x14c] sm:$0xf]
        %v10040 = vld [vmem:[#allocation3 + $0x150] sm:$0xff]
        %v10041 = vld [vmem:[#allocation3 + $0x158] sm:$0xf]
        %v10042 = vld [vmem:[#allocation3 + $0x15c] sm:$0xff]
        %v10043 = vld [vmem:[#allocation3 + $0x164] sm:$0xf]
        %v10044 = vld [vmem:[#allocation3 + $0x168] sm:$0xff]
        %v10045 = vld [vmem:[#allocation3 + $0x170] sm:$0xf]
        %v10046 = vld [vmem:[#allocation3 + $0x174] sm:$0xff]
        %v10047 = vld [vmem:[#allocation3 + $0x17c] sm:$0xf]
        %v10048 = vld [vmem:[%s7] sm:$0xf]
        %v10049 = vld [vmem:[%s7 + $0x4] sm:$0xf]
        %v10050 = vld [vmem:[%s7 + $0x8] sm:$0xf]
        %v10051 = vld [vmem:[%s7 + $0xc] sm:$0xf]
        %v10052 = vld [vmem:[%s7 + $0x10] sm:$0xf]
        %v10053 = vld [vmem:[%s7 + $0x14] sm:$0xf]
        %v10054 = vld [vmem:[%s7 + $0x18] sm:$0xf]
        %v10055 = vld [vmem:[%s7 + $0x1c] sm:$0xf]
        %v10056 = vld [vmem:[%s7 + $0x20] sm:$0xf]
        %v10057 = vld [vmem:[%s7 + $0x24] sm:$0xf]
        %v10058 = vld [vmem:[%s7 + $0x28] sm:$0xf]
        %v10059 = vld [vmem:[%s7 + $0x2c] sm:$0xf]
        %v10060 = vld [vmem:[%s7 + $0x30] sm:$0xf]
        %v10061 = vld [vmem:[%s7 + $0x34] sm:$0xf]
        %v10062 = vld [vmem:[%s7 + $0x38] sm:$0xf]
        %v10063 = vld [vmem:[%s7 + $0x3c] sm:$0xf]
        %v10064 = vld [vmem:[%s7 + $0x40] sm:$0xf]
        %v10065 = vld [vmem:[%s7 + $0x44] sm:$0xf]
        %v10066 = vld [vmem:[%s7 + $0x48] sm:$0xf]
        %v10067 = vld [vmem:[%s7 + $0x4c] sm:$0xf]
        %v10068 = vld [vmem:[%s7 + $0x50] sm:$0xf]
        %v10069 = vld [vmem:[%s7 + $0x54] sm:$0xf]
        %v10070 = vld [vmem:[%s7 + $0x58] sm:$0xf]
        %v10071 = vld [vmem:[%s7 + $0x5c] sm:$0xf]
        %v10072 = vld [vmem:[%s7 + $0x60] sm:$0xf]
        %v10073 = vld [vmem:[%s7 + $0x64] sm:$0xf]
        %v10074 = vld [vmem:[%s7 + $0x68] sm:$0xf]
        %v10075 = vld [vmem:[%s7 + $0x6c] sm:$0xf]
        %v10076 = vld [vmem:[%s7 + $0x70] sm:$0xf]
        %v10077 = vld [vmem:[%s7 + $0x74] sm:$0xf]
        %v10078 = vld [vmem:[%s7 + $0x78] sm:$0xf]
        %v10079 = vld [vmem:[%s7 + $0x7c] sm:$0xf]
        %v10080 = vld [vmem:[%s7 + $0x80] sm:$0xf]
        %v10081 = vld [vmem:[%s7 + $0x84] sm:$0xf]
        %v10082 = vld [vmem:[%s7 + $0x88] sm:$0xf]
        %v10083 = vld [vmem:[%s7 + $0x8c] sm:$0xf]
        %v10084 = vld [vmem:[%s8] sm:$0x1]
        %v10086 = vlaneseq
        %v10087 = vshrl.u32 %v10086, 7
        %v10088 = vsub.s32 0, %v10087
        %v10089 = vrot.slane %v10084, %v10088
        %v10155 = vunpack.c.l.b16 %v9984
        %v10156 = vunpack.c.h.b16 %v9984
        %v10157 = vunpack.c.l.b16 %v9985
        %v10158 = vunpack.c.l.b16 %v9986
        %v10159 = vunpack.c.h.b16 %v9986
        %v10160 = vunpack.c.l.b16 %v9987
        %v10161 = vunpack.c.l.b16 %v9988
        %v10162 = vunpack.c.h.b16 %v9988
        %v10163 = vunpack.c.l.b16 %v9989
        %v10164 = vunpack.c.l.b16 %v9990
        %v10165 = vunpack.c.h.b16 %v9990
        %v10166 = vunpack.c.l.b16 %v9991
        %v10167 = vunpack.c.l.b16 %v9992
        %v10168 = vunpack.c.h.b16 %v9992
        %v10169 = vunpack.c.l.b16 %v9993
        %v10170 = vunpack.c.l.b16 %v9994
        %v10171 = vunpack.c.h.b16 %v9994
        %v10172 = vunpack.c.l.b16 %v9995
        %v10173 = vunpack.c.l.b16 %v9996
        %v10174 = vunpack.c.h.b16 %v9996
        %v10175 = vunpack.c.l.b16 %v9997
        %v10176 = vunpack.c.l.b16 %v9998
        %v10177 = vunpack.c.h.b16 %v9998
        %v10178 = vunpack.c.l.b16 %v9999
        %v10179 = vunpack.c.l.b16 %v10000
        %v10180 = vunpack.c.h.b16 %v10000
        %v10181 = vunpack.c.l.b16 %v10001
        %v10182 = vunpack.c.l.b16 %v10002
        %v10183 = vunpack.c.h.b16 %v10002
        %v10184 = vunpack.c.l.b16 %v10003
        %v10185 = vunpack.c.l.b16 %v10004
        %v10186 = vunpack.c.h.b16 %v10004
        %v10187 = vunpack.c.l.b16 %v10005
        %v10188 = vunpack.c.l.b16 %v10006
        %v10189 = vunpack.c.h.b16 %v10006
        %v10190 = vunpack.c.l.b16 %v10007
        %v10191 = vunpack.c.l.b16 %v10008
        %v10192 = vunpack.c.h.b16 %v10008
        %v10193 = vunpack.c.l.b16 %v10009
        %v10194 = vunpack.c.l.b16 %v10010
        %v10195 = vunpack.c.h.b16 %v10010
        %v10196 = vunpack.c.l.b16 %v10011
        %v10197 = vunpack.c.l.b16 %v10012
        %v10198 = vunpack.c.h.b16 %v10012
        %v10199 = vunpack.c.l.b16 %v10013
        %v10200 = vunpack.c.l.b16 %v10014
        %v10201 = vunpack.c.h.b16 %v10014
        %v10202 = vunpack.c.l.b16 %v10015
        %v10203 = vunpack.c.l.b16 %v10016
        %v10204 = vunpack.c.h.b16 %v10016
        %v10205 = vunpack.c.l.b16 %v10017
        %v10206 = vunpack.c.l.b16 %v10018
        %v10207 = vunpack.c.h.b16 %v10018
        %v10208 = vunpack.c.l.b16 %v10019
        %v10209 = vunpack.c.l.b16 %v10020
        %v10210 = vunpack.c.h.b16 %v10020
        %v10211 = vunpack.c.l.b16 %v10021
        %v10212 = vunpack.c.l.b16 %v10022
        %v10213 = vunpack.c.h.b16 %v10022
        %v10214 = vunpack.c.l.b16 %v10023
        %v10215 = vunpack.c.l.b16 %v10024
        %v10216 = vunpack.c.h.b16 %v10024
        %v10217 = vunpack.c.l.b16 %v10025
        %v10218 = vunpack.c.l.b16 %v10026
        %v10219 = vunpack.c.h.b16 %v10026
        %v10220 = vunpack.c.l.b16 %v10027
        %v10221 = vunpack.c.l.b16 %v10028
        %v10222 = vunpack.c.h.b16 %v10028
        %v10223 = vunpack.c.l.b16 %v10029
        %v10224 = vunpack.c.l.b16 %v10030
        %v10225 = vunpack.c.h.b16 %v10030
        %v10226 = vunpack.c.l.b16 %v10031
        %v10227 = vunpack.c.l.b16 %v10032
        %v10228 = vunpack.c.h.b16 %v10032
        %v10229 = vunpack.c.l.b16 %v10033
        %v10230 = vunpack.c.l.b16 %v10034
        %v10231 = vunpack.c.h.b16 %v10034
        %v10232 = vunpack.c.l.b16 %v10035
        %v10233 = vunpack.c.l.b16 %v10036
        %v10234 = vunpack.c.h.b16 %v10036
        %v10235 = vunpack.c.l.b16 %v10037
        %v10236 = vunpack.c.l.b16 %v10038
        %v10237 = vunpack.c.h.b16 %v10038
        %v10238 = vunpack.c.l.b16 %v10039
        %v10239 = vunpack.c.l.b16 %v10040
        %v10240 = vunpack.c.h.b16 %v10040
        %v10241 = vunpack.c.l.b16 %v10041
        %v10242 = vunpack.c.l.b16 %v10042
        %v10243 = vunpack.c.h.b16 %v10042
        %v10244 = vunpack.c.l.b16 %v10043
        %v10245 = vunpack.c.l.b16 %v10044
        %v10246 = vunpack.c.h.b16 %v10044
        %v10247 = vunpack.c.l.b16 %v10045
        %v10248 = vunpack.c.l.b16 %v10046
        %v10249 = vunpack.c.h.b16 %v10046
        %v10250 = vunpack.c.l.b16 %v10047
        %v10251 = vpack.c.b16 %v10158, %v10155
        %v10252 = vpack.c.b16 %v10159, %v10156
        %v10253 = vpack.c.b16 %v10160, %v10157
        %v10254 = vpack.c.b16 %v10164, %v10161
        %v10255 = vpack.c.b16 %v10165, %v10162
        %v10256 = vpack.c.b16 %v10166, %v10163
        %v10257 = vpack.c.b16 %v10170, %v10167
        %v10258 = vpack.c.b16 %v10171, %v10168
        %v10259 = vpack.c.b16 %v10172, %v10169
        %v10260 = vpack.c.b16 %v10176, %v10173
        %v10261 = vpack.c.b16 %v10177, %v10174
        %v10262 = vpack.c.b16 %v10178, %v10175
        %v10263 = vpack.c.b16 %v10182, %v10179
        %v10264 = vpack.c.b16 %v10183, %v10180
        %v10265 = vpack.c.b16 %v10184, %v10181
        %v10266 = vpack.c.b16 %v10188, %v10185
        %v10267 = vpack.c.b16 %v10189, %v10186
        %v10268 = vpack.c.b16 %v10190, %v10187
        %v10269 = vpack.c.b16 %v10194, %v10191
        %v10270 = vpack.c.b16 %v10195, %v10192
        %v10271 = vpack.c.b16 %v10196, %v10193
        %v10272 = vpack.c.b16 %v10200, %v10197
        %v10273 = vpack.c.b16 %v10201, %v10198
        %v10274 = vpack.c.b16 %v10202, %v10199
        %v10275 = vpack.c.b16 %v10206, %v10203
        %v10276 = vpack.c.b16 %v10207, %v10204
        %v10277 = vpack.c.b16 %v10208, %v10205
        %v10278 = vpack.c.b16 %v10212, %v10209
        %v10279 = vpack.c.b16 %v10213, %v10210
        %v10280 = vpack.c.b16 %v10214, %v10211
        %v10281 = vpack.c.b16 %v10218, %v10215
        %v10282 = vpack.c.b16 %v10219, %v10216
        %v10283 = vpack.c.b16 %v10220, %v10217
        %v10284 = vpack.c.b16 %v10224, %v10221
        %v10285 = vpack.c.b16 %v10225, %v10222
        %v10286 = vpack.c.b16 %v10226, %v10223
        %v10287 = vpack.c.b16 %v10230, %v10227
        %v10288 = vpack.c.b16 %v10231, %v10228
        %v10289 = vpack.c.b16 %v10232, %v10229
        %v10290 = vpack.c.b16 %v10236, %v10233
        %v10291 = vpack.c.b16 %v10237, %v10234
        %v10292 = vpack.c.b16 %v10238, %v10235
        %v10293 = vpack.c.b16 %v10242, %v10239
        %v10294 = vpack.c.b16 %v10243, %v10240
        %v10295 = vpack.c.b16 %v10244, %v10241
        %v10296 = vpack.c.b16 %v10248, %v10245
        %v10297 = vpack.c.b16 %v10249, %v10246
        %v10298 = vpack.c.b16 %v10250, %v10247
        %v10367 = vunpack.c.l.b16 %v10048
        %v10368 = vunpack.c.l.b16 %v10049
        %v10369 = vunpack.c.l.b16 %v10050
        %v10370 = vunpack.c.l.b16 %v10051
        %v10371 = vunpack.c.l.b16 %v10052
        %v10372 = vunpack.c.l.b16 %v10053
        %v10373 = vunpack.c.l.b16 %v10054
        %v10374 = vunpack.c.l.b16 %v10055
        %v10375 = vunpack.c.l.b16 %v10056
        %v10376 = vunpack.c.l.b16 %v10057
        %v10377 = vunpack.c.l.b16 %v10058
        %v10378 = vunpack.c.l.b16 %v10059
        %v10379 = vunpack.c.l.b16 %v10060
        %v10380 = vunpack.c.l.b16 %v10061
        %v10381 = vunpack.c.l.b16 %v10062
        %v10382 = vunpack.c.l.b16 %v10063
        %v10383 = vunpack.c.l.b16 %v10064
        %v10384 = vunpack.c.l.b16 %v10065
        %v10385 = vunpack.c.l.b16 %v10066
        %v10386 = vunpack.c.l.b16 %v10067
        %v10387 = vunpack.c.l.b16 %v10068
        %v10388 = vunpack.c.l.b16 %v10069
        %v10389 = vunpack.c.l.b16 %v10070
        %v10390 = vunpack.c.l.b16 %v10071
        %v10391 = vunpack.c.l.b16 %v10072
        %v10392 = vunpack.c.l.b16 %v10073
        %v10393 = vunpack.c.l.b16 %v10074
        %v10394 = vunpack.c.l.b16 %v10075
        %v10395 = vunpack.c.l.b16 %v10076
        %v10396 = vunpack.c.l.b16 %v10077
        %v10397 = vunpack.c.l.b16 %v10078
        %v10398 = vunpack.c.l.b16 %v10079
        %v10399 = vunpack.c.l.b16 %v10080
        %v10400 = vunpack.c.l.b16 %v10081
        %v10401 = vunpack.c.l.b16 %v10082
        %v10402 = vunpack.c.l.b16 %v10083
        %v10403 = vpack.c.b16 %v10368, %v10367
        %v10404 = vpack.c.b16 %v10370, %v10369
        %v10405 = vpack.c.b16 %v10372, %v10371
        %v10406 = vpack.c.b16 %v10374, %v10373
        %v10407 = vpack.c.b16 %v10376, %v10375
        %v10408 = vpack.c.b16 %v10378, %v10377
        %v10409 = vpack.c.b16 %v10380, %v10379
        %v10410 = vpack.c.b16 %v10382, %v10381
        %v10411 = vpack.c.b16 %v10384, %v10383
        %v10412 = vpack.c.b16 %v10386, %v10385
        %v10413 = vpack.c.b16 %v10388, %v10387
        %v10414 = vpack.c.b16 %v10390, %v10389
        %v10415 = vpack.c.b16 %v10392, %v10391
        %v10416 = vpack.c.b16 %v10394, %v10393
        %v10417 = vpack.c.b16 %v10396, %v10395
        %v10418 = vpack.c.b16 %v10398, %v10397
        %v10419 = vpack.c.b16 %v10400, %v10399
        %v10420 = vpack.c.b16 %v10402, %v10401
        %v10440 = vsel %vm6011, %v10253, 0
        %v10443 = vsel %vm6011, %v10256, 0
        %v10446 = vsel %vm6011, %v10259, 0
        %v10449 = vsel %vm6011, %v10262, 0
        %v10452 = vsel %vm6011, %v10265, 0
        %v10455 = vsel %vm6011, %v10268, 0
        %v10458 = vsel %vm6011, %v10271, 0
        %v10461 = vsel %vm6011, %v10274, 0
        %v10464 = vsel %vm6011, %v10277, 0
        %v10467 = vsel %vm6011, %v10280, 0
        %v10470 = vsel %vm6011, %v10283, 0
        %v10473 = vsel %vm6011, %v10286, 0
        %v10476 = vsel %vm6011, %v10289, 0
        %v10479 = vsel %vm6011, %v10292, 0
        %v10482 = vsel %vm6011, %v10295, 0
        %v10485 = vsel %vm6011, %v10298, 0
        %10487 = vmatprep.subr.bf16.mxu0 0
        %10488 = vmatpush1.bf16.msra.mxu0 %v10410
        %10489 = vmatprep.subr.bf16.mxu0 0
        %10490 = vmatpush1.bf16.msra.mxu0 %v10409
        %10491 = vmatprep.subr.bf16.mxu0 0
        %10492 = vmatpush1.bf16.msra.mxu0 %v10408
        %10493 = vmatprep.subr.bf16.mxu0 0
        %10494 = vmatpush1.bf16.msra.mxu0 %v10407
        %10495 = vmatprep.subr.bf16.mxu0 0
        %10496 = vmatpush1.bf16.msra.mxu0 %v10406
        %10497 = vmatprep.subr.bf16.mxu0 0
        %10498 = vmatpush1.bf16.msra.mxu0 %v10405
        %10499 = vmatprep.subr.bf16.mxu0 0
        %10500 = vmatpush1.bf16.msra.mxu0 %v10404
        %10501 = vmatprep.subr.bf16.mxu0 0
        %10502 = vmatpush1.bf16.msra.mxu0 %v10403
        %10503 = vmatprep.subr.bf16.mxu0 0
        %10504 = vmatpush2.bf16.msra.mxu0 %v10418
        %10505 = vmatprep.subr.bf16.mxu0 0
        %10506 = vmatpush2.bf16.msra.mxu0 %v10417
        %10507 = vmatprep.subr.bf16.mxu0 0
        %10508 = vmatpush2.bf16.msra.mxu0 %v10416
        %10509 = vmatprep.subr.bf16.mxu0 0
        %10510 = vmatpush2.bf16.msra.mxu0 %v10415
        %10511 = vmatprep.subr.bf16.mxu0 0
        %10512 = vmatpush2.bf16.msra.mxu0 %v10414
        %10513 = vmatprep.subr.bf16.mxu0 0
        %10514 = vmatpush2.bf16.msra.mxu0 %v10413
        %10515 = vmatprep.subr.bf16.mxu0 0
        %10516 = vmatpush2.bf16.msra.mxu0 %v10412
        %10517 = vmatprep.subr.bf16.mxu0 0
        %10518 = vmatpush2.bf16.msra.mxu0 %v10411
        %10519 = vmatprep.mubr.bf16.mxu0 %v10252
        %10520 = vmatmul.mubr.bf16.gmra.mxu0 %v10251
        %v10521 = vpop.f32.mrf.mxu0
        %v10522 = vadd.f32 %v10089, %v10521
        %v10523 = vpop.f32.mrf.mxu0
        %v10524 = vpop.f32.mrf.mxu0
        %v10525 = vadd.f32 %v10089, %v10524
        %v10526 = vpop.f32.mrf.mxu0
        %10527 = vmatprep.mubr.bf16.mxu0 %v10255
        %10528 = vmatmul.mubr.bf16.gmra.mxu0 %v10254
        %v10529 = vpop.f32.mrf.mxu0
        %v10530 = vadd.f32 %v10089, %v10529
        %v10531 = vpop.f32.mrf.mxu0
        %v10532 = vpop.f32.mrf.mxu0
        %v10533 = vadd.f32 %v10089, %v10532
        %v10534 = vpop.f32.mrf.mxu0
        %10535 = vmatprep.mubr.bf16.mxu0 %v10258
        %10536 = vmatmul.mubr.bf16.gmra.mxu0 %v10257
        %v10537 = vpop.f32.mrf.mxu0
        %v10538 = vadd.f32 %v10089, %v10537
        %v10539 = vpop.f32.mrf.mxu0
        %v10540 = vpop.f32.mrf.mxu0
        %v10541 = vadd.f32 %v10089, %v10540
        %v10542 = vpop.f32.mrf.mxu0
        %10543 = vmatprep.mubr.bf16.mxu0 %v10261
        %10544 = vmatmul.mubr.bf16.gmra.mxu0 %v10260
        %v10545 = vpop.f32.mrf.mxu0
        %v10546 = vadd.f32 %v10089, %v10545
        %v10547 = vpop.f32.mrf.mxu0
        %v10548 = vpop.f32.mrf.mxu0
        %v10549 = vadd.f32 %v10089, %v10548
        %v10550 = vpop.f32.mrf.mxu0
        %10551 = vmatprep.mubr.bf16.mxu0 %v10264
        %10552 = vmatmul.mubr.bf16.gmra.mxu0 %v10263
        %v10553 = vpop.f32.mrf.mxu0
        %v10554 = vadd.f32 %v10089, %v10553
        %v10555 = vpop.f32.mrf.mxu0
        %v10556 = vpop.f32.mrf.mxu0
        %v10557 = vadd.f32 %v10089, %v10556
        %v10558 = vpop.f32.mrf.mxu0
        %10559 = vmatprep.mubr.bf16.mxu0 %v10267
        %10560 = vmatmul.mubr.bf16.gmra.mxu0 %v10266
        %v10561 = vpop.f32.mrf.mxu0
        %v10562 = vadd.f32 %v10089, %v10561
        %v10563 = vpop.f32.mrf.mxu0
        %v10564 = vpop.f32.mrf.mxu0
        %v10565 = vadd.f32 %v10089, %v10564
        %v10566 = vpop.f32.mrf.mxu0
        %10567 = vmatprep.mubr.bf16.mxu0 %v10270
        %10568 = vmatmul.mubr.bf16.gmra.mxu0 %v10269
        %v10569 = vpop.f32.mrf.mxu0
        %v10570 = vadd.f32 %v10089, %v10569
        %v10571 = vpop.f32.mrf.mxu0
        %v10572 = vpop.f32.mrf.mxu0
        %v10573 = vadd.f32 %v10089, %v10572
        %v10574 = vpop.f32.mrf.mxu0
        %10575 = vmatprep.mubr.bf16.mxu0 %v10273
        %10576 = vmatmul.mubr.bf16.gmra.mxu0 %v10272
        %v10577 = vpop.f32.mrf.mxu0
        %v10578 = vadd.f32 %v10089, %v10577
        %v10579 = vpop.f32.mrf.mxu0
        %v10580 = vpop.f32.mrf.mxu0
        %v10581 = vadd.f32 %v10089, %v10580
        %v10582 = vpop.f32.mrf.mxu0
        %10583 = vmatprep.mubr.bf16.mxu0 %v10276
        %10584 = vmatmul.mubr.bf16.gmra.mxu0 %v10275
        %v10585 = vpop.f32.mrf.mxu0
        %v10586 = vadd.f32 %v10089, %v10585
        %v10587 = vpop.f32.mrf.mxu0
        %v10588 = vpop.f32.mrf.mxu0
        %v10589 = vadd.f32 %v10089, %v10588
        %v10590 = vpop.f32.mrf.mxu0
        %10591 = vmatprep.mubr.bf16.mxu0 %v10279
        %10592 = vmatmul.mubr.bf16.gmra.mxu0 %v10278
        %v10593 = vpop.f32.mrf.mxu0
        %v10594 = vadd.f32 %v10089, %v10593
        %v10595 = vpop.f32.mrf.mxu0
        %v10596 = vpop.f32.mrf.mxu0
        %v10597 = vadd.f32 %v10089, %v10596
        %v10598 = vpop.f32.mrf.mxu0
        %10599 = vmatprep.mubr.bf16.mxu0 %v10282
        %10600 = vmatmul.mubr.bf16.gmra.mxu0 %v10281
        %v10601 = vpop.f32.mrf.mxu0
        %v10602 = vadd.f32 %v10089, %v10601
        %v10603 = vpop.f32.mrf.mxu0
        %v10604 = vpop.f32.mrf.mxu0
        %v10605 = vadd.f32 %v10089, %v10604
        %v10606 = vpop.f32.mrf.mxu0
        %10607 = vmatprep.mubr.bf16.mxu0 %v10285
        %10608 = vmatmul.mubr.bf16.gmra.mxu0 %v10284
        %v10609 = vpop.f32.mrf.mxu0
        %v10610 = vadd.f32 %v10089, %v10609
        %v10611 = vpop.f32.mrf.mxu0
        %v10612 = vpop.f32.mrf.mxu0
        %v10613 = vadd.f32 %v10089, %v10612
        %v10614 = vpop.f32.mrf.mxu0
        %10615 = vmatprep.mubr.bf16.mxu0 %v10288
        %10616 = vmatmul.mubr.bf16.gmra.mxu0 %v10287
        %v10617 = vpop.f32.mrf.mxu0
        %v10618 = vadd.f32 %v10089, %v10617
        %v10619 = vpop.f32.mrf.mxu0
        %v10620 = vpop.f32.mrf.mxu0
        %v10621 = vadd.f32 %v10089, %v10620
        %v10622 = vpop.f32.mrf.mxu0
        %10623 = vmatprep.mubr.bf16.mxu0 %v10291
        %10624 = vmatmul.mubr.bf16.gmra.mxu0 %v10290
        %v10625 = vpop.f32.mrf.mxu0
        %v10626 = vadd.f32 %v10089, %v10625
        %v10627 = vpop.f32.mrf.mxu0
        %v10628 = vpop.f32.mrf.mxu0
        %v10629 = vadd.f32 %v10089, %v10628
        %v10630 = vpop.f32.mrf.mxu0
        %10631 = vmatprep.mubr.bf16.mxu0 %v10294
        %10632 = vmatmul.mubr.bf16.gmra.mxu0 %v10293
        %v10633 = vpop.f32.mrf.mxu0
        %v10634 = vadd.f32 %v10089, %v10633
        %v10635 = vpop.f32.mrf.mxu0
        %v10636 = vpop.f32.mrf.mxu0
        %v10637 = vadd.f32 %v10089, %v10636
        %v10638 = vpop.f32.mrf.mxu0
        %10639 = vmatprep.mubr.bf16.mxu0 %v10297
        %10640 = vmatmul.mubr.bf16.gmra.mxu0 %v10296
        %v10641 = vpop.f32.mrf.mxu0
        %v10642 = vadd.f32 %v10089, %v10641
        %v10643 = vpop.f32.mrf.mxu0
        %v10644 = vpop.f32.mrf.mxu0
        %v10645 = vadd.f32 %v10089, %v10644
        %v10646 = vpop.f32.mrf.mxu0
        %10647 = vdwg.mxu0
        %10648 = vmatprep.subr.bf16.mxu0 0
        %10649 = vmatpush1.bf16.msra.mxu0 0
        %10650 = vmatprep.subr.bf16.mxu0 0
        %10651 = vmatpush1.bf16.msra.mxu0 0
        %10652 = vmatprep.subr.bf16.mxu0 0
        %10653 = vmatpush1.bf16.msra.mxu0 0
        %10654 = vmatprep.subr.bf16.mxu0 0
        %10655 = vmatpush1.bf16.msra.mxu0 0
        %10656 = vmatprep.subr.bf16.mxu0 0
        %10657 = vmatpush1.bf16.msra.mxu0 0
        %10658 = vmatprep.subr.bf16.mxu0 0
        %10659 = vmatpush1.bf16.msra.mxu0 0
        %10660 = vmatprep.subr.bf16.mxu0 0
        %10661 = vmatpush1.bf16.msra.mxu0 %v10420
        %10662 = vmatprep.subr.bf16.mxu0 0
        %10663 = vmatpush1.bf16.msra.mxu0 %v10419
        %10664 = vmatprep.subr.bf16.mxu0 0
        %10665 = vmatpush2.bf16.msra.mxu0 0
        %10666 = vmatprep.subr.bf16.mxu0 0
        %10667 = vmatpush2.bf16.msra.mxu0 0
        %10668 = vmatprep.subr.bf16.mxu0 0
        %10669 = vmatpush2.bf16.msra.mxu0 0
        %10670 = vmatprep.subr.bf16.mxu0 0
        %10671 = vmatpush2.bf16.msra.mxu0 0
        %10672 = vmatprep.subr.bf16.mxu0 0
        %10673 = vmatpush2.bf16.msra.mxu0 0
        %10674 = vmatprep.subr.bf16.mxu0 0
        %10675 = vmatpush2.bf16.msra.mxu0 0
        %10676 = vmatprep.subr.bf16.mxu0 0
        %10677 = vmatpush2.bf16.msra.mxu0 0
        %10678 = vmatprep.subr.bf16.mxu0 0
        %10679 = vmatpush2.bf16.msra.mxu0 0
        %10680 = vmatprep.mubr.bf16.mxu0 0
        %10681 = vmatmul.mubr.bf16.gmra.mxu0 %v10440
        %v10682 = vpop.f32.mrf.mxu0
        %v10683 = vadd.f32 %v10522, %v10682
        %v10684 = vpop.f32.mrf.mxu0
        %v10685 = vpop.f32.mrf.mxu0
        %v10686 = vadd.f32 %v10525, %v10685
        %v10687 = vpop.f32.mrf.mxu0
        %10688 = vmatprep.mubr.bf16.mxu0 0
        %10689 = vmatmul.mubr.bf16.gmra.mxu0 %v10443
        %v10690 = vpop.f32.mrf.mxu0
        %v10691 = vadd.f32 %v10530, %v10690
        %v10692 = vpop.f32.mrf.mxu0
        %v10693 = vpop.f32.mrf.mxu0
        %v10694 = vadd.f32 %v10533, %v10693
        %v10695 = vpop.f32.mrf.mxu0
        %10696 = vmatprep.mubr.bf16.mxu0 0
        %10697 = vmatmul.mubr.bf16.gmra.mxu0 %v10446
        %v10698 = vpop.f32.mrf.mxu0
        %v10699 = vadd.f32 %v10538, %v10698
        %v10700 = vpop.f32.mrf.mxu0
        %v10701 = vpop.f32.mrf.mxu0
        %v10702 = vadd.f32 %v10541, %v10701
        %v10703 = vpop.f32.mrf.mxu0
        %10704 = vmatprep.mubr.bf16.mxu0 0
        %10705 = vmatmul.mubr.bf16.gmra.mxu0 %v10449
        %v10706 = vpop.f32.mrf.mxu0
        %v10707 = vadd.f32 %v10546, %v10706
        %v10708 = vpop.f32.mrf.mxu0
        %v10709 = vpop.f32.mrf.mxu0
        %v10710 = vadd.f32 %v10549, %v10709
        %v10711 = vpop.f32.mrf.mxu0
        %10712 = vmatprep.mubr.bf16.mxu0 0
        %10713 = vmatmul.mubr.bf16.gmra.mxu0 %v10452
        %v10714 = vpop.f32.mrf.mxu0
        %v10715 = vadd.f32 %v10554, %v10714
        %v10716 = vpop.f32.mrf.mxu0
        %v10717 = vpop.f32.mrf.mxu0
        %v10718 = vadd.f32 %v10557, %v10717
        %v10719 = vpop.f32.mrf.mxu0
        %10720 = vmatprep.mubr.bf16.mxu0 0
        %10721 = vmatmul.mubr.bf16.gmra.mxu0 %v10455
        %v10722 = vpop.f32.mrf.mxu0
        %v10723 = vadd.f32 %v10562, %v10722
        %v10724 = vpop.f32.mrf.mxu0
        %v10725 = vpop.f32.mrf.mxu0
        %v10726 = vadd.f32 %v10565, %v10725
        %v10727 = vpop.f32.mrf.mxu0
        %10728 = vmatprep.mubr.bf16.mxu0 0
        %10729 = vmatmul.mubr.bf16.gmra.mxu0 %v10458
        %v10730 = vpop.f32.mrf.mxu0
        %v10731 = vadd.f32 %v10570, %v10730
        %v10732 = vpop.f32.mrf.mxu0
        %v10733 = vpop.f32.mrf.mxu0
        %v10734 = vadd.f32 %v10573, %v10733
        %v10735 = vpop.f32.mrf.mxu0
        %10736 = vmatprep.mubr.bf16.mxu0 0
        %10737 = vmatmul.mubr.bf16.gmra.mxu0 %v10461
        %v10738 = vpop.f32.mrf.mxu0
        %v10739 = vadd.f32 %v10578, %v10738
        %v10740 = vpop.f32.mrf.mxu0
        %v10741 = vpop.f32.mrf.mxu0
        %v10742 = vadd.f32 %v10581, %v10741
        %v10743 = vpop.f32.mrf.mxu0
        %10744 = vmatprep.mubr.bf16.mxu0 0
        %10745 = vmatmul.mubr.bf16.gmra.mxu0 %v10464
        %v10746 = vpop.f32.mrf.mxu0
        %v10747 = vadd.f32 %v10586, %v10746
        %v10748 = vpop.f32.mrf.mxu0
        %v10749 = vpop.f32.mrf.mxu0
        %v10750 = vadd.f32 %v10589, %v10749
        %v10751 = vpop.f32.mrf.mxu0
        %10752 = vmatprep.mubr.bf16.mxu0 0
        %10753 = vmatmul.mubr.bf16.gmra.mxu0 %v10467
        %v10754 = vpop.f32.mrf.mxu0
        %v10755 = vadd.f32 %v10594, %v10754
        %v10756 = vpop.f32.mrf.mxu0
        %v10757 = vpop.f32.mrf.mxu0
        %v10758 = vadd.f32 %v10597, %v10757
        %v10759 = vpop.f32.mrf.mxu0
        %10760 = vmatprep.mubr.bf16.mxu0 0
        %10761 = vmatmul.mubr.bf16.gmra.mxu0 %v10470
        %v10762 = vpop.f32.mrf.mxu0
        %v10763 = vadd.f32 %v10602, %v10762
        %v10764 = vpop.f32.mrf.mxu0
        %v10765 = vpop.f32.mrf.mxu0
        %v10766 = vadd.f32 %v10605, %v10765
        %v10767 = vpop.f32.mrf.mxu0
        %10768 = vmatprep.mubr.bf16.mxu0 0
        %10769 = vmatmul.mubr.bf16.gmra.mxu0 %v10473
        %v10770 = vpop.f32.mrf.mxu0
        %v10771 = vadd.f32 %v10610, %v10770
        %v10772 = vpop.f32.mrf.mxu0
        %v10773 = vpop.f32.mrf.mxu0
        %v10774 = vadd.f32 %v10613, %v10773
        %v10775 = vpop.f32.mrf.mxu0
        %10776 = vmatprep.mubr.bf16.mxu0 0
        %10777 = vmatmul.mubr.bf16.gmra.mxu0 %v10476
        %v10778 = vpop.f32.mrf.mxu0
        %v10779 = vadd.f32 %v10618, %v10778
        %v10780 = vpop.f32.mrf.mxu0
        %v10781 = vpop.f32.mrf.mxu0
        %v10782 = vadd.f32 %v10621, %v10781
        %v10783 = vpop.f32.mrf.mxu0
        %10784 = vmatprep.mubr.bf16.mxu0 0
        %10785 = vmatmul.mubr.bf16.gmra.mxu0 %v10479
        %v10786 = vpop.f32.mrf.mxu0
        %v10787 = vadd.f32 %v10626, %v10786
        %v10788 = vpop.f32.mrf.mxu0
        %v10789 = vpop.f32.mrf.mxu0
        %v10790 = vadd.f32 %v10629, %v10789
        %v10791 = vpop.f32.mrf.mxu0
        %10792 = vmatprep.mubr.bf16.mxu0 0
        %10793 = vmatmul.mubr.bf16.gmra.mxu0 %v10482
        %v10794 = vpop.f32.mrf.mxu0
        %v10795 = vadd.f32 %v10634, %v10794
        %v10796 = vpop.f32.mrf.mxu0
        %v10797 = vpop.f32.mrf.mxu0
        %v10798 = vadd.f32 %v10637, %v10797
        %v10799 = vpop.f32.mrf.mxu0
        %10800 = vmatprep.mubr.bf16.mxu0 0
        %10801 = vmatmul.mubr.bf16.gmra.mxu0 %v10485
        %v10802 = vpop.f32.mrf.mxu0
        %v10803 = vadd.f32 %v10642, %v10802
        %v10804 = vpop.f32.mrf.mxu0
        %v10805 = vpop.f32.mrf.mxu0
        %v10806 = vadd.f32 %v10645, %v10805
        %v10807 = vpop.f32.mrf.mxu0
        %10808 = vdwg.mxu0
        %v10809 = vld [vmem:[%s331] sm:$0xff]
        %v10810 = vld [vmem:[%s331 + $0x8] sm:$0xff]
        %v10811 = vld [vmem:[%s331 + $0x10] sm:$0xff]
        %v10812 = vld [vmem:[%s331 + $0x18] sm:$0xff]
        %v10813 = vld [vmem:[%s331 + $0x20] sm:$0xff]
        %v10814 = vld [vmem:[%s331 + $0x28] sm:$0xff]
        %v10815 = vld [vmem:[%s331 + $0x30] sm:$0xff]
        %v10816 = vld [vmem:[%s331 + $0x38] sm:$0xff]
        %v10817 = vld [vmem:[%s331 + $0x40] sm:$0xff]
        %v10818 = vld [vmem:[%s331 + $0x48] sm:$0xff]
        %v10819 = vld [vmem:[%s331 + $0x50] sm:$0xff]
        %v10820 = vld [vmem:[%s331 + $0x58] sm:$0xff]
        %v10821 = vld [vmem:[%s331 + $0x60] sm:$0xff]
        %v10822 = vld [vmem:[%s331 + $0x68] sm:$0xff]
        %v10823 = vld [vmem:[%s331 + $0x70] sm:$0xff]
        %v10824 = vld [vmem:[%s331 + $0x78] sm:$0xff]
        %v10825 = vld [vmem:[%s331 + $0x80] sm:$0xff]
        %v10826 = vld [vmem:[%s331 + $0x88] sm:$0xff]
        %v10827 = vld [vmem:[%s331 + $0x90] sm:$0xff]
        %v10828 = vld [vmem:[%s331 + $0x98] sm:$0xff]
        %v10829 = vld [vmem:[%s331 + $0xa0] sm:$0xff]
        %v10830 = vld [vmem:[%s331 + $0xa8] sm:$0xff]
        %v10831 = vld [vmem:[%s331 + $0xb0] sm:$0xff]
        %v10832 = vld [vmem:[%s331 + $0xb8] sm:$0xff]
        %v10833 = vld [vmem:[%s331 + $0xc0] sm:$0xff]
        %v10834 = vld [vmem:[%s331 + $0xc8] sm:$0xff]
        %v10835 = vld [vmem:[%s331 + $0xd0] sm:$0xff]
        %v10836 = vld [vmem:[%s331 + $0xd8] sm:$0xff]
        %v10837 = vld [vmem:[%s331 + $0xe0] sm:$0xff]
        %v10838 = vld [vmem:[%s331 + $0xe8] sm:$0xff]
        %v10839 = vld [vmem:[%s331 + $0xf0] sm:$0xff]
        %v10840 = vld [vmem:[%s331 + $0xf8] sm:$0xff]
        %v10841 = vadd.f32 %v10683, %v10809
        %v10842 = vadd.f32 %v10686, %v10810
        %v10843 = vadd.f32 %v10691, %v10811
        %v10844 = vadd.f32 %v10694, %v10812
        %v10845 = vadd.f32 %v10699, %v10813
        %v10846 = vadd.f32 %v10702, %v10814
        %v10847 = vadd.f32 %v10707, %v10815
        %v10848 = vadd.f32 %v10710, %v10816
        %v10849 = vadd.f32 %v10715, %v10817
        %v10850 = vadd.f32 %v10718, %v10818
        %v10851 = vadd.f32 %v10723, %v10819
        %v10852 = vadd.f32 %v10726, %v10820
        %v10853 = vadd.f32 %v10731, %v10821
        %v10854 = vadd.f32 %v10734, %v10822
        %v10855 = vadd.f32 %v10739, %v10823
        %v10856 = vadd.f32 %v10742, %v10824
        %v10857 = vadd.f32 %v10747, %v10825
        %v10858 = vadd.f32 %v10750, %v10826
        %v10859 = vadd.f32 %v10755, %v10827
        %v10860 = vadd.f32 %v10758, %v10828
        %v10861 = vadd.f32 %v10763, %v10829
        %v10862 = vadd.f32 %v10766, %v10830
        %v10863 = vadd.f32 %v10771, %v10831
        %v10864 = vadd.f32 %v10774, %v10832
        %v10865 = vadd.f32 %v10779, %v10833
        %v10866 = vadd.f32 %v10782, %v10834
        %v10867 = vadd.f32 %v10787, %v10835
        %v10868 = vadd.f32 %v10790, %v10836
        %v10869 = vadd.f32 %v10795, %v10837
        %v10870 = vadd.f32 %v10798, %v10838
        %v10871 = vadd.f32 %v10803, %v10839
        %v10872 = vadd.f32 %v10806, %v10840
        %10873 = vst.msk [vmem:[%s326] sm:$0xff] %vm6011, %v10841
        %10874 = vst.msk [vmem:[%s326 + $0x8] sm:$0xff] %vm6011, %v10842
        %10875 = vst.msk [vmem:[%s326 + $0x10] sm:$0xff] %vm6011, %v10843
        %10876 = vst.msk [vmem:[%s326 + $0x18] sm:$0xff] %vm6011, %v10844
        %10877 = vst.msk [vmem:[%s326 + $0x20] sm:$0xff] %vm6011, %v10845
        %10878 = vst.msk [vmem:[%s326 + $0x28] sm:$0xff] %vm6011, %v10846
        %10879 = vst.msk [vmem:[%s326 + $0x30] sm:$0xff] %vm6011, %v10847
        %10880 = vst.msk [vmem:[%s326 + $0x38] sm:$0xff] %vm6011, %v10848
        %10881 = vst.msk [vmem:[%s326 + $0x40] sm:$0xff] %vm6011, %v10849
        %10882 = vst.msk [vmem:[%s326 + $0x48] sm:$0xff] %vm6011, %v10850
        %10883 = vst.msk [vmem:[%s326 + $0x50] sm:$0xff] %vm6011, %v10851
        %10884 = vst.msk [vmem:[%s326 + $0x58] sm:$0xff] %vm6011, %v10852
        %10885 = vst.msk [vmem:[%s326 + $0x60] sm:$0xff] %vm6011, %v10853
        %10886 = vst.msk [vmem:[%s326 + $0x68] sm:$0xff] %vm6011, %v10854
        %10887 = vst.msk [vmem:[%s326 + $0x70] sm:$0xff] %vm6011, %v10855
        %10888 = vst.msk [vmem:[%s326 + $0x78] sm:$0xff] %vm6011, %v10856
        %10889 = vst.msk [vmem:[%s326 + $0x80] sm:$0xff] %vm6011, %v10857
        %10890 = vst.msk [vmem:[%s326 + $0x88] sm:$0xff] %vm6011, %v10858
        %10891 = vst.msk [vmem:[%s326 + $0x90] sm:$0xff] %vm6011, %v10859
        %10892 = vst.msk [vmem:[%s326 + $0x98] sm:$0xff] %vm6011, %v10860
        %10893 = vst.msk [vmem:[%s326 + $0xa0] sm:$0xff] %vm6011, %v10861
        %10894 = vst.msk [vmem:[%s326 + $0xa8] sm:$0xff] %vm6011, %v10862
        %10895 = vst.msk [vmem:[%s326 + $0xb0] sm:$0xff] %vm6011, %v10863
        %10896 = vst.msk [vmem:[%s326 + $0xb8] sm:$0xff] %vm6011, %v10864
        %10897 = vst.msk [vmem:[%s326 + $0xc0] sm:$0xff] %vm6011, %v10865
        %10898 = vst.msk [vmem:[%s326 + $0xc8] sm:$0xff] %vm6011, %v10866
        %10899 = vst.msk [vmem:[%s326 + $0xd0] sm:$0xff] %vm6011, %v10867
        %10900 = vst.msk [vmem:[%s326 + $0xd8] sm:$0xff] %vm6011, %v10868
        %10901 = vst.msk [vmem:[%s326 + $0xe0] sm:$0xff] %vm6011, %v10869
        %10902 = vst.msk [vmem:[%s326 + $0xe8] sm:$0xff] %vm6011, %v10870
        %10903 = vst.msk [vmem:[%s326 + $0xf0] sm:$0xff] %vm6011, %v10871
        %10904 = vst.msk [vmem:[%s326 + $0xf8] sm:$0xff] %vm6011, %v10872
        %s10905 = sand.u32 %s225, 1
        %s10906 = scalar_lea.sflag [#allocation5], %s10905
        %s10907 = sand.u32 %s225, 1
        %s10908 = smul.addr %s10907, 256
        %s10909 = scalar_lea.vmem [#allocation4], %s10908
        // Predicated region
        $region57: #{wide_basic_forward.1} parent=55 // pred_check
          %p10910 = pneg %p235
        $region58: #{wide_basic_forward.1} parent=55 // pred_check_branch
          %10912 = sbr.rel (%p10910) target = $region60
        $region59: #{wide_basic_forward.1} parent=55 // pred_region
          %s10913 = smul.u32 32, %s23
          %s10915 = ssub.s32 4096, 4096
          %10916 = vsyncadd %s10906, %s10915
          %s10917 = smul.addr %s10913, 128
          %s10918 = scalar_lea.hbm %s9, %s10917
          %s10919 = sshll.u32 %s10909, 4
          %s10920 = int_to_ptr.vmem [resolvable:$true] %s10919
          %10925 = dma.vmem_to_hbm [thread:$0]  %s10920, 4096, %s10918, %s10906, 128, 128, 8
        $region60: #{wide_basic_forward.1} parent=55 // pred_fallthru
          _
      $region56: #{wide_basic_forward.1} parent=5 // pred_fallthru
        _
      %p10926 = scmp.le.s32.totalorder 2, %s18
      // Predicated region
      $region61: #{wide_basic_forward.1} parent=5 // pred_check
        %p10927 = pneg %p10926
      $region62: #{wide_basic_forward.1} parent=5 // pred_check_branch
        %10929 = sbr.rel (%p10927) target = $region64
      $region63: #{wide_basic_forward.1} parent=5 // pred_region
        %s10930 = ssub.s32 %s18, 2
        // Predicated region
        $region65: #{wide_basic_forward.1} parent=63 // pred_check
          %p10931 = pneg %p241
        $region66: #{wide_basic_forward.1} parent=63 // pred_check_branch
          %10933 = sbr.rel (%p10931) target = $region68
        $region67: #{wide_basic_forward.1} parent=63 // pred_region
          %s10934 = sand.u32 %s226, 1
          %s10935 = scalar_lea.sflag [#allocation5], %s10934
          %s10936 = sand.u32 %s226, 1
          %s10937 = smul.addr %s10936, 256
          %s10938 = scalar_lea.vmem [#allocation4], %s10937
          %10939 = dma.done %s10935, 4096
        $region68: #{wide_basic_forward.1} parent=63 // pred_fallthru
          _
      $region64: #{wide_basic_forward.1} parent=5 // pred_fallthru
        _
    $region6: #{wide_basic_forward.1} parent=1 // loop_footer
      %s22 = sadd.s32 1, %s18
    $region7: #{wide_basic_forward.1} parent=1 // loop_footer_branch
      %17 = sbr.rel target = $region3
    $region8: #{wide_basic_forward.1} parent=1 // loop_exit
      _
    %10940 = vsyncpa [#allocation5], 1
    %s10941 = scalar_lea.sflag [#allocation5], 1
    %10942 = vsyncpa %s10941, 1

</llo_original>
